<compile_context>
chip_gen: v5e
topology: v5e:2x2
jax: 0.10.0
libtpu: 0.0.40
codegen_flags: <defaults>
</compile_context>

<pallas_src>
import functools
import numpy as np
import jax
import jax.numpy as jnp
from jax.experimental import pallas as pl
from jax.experimental.pallas import tpu as pltpu

# ----------------------------- configuration --------------------------------
B = 2                                   # batch
C, H, W = 3, 16, 16                     # image NCHW
PATCH = 4
P = (H // PATCH) * (W // PATCH)         # 16 visual tokens
PATCH_DIM = C * PATCH * PATCH           # 48
D_VF = 64                               # args.d_vf
D_MODEL = 32                            # args.d_model
D_FF = 64                               # args.d_ff
NUM_HEADS = 4                           # args.num_heads
DK = D_MODEL // NUM_HEADS               # 8
NUM_LABELS = 8                          # args.num_labels
NUM_LAYERS = 2                          # args.num_layers
VOCAB = 30                              # len(tokenizer.idx2token) + 1
T = 8                                   # raw target sequence length
TM = T - 1                              # R2Gen crops the last target token
S_ENC = P + 1                           # visual tokens + label token = 17
S_PAD = 24                              # padded to a sublane multiple
NEG = -1e9


# --------------------------- in-kernel helpers --------------------------------
def _mm(a, b):
    # MXU matmul: bf16 operands, f32 accumulation (review: v6e/v7x full-rate).
    return jnp.dot(a.astype(jnp.bfloat16), b.astype(jnp.bfloat16),
                   preferred_element_type=jnp.float32)


def _layernorm(x, lnp):
    mu = jnp.mean(x, axis=-1, keepdims=True)
    var = jnp.mean((x - mu) ** 2, axis=-1, keepdims=True)
    return (x - mu) * jax.lax.rsqrt(var + 1e-6) * lnp['g'] + lnp['b']


def _ffn(x, fp):
    h = jnp.maximum(_mm(x, fp['w1']) + fp['b1'], 0.0)
    return _mm(h, fp['w2']) + fp['b2']


def _heads_attention(Q, K, V, wo, bo, mask):
    scale = 1.0 / np.sqrt(DK)
    ctxs = []
    for h in range(NUM_HEADS):                       # static head loop
        sl = slice(h * DK, (h + 1) * DK)
        s = jax.lax.dot_general(
            Q[:, sl].astype(jnp.bfloat16), K[:, sl].astype(jnp.bfloat16),
            (((1,), (1,)), ((), ())), preferred_element_type=jnp.float32)
        s = s * scale + mask                         # f32 scores + f32 mask
        s = s - jnp.max(s, axis=-1, keepdims=True)
        e = jnp.exp(s)
        pr = e * pl.reciprocal(jnp.sum(e, axis=-1, keepdims=True), approx=True)
        ctxs.append(_mm(pr, V[:, sl]))
    ctx = jnp.concatenate(ctxs, axis=-1)             # (Tq, D) -> single Wo matmul
    return _mm(ctx, wo) + bo


def _mha_self(x, ap, mask):
    qkv = _mm(x, ap['wqkv']) + ap['bqkv']            # single fused QKV matmul
    Q = qkv[:, 0:D_MODEL]
    K = qkv[:, D_MODEL:2 * D_MODEL]
    V = qkv[:, 2 * D_MODEL:3 * D_MODEL]
    return _heads_attention(Q, K, V, ap['wo'], ap['bo'], mask)


def _mha_cross(q_in, kv_in, ap, mask):
    Q = _mm(q_in, ap['wq']) + ap['bq']
    kv = _mm(kv_in, ap['wkv']) + ap['bkv']           # fused KV matmul
    K = kv[:, 0:D_MODEL]
    V = kv[:, D_MODEL:2 * D_MODEL]
    return _heads_attention(Q, K, V, ap['wo'], ap['bo'], mask)


# ------------------------------ fused kernel ----------------------------------
def _fused_forward_kernel(*refs, treedef, n_params):
    patches_ref, y0_ref, valid_ref = refs[0], refs[1], refs[2]
    param_refs = refs[3:3 + n_params]
    out_ref = refs[3 + n_params]
    labels_ref = refs[4 + n_params]
    enc_buf = refs[5 + n_params]                     # VMEM scratch (S_PAD, D_VF)

    p = jax.tree_util.tree_unflatten(treedef, [r[...] for r in param_refs])

    # ---- VisualExtractor (patch embedding) + classifier head ----
    x = patches_ref[0]                               # (P, PATCH_DIM) f32
    att = _mm(x, p['ve']['w']) + p['ve']['b']        # (P, D_VF)
    avg = jnp.mean(att, axis=0, keepdims=True)       # (1, D_VF)  == avg_feats
    out_labels = _mm(avg, p['cls']['w']) + p['cls']['b']            # (1, NUM_LABELS)

    # ---- label_feats = proj(out_labels); concat to att_feats (row-padded) ----
    label_feats = _mm(out_labels, p['proj']['w']) + p['proj']['b']  # (1, D_VF)
    enc_buf[...] = jnp.zeros((S_PAD, D_VF), jnp.float32)
    enc_buf[pl.ds(0, P), :] = att
    enc_buf[pl.ds(P, 1), :] = label_feats

    # ---- encoder: att_embed = Linear + ReLU, pre-LN layers, final LN ----
    src = jnp.maximum(_mm(enc_buf[...], p['att_embed']['w'])
                      + p['att_embed']['b'], 0.0)                   # (S_PAD, D_MODEL)
    enc_mask = jnp.where(
        jax.lax.broadcasted_iota(jnp.int32, (S_PAD, S_PAD), 1) < S_ENC, 0.0, NEG)
    for lp in p['enc_layers']:
        h = _layernorm(src, lp['ln1'])
        src = src + _mha_self(h, lp['attn'], enc_mask)
        h = _layernorm(src, lp['ln2'])
        src = src + _ffn(h, lp['ffn'])
    memory = _layernorm(src, p['enc_ln'])            # (S_PAD, D_MODEL)

    # ---- decoder masks built in-kernel ----
    valid = valid_ref[0]                             # (1, TM) 1.0 = real token
    row = jax.lax.broadcasted_iota(jnp.int32, (TM, TM), 0)
    col = jax.lax.broadcasted_iota(jnp.int32, (TM, TM), 1)
    dec_mask = jnp.where(
        (col <= row) & (jnp.broadcast_to(valid, (TM, TM)) > 0.5), 0.0, NEG)
    cross_mask = jnp.where(
        jax.lax.broadcasted_iota(jnp.int32, (TM, S_PAD), 1) < S_ENC, 0.0, NEG)

    # ---- decoder (pre-LN layers, final LN) ----
    y = y0_ref[0]                                    # (TM, D_MODEL) embed+PE
    for lp in p['dec_layers']:
        h = _layernorm(y, lp['ln1'])
        y = y + _mha_self(h, lp['self_attn'], dec_mask)
        h = _layernorm(y, lp['ln2'])
        y = y + _mha_cross(h, memory, lp['cross_attn'], cross_mask)
        h = _layernorm(y, lp['ln3'])
        y = y + _ffn(h, lp['ffn'])
    y = _layernorm(y, p['dec_ln'])

    # ---- fused logit projection + log_softmax ----
    logits = _mm(y, p['logit']['w']) + p['logit']['b']              # (TM, VOCAB)
    m = jnp.max(logits, axis=-1, keepdims=True)
    lse = jnp.log(jnp.sum(jnp.exp(logits - m), axis=-1, keepdims=True))
    out_ref[0] = logits - m - lse
    labels_ref[0] = out_labels


# ------------------------------ forward wrapper -------------------------------
def _positional_encoding(tseq, d):
    pos = np.arange(tseq)[:, None].astype(np.float32)
    i = np.arange(d)[None, :].astype(np.float32)
    angle = pos / np.power(10000.0, (2.0 * (i // 2)) / d)
    pe = np.zeros((tseq, d), np.float32)
    pe[:, 0::2] = np.sin(angle[:, 0::2])
    pe[:, 1::2] = np.cos(angle[:, 1::2])
    return jnp.asarray(pe)


_PE = _positional_encoding(TM, D_MODEL)


def lamrg_v7_forward(params, images, targets):
    """LAMRGModel_v7.forward(images, targets, mode='train') -> (output, out_labels)."""
    bsz = images.shape[0]

    # glue: NCHW -> patch-major rows with features on lanes
    x = images.reshape(bsz, C, H // PATCH, PATCH, W // PATCH, PATCH)
    patches = jnp.transpose(x, (0, 2, 4, 1, 3, 5)).reshape(bsz, P, PATCH_DIM)

    # glue: R2Gen target prep -- crop last token, embed*sqrt(d)+PE, pad validity
    seq = targets[:, :-1]                                            # (B, TM)
    y0 = jnp.take(params['tgt_embed'], seq, axis=0) * np.sqrt(D_MODEL) + _PE[None]
    seq_valid = (seq > 0).astype(jnp.float32).at[:, 0].set(1.0).reshape(bsz, 1, TM)

    flat, treedef = jax.tree_util.tree_flatten(params['net'])
    kernel = functools.partial(_fused_forward_kernel, treedef=treedef,
                               n_params=len(flat))

    out, labels3 = pl.pallas_call(
        kernel,
        out_shape=(jax.ShapeDtypeStruct((bsz, TM, VOCAB), jnp.float32),
                   jax.ShapeDtypeStruct((bsz, 1, NUM_LABELS), jnp.float32)),
        grid=(bsz,),
        in_specs=([pl.BlockSpec((1, P, PATCH_DIM), lambda b: (b, 0, 0)),
                   pl.BlockSpec((1, TM, D_MODEL), lambda b: (b, 0, 0)),
                   pl.BlockSpec((1, 1, TM), lambda b: (b, 0, 0))]
                  + [pl.BlockSpec(w.shape, lambda b: (0, 0)) for w in flat]),
        out_specs=(pl.BlockSpec((1, TM, VOCAB), lambda b: (b, 0, 0)),
                   pl.BlockSpec((1, 1, NUM_LABELS), lambda b: (b, 0, 0))),
        scratch_shapes=[pltpu.VMEM((S_PAD, D_VF), jnp.float32)],
        compiler_params=pltpu.CompilerParams(
            dimension_semantics=("parallel",)),       # 2-TC batch sharding on v7x
    )(patches, y0, seq_valid, *flat)
    return out, labels3[:, 0, :]


# ------------------------------ parameter init --------------------------------
class KeyGen:
    def __init__(self, key):
        self.key = key

    def __call__(self):
        self.key, k = jax.random.split(self.key)
        return k


def _kaiming(key, din, dout):
    return jax.random.normal(key, (din, dout), jnp.float32) * np.sqrt(2.0 / din)


def init_params(seed=0):
    kg = KeyGen(jax.random.PRNGKey(seed))

    def lin(din, dout):
        return {'w': _kaiming(kg(), din, dout),
                'b': jnp.zeros((1, dout), jnp.float32)}

    def ln(d):
        return {'g': jnp.ones((1, d), jnp.float32),
                'b': jnp.zeros((1, d), jnp.float32)}

    def self_attn():
        return {'wqkv': _kaiming(kg(), D_MODEL, 3 * D_MODEL),
                'bqkv': jnp.zeros((1, 3 * D_MODEL), jnp.float32),
                'wo': _kaiming(kg(), D_MODEL, D_MODEL),
                'bo': jnp.zeros((1, D_MODEL), jnp.float32)}

    def cross_attn():
        return {'wq': _kaiming(kg(), D_MODEL, D_MODEL),
                'bq': jnp.zeros((1, D_MODEL), jnp.float32),
                'wkv': _kaiming(kg(), D_MODEL, 2 * D_MODEL),
                'bkv': jnp.zeros((1, 2 * D_MODEL), jnp.float32),
                'wo': _kaiming(kg(), D_MODEL, D_MODEL),
                'bo': jnp.zeros((1, D_MODEL), jnp.float32)}

    def ffn_p():
        return {'w1': _kaiming(kg(), D_MODEL, D_FF),
                'b1': jnp.zeros((1, D_FF), jnp.float32),
                'w2': _kaiming(kg(), D_FF, D_MODEL),
                'b2': jnp.zeros((1, D_MODEL), jnp.float32)}

    net = {
        've': lin(PATCH_DIM, D_VF),          # simplified VisualExtractor backbone
        'cls': lin(D_VF, NUM_LABELS),        # VisualExtractor.classifier
        'proj': lin(NUM_LABELS, D_VF),       # _LAMRG.proj
        'att_embed': lin(D_VF, D_MODEL),
        'enc_layers': [{'ln1': ln(D_MODEL), 'attn': self_attn(),
                        'ln2': ln(D_MODEL), 'ffn': ffn_p()}
                       for _ in range(NUM_LAYERS)],
        'enc_ln': ln(D_MODEL),
        'dec_layers': [{'ln1': ln(D_MODEL), 'self_attn': self_attn(),
                        'ln2': ln(D_MODEL), 'cross_attn': cross_attn(),
                        'ln3': ln(D_MODEL), 'ffn': ffn_p()}
                       for _ in range(NUM_LAYERS)],
        'dec_ln': ln(D_MODEL),
        'logit': lin(D_MODEL, VOCAB),
    }
    tgt_embed = jax.random.normal(kg(), (VOCAB, D_MODEL), jnp.float32) * 0.02
    return {'net': net, 'tgt_embed': tgt_embed}


# ------------------------------------ main ------------------------------------
if __name__ == "__main__":
    params = init_params(0)
    k_img, k_tgt = jax.random.split(jax.random.PRNGKey(0))
    images = jax.random.normal(k_img, (B, C, H, W), jnp.float32)
    targets = jax.random.randint(k_tgt, (B, T), 0, VOCAB, dtype=jnp.int32)

    fwd = jax.jit(lamrg_v7_forward)
    output, out_labels = fwd(params, images, targets)
    jax.block_until_ready((output, out_labels))

    assert output.shape == (B, TM, VOCAB)
    assert out_labels.shape == (B, NUM_LABELS)
    assert bool(jnp.all(jnp.isfinite(output)))
    assert bool(jnp.all(jnp.isfinite(out_labels)))
    print("KERNEL_OK")
</pallas_src>

<mosaic_0001>
module attributes {stable_mosaic.version = 11 : i64} {
  func.func @_fused_forward_kernel(%arg0: i32, %arg1: memref<1x16x48xf32, #tpu.memory_space<vmem>>, %arg2: memref<1x7x32xf32, #tpu.memory_space<vmem>>, %arg3: memref<1x1x7xf32, #tpu.memory_space<vmem>>, %arg4: memref<1x32xf32, #tpu.memory_space<vmem>>, %arg5: memref<64x32xf32, #tpu.memory_space<vmem>>, %arg6: memref<1x8xf32, #tpu.memory_space<vmem>>, %arg7: memref<64x8xf32, #tpu.memory_space<vmem>>, %arg8: memref<1x64xf32, #tpu.memory_space<vmem>>, %arg9: memref<1x32xf32, #tpu.memory_space<vmem>>, %arg10: memref<1x32xf32, #tpu.memory_space<vmem>>, %arg11: memref<32x64xf32, #tpu.memory_space<vmem>>, %arg12: memref<32x32xf32, #tpu.memory_space<vmem>>, %arg13: memref<32x32xf32, #tpu.memory_space<vmem>>, %arg14: memref<1x64xf32, #tpu.memory_space<vmem>>, %arg15: memref<1x32xf32, #tpu.memory_space<vmem>>, %arg16: memref<32x64xf32, #tpu.memory_space<vmem>>, %arg17: memref<64x32xf32, #tpu.memory_space<vmem>>, %arg18: memref<1x32xf32, #tpu.memory_space<vmem>>, %arg19: memref<1x32xf32, #tpu.memory_space<vmem>>, %arg20: memref<1x32xf32, #tpu.memory_space<vmem>>, %arg21: memref<1x32xf32, #tpu.memory_space<vmem>>, %arg22: memref<1x32xf32, #tpu.memory_space<vmem>>, %arg23: memref<1x32xf32, #tpu.memory_space<vmem>>, %arg24: memref<1x32xf32, #tpu.memory_space<vmem>>, %arg25: memref<1x96xf32, #tpu.memory_space<vmem>>, %arg26: memref<32x32xf32, #tpu.memory_space<vmem>>, %arg27: memref<32x96xf32, #tpu.memory_space<vmem>>, %arg28: memref<1x64xf32, #tpu.memory_space<vmem>>, %arg29: memref<1x32xf32, #tpu.memory_space<vmem>>, %arg30: memref<1x32xf32, #tpu.memory_space<vmem>>, %arg31: memref<32x64xf32, #tpu.memory_space<vmem>>, %arg32: memref<32x32xf32, #tpu.memory_space<vmem>>, %arg33: memref<32x32xf32, #tpu.memory_space<vmem>>, %arg34: memref<1x64xf32, #tpu.memory_space<vmem>>, %arg35: memref<1x32xf32, #tpu.memory_space<vmem>>, %arg36: memref<32x64xf32, #tpu.memory_space<vmem>>, %arg37: memref<64x32xf32, #tpu.memory_space<vmem>>, %arg38: memref<1x32xf32, #tpu.memory_space<vmem>>, %arg39: memref<1x32xf32, #tpu.memory_space<vmem>>, %arg40: memref<1x32xf32, #tpu.memory_space<vmem>>, %arg41: memref<1x32xf32, #tpu.memory_space<vmem>>, %arg42: memref<1x32xf32, #tpu.memory_space<vmem>>, %arg43: memref<1x32xf32, #tpu.memory_space<vmem>>, %arg44: memref<1x32xf32, #tpu.memory_space<vmem>>, %arg45: memref<1x96xf32, #tpu.memory_space<vmem>>, %arg46: memref<32x32xf32, #tpu.memory_space<vmem>>, %arg47: memref<32x96xf32, #tpu.memory_space<vmem>>, %arg48: memref<1x32xf32, #tpu.memory_space<vmem>>, %arg49: memref<1x32xf32, #tpu.memory_space<vmem>>, %arg50: memref<1x32xf32, #tpu.memory_space<vmem>>, %arg51: memref<1x96xf32, #tpu.memory_space<vmem>>, %arg52: memref<32x32xf32, #tpu.memory_space<vmem>>, %arg53: memref<32x96xf32, #tpu.memory_space<vmem>>, %arg54: memref<1x64xf32, #tpu.memory_space<vmem>>, %arg55: memref<1x32xf32, #tpu.memory_space<vmem>>, %arg56: memref<32x64xf32, #tpu.memory_space<vmem>>, %arg57: memref<64x32xf32, #tpu.memory_space<vmem>>, %arg58: memref<1x32xf32, #tpu.memory_space<vmem>>, %arg59: memref<1x32xf32, #tpu.memory_space<vmem>>, %arg60: memref<1x32xf32, #tpu.memory_space<vmem>>, %arg61: memref<1x32xf32, #tpu.memory_space<vmem>>, %arg62: memref<1x32xf32, #tpu.memory_space<vmem>>, %arg63: memref<1x96xf32, #tpu.memory_space<vmem>>, %arg64: memref<32x32xf32, #tpu.memory_space<vmem>>, %arg65: memref<32x96xf32, #tpu.memory_space<vmem>>, %arg66: memref<1x64xf32, #tpu.memory_space<vmem>>, %arg67: memref<1x32xf32, #tpu.memory_space<vmem>>, %arg68: memref<32x64xf32, #tpu.memory_space<vmem>>, %arg69: memref<64x32xf32, #tpu.memory_space<vmem>>, %arg70: memref<1x32xf32, #tpu.memory_space<vmem>>, %arg71: memref<1x32xf32, #tpu.memory_space<vmem>>, %arg72: memref<1x32xf32, #tpu.memory_space<vmem>>, %arg73: memref<1x32xf32, #tpu.memory_space<vmem>>, %arg74: memref<1x32xf32, #tpu.memory_space<vmem>>, %arg75: memref<1x32xf32, #tpu.memory_space<vmem>>, %arg76: memref<1x30xf32, #tpu.memory_space<vmem>>, %arg77: memref<32x30xf32, #tpu.memory_space<vmem>>, %arg78: memref<1x64xf32, #tpu.memory_space<vmem>>, %arg79: memref<8x64xf32, #tpu.memory_space<vmem>>, %arg80: memref<1x64xf32, #tpu.memory_space<vmem>>, %arg81: memref<48x64xf32, #tpu.memory_space<vmem>>, %arg82: memref<1x7x30xf32, #tpu.memory_space<vmem>>, %arg83: memref<1x1x8xf32, #tpu.memory_space<vmem>>, %arg84: memref<24x64xf32, #tpu.memory_space<vmem>>) attributes {dimension_semantics = [#tpu.dimension_semantics<parallel>], iteration_bounds = array<i64: 2>, scalar_prefetch = 0 : i64, scratch_operands = 1 : i64, tpu.core_type = #tpu.core_type<tc>, window_params = [{transform_indices = @transform_0, window_bounds = array<i64: 1, 16, 48>}, {transform_indices = @transform_1, window_bounds = array<i64: 1, 7, 32>}, {transform_indices = @transform_2, window_bounds = array<i64: 1, 1, 7>}, {pipeline_mode = #tpu.pipeline_mode<synchronous>, transform_indices = @transform_3, window_bounds = array<i64: 1, 32>}, {pipeline_mode = #tpu.pipeline_mode<synchronous>, transform_indices = @transform_4, window_bounds = array<i64: 64, 32>}, {pipeline_mode = #tpu.pipeline_mode<synchronous>, transform_indices = @transform_5, window_bounds = array<i64: 1, 8>}, {pipeline_mode = #tpu.pipeline_mode<synchronous>, transform_indices = @transform_6, window_bounds = array<i64: 64, 8>}, {pipeline_mode = #tpu.pipeline_mode<synchronous>, transform_indices = @transform_7, window_bounds = array<i64: 1, 64>}, {pipeline_mode = #tpu.pipeline_mode<synchronous>, transform_indices = @transform_8, window_bounds = array<i64: 1, 32>}, {pipeline_mode = #tpu.pipeline_mode<synchronous>, transform_indices = @transform_9, window_bounds = array<i64: 1, 32>}, {pipeline_mode = #tpu.pipeline_mode<synchronous>, transform_indices = @transform_10, window_bounds = array<i64: 32, 64>}, {pipeline_mode = #tpu.pipeline_mode<synchronous>, transform_indices = @transform_11, window_bounds = array<i64: 32, 32>}, {pipeline_mode = #tpu.pipeline_mode<synchronous>, transform_indices = @transform_12, window_bounds = array<i64: 32, 32>}, {pipeline_mode = #tpu.pipeline_mode<synchronous>, transform_indices = @transform_13, window_bounds = array<i64: 1, 64>}, {pipeline_mode = #tpu.pipeline_mode<synchronous>, transform_indices = @transform_14, window_bounds = array<i64: 1, 32>}, {pipeline_mode = #tpu.pipeline_mode<synchronous>, transform_indices = @transform_15, window_bounds = array<i64: 32, 64>}, {pipeline_mode = #tpu.pipeline_mode<synchronous>, transform_indices = @transform_16, window_bounds = array<i64: 64, 32>}, {pipeline_mode = #tpu.pipeline_mode<synchronous>, transform_indices = @transform_17, window_bounds = array<i64: 1, 32>}, {pipeline_mode = #tpu.pipeline_mode<synchronous>, transform_indices = @transform_18, window_bounds = array<i64: 1, 32>}, {pipeline_mode = #tpu.pipeline_mode<synchronous>, transform_indices = @transform_19, window_bounds = array<i64: 1, 32>}, {pipeline_mode = #tpu.pipeline_mode<synchronous>, transform_indices = @transform_20, window_bounds = array<i64: 1, 32>}, {pipeline_mode = #tpu.pipeline_mode<synchronous>, transform_indices = @transform_21, window_bounds = array<i64: 1, 32>}, {pipeline_mode = #tpu.pipeline_mode<synchronous>, transform_indices = @transform_22, window_bounds = array<i64: 1, 32>}, {pipeline_mode = #tpu.pipeline_mode<synchronous>, transform_indices = @transform_23, window_bounds = array<i64: 1, 32>}, {pipeline_mode = #tpu.pipeline_mode<synchronous>, transform_indices = @transform_24, window_bounds = array<i64: 1, 96>}, {pipeline_mode = #tpu.pipeline_mode<synchronous>, transform_indices = @transform_25, window_bounds = array<i64: 32, 32>}, {pipeline_mode = #tpu.pipeline_mode<synchronous>, transform_indices = @transform_26, window_bounds = array<i64: 32, 96>}, {pipeline_mode = #tpu.pipeline_mode<synchronous>, transform_indices = @transform_27, window_bounds = array<i64: 1, 64>}, {pipeline_mode = #tpu.pipeline_mode<synchronous>, transform_indices = @transform_28, window_bounds = array<i64: 1, 32>}, {pipeline_mode = #tpu.pipeline_mode<synchronous>, transform_indices = @transform_29, window_bounds = array<i64: 1, 32>}, {pipeline_mode = #tpu.pipeline_mode<synchronous>, transform_indices = @transform_30, window_bounds = array<i64: 32, 64>}, {pipeline_mode = #tpu.pipeline_mode<synchronous>, transform_indices = @transform_31, window_bounds = array<i64: 32, 32>}, {pipeline_mode = #tpu.pipeline_mode<synchronous>, transform_indices = @transform_32, window_bounds = array<i64: 32, 32>}, {pipeline_mode = #tpu.pipeline_mode<synchronous>, transform_indices = @transform_33, window_bounds = array<i64: 1, 64>}, {pipeline_mode = #tpu.pipeline_mode<synchronous>, transform_indices = @transform_34, window_bounds = array<i64: 1, 32>}, {pipeline_mode = #tpu.pipeline_mode<synchronous>, transform_indices = @transform_35, window_bounds = array<i64: 32, 64>}, {pipeline_mode = #tpu.pipeline_mode<synchronous>, transform_indices = @transform_36, window_bounds = array<i64: 64, 32>}, {pipeline_mode = #tpu.pipeline_mode<synchronous>, transform_indices = @transform_37, window_bounds = array<i64: 1, 32>}, {pipeline_mode = #tpu.pipeline_mode<synchronous>, transform_indices = @transform_38, window_bounds = array<i64: 1, 32>}, {pipeline_mode = #tpu.pipeline_mode<synchronous>, transform_indices = @transform_39, window_bounds = array<i64: 1, 32>}, {pipeline_mode = #tpu.pipeline_mode<synchronous>, transform_indices = @transform_40, window_bounds = array<i64: 1, 32>}, {pipeline_mode = #tpu.pipeline_mode<synchronous>, transform_indices = @transform_41, window_bounds = array<i64: 1, 32>}, {pipeline_mode = #tpu.pipeline_mode<synchronous>, transform_indices = @transform_42, window_bounds = array<i64: 1, 32>}, {pipeline_mode = #tpu.pipeline_mode<synchronous>, transform_indices = @transform_43, window_bounds = array<i64: 1, 32>}, {pipeline_mode = #tpu.pipeline_mode<synchronous>, transform_indices = @transform_44, window_bounds = array<i64: 1, 96>}, {pipeline_mode = #tpu.pipeline_mode<synchronous>, transform_indices = @transform_45, window_bounds = array<i64: 32, 32>}, {pipeline_mode = #tpu.pipeline_mode<synchronous>, transform_indices = @transform_46, window_bounds = array<i64: 32, 96>}, {pipeline_mode = #tpu.pipeline_mode<synchronous>, transform_indices = @transform_47, window_bounds = array<i64: 1, 32>}, {pipeline_mode = #tpu.pipeline_mode<synchronous>, transform_indices = @transform_48, window_bounds = array<i64: 1, 32>}, {pipeline_mode = #tpu.pipeline_mode<synchronous>, transform_indices = @transform_49, window_bounds = array<i64: 1, 32>}, {pipeline_mode = #tpu.pipeline_mode<synchronous>, transform_indices = @transform_50, window_bounds = array<i64: 1, 96>}, {pipeline_mode = #tpu.pipeline_mode<synchronous>, transform_indices = @transform_51, window_bounds = array<i64: 32, 32>}, {pipeline_mode = #tpu.pipeline_mode<synchronous>, transform_indices = @transform_52, window_bounds = array<i64: 32, 96>}, {pipeline_mode = #tpu.pipeline_mode<synchronous>, transform_indices = @transform_53, window_bounds = array<i64: 1, 64>}, {pipeline_mode = #tpu.pipeline_mode<synchronous>, transform_indices = @transform_54, window_bounds = array<i64: 1, 32>}, {pipeline_mode = #tpu.pipeline_mode<synchronous>, transform_indices = @transform_55, window_bounds = array<i64: 32, 64>}, {pipeline_mode = #tpu.pipeline_mode<synchronous>, transform_indices = @transform_56, window_bounds = array<i64: 64, 32>}, {pipeline_mode = #tpu.pipeline_mode<synchronous>, transform_indices = @transform_57, window_bounds = array<i64: 1, 32>}, {pipeline_mode = #tpu.pipeline_mode<synchronous>, transform_indices = @transform_58, window_bounds = array<i64: 1, 32>}, {pipeline_mode = #tpu.pipeline_mode<synchronous>, transform_indices = @transform_59, window_bounds = array<i64: 1, 32>}, {pipeline_mode = #tpu.pipeline_mode<synchronous>, transform_indices = @transform_60, window_bounds = array<i64: 1, 32>}, {pipeline_mode = #tpu.pipeline_mode<synchronous>, transform_indices = @transform_61, window_bounds = array<i64: 1, 32>}, {pipeline_mode = #tpu.pipeline_mode<synchronous>, transform_indices = @transform_62, window_bounds = array<i64: 1, 96>}, {pipeline_mode = #tpu.pipeline_mode<synchronous>, transform_indices = @transform_63, window_bounds = array<i64: 32, 32>}, {pipeline_mode = #tpu.pipeline_mode<synchronous>, transform_indices = @transform_64, window_bounds = array<i64: 32, 96>}, {pipeline_mode = #tpu.pipeline_mode<synchronous>, transform_indices = @transform_65, window_bounds = array<i64: 1, 64>}, {pipeline_mode = #tpu.pipeline_mode<synchronous>, transform_indices = @transform_66, window_bounds = array<i64: 1, 32>}, {pipeline_mode = #tpu.pipeline_mode<synchronous>, transform_indices = @transform_67, window_bounds = array<i64: 32, 64>}, {pipeline_mode = #tpu.pipeline_mode<synchronous>, transform_indices = @transform_68, window_bounds = array<i64: 64, 32>}, {pipeline_mode = #tpu.pipeline_mode<synchronous>, transform_indices = @transform_69, window_bounds = array<i64: 1, 32>}, {pipeline_mode = #tpu.pipeline_mode<synchronous>, transform_indices = @transform_70, window_bounds = array<i64: 1, 32>}, {pipeline_mode = #tpu.pipeline_mode<synchronous>, transform_indices = @transform_71, window_bounds = array<i64: 1, 32>}, {pipeline_mode = #tpu.pipeline_mode<synchronous>, transform_indices = @transform_72, window_bounds = array<i64: 1, 32>}, {pipeline_mode = #tpu.pipeline_mode<synchronous>, transform_indices = @transform_73, window_bounds = array<i64: 1, 32>}, {pipeline_mode = #tpu.pipeline_mode<synchronous>, transform_indices = @transform_74, window_bounds = array<i64: 1, 32>}, {pipeline_mode = #tpu.pipeline_mode<synchronous>, transform_indices = @transform_75, window_bounds = array<i64: 1, 30>}, {pipeline_mode = #tpu.pipeline_mode<synchronous>, transform_indices = @transform_76, window_bounds = array<i64: 32, 30>}, {pipeline_mode = #tpu.pipeline_mode<synchronous>, transform_indices = @transform_77, window_bounds = array<i64: 1, 64>}, {pipeline_mode = #tpu.pipeline_mode<synchronous>, transform_indices = @transform_78, window_bounds = array<i64: 8, 64>}, {pipeline_mode = #tpu.pipeline_mode<synchronous>, transform_indices = @transform_79, window_bounds = array<i64: 1, 64>}, {pipeline_mode = #tpu.pipeline_mode<synchronous>, transform_indices = @transform_80, window_bounds = array<i64: 48, 64>}, {transform_indices = @transform_81, window_bounds = array<i64: 1, 7, 30>}, {transform_indices = @transform_82, window_bounds = array<i64: 1, 1, 8>}]} {
    %c0 = arith.constant 0 : index
    %c0_0 = arith.constant 0 : index
    %0 = vector.load %arg4[%c0, %c0_0] : memref<1x32xf32, #tpu.memory_space<vmem>>, vector<1x32xf32>
    %c0_1 = arith.constant 0 : index
    %c0_2 = arith.constant 0 : index
    %1 = vector.load %arg5[%c0_1, %c0_2] : memref<64x32xf32, #tpu.memory_space<vmem>>, vector<64x32xf32>
    %c0_3 = arith.constant 0 : index
    %c0_4 = arith.constant 0 : index
    %2 = vector.load %arg6[%c0_3, %c0_4] : memref<1x8xf32, #tpu.memory_space<vmem>>, vector<1x8xf32>
    %c0_5 = arith.constant 0 : index
    %c0_6 = arith.constant 0 : index
    %3 = vector.load %arg7[%c0_5, %c0_6] : memref<64x8xf32, #tpu.memory_space<vmem>>, vector<64x8xf32>
    %c0_7 = arith.constant 0 : index
    %c0_8 = arith.constant 0 : index
    %4 = vector.load %arg8[%c0_7, %c0_8] : memref<1x64xf32, #tpu.memory_space<vmem>>, vector<1x64xf32>
    %c0_9 = arith.constant 0 : index
    %c0_10 = arith.constant 0 : index
    %5 = vector.load %arg9[%c0_9, %c0_10] : memref<1x32xf32, #tpu.memory_space<vmem>>, vector<1x32xf32>
    %c0_11 = arith.constant 0 : index
    %c0_12 = arith.constant 0 : index
    %6 = vector.load %arg10[%c0_11, %c0_12] : memref<1x32xf32, #tpu.memory_space<vmem>>, vector<1x32xf32>
    %c0_13 = arith.constant 0 : index
    %c0_14 = arith.constant 0 : index
    %7 = vector.load %arg11[%c0_13, %c0_14] : memref<32x64xf32, #tpu.memory_space<vmem>>, vector<32x64xf32>
    %c0_15 = arith.constant 0 : index
    %c0_16 = arith.constant 0 : index
    %8 = vector.load %arg12[%c0_15, %c0_16] : memref<32x32xf32, #tpu.memory_space<vmem>>, vector<32x32xf32>
    %c0_17 = arith.constant 0 : index
    %c0_18 = arith.constant 0 : index
    %9 = vector.load %arg13[%c0_17, %c0_18] : memref<32x32xf32, #tpu.memory_space<vmem>>, vector<32x32xf32>
    %c0_19 = arith.constant 0 : index
    %c0_20 = arith.constant 0 : index
    %10 = vector.load %arg14[%c0_19, %c0_20] : memref<1x64xf32, #tpu.memory_space<vmem>>, vector<1x64xf32>
    %c0_21 = arith.constant 0 : index
    %c0_22 = arith.constant 0 : index
    %11 = vector.load %arg15[%c0_21, %c0_22] : memref<1x32xf32, #tpu.memory_space<vmem>>, vector<1x32xf32>
    %c0_23 = arith.constant 0 : index
    %c0_24 = arith.constant 0 : index
    %12 = vector.load %arg16[%c0_23, %c0_24] : memref<32x64xf32, #tpu.memory_space<vmem>>, vector<32x64xf32>
    %c0_25 = arith.constant 0 : index
    %c0_26 = arith.constant 0 : index
    %13 = vector.load %arg17[%c0_25, %c0_26] : memref<64x32xf32, #tpu.memory_space<vmem>>, vector<64x32xf32>
    %c0_27 = arith.constant 0 : index
    %c0_28 = arith.constant 0 : index
    %14 = vector.load %arg18[%c0_27, %c0_28] : memref<1x32xf32, #tpu.memory_space<vmem>>, vector<1x32xf32>
    %c0_29 = arith.constant 0 : index
    %c0_30 = arith.constant 0 : index
    %15 = vector.load %arg19[%c0_29, %c0_30] : memref<1x32xf32, #tpu.memory_space<vmem>>, vector<1x32xf32>
    %c0_31 = arith.constant 0 : index
    %c0_32 = arith.constant 0 : index
    %16 = vector.load %arg20[%c0_31, %c0_32] : memref<1x32xf32, #tpu.memory_space<vmem>>, vector<1x32xf32>
    %c0_33 = arith.constant 0 : index
    %c0_34 = arith.constant 0 : index
    %17 = vector.load %arg21[%c0_33, %c0_34] : memref<1x32xf32, #tpu.memory_space<vmem>>, vector<1x32xf32>
    %c0_35 = arith.constant 0 : index
    %c0_36 = arith.constant 0 : index
    %18 = vector.load %arg22[%c0_35, %c0_36] : memref<1x32xf32, #tpu.memory_space<vmem>>, vector<1x32xf32>
    %c0_37 = arith.constant 0 : index
    %c0_38 = arith.constant 0 : index
    %19 = vector.load %arg23[%c0_37, %c0_38] : memref<1x32xf32, #tpu.memory_space<vmem>>, vector<1x32xf32>
    %c0_39 = arith.constant 0 : index
    %c0_40 = arith.constant 0 : index
    %20 = vector.load %arg24[%c0_39, %c0_40] : memref<1x32xf32, #tpu.memory_space<vmem>>, vector<1x32xf32>
    %c0_41 = arith.constant 0 : index
    %c0_42 = arith.constant 0 : index
    %21 = vector.load %arg25[%c0_41, %c0_42] : memref<1x96xf32, #tpu.memory_space<vmem>>, vector<1x96xf32>
    %c0_43 = arith.constant 0 : index
    %c0_44 = arith.constant 0 : index
    %22 = vector.load %arg26[%c0_43, %c0_44] : memref<32x32xf32, #tpu.memory_space<vmem>>, vector<32x32xf32>
    %c0_45 = arith.constant 0 : index
    %c0_46 = arith.constant 0 : index
    %23 = vector.load %arg27[%c0_45, %c0_46] : memref<32x96xf32, #tpu.memory_space<vmem>>, vector<32x96xf32>
    %c0_47 = arith.constant 0 : index
    %c0_48 = arith.constant 0 : index
    %24 = vector.load %arg28[%c0_47, %c0_48] : memref<1x64xf32, #tpu.memory_space<vmem>>, vector<1x64xf32>
    %c0_49 = arith.constant 0 : index
    %c0_50 = arith.constant 0 : index
    %25 = vector.load %arg29[%c0_49, %c0_50] : memref<1x32xf32, #tpu.memory_space<vmem>>, vector<1x32xf32>
    %c0_51 = arith.constant 0 : index
    %c0_52 = arith.constant 0 : index
    %26 = vector.load %arg30[%c0_51, %c0_52] : memref<1x32xf32, #tpu.memory_space<vmem>>, vector<1x32xf32>
    %c0_53 = arith.constant 0 : index
    %c0_54 = arith.constant 0 : index
    %27 = vector.load %arg31[%c0_53, %c0_54] : memref<32x64xf32, #tpu.memory_space<vmem>>, vector<32x64xf32>
    %c0_55 = arith.constant 0 : index
    %c0_56 = arith.constant 0 : index
    %28 = vector.load %arg32[%c0_55, %c0_56] : memref<32x32xf32, #tpu.memory_space<vmem>>, vector<32x32xf32>
    %c0_57 = arith.constant 0 : index
    %c0_58 = arith.constant 0 : index
    %29 = vector.load %arg33[%c0_57, %c0_58] : memref<32x32xf32, #tpu.memory_space<vmem>>, vector<32x32xf32>
    %c0_59 = arith.constant 0 : index
    %c0_60 = arith.constant 0 : index
    %30 = vector.load %arg34[%c0_59, %c0_60] : memref<1x64xf32, #tpu.memory_space<vmem>>, vector<1x64xf32>
    %c0_61 = arith.constant 0 : index
    %c0_62 = arith.constant 0 : index
    %31 = vector.load %arg35[%c0_61, %c0_62] : memref<1x32xf32, #tpu.memory_space<vmem>>, vector<1x32xf32>
    %c0_63 = arith.constant 0 : index
    %c0_64 = arith.constant 0 : index
    %32 = vector.load %arg36[%c0_63, %c0_64] : memref<32x64xf32, #tpu.memory_space<vmem>>, vector<32x64xf32>
    %c0_65 = arith.constant 0 : index
    %c0_66 = arith.constant 0 : index
    %33 = vector.load %arg37[%c0_65, %c0_66] : memref<64x32xf32, #tpu.memory_space<vmem>>, vector<64x32xf32>
    %c0_67 = arith.constant 0 : index
    %c0_68 = arith.constant 0 : index
    %34 = vector.load %arg38[%c0_67, %c0_68] : memref<1x32xf32, #tpu.memory_space<vmem>>, vector<1x32xf32>
    %c0_69 = arith.constant 0 : index
    %c0_70 = arith.constant 0 : index
    %35 = vector.load %arg39[%c0_69, %c0_70] : memref<1x32xf32, #tpu.memory_space<vmem>>, vector<1x32xf32>
    %c0_71 = arith.constant 0 : index
    %c0_72 = arith.constant 0 : index
    %36 = vector.load %arg40[%c0_71, %c0_72] : memref<1x32xf32, #tpu.memory_space<vmem>>, vector<1x32xf32>
    %c0_73 = arith.constant 0 : index
    %c0_74 = arith.constant 0 : index
    %37 = vector.load %arg41[%c0_73, %c0_74] : memref<1x32xf32, #tpu.memory_space<vmem>>, vector<1x32xf32>
    %c0_75 = arith.constant 0 : index
    %c0_76 = arith.constant 0 : index
    %38 = vector.load %arg42[%c0_75, %c0_76] : memref<1x32xf32, #tpu.memory_space<vmem>>, vector<1x32xf32>
    %c0_77 = arith.constant 0 : index
    %c0_78 = arith.constant 0 : index
    %39 = vector.load %arg43[%c0_77, %c0_78] : memref<1x32xf32, #tpu.memory_space<vmem>>, vector<1x32xf32>
    %c0_79 = arith.constant 0 : index
    %c0_80 = arith.constant 0 : index
    %40 = vector.load %arg44[%c0_79, %c0_80] : memref<1x32xf32, #tpu.memory_space<vmem>>, vector<1x32xf32>
    %c0_81 = arith.constant 0 : index
    %c0_82 = arith.constant 0 : index
    %41 = vector.load %arg45[%c0_81, %c0_82] : memref<1x96xf32, #tpu.memory_space<vmem>>, vector<1x96xf32>
    %c0_83 = arith.constant 0 : index
    %c0_84 = arith.constant 0 : index
    %42 = vector.load %arg46[%c0_83, %c0_84] : memref<32x32xf32, #tpu.memory_space<vmem>>, vector<32x32xf32>
    %c0_85 = arith.constant 0 : index
    %c0_86 = arith.constant 0 : index
    %43 = vector.load %arg47[%c0_85, %c0_86] : memref<32x96xf32, #tpu.memory_space<vmem>>, vector<32x96xf32>
    %c0_87 = arith.constant 0 : index
    %c0_88 = arith.constant 0 : index
    %44 = vector.load %arg48[%c0_87, %c0_88] : memref<1x32xf32, #tpu.memory_space<vmem>>, vector<1x32xf32>
    %c0_89 = arith.constant 0 : index
    %c0_90 = arith.constant 0 : index
    %45 = vector.load %arg49[%c0_89, %c0_90] : memref<1x32xf32, #tpu.memory_space<vmem>>, vector<1x32xf32>
    %c0_91 = arith.constant 0 : index
    %c0_92 = arith.constant 0 : index
    %46 = vector.load %arg50[%c0_91, %c0_92] : memref<1x32xf32, #tpu.memory_space<vmem>>, vector<1x32xf32>
    %c0_93 = arith.constant 0 : index
    %c0_94 = arith.constant 0 : index
    %47 = vector.load %arg51[%c0_93, %c0_94] : memref<1x96xf32, #tpu.memory_space<vmem>>, vector<1x96xf32>
    %c0_95 = arith.constant 0 : index
    %c0_96 = arith.constant 0 : index
    %48 = vector.load %arg52[%c0_95, %c0_96] : memref<32x32xf32, #tpu.memory_space<vmem>>, vector<32x32xf32>
    %c0_97 = arith.constant 0 : index
    %c0_98 = arith.constant 0 : index
    %49 = vector.load %arg53[%c0_97, %c0_98] : memref<32x96xf32, #tpu.memory_space<vmem>>, vector<32x96xf32>
    %c0_99 = arith.constant 0 : index
    %c0_100 = arith.constant 0 : index
    %50 = vector.load %arg54[%c0_99, %c0_100] : memref<1x64xf32, #tpu.memory_space<vmem>>, vector<1x64xf32>
    %c0_101 = arith.constant 0 : index
    %c0_102 = arith.constant 0 : index
    %51 = vector.load %arg55[%c0_101, %c0_102] : memref<1x32xf32, #tpu.memory_space<vmem>>, vector<1x32xf32>
    %c0_103 = arith.constant 0 : index
    %c0_104 = arith.constant 0 : index
    %52 = vector.load %arg56[%c0_103, %c0_104] : memref<32x64xf32, #tpu.memory_space<vmem>>, vector<32x64xf32>
    %c0_105 = arith.constant 0 : index
    %c0_106 = arith.constant 0 : index
    %53 = vector.load %arg57[%c0_105, %c0_106] : memref<64x32xf32, #tpu.memory_space<vmem>>, vector<64x32xf32>
    %c0_107 = arith.constant 0 : index
    %c0_108 = arith.constant 0 : index
    %54 = vector.load %arg58[%c0_107, %c0_108] : memref<1x32xf32, #tpu.memory_space<vmem>>, vector<1x32xf32>
    %c0_109 = arith.constant 0 : index
    %c0_110 = arith.constant 0 : index
    %55 = vector.load %arg59[%c0_109, %c0_110] : memref<1x32xf32, #tpu.memory_space<vmem>>, vector<1x32xf32>
    %c0_111 = arith.constant 0 : index
    %c0_112 = arith.constant 0 : index
    %56 = vector.load %arg60[%c0_111, %c0_112] : memref<1x32xf32, #tpu.memory_space<vmem>>, vector<1x32xf32>
    %c0_113 = arith.constant 0 : index
    %c0_114 = arith.constant 0 : index
    %57 = vector.load %arg61[%c0_113, %c0_114] : memref<1x32xf32, #tpu.memory_space<vmem>>, vector<1x32xf32>
    %c0_115 = arith.constant 0 : index
    %c0_116 = arith.constant 0 : index
    %58 = vector.load %arg62[%c0_115, %c0_116] : memref<1x32xf32, #tpu.memory_space<vmem>>, vector<1x32xf32>
    %c0_117 = arith.constant 0 : index
    %c0_118 = arith.constant 0 : index
    %59 = vector.load %arg63[%c0_117, %c0_118] : memref<1x96xf32, #tpu.memory_space<vmem>>, vector<1x96xf32>
    %c0_119 = arith.constant 0 : index
    %c0_120 = arith.constant 0 : index
    %60 = vector.load %arg64[%c0_119, %c0_120] : memref<32x32xf32, #tpu.memory_space<vmem>>, vector<32x32xf32>
    %c0_121 = arith.constant 0 : index
    %c0_122 = arith.constant 0 : index
    %61 = vector.load %arg65[%c0_121, %c0_122] : memref<32x96xf32, #tpu.memory_space<vmem>>, vector<32x96xf32>
    %c0_123 = arith.constant 0 : index
    %c0_124 = arith.constant 0 : index
    %62 = vector.load %arg66[%c0_123, %c0_124] : memref<1x64xf32, #tpu.memory_space<vmem>>, vector<1x64xf32>
    %c0_125 = arith.constant 0 : index
    %c0_126 = arith.constant 0 : index
    %63 = vector.load %arg67[%c0_125, %c0_126] : memref<1x32xf32, #tpu.memory_space<vmem>>, vector<1x32xf32>
    %c0_127 = arith.constant 0 : index
    %c0_128 = arith.constant 0 : index
    %64 = vector.load %arg68[%c0_127, %c0_128] : memref<32x64xf32, #tpu.memory_space<vmem>>, vector<32x64xf32>
    %c0_129 = arith.constant 0 : index
    %c0_130 = arith.constant 0 : index
    %65 = vector.load %arg69[%c0_129, %c0_130] : memref<64x32xf32, #tpu.memory_space<vmem>>, vector<64x32xf32>
    %c0_131 = arith.constant 0 : index
    %c0_132 = arith.constant 0 : index
    %66 = vector.load %arg70[%c0_131, %c0_132] : memref<1x32xf32, #tpu.memory_space<vmem>>, vector<1x32xf32>
    %c0_133 = arith.constant 0 : index
    %c0_134 = arith.constant 0 : index
    %67 = vector.load %arg71[%c0_133, %c0_134] : memref<1x32xf32, #tpu.memory_space<vmem>>, vector<1x32xf32>
    %c0_135 = arith.constant 0 : index
    %c0_136 = arith.constant 0 : index
    %68 = vector.load %arg72[%c0_135, %c0_136] : memref<1x32xf32, #tpu.memory_space<vmem>>, vector<1x32xf32>
    %c0_137 = arith.constant 0 : index
    %c0_138 = arith.constant 0 : index
    %69 = vector.load %arg73[%c0_137, %c0_138] : memref<1x32xf32, #tpu.memory_space<vmem>>, vector<1x32xf32>
    %c0_139 = arith.constant 0 : index
    %c0_140 = arith.constant 0 : index
    %70 = vector.load %arg74[%c0_139, %c0_140] : memref<1x32xf32, #tpu.memory_space<vmem>>, vector<1x32xf32>
    %c0_141 = arith.constant 0 : index
    %c0_142 = arith.constant 0 : index
    %71 = vector.load %arg75[%c0_141, %c0_142] : memref<1x32xf32, #tpu.memory_space<vmem>>, vector<1x32xf32>
    %c0_143 = arith.constant 0 : index
    %c0_144 = arith.constant 0 : index
    %72 = vector.load %arg76[%c0_143, %c0_144] : memref<1x30xf32, #tpu.memory_space<vmem>>, vector<1x30xf32>
    %c0_145 = arith.constant 0 : index
    %c0_146 = arith.constant 0 : index
    %73 = vector.load %arg77[%c0_145, %c0_146] : memref<32x30xf32, #tpu.memory_space<vmem>>, vector<32x30xf32>
    %c0_147 = arith.constant 0 : index
    %c0_148 = arith.constant 0 : index
    %74 = vector.load %arg78[%c0_147, %c0_148] : memref<1x64xf32, #tpu.memory_space<vmem>>, vector<1x64xf32>
    %c0_149 = arith.constant 0 : index
    %c0_150 = arith.constant 0 : index
    %75 = vector.load %arg79[%c0_149, %c0_150] : memref<8x64xf32, #tpu.memory_space<vmem>>, vector<8x64xf32>
    %c0_151 = arith.constant 0 : index
    %c0_152 = arith.constant 0 : index
    %76 = vector.load %arg80[%c0_151, %c0_152] : memref<1x64xf32, #tpu.memory_space<vmem>>, vector<1x64xf32>
    %c0_153 = arith.constant 0 : index
    %c0_154 = arith.constant 0 : index
    %77 = vector.load %arg81[%c0_153, %c0_154] : memref<48x64xf32, #tpu.memory_space<vmem>>, vector<48x64xf32>
    %c0_155 = arith.constant 0 : index
    %c0_156 = arith.constant 0 : index
    %c0_157 = arith.constant 0 : index
    %78 = vector.load %arg1[%c0_155, %c0_156, %c0_157] : memref<1x16x48xf32, #tpu.memory_space<vmem>>, vector<1x16x48xf32>
    %79 = vector.shape_cast %78 : vector<1x16x48xf32> to vector<16x48xf32>
    %80 = arith.truncf %79 : vector<16x48xf32> to vector<16x48xbf16>
    %81 = arith.truncf %77 : vector<48x64xf32> to vector<48x64xbf16>
    %cst = arith.constant dense<0.000000e+00> : vector<16x64xf32>
    %82 = tpu.matmul %80, %81, %cst {dimension_numbers = #tpu.dot_dimension_numbers<[1], [0], [0], [1], [0, 0, 1, 1], [], []>} : vector<16x48xbf16>, vector<48x64xbf16>, vector<16x64xf32> -> vector<16x64xf32>
    %83 = vector.broadcast %76 : vector<1x64xf32> to vector<16x64xf32>
    %84 = arith.addf %82, %83 : vector<16x64xf32>
    %cst_158 = arith.constant dense<0.000000e+00> : vector<64xf32>
    %85 = vector.multi_reduction <add>, %84, %cst_158 [0] : vector<16x64xf32> to vector<64xf32>
    %86 = vector.shape_cast %85 : vector<64xf32> to vector<1x64xf32>
    %cst_159 = arith.constant 1.600000e+01 : f32
    %87 = vector.broadcast %cst_159 : f32 to vector<1x64xf32>
    %88 = arith.divf %86, %87 : vector<1x64xf32>
    %89 = arith.truncf %88 : vector<1x64xf32> to vector<1x64xbf16>
    %90 = arith.truncf %3 : vector<64x8xf32> to vector<64x8xbf16>
    %cst_160 = arith.constant dense<0.000000e+00> : vector<1x8xf32>
    %91 = tpu.matmul %89, %90, %cst_160 {dimension_numbers = #tpu.dot_dimension_numbers<[1], [0], [0], [1], [0, 0, 1, 1], [], []>} : vector<1x64xbf16>, vector<64x8xbf16>, vector<1x8xf32> -> vector<1x8xf32>
    %92 = arith.addf %91, %2 : vector<1x8xf32>
    %93 = arith.truncf %92 : vector<1x8xf32> to vector<1x8xbf16>
    %94 = arith.truncf %75 : vector<8x64xf32> to vector<8x64xbf16>
    %cst_161 = arith.constant dense<0.000000e+00> : vector<1x64xf32>
    %95 = tpu.matmul %93, %94, %cst_161 {dimension_numbers = #tpu.dot_dimension_numbers<[1], [0], [0], [1], [0, 0, 1, 1], [], []>} : vector<1x8xbf16>, vector<8x64xbf16>, vector<1x64xf32> -> vector<1x64xf32>
    %96 = arith.addf %95, %74 : vector<1x64xf32>
    %cst_162 = arith.constant 0.000000e+00 : f32
    %97 = vector.broadcast %cst_162 : f32 to vector<24x64xf32>
    %c0_163 = arith.constant 0 : index
    %c0_164 = arith.constant 0 : index
    %98 = vector.load %arg84[%c0_163, %c0_164] : memref<24x64xf32, #tpu.memory_space<vmem>>, vector<24x64xf32>
    tpu.vector_store %arg84[%c0_163, %c0_164], %97 {strides = array<i32>} : memref<24x64xf32, #tpu.memory_space<vmem>>, vector<24x64xf32>,
    %c0_165 = arith.constant 0 : index
    %c0_166 = arith.constant 0 : index
    %99 = vector.load %arg84[%c0_165, %c0_166] : memref<24x64xf32, #tpu.memory_space<vmem>>, vector<16x64xf32>
    tpu.vector_store %arg84[%c0_165, %c0_166], %84 {strides = array<i32>} : memref<24x64xf32, #tpu.memory_space<vmem>>, vector<16x64xf32>,
    %c16 = arith.constant 16 : index
    %c0_167 = arith.constant 0 : index
    %100 = vector.load %arg84[%c16, %c0_167] : memref<24x64xf32, #tpu.memory_space<vmem>>, vector<1x64xf32>
    tpu.vector_store %arg84[%c16, %c0_167], %96 {strides = array<i32>} : memref<24x64xf32, #tpu.memory_space<vmem>>, vector<1x64xf32>,
    %c0_168 = arith.constant 0 : index
    %c0_169 = arith.constant 0 : index
    %101 = vector.load %arg84[%c0_168, %c0_169] : memref<24x64xf32, #tpu.memory_space<vmem>>, vector<24x64xf32>
    %102 = arith.truncf %101 : vector<24x64xf32> to vector<24x64xbf16>
    %103 = arith.truncf %1 : vector<64x32xf32> to vector<64x32xbf16>
    %cst_170 = arith.constant dense<0.000000e+00> : vector<24x32xf32>
    %104 = tpu.matmul %102, %103, %cst_170 {dimension_numbers = #tpu.dot_dimension_numbers<[1], [0], [0], [1], [0, 0, 1, 1], [], []>} : vector<24x64xbf16>, vector<64x32xbf16>, vector<24x32xf32> -> vector<24x32xf32>
    %105 = vector.broadcast %0 : vector<1x32xf32> to vector<24x32xf32>
    %106 = arith.addf %104, %105 : vector<24x32xf32>
    %cst_171 = arith.constant 0.000000e+00 : f32
    %107 = vector.broadcast %cst_171 : f32 to vector<24x32xf32>
    %108 = arith.maximumf %106, %107 : vector<24x32xf32>
    %109 = tpu.iota {dimensions = array<i32: 1>} : vector<24x24xi32>
    %c17_i32 = arith.constant 17 : i32
    %110 = vector.broadcast %c17_i32 : i32 to vector<24x24xi32>
    %111 = arith.cmpi slt, %109, %110 : vector<24x24xi32>
    %cst_172 = arith.constant 0.000000e+00 : f32
    %cst_173 = arith.constant -1.000000e+09 : f32
    %112 = vector.broadcast %cst_172 : f32 to vector<24x24xf32>
    %113 = vector.broadcast %cst_173 : f32 to vector<24x24xf32>
    %114 = arith.select %111, %112, %113 : vector<24x24xi1>, vector<24x24xf32>
    %cst_174 = arith.constant dense<0.000000e+00> : vector<24xf32>
    %115 = vector.multi_reduction <add>, %108, %cst_174 [1] : vector<24x32xf32> to vector<24xf32>
    %116 = vector.shape_cast %115 : vector<24xf32> to vector<24x1xf32>
    %cst_175 = arith.constant 3.200000e+01 : f32
    %117 = vector.broadcast %cst_175 : f32 to vector<24x1xf32>
    %118 = arith.divf %116, %117 : vector<24x1xf32>
    %119 = vector.broadcast %118 : vector<24x1xf32> to vector<24x32xf32>
    %120 = arith.subf %108, %119 : vector<24x32xf32>
    %121 = arith.mulf %120, %120 : vector<24x32xf32>
    %cst_176 = arith.constant dense<0.000000e+00> : vector<24xf32>
    %122 = vector.multi_reduction <add>, %121, %cst_176 [1] : vector<24x32xf32> to vector<24xf32>
    %123 = vector.shape_cast %122 : vector<24xf32> to vector<24x1xf32>
    %cst_177 = arith.constant 3.200000e+01 : f32
    %124 = vector.broadcast %cst_177 : f32 to vector<24x1xf32>
    %125 = arith.divf %123, %124 : vector<24x1xf32>
    %126 = vector.broadcast %118 : vector<24x1xf32> to vector<24x32xf32>
    %127 = arith.subf %108, %126 : vector<24x32xf32>
    %cst_178 = arith.constant 9.99999997E-7 : f32
    %128 = vector.broadcast %cst_178 : f32 to vector<24x1xf32>
    %129 = arith.addf %125, %128 : vector<24x1xf32>
    %130 = math.rsqrt %129 : vector<24x1xf32>
    %131 = vector.broadcast %130 : vector<24x1xf32> to vector<24x32xf32>
    %132 = arith.mulf %127, %131 : vector<24x32xf32>
    %133 = vector.broadcast %55 : vector<1x32xf32> to vector<24x32xf32>
    %134 = arith.mulf %132, %133 : vector<24x32xf32>
    %135 = vector.broadcast %54 : vector<1x32xf32> to vector<24x32xf32>
    %136 = arith.addf %134, %135 : vector<24x32xf32>
    %137 = arith.truncf %136 : vector<24x32xf32> to vector<24x32xbf16>
    %138 = arith.truncf %49 : vector<32x96xf32> to vector<32x96xbf16>
    %cst_179 = arith.constant dense<0.000000e+00> : vector<24x96xf32>
    %139 = tpu.matmul %137, %138, %cst_179 {dimension_numbers = #tpu.dot_dimension_numbers<[1], [0], [0], [1], [0, 0, 1, 1], [], []>} : vector<24x32xbf16>, vector<32x96xbf16>, vector<24x96xf32> -> vector<24x96xf32>
    %140 = vector.broadcast %47 : vector<1x96xf32> to vector<24x96xf32>
    %141 = arith.addf %139, %140 : vector<24x96xf32>
    %142 = vector.extract_strided_slice %141 {offsets = [0, 0], sizes = [24, 32], strides = [1, 1]} : vector<24x96xf32> to vector<24x32xf32>
    %143 = vector.extract_strided_slice %141 {offsets = [0, 32], sizes = [24, 32], strides = [1, 1]} : vector<24x96xf32> to vector<24x32xf32>
    %144 = vector.extract_strided_slice %141 {offsets = [0, 64], sizes = [24, 32], strides = [1, 1]} : vector<24x96xf32> to vector<24x32xf32>
    %145 = vector.extract_strided_slice %142 {offsets = [0, 0], sizes = [24, 8], strides = [1, 1]} : vector<24x32xf32> to vector<24x8xf32>
    %146 = arith.truncf %145 : vector<24x8xf32> to vector<24x8xbf16>
    %147 = vector.extract_strided_slice %143 {offsets = [0, 0], sizes = [24, 8], strides = [1, 1]} : vector<24x32xf32> to vector<24x8xf32>
    %148 = arith.truncf %147 : vector<24x8xf32> to vector<24x8xbf16>
    %cst_180 = arith.constant dense<0.000000e+00> : vector<24x24xf32>
    %149 = tpu.matmul %146, %148, %cst_180 {dimension_numbers = #tpu.dot_dimension_numbers<[1], [1], [0], [0], [0, 0, 1, 0], [], []>} : vector<24x8xbf16>, vector<24x8xbf16>, vector<24x24xf32> -> vector<24x24xf32>
    %cst_181 = arith.constant 0.353553385 : f32
    %150 = vector.broadcast %cst_181 : f32 to vector<24x24xf32>
    %151 = arith.mulf %149, %150 : vector<24x24xf32>
    %152 = arith.addf %151, %114 : vector<24x24xf32>
    %cst_182 = arith.constant dense<0xFF800000> : vector<24xf32>
    %153 = vector.multi_reduction <maximumf>, %152, %cst_182 [1] : vector<24x24xf32> to vector<24xf32>
    %154 = vector.shape_cast %153 : vector<24xf32> to vector<24x1xf32>
    %155 = vector.broadcast %154 : vector<24x1xf32> to vector<24x24xf32>
    %156 = arith.subf %152, %155 : vector<24x24xf32>
    %157 = math.exp %156 : vector<24x24xf32>
    %cst_183 = arith.constant dense<0.000000e+00> : vector<24xf32>
    %158 = vector.multi_reduction <add>, %157, %cst_183 [1] : vector<24x24xf32> to vector<24xf32>
    %159 = vector.shape_cast %158 : vector<24xf32> to vector<24x1xf32>
    %160 = tpu.reciprocal %159 {approx = true} : vector<24x1xf32> -> vector<24x1xf32>
    %161 = vector.broadcast %160 : vector<24x1xf32> to vector<24x24xf32>
    %162 = arith.mulf %157, %161 : vector<24x24xf32>
    %163 = vector.extract_strided_slice %144 {offsets = [0, 0], sizes = [24, 8], strides = [1, 1]} : vector<24x32xf32> to vector<24x8xf32>
    %164 = arith.truncf %162 : vector<24x24xf32> to vector<24x24xbf16>
    %165 = arith.truncf %163 : vector<24x8xf32> to vector<24x8xbf16>
    %cst_184 = arith.constant dense<0.000000e+00> : vector<24x8xf32>
    %166 = tpu.matmul %164, %165, %cst_184 {dimension_numbers = #tpu.dot_dimension_numbers<[1], [0], [0], [1], [0, 0, 1, 1], [], []>} : vector<24x24xbf16>, vector<24x8xbf16>, vector<24x8xf32> -> vector<24x8xf32>
    %167 = vector.extract_strided_slice %142 {offsets = [0, 8], sizes = [24, 8], strides = [1, 1]} : vector<24x32xf32> to vector<24x8xf32>
    %168 = arith.truncf %167 : vector<24x8xf32> to vector<24x8xbf16>
    %169 = vector.extract_strided_slice %143 {offsets = [0, 8], sizes = [24, 8], strides = [1, 1]} : vector<24x32xf32> to vector<24x8xf32>
    %170 = arith.truncf %169 : vector<24x8xf32> to vector<24x8xbf16>
    %cst_185 = arith.constant dense<0.000000e+00> : vector<24x24xf32>
    %171 = tpu.matmul %168, %170, %cst_185 {dimension_numbers = #tpu.dot_dimension_numbers<[1], [1], [0], [0], [0, 0, 1, 0], [], []>} : vector<24x8xbf16>, vector<24x8xbf16>, vector<24x24xf32> -> vector<24x24xf32>
    %cst_186 = arith.constant 0.353553385 : f32
    %172 = vector.broadcast %cst_186 : f32 to vector<24x24xf32>
    %173 = arith.mulf %171, %172 : vector<24x24xf32>
    %174 = arith.addf %173, %114 : vector<24x24xf32>
    %cst_187 = arith.constant dense<0xFF800000> : vector<24xf32>
    %175 = vector.multi_reduction <maximumf>, %174, %cst_187 [1] : vector<24x24xf32> to vector<24xf32>
    %176 = vector.shape_cast %175 : vector<24xf32> to vector<24x1xf32>
    %177 = vector.broadcast %176 : vector<24x1xf32> to vector<24x24xf32>
    %178 = arith.subf %174, %177 : vector<24x24xf32>
    %179 = math.exp %178 : vector<24x24xf32>
    %cst_188 = arith.constant dense<0.000000e+00> : vector<24xf32>
    %180 = vector.multi_reduction <add>, %179, %cst_188 [1] : vector<24x24xf32> to vector<24xf32>
    %181 = vector.shape_cast %180 : vector<24xf32> to vector<24x1xf32>
    %182 = tpu.reciprocal %181 {approx = true} : vector<24x1xf32> -> vector<24x1xf32>
    %183 = vector.broadcast %182 : vector<24x1xf32> to vector<24x24xf32>
    %184 = arith.mulf %179, %183 : vector<24x24xf32>
    %185 = vector.extract_strided_slice %144 {offsets = [0, 8], sizes = [24, 8], strides = [1, 1]} : vector<24x32xf32> to vector<24x8xf32>
    %186 = arith.truncf %184 : vector<24x24xf32> to vector<24x24xbf16>
    %187 = arith.truncf %185 : vector<24x8xf32> to vector<24x8xbf16>
    %cst_189 = arith.constant dense<0.000000e+00> : vector<24x8xf32>
    %188 = tpu.matmul %186, %187, %cst_189 {dimension_numbers = #tpu.dot_dimension_numbers<[1], [0], [0], [1], [0, 0, 1, 1], [], []>} : vector<24x24xbf16>, vector<24x8xbf16>, vector<24x8xf32> -> vector<24x8xf32>
    %189 = vector.extract_strided_slice %142 {offsets = [0, 16], sizes = [24, 8], strides = [1, 1]} : vector<24x32xf32> to vector<24x8xf32>
    %190 = arith.truncf %189 : vector<24x8xf32> to vector<24x8xbf16>
    %191 = vector.extract_strided_slice %143 {offsets = [0, 16], sizes = [24, 8], strides = [1, 1]} : vector<24x32xf32> to vector<24x8xf32>
    %192 = arith.truncf %191 : vector<24x8xf32> to vector<24x8xbf16>
    %cst_190 = arith.constant dense<0.000000e+00> : vector<24x24xf32>
    %193 = tpu.matmul %190, %192, %cst_190 {dimension_numbers = #tpu.dot_dimension_numbers<[1], [1], [0], [0], [0, 0, 1, 0], [], []>} : vector<24x8xbf16>, vector<24x8xbf16>, vector<24x24xf32> -> vector<24x24xf32>
    %cst_191 = arith.constant 0.353553385 : f32
    %194 = vector.broadcast %cst_191 : f32 to vector<24x24xf32>
    %195 = arith.mulf %193, %194 : vector<24x24xf32>
    %196 = arith.addf %195, %114 : vector<24x24xf32>
    %cst_192 = arith.constant dense<0xFF800000> : vector<24xf32>
    %197 = vector.multi_reduction <maximumf>, %196, %cst_192 [1] : vector<24x24xf32> to vector<24xf32>
    %198 = vector.shape_cast %197 : vector<24xf32> to vector<24x1xf32>
    %199 = vector.broadcast %198 : vector<24x1xf32> to vector<24x24xf32>
    %200 = arith.subf %196, %199 : vector<24x24xf32>
    %201 = math.exp %200 : vector<24x24xf32>
    %cst_193 = arith.constant dense<0.000000e+00> : vector<24xf32>
    %202 = vector.multi_reduction <add>, %201, %cst_193 [1] : vector<24x24xf32> to vector<24xf32>
    %203 = vector.shape_cast %202 : vector<24xf32> to vector<24x1xf32>
    %204 = tpu.reciprocal %203 {approx = true} : vector<24x1xf32> -> vector<24x1xf32>
    %205 = vector.broadcast %204 : vector<24x1xf32> to vector<24x24xf32>
    %206 = arith.mulf %201, %205 : vector<24x24xf32>
    %207 = vector.extract_strided_slice %144 {offsets = [0, 16], sizes = [24, 8], strides = [1, 1]} : vector<24x32xf32> to vector<24x8xf32>
    %208 = arith.truncf %206 : vector<24x24xf32> to vector<24x24xbf16>
    %209 = arith.truncf %207 : vector<24x8xf32> to vector<24x8xbf16>
    %cst_194 = arith.constant dense<0.000000e+00> : vector<24x8xf32>
    %210 = tpu.matmul %208, %209, %cst_194 {dimension_numbers = #tpu.dot_dimension_numbers<[1], [0], [0], [1], [0, 0, 1, 1], [], []>} : vector<24x24xbf16>, vector<24x8xbf16>, vector<24x8xf32> -> vector<24x8xf32>
    %211 = vector.extract_strided_slice %142 {offsets = [0, 24], sizes = [24, 8], strides = [1, 1]} : vector<24x32xf32> to vector<24x8xf32>
    %212 = arith.truncf %211 : vector<24x8xf32> to vector<24x8xbf16>
    %213 = vector.extract_strided_slice %143 {offsets = [0, 24], sizes = [24, 8], strides = [1, 1]} : vector<24x32xf32> to vector<24x8xf32>
    %214 = arith.truncf %213 : vector<24x8xf32> to vector<24x8xbf16>
    %cst_195 = arith.constant dense<0.000000e+00> : vector<24x24xf32>
    %215 = tpu.matmul %212, %214, %cst_195 {dimension_numbers = #tpu.dot_dimension_numbers<[1], [1], [0], [0], [0, 0, 1, 0], [], []>} : vector<24x8xbf16>, vector<24x8xbf16>, vector<24x24xf32> -> vector<24x24xf32>
    %cst_196 = arith.constant 0.353553385 : f32
    %216 = vector.broadcast %cst_196 : f32 to vector<24x24xf32>
    %217 = arith.mulf %215, %216 : vector<24x24xf32>
    %218 = arith.addf %217, %114 : vector<24x24xf32>
    %cst_197 = arith.constant dense<0xFF800000> : vector<24xf32>
    %219 = vector.multi_reduction <maximumf>, %218, %cst_197 [1] : vector<24x24xf32> to vector<24xf32>
    %220 = vector.shape_cast %219 : vector<24xf32> to vector<24x1xf32>
    %221 = vector.broadcast %220 : vector<24x1xf32> to vector<24x24xf32>
    %222 = arith.subf %218, %221 : vector<24x24xf32>
    %223 = math.exp %222 : vector<24x24xf32>
    %cst_198 = arith.constant dense<0.000000e+00> : vector<24xf32>
    %224 = vector.multi_reduction <add>, %223, %cst_198 [1] : vector<24x24xf32> to vector<24xf32>
    %225 = vector.shape_cast %224 : vector<24xf32> to vector<24x1xf32>
    %226 = tpu.reciprocal %225 {approx = true} : vector<24x1xf32> -> vector<24x1xf32>
    %227 = vector.broadcast %226 : vector<24x1xf32> to vector<24x24xf32>
    %228 = arith.mulf %223, %227 : vector<24x24xf32>
    %229 = vector.extract_strided_slice %144 {offsets = [0, 24], sizes = [24, 8], strides = [1, 1]} : vector<24x32xf32> to vector<24x8xf32>
    %230 = arith.truncf %228 : vector<24x24xf32> to vector<24x24xbf16>
    %231 = arith.truncf %229 : vector<24x8xf32> to vector<24x8xbf16>
    %cst_199 = arith.constant dense<0.000000e+00> : vector<24x8xf32>
    %232 = tpu.matmul %230, %231, %cst_199 {dimension_numbers = #tpu.dot_dimension_numbers<[1], [0], [0], [1], [0, 0, 1, 1], [], []>} : vector<24x24xbf16>, vector<24x8xbf16>, vector<24x8xf32> -> vector<24x8xf32>
    %233 = tpu.concatenate %166, %188, %210, %232 in 1 : vector<24x8xf32>, vector<24x8xf32>, vector<24x8xf32>, vector<24x8xf32> -> vector<24x32xf32>
    %234 = arith.truncf %233 : vector<24x32xf32> to vector<24x32xbf16>
    %235 = arith.truncf %48 : vector<32x32xf32> to vector<32x32xbf16>
    %cst_200 = arith.constant dense<0.000000e+00> : vector<24x32xf32>
    %236 = tpu.matmul %234, %235, %cst_200 {dimension_numbers = #tpu.dot_dimension_numbers<[1], [0], [0], [1], [0, 0, 1, 1], [], []>} : vector<24x32xbf16>, vector<32x32xbf16>, vector<24x32xf32> -> vector<24x32xf32>
    %237 = vector.broadcast %46 : vector<1x32xf32> to vector<24x32xf32>
    %238 = arith.addf %236, %237 : vector<24x32xf32>
    %239 = arith.addf %108, %238 : vector<24x32xf32>
    %cst_201 = arith.constant dense<0.000000e+00> : vector<24xf32>
    %240 = vector.multi_reduction <add>, %239, %cst_201 [1] : vector<24x32xf32> to vector<24xf32>
    %241 = vector.shape_cast %240 : vector<24xf32> to vector<24x1xf32>
    %cst_202 = arith.constant 3.200000e+01 : f32
    %242 = vector.broadcast %cst_202 : f32 to vector<24x1xf32>
    %243 = arith.divf %241, %242 : vector<24x1xf32>
    %244 = vector.broadcast %243 : vector<24x1xf32> to vector<24x32xf32>
    %245 = arith.subf %239, %244 : vector<24x32xf32>
    %246 = arith.mulf %245, %245 : vector<24x32xf32>
    %cst_203 = arith.constant dense<0.000000e+00> : vector<24xf32>
    %247 = vector.multi_reduction <add>, %246, %cst_203 [1] : vector<24x32xf32> to vector<24xf32>
    %248 = vector.shape_cast %247 : vector<24xf32> to vector<24x1xf32>
    %cst_204 = arith.constant 3.200000e+01 : f32
    %249 = vector.broadcast %cst_204 : f32 to vector<24x1xf32>
    %250 = arith.divf %248, %249 : vector<24x1xf32>
    %251 = vector.broadcast %243 : vector<24x1xf32> to vector<24x32xf32>
    %252 = arith.subf %239, %251 : vector<24x32xf32>
    %cst_205 = arith.constant 9.99999997E-7 : f32
    %253 = vector.broadcast %cst_205 : f32 to vector<24x1xf32>
    %254 = arith.addf %250, %253 : vector<24x1xf32>
    %255 = math.rsqrt %254 : vector<24x1xf32>
    %256 = vector.broadcast %255 : vector<24x1xf32> to vector<24x32xf32>
    %257 = arith.mulf %252, %256 : vector<24x32xf32>
    %258 = vector.broadcast %57 : vector<1x32xf32> to vector<24x32xf32>
    %259 = arith.mulf %257, %258 : vector<24x32xf32>
    %260 = vector.broadcast %56 : vector<1x32xf32> to vector<24x32xf32>
    %261 = arith.addf %259, %260 : vector<24x32xf32>
    %262 = arith.truncf %261 : vector<24x32xf32> to vector<24x32xbf16>
    %263 = arith.truncf %52 : vector<32x64xf32> to vector<32x64xbf16>
    %cst_206 = arith.constant dense<0.000000e+00> : vector<24x64xf32>
    %264 = tpu.matmul %262, %263, %cst_206 {dimension_numbers = #tpu.dot_dimension_numbers<[1], [0], [0], [1], [0, 0, 1, 1], [], []>} : vector<24x32xbf16>, vector<32x64xbf16>, vector<24x64xf32> -> vector<24x64xf32>
    %265 = vector.broadcast %50 : vector<1x64xf32> to vector<24x64xf32>
    %266 = arith.addf %264, %265 : vector<24x64xf32>
    %cst_207 = arith.constant 0.000000e+00 : f32
    %267 = vector.broadcast %cst_207 : f32 to vector<24x64xf32>
    %268 = arith.maximumf %266, %267 : vector<24x64xf32>
    %269 = arith.truncf %268 : vector<24x64xf32> to vector<24x64xbf16>
    %270 = arith.truncf %53 : vector<64x32xf32> to vector<64x32xbf16>
    %cst_208 = arith.constant dense<0.000000e+00> : vector<24x32xf32>
    %271 = tpu.matmul %269, %270, %cst_208 {dimension_numbers = #tpu.dot_dimension_numbers<[1], [0], [0], [1], [0, 0, 1, 1], [], []>} : vector<24x64xbf16>, vector<64x32xbf16>, vector<24x32xf32> -> vector<24x32xf32>
    %272 = vector.broadcast %51 : vector<1x32xf32> to vector<24x32xf32>
    %273 = arith.addf %271, %272 : vector<24x32xf32>
    %274 = arith.addf %239, %273 : vector<24x32xf32>
    %cst_209 = arith.constant dense<0.000000e+00> : vector<24xf32>
    %275 = vector.multi_reduction <add>, %274, %cst_209 [1] : vector<24x32xf32> to vector<24xf32>
    %276 = vector.shape_cast %275 : vector<24xf32> to vector<24x1xf32>
    %cst_210 = arith.constant 3.200000e+01 : f32
    %277 = vector.broadcast %cst_210 : f32 to vector<24x1xf32>
    %278 = arith.divf %276, %277 : vector<24x1xf32>
    %279 = vector.broadcast %278 : vector<24x1xf32> to vector<24x32xf32>
    %280 = arith.subf %274, %279 : vector<24x32xf32>
    %281 = arith.mulf %280, %280 : vector<24x32xf32>
    %cst_211 = arith.constant dense<0.000000e+00> : vector<24xf32>
    %282 = vector.multi_reduction <add>, %281, %cst_211 [1] : vector<24x32xf32> to vector<24xf32>
    %283 = vector.shape_cast %282 : vector<24xf32> to vector<24x1xf32>
    %cst_212 = arith.constant 3.200000e+01 : f32
    %284 = vector.broadcast %cst_212 : f32 to vector<24x1xf32>
    %285 = arith.divf %283, %284 : vector<24x1xf32>
    %286 = vector.broadcast %278 : vector<24x1xf32> to vector<24x32xf32>
    %287 = arith.subf %274, %286 : vector<24x32xf32>
    %cst_213 = arith.constant 9.99999997E-7 : f32
    %288 = vector.broadcast %cst_213 : f32 to vector<24x1xf32>
    %289 = arith.addf %285, %288 : vector<24x1xf32>
    %290 = math.rsqrt %289 : vector<24x1xf32>
    %291 = vector.broadcast %290 : vector<24x1xf32> to vector<24x32xf32>
    %292 = arith.mulf %287, %291 : vector<24x32xf32>
    %293 = vector.broadcast %67 : vector<1x32xf32> to vector<24x32xf32>
    %294 = arith.mulf %292, %293 : vector<24x32xf32>
    %295 = vector.broadcast %66 : vector<1x32xf32> to vector<24x32xf32>
    %296 = arith.addf %294, %295 : vector<24x32xf32>
    %297 = arith.truncf %296 : vector<24x32xf32> to vector<24x32xbf16>
    %298 = arith.truncf %61 : vector<32x96xf32> to vector<32x96xbf16>
    %cst_214 = arith.constant dense<0.000000e+00> : vector<24x96xf32>
    %299 = tpu.matmul %297, %298, %cst_214 {dimension_numbers = #tpu.dot_dimension_numbers<[1], [0], [0], [1], [0, 0, 1, 1], [], []>} : vector<24x32xbf16>, vector<32x96xbf16>, vector<24x96xf32> -> vector<24x96xf32>
    %300 = vector.broadcast %59 : vector<1x96xf32> to vector<24x96xf32>
    %301 = arith.addf %299, %300 : vector<24x96xf32>
    %302 = vector.extract_strided_slice %301 {offsets = [0, 0], sizes = [24, 32], strides = [1, 1]} : vector<24x96xf32> to vector<24x32xf32>
    %303 = vector.extract_strided_slice %301 {offsets = [0, 32], sizes = [24, 32], strides = [1, 1]} : vector<24x96xf32> to vector<24x32xf32>
    %304 = vector.extract_strided_slice %301 {offsets = [0, 64], sizes = [24, 32], strides = [1, 1]} : vector<24x96xf32> to vector<24x32xf32>
    %305 = vector.extract_strided_slice %302 {offsets = [0, 0], sizes = [24, 8], strides = [1, 1]} : vector<24x32xf32> to vector<24x8xf32>
    %306 = arith.truncf %305 : vector<24x8xf32> to vector<24x8xbf16>
    %307 = vector.extract_strided_slice %303 {offsets = [0, 0], sizes = [24, 8], strides = [1, 1]} : vector<24x32xf32> to vector<24x8xf32>
    %308 = arith.truncf %307 : vector<24x8xf32> to vector<24x8xbf16>
    %cst_215 = arith.constant dense<0.000000e+00> : vector<24x24xf32>
    %309 = tpu.matmul %306, %308, %cst_215 {dimension_numbers = #tpu.dot_dimension_numbers<[1], [1], [0], [0], [0, 0, 1, 0], [], []>} : vector<24x8xbf16>, vector<24x8xbf16>, vector<24x24xf32> -> vector<24x24xf32>
    %cst_216 = arith.constant 0.353553385 : f32
    %310 = vector.broadcast %cst_216 : f32 to vector<24x24xf32>
    %311 = arith.mulf %309, %310 : vector<24x24xf32>
    %312 = arith.addf %311, %114 : vector<24x24xf32>
    %cst_217 = arith.constant dense<0xFF800000> : vector<24xf32>
    %313 = vector.multi_reduction <maximumf>, %312, %cst_217 [1] : vector<24x24xf32> to vector<24xf32>
    %314 = vector.shape_cast %313 : vector<24xf32> to vector<24x1xf32>
    %315 = vector.broadcast %314 : vector<24x1xf32> to vector<24x24xf32>
    %316 = arith.subf %312, %315 : vector<24x24xf32>
    %317 = math.exp %316 : vector<24x24xf32>
    %cst_218 = arith.constant dense<0.000000e+00> : vector<24xf32>
    %318 = vector.multi_reduction <add>, %317, %cst_218 [1] : vector<24x24xf32> to vector<24xf32>
    %319 = vector.shape_cast %318 : vector<24xf32> to vector<24x1xf32>
    %320 = tpu.reciprocal %319 {approx = true} : vector<24x1xf32> -> vector<24x1xf32>
    %321 = vector.broadcast %320 : vector<24x1xf32> to vector<24x24xf32>
    %322 = arith.mulf %317, %321 : vector<24x24xf32>
    %323 = vector.extract_strided_slice %304 {offsets = [0, 0], sizes = [24, 8], strides = [1, 1]} : vector<24x32xf32> to vector<24x8xf32>
    %324 = arith.truncf %322 : vector<24x24xf32> to vector<24x24xbf16>
    %325 = arith.truncf %323 : vector<24x8xf32> to vector<24x8xbf16>
    %cst_219 = arith.constant dense<0.000000e+00> : vector<24x8xf32>
    %326 = tpu.matmul %324, %325, %cst_219 {dimension_numbers = #tpu.dot_dimension_numbers<[1], [0], [0], [1], [0, 0, 1, 1], [], []>} : vector<24x24xbf16>, vector<24x8xbf16>, vector<24x8xf32> -> vector<24x8xf32>
    %327 = vector.extract_strided_slice %302 {offsets = [0, 8], sizes = [24, 8], strides = [1, 1]} : vector<24x32xf32> to vector<24x8xf32>
    %328 = arith.truncf %327 : vector<24x8xf32> to vector<24x8xbf16>
    %329 = vector.extract_strided_slice %303 {offsets = [0, 8], sizes = [24, 8], strides = [1, 1]} : vector<24x32xf32> to vector<24x8xf32>
    %330 = arith.truncf %329 : vector<24x8xf32> to vector<24x8xbf16>
    %cst_220 = arith.constant dense<0.000000e+00> : vector<24x24xf32>
    %331 = tpu.matmul %328, %330, %cst_220 {dimension_numbers = #tpu.dot_dimension_numbers<[1], [1], [0], [0], [0, 0, 1, 0], [], []>} : vector<24x8xbf16>, vector<24x8xbf16>, vector<24x24xf32> -> vector<24x24xf32>
    %cst_221 = arith.constant 0.353553385 : f32
    %332 = vector.broadcast %cst_221 : f32 to vector<24x24xf32>
    %333 = arith.mulf %331, %332 : vector<24x24xf32>
    %334 = arith.addf %333, %114 : vector<24x24xf32>
    %cst_222 = arith.constant dense<0xFF800000> : vector<24xf32>
    %335 = vector.multi_reduction <maximumf>, %334, %cst_222 [1] : vector<24x24xf32> to vector<24xf32>
    %336 = vector.shape_cast %335 : vector<24xf32> to vector<24x1xf32>
    %337 = vector.broadcast %336 : vector<24x1xf32> to vector<24x24xf32>
    %338 = arith.subf %334, %337 : vector<24x24xf32>
    %339 = math.exp %338 : vector<24x24xf32>
    %cst_223 = arith.constant dense<0.000000e+00> : vector<24xf32>
    %340 = vector.multi_reduction <add>, %339, %cst_223 [1] : vector<24x24xf32> to vector<24xf32>
    %341 = vector.shape_cast %340 : vector<24xf32> to vector<24x1xf32>
    %342 = tpu.reciprocal %341 {approx = true} : vector<24x1xf32> -> vector<24x1xf32>
    %343 = vector.broadcast %342 : vector<24x1xf32> to vector<24x24xf32>
    %344 = arith.mulf %339, %343 : vector<24x24xf32>
    %345 = vector.extract_strided_slice %304 {offsets = [0, 8], sizes = [24, 8], strides = [1, 1]} : vector<24x32xf32> to vector<24x8xf32>
    %346 = arith.truncf %344 : vector<24x24xf32> to vector<24x24xbf16>
    %347 = arith.truncf %345 : vector<24x8xf32> to vector<24x8xbf16>
    %cst_224 = arith.constant dense<0.000000e+00> : vector<24x8xf32>
    %348 = tpu.matmul %346, %347, %cst_224 {dimension_numbers = #tpu.dot_dimension_numbers<[1], [0], [0], [1], [0, 0, 1, 1], [], []>} : vector<24x24xbf16>, vector<24x8xbf16>, vector<24x8xf32> -> vector<24x8xf32>
    %349 = vector.extract_strided_slice %302 {offsets = [0, 16], sizes = [24, 8], strides = [1, 1]} : vector<24x32xf32> to vector<24x8xf32>
    %350 = arith.truncf %349 : vector<24x8xf32> to vector<24x8xbf16>
    %351 = vector.extract_strided_slice %303 {offsets = [0, 16], sizes = [24, 8], strides = [1, 1]} : vector<24x32xf32> to vector<24x8xf32>
    %352 = arith.truncf %351 : vector<24x8xf32> to vector<24x8xbf16>
    %cst_225 = arith.constant dense<0.000000e+00> : vector<24x24xf32>
    %353 = tpu.matmul %350, %352, %cst_225 {dimension_numbers = #tpu.dot_dimension_numbers<[1], [1], [0], [0], [0, 0, 1, 0], [], []>} : vector<24x8xbf16>, vector<24x8xbf16>, vector<24x24xf32> -> vector<24x24xf32>
    %cst_226 = arith.constant 0.353553385 : f32
    %354 = vector.broadcast %cst_226 : f32 to vector<24x24xf32>
    %355 = arith.mulf %353, %354 : vector<24x24xf32>
    %356 = arith.addf %355, %114 : vector<24x24xf32>
    %cst_227 = arith.constant dense<0xFF800000> : vector<24xf32>
    %357 = vector.multi_reduction <maximumf>, %356, %cst_227 [1] : vector<24x24xf32> to vector<24xf32>
    %358 = vector.shape_cast %357 : vector<24xf32> to vector<24x1xf32>
    %359 = vector.broadcast %358 : vector<24x1xf32> to vector<24x24xf32>
    %360 = arith.subf %356, %359 : vector<24x24xf32>
    %361 = math.exp %360 : vector<24x24xf32>
    %cst_228 = arith.constant dense<0.000000e+00> : vector<24xf32>
    %362 = vector.multi_reduction <add>, %361, %cst_228 [1] : vector<24x24xf32> to vector<24xf32>
    %363 = vector.shape_cast %362 : vector<24xf32> to vector<24x1xf32>
    %364 = tpu.reciprocal %363 {approx = true} : vector<24x1xf32> -> vector<24x1xf32>
    %365 = vector.broadcast %364 : vector<24x1xf32> to vector<24x24xf32>
    %366 = arith.mulf %361, %365 : vector<24x24xf32>
    %367 = vector.extract_strided_slice %304 {offsets = [0, 16], sizes = [24, 8], strides = [1, 1]} : vector<24x32xf32> to vector<24x8xf32>
    %368 = arith.truncf %366 : vector<24x24xf32> to vector<24x24xbf16>
    %369 = arith.truncf %367 : vector<24x8xf32> to vector<24x8xbf16>
    %cst_229 = arith.constant dense<0.000000e+00> : vector<24x8xf32>
    %370 = tpu.matmul %368, %369, %cst_229 {dimension_numbers = #tpu.dot_dimension_numbers<[1], [0], [0], [1], [0, 0, 1, 1], [], []>} : vector<24x24xbf16>, vector<24x8xbf16>, vector<24x8xf32> -> vector<24x8xf32>
    %371 = vector.extract_strided_slice %302 {offsets = [0, 24], sizes = [24, 8], strides = [1, 1]} : vector<24x32xf32> to vector<24x8xf32>
    %372 = arith.truncf %371 : vector<24x8xf32> to vector<24x8xbf16>
    %373 = vector.extract_strided_slice %303 {offsets = [0, 24], sizes = [24, 8], strides = [1, 1]} : vector<24x32xf32> to vector<24x8xf32>
    %374 = arith.truncf %373 : vector<24x8xf32> to vector<24x8xbf16>
    %cst_230 = arith.constant dense<0.000000e+00> : vector<24x24xf32>
    %375 = tpu.matmul %372, %374, %cst_230 {dimension_numbers = #tpu.dot_dimension_numbers<[1], [1], [0], [0], [0, 0, 1, 0], [], []>} : vector<24x8xbf16>, vector<24x8xbf16>, vector<24x24xf32> -> vector<24x24xf32>
    %cst_231 = arith.constant 0.353553385 : f32
    %376 = vector.broadcast %cst_231 : f32 to vector<24x24xf32>
    %377 = arith.mulf %375, %376 : vector<24x24xf32>
    %378 = arith.addf %377, %114 : vector<24x24xf32>
    %cst_232 = arith.constant dense<0xFF800000> : vector<24xf32>
    %379 = vector.multi_reduction <maximumf>, %378, %cst_232 [1] : vector<24x24xf32> to vector<24xf32>
    %380 = vector.shape_cast %379 : vector<24xf32> to vector<24x1xf32>
    %381 = vector.broadcast %380 : vector<24x1xf32> to vector<24x24xf32>
    %382 = arith.subf %378, %381 : vector<24x24xf32>
    %383 = math.exp %382 : vector<24x24xf32>
    %cst_233 = arith.constant dense<0.000000e+00> : vector<24xf32>
    %384 = vector.multi_reduction <add>, %383, %cst_233 [1] : vector<24x24xf32> to vector<24xf32>
    %385 = vector.shape_cast %384 : vector<24xf32> to vector<24x1xf32>
    %386 = tpu.reciprocal %385 {approx = true} : vector<24x1xf32> -> vector<24x1xf32>
    %387 = vector.broadcast %386 : vector<24x1xf32> to vector<24x24xf32>
    %388 = arith.mulf %383, %387 : vector<24x24xf32>
    %389 = vector.extract_strided_slice %304 {offsets = [0, 24], sizes = [24, 8], strides = [1, 1]} : vector<24x32xf32> to vector<24x8xf32>
    %390 = arith.truncf %388 : vector<24x24xf32> to vector<24x24xbf16>
    %391 = arith.truncf %389 : vector<24x8xf32> to vector<24x8xbf16>
    %cst_234 = arith.constant dense<0.000000e+00> : vector<24x8xf32>
    %392 = tpu.matmul %390, %391, %cst_234 {dimension_numbers = #tpu.dot_dimension_numbers<[1], [0], [0], [1], [0, 0, 1, 1], [], []>} : vector<24x24xbf16>, vector<24x8xbf16>, vector<24x8xf32> -> vector<24x8xf32>
    %393 = tpu.concatenate %326, %348, %370, %392 in 1 : vector<24x8xf32>, vector<24x8xf32>, vector<24x8xf32>, vector<24x8xf32> -> vector<24x32xf32>
    %394 = arith.truncf %393 : vector<24x32xf32> to vector<24x32xbf16>
    %395 = arith.truncf %60 : vector<32x32xf32> to vector<32x32xbf16>
    %cst_235 = arith.constant dense<0.000000e+00> : vector<24x32xf32>
    %396 = tpu.matmul %394, %395, %cst_235 {dimension_numbers = #tpu.dot_dimension_numbers<[1], [0], [0], [1], [0, 0, 1, 1], [], []>} : vector<24x32xbf16>, vector<32x32xbf16>, vector<24x32xf32> -> vector<24x32xf32>
    %397 = vector.broadcast %58 : vector<1x32xf32> to vector<24x32xf32>
    %398 = arith.addf %396, %397 : vector<24x32xf32>
    %399 = arith.addf %274, %398 : vector<24x32xf32>
    %cst_236 = arith.constant dense<0.000000e+00> : vector<24xf32>
    %400 = vector.multi_reduction <add>, %399, %cst_236 [1] : vector<24x32xf32> to vector<24xf32>
    %401 = vector.shape_cast %400 : vector<24xf32> to vector<24x1xf32>
    %cst_237 = arith.constant 3.200000e+01 : f32
    %402 = vector.broadcast %cst_237 : f32 to vector<24x1xf32>
    %403 = arith.divf %401, %402 : vector<24x1xf32>
    %404 = vector.broadcast %403 : vector<24x1xf32> to vector<24x32xf32>
    %405 = arith.subf %399, %404 : vector<24x32xf32>
    %406 = arith.mulf %405, %405 : vector<24x32xf32>
    %cst_238 = arith.constant dense<0.000000e+00> : vector<24xf32>
    %407 = vector.multi_reduction <add>, %406, %cst_238 [1] : vector<24x32xf32> to vector<24xf32>
    %408 = vector.shape_cast %407 : vector<24xf32> to vector<24x1xf32>
    %cst_239 = arith.constant 3.200000e+01 : f32
    %409 = vector.broadcast %cst_239 : f32 to vector<24x1xf32>
    %410 = arith.divf %408, %409 : vector<24x1xf32>
    %411 = vector.broadcast %403 : vector<24x1xf32> to vector<24x32xf32>
    %412 = arith.subf %399, %411 : vector<24x32xf32>
    %cst_240 = arith.constant 9.99999997E-7 : f32
    %413 = vector.broadcast %cst_240 : f32 to vector<24x1xf32>
    %414 = arith.addf %410, %413 : vector<24x1xf32>
    %415 = math.rsqrt %414 : vector<24x1xf32>
    %416 = vector.broadcast %415 : vector<24x1xf32> to vector<24x32xf32>
    %417 = arith.mulf %412, %416 : vector<24x32xf32>
    %418 = vector.broadcast %69 : vector<1x32xf32> to vector<24x32xf32>
    %419 = arith.mulf %417, %418 : vector<24x32xf32>
    %420 = vector.broadcast %68 : vector<1x32xf32> to vector<24x32xf32>
    %421 = arith.addf %419, %420 : vector<24x32xf32>
    %422 = arith.truncf %421 : vector<24x32xf32> to vector<24x32xbf16>
    %423 = arith.truncf %64 : vector<32x64xf32> to vector<32x64xbf16>
    %cst_241 = arith.constant dense<0.000000e+00> : vector<24x64xf32>
    %424 = tpu.matmul %422, %423, %cst_241 {dimension_numbers = #tpu.dot_dimension_numbers<[1], [0], [0], [1], [0, 0, 1, 1], [], []>} : vector<24x32xbf16>, vector<32x64xbf16>, vector<24x64xf32> -> vector<24x64xf32>
    %425 = vector.broadcast %62 : vector<1x64xf32> to vector<24x64xf32>
    %426 = arith.addf %424, %425 : vector<24x64xf32>
    %cst_242 = arith.constant 0.000000e+00 : f32
    %427 = vector.broadcast %cst_242 : f32 to vector<24x64xf32>
    %428 = arith.maximumf %426, %427 : vector<24x64xf32>
    %429 = arith.truncf %428 : vector<24x64xf32> to vector<24x64xbf16>
    %430 = arith.truncf %65 : vector<64x32xf32> to vector<64x32xbf16>
    %cst_243 = arith.constant dense<0.000000e+00> : vector<24x32xf32>
    %431 = tpu.matmul %429, %430, %cst_243 {dimension_numbers = #tpu.dot_dimension_numbers<[1], [0], [0], [1], [0, 0, 1, 1], [], []>} : vector<24x64xbf16>, vector<64x32xbf16>, vector<24x32xf32> -> vector<24x32xf32>
    %432 = vector.broadcast %63 : vector<1x32xf32> to vector<24x32xf32>
    %433 = arith.addf %431, %432 : vector<24x32xf32>
    %434 = arith.addf %399, %433 : vector<24x32xf32>
    %cst_244 = arith.constant dense<0.000000e+00> : vector<24xf32>
    %435 = vector.multi_reduction <add>, %434, %cst_244 [1] : vector<24x32xf32> to vector<24xf32>
    %436 = vector.shape_cast %435 : vector<24xf32> to vector<24x1xf32>
    %cst_245 = arith.constant 3.200000e+01 : f32
    %437 = vector.broadcast %cst_245 : f32 to vector<24x1xf32>
    %438 = arith.divf %436, %437 : vector<24x1xf32>
    %439 = vector.broadcast %438 : vector<24x1xf32> to vector<24x32xf32>
    %440 = arith.subf %434, %439 : vector<24x32xf32>
    %441 = arith.mulf %440, %440 : vector<24x32xf32>
    %cst_246 = arith.constant dense<0.000000e+00> : vector<24xf32>
    %442 = vector.multi_reduction <add>, %441, %cst_246 [1] : vector<24x32xf32> to vector<24xf32>
    %443 = vector.shape_cast %442 : vector<24xf32> to vector<24x1xf32>
    %cst_247 = arith.constant 3.200000e+01 : f32
    %444 = vector.broadcast %cst_247 : f32 to vector<24x1xf32>
    %445 = arith.divf %443, %444 : vector<24x1xf32>
    %446 = vector.broadcast %438 : vector<24x1xf32> to vector<24x32xf32>
    %447 = arith.subf %434, %446 : vector<24x32xf32>
    %cst_248 = arith.constant 9.99999997E-7 : f32
    %448 = vector.broadcast %cst_248 : f32 to vector<24x1xf32>
    %449 = arith.addf %445, %448 : vector<24x1xf32>
    %450 = math.rsqrt %449 : vector<24x1xf32>
    %451 = vector.broadcast %450 : vector<24x1xf32> to vector<24x32xf32>
    %452 = arith.mulf %447, %451 : vector<24x32xf32>
    %453 = vector.broadcast %71 : vector<1x32xf32> to vector<24x32xf32>
    %454 = arith.mulf %452, %453 : vector<24x32xf32>
    %455 = vector.broadcast %70 : vector<1x32xf32> to vector<24x32xf32>
    %456 = arith.addf %454, %455 : vector<24x32xf32>
    %c0_249 = arith.constant 0 : index
    %c0_250 = arith.constant 0 : index
    %c0_251 = arith.constant 0 : index
    %457 = vector.load %arg3[%c0_249, %c0_250, %c0_251] : memref<1x1x7xf32, #tpu.memory_space<vmem>>, vector<1x1x7xf32>
    %458 = vector.shape_cast %457 : vector<1x1x7xf32> to vector<1x7xf32>
    %459 = tpu.iota {dimensions = array<i32: 0>} : vector<7x7xi32>
    %460 = tpu.iota {dimensions = array<i32: 1>} : vector<7x7xi32>
    %461 = arith.cmpi sle, %460, %459 : vector<7x7xi32>
    %462 = vector.shape_cast %458 : vector<1x7xf32> to vector<1x7xf32>
    %463 = vector.broadcast %462 : vector<1x7xf32> to vector<7x7xf32>
    %cst_252 = arith.constant 5.000000e-01 : f32
    %464 = vector.broadcast %cst_252 : f32 to vector<7x7xf32>
    %465 = arith.cmpf ogt, %463, %464 : vector<7x7xf32>
    %466 = arith.andi %461, %465 : vector<7x7xi1>
    %cst_253 = arith.constant 0.000000e+00 : f32
    %cst_254 = arith.constant -1.000000e+09 : f32
    %467 = vector.broadcast %cst_253 : f32 to vector<7x7xf32>
    %468 = vector.broadcast %cst_254 : f32 to vector<7x7xf32>
    %469 = arith.select %466, %467, %468 : vector<7x7xi1>, vector<7x7xf32>
    %470 = tpu.iota {dimensions = array<i32: 1>} : vector<7x24xi32>
    %c17_i32_255 = arith.constant 17 : i32
    %471 = vector.broadcast %c17_i32_255 : i32 to vector<7x24xi32>
    %472 = arith.cmpi slt, %470, %471 : vector<7x24xi32>
    %cst_256 = arith.constant 0.000000e+00 : f32
    %cst_257 = arith.constant -1.000000e+09 : f32
    %473 = vector.broadcast %cst_256 : f32 to vector<7x24xf32>
    %474 = vector.broadcast %cst_257 : f32 to vector<7x24xf32>
    %475 = arith.select %472, %473, %474 : vector<7x24xi1>, vector<7x24xf32>
    %c0_258 = arith.constant 0 : index
    %c0_259 = arith.constant 0 : index
    %c0_260 = arith.constant 0 : index
    %476 = vector.load %arg2[%c0_258, %c0_259, %c0_260] : memref<1x7x32xf32, #tpu.memory_space<vmem>>, vector<1x7x32xf32>
    %477 = vector.shape_cast %476 : vector<1x7x32xf32> to vector<7x32xf32>
    %cst_261 = arith.constant dense<0.000000e+00> : vector<7xf32>
    %478 = vector.multi_reduction <add>, %477, %cst_261 [1] : vector<7x32xf32> to vector<7xf32>
    %479 = vector.shape_cast %478 : vector<7xf32> to vector<7x1xf32>
    %cst_262 = arith.constant 3.200000e+01 : f32
    %480 = vector.broadcast %cst_262 : f32 to vector<7x1xf32>
    %481 = arith.divf %479, %480 : vector<7x1xf32>
    %482 = vector.broadcast %481 : vector<7x1xf32> to vector<7x32xf32>
    %483 = arith.subf %477, %482 : vector<7x32xf32>
    %484 = arith.mulf %483, %483 : vector<7x32xf32>
    %cst_263 = arith.constant dense<0.000000e+00> : vector<7xf32>
    %485 = vector.multi_reduction <add>, %484, %cst_263 [1] : vector<7x32xf32> to vector<7xf32>
    %486 = vector.shape_cast %485 : vector<7xf32> to vector<7x1xf32>
    %cst_264 = arith.constant 3.200000e+01 : f32
    %487 = vector.broadcast %cst_264 : f32 to vector<7x1xf32>
    %488 = arith.divf %486, %487 : vector<7x1xf32>
    %489 = vector.broadcast %481 : vector<7x1xf32> to vector<7x32xf32>
    %490 = arith.subf %477, %489 : vector<7x32xf32>
    %cst_265 = arith.constant 9.99999997E-7 : f32
    %491 = vector.broadcast %cst_265 : f32 to vector<7x1xf32>
    %492 = arith.addf %488, %491 : vector<7x1xf32>
    %493 = math.rsqrt %492 : vector<7x1xf32>
    %494 = vector.broadcast %493 : vector<7x1xf32> to vector<7x32xf32>
    %495 = arith.mulf %490, %494 : vector<7x32xf32>
    %496 = vector.broadcast %15 : vector<1x32xf32> to vector<7x32xf32>
    %497 = arith.mulf %495, %496 : vector<7x32xf32>
    %498 = vector.broadcast %14 : vector<1x32xf32> to vector<7x32xf32>
    %499 = arith.addf %497, %498 : vector<7x32xf32>
    %500 = arith.truncf %499 : vector<7x32xf32> to vector<7x32xbf16>
    %501 = arith.truncf %23 : vector<32x96xf32> to vector<32x96xbf16>
    %cst_266 = arith.constant dense<0.000000e+00> : vector<7x96xf32>
    %502 = tpu.matmul %500, %501, %cst_266 {dimension_numbers = #tpu.dot_dimension_numbers<[1], [0], [0], [1], [0, 0, 1, 1], [], []>} : vector<7x32xbf16>, vector<32x96xbf16>, vector<7x96xf32> -> vector<7x96xf32>
    %503 = vector.broadcast %21 : vector<1x96xf32> to vector<7x96xf32>
    %504 = arith.addf %502, %503 : vector<7x96xf32>
    %505 = vector.extract_strided_slice %504 {offsets = [0, 0], sizes = [7, 32], strides = [1, 1]} : vector<7x96xf32> to vector<7x32xf32>
    %506 = vector.extract_strided_slice %504 {offsets = [0, 32], sizes = [7, 32], strides = [1, 1]} : vector<7x96xf32> to vector<7x32xf32>
    %507 = vector.extract_strided_slice %504 {offsets = [0, 64], sizes = [7, 32], strides = [1, 1]} : vector<7x96xf32> to vector<7x32xf32>
    %508 = vector.extract_strided_slice %505 {offsets = [0, 0], sizes = [7, 8], strides = [1, 1]} : vector<7x32xf32> to vector<7x8xf32>
    %509 = arith.truncf %508 : vector<7x8xf32> to vector<7x8xbf16>
    %510 = vector.extract_strided_slice %506 {offsets = [0, 0], sizes = [7, 8], strides = [1, 1]} : vector<7x32xf32> to vector<7x8xf32>
    %511 = arith.truncf %510 : vector<7x8xf32> to vector<7x8xbf16>
    %cst_267 = arith.constant dense<0.000000e+00> : vector<7x7xf32>
    %512 = tpu.matmul %509, %511, %cst_267 {dimension_numbers = #tpu.dot_dimension_numbers<[1], [1], [0], [0], [0, 0, 1, 0], [], []>} : vector<7x8xbf16>, vector<7x8xbf16>, vector<7x7xf32> -> vector<7x7xf32>
    %cst_268 = arith.constant 0.353553385 : f32
    %513 = vector.broadcast %cst_268 : f32 to vector<7x7xf32>
    %514 = arith.mulf %512, %513 : vector<7x7xf32>
    %515 = arith.addf %514, %469 : vector<7x7xf32>
    %cst_269 = arith.constant dense<0xFF800000> : vector<7xf32>
    %516 = vector.multi_reduction <maximumf>, %515, %cst_269 [1] : vector<7x7xf32> to vector<7xf32>
    %517 = vector.shape_cast %516 : vector<7xf32> to vector<7x1xf32>
    %518 = vector.broadcast %517 : vector<7x1xf32> to vector<7x7xf32>
    %519 = arith.subf %515, %518 : vector<7x7xf32>
    %520 = math.exp %519 : vector<7x7xf32>
    %cst_270 = arith.constant dense<0.000000e+00> : vector<7xf32>
    %521 = vector.multi_reduction <add>, %520, %cst_270 [1] : vector<7x7xf32> to vector<7xf32>
    %522 = vector.shape_cast %521 : vector<7xf32> to vector<7x1xf32>
    %523 = tpu.reciprocal %522 {approx = true} : vector<7x1xf32> -> vector<7x1xf32>
    %524 = vector.broadcast %523 : vector<7x1xf32> to vector<7x7xf32>
    %525 = arith.mulf %520, %524 : vector<7x7xf32>
    %526 = vector.extract_strided_slice %507 {offsets = [0, 0], sizes = [7, 8], strides = [1, 1]} : vector<7x32xf32> to vector<7x8xf32>
    %527 = arith.truncf %525 : vector<7x7xf32> to vector<7x7xbf16>
    %528 = arith.truncf %526 : vector<7x8xf32> to vector<7x8xbf16>
    %cst_271 = arith.constant dense<0.000000e+00> : vector<7x8xf32>
    %529 = tpu.matmul %527, %528, %cst_271 {dimension_numbers = #tpu.dot_dimension_numbers<[1], [0], [0], [1], [0, 0, 1, 1], [], []>} : vector<7x7xbf16>, vector<7x8xbf16>, vector<7x8xf32> -> vector<7x8xf32>
    %530 = vector.extract_strided_slice %505 {offsets = [0, 8], sizes = [7, 8], strides = [1, 1]} : vector<7x32xf32> to vector<7x8xf32>
    %531 = arith.truncf %530 : vector<7x8xf32> to vector<7x8xbf16>
    %532 = vector.extract_strided_slice %506 {offsets = [0, 8], sizes = [7, 8], strides = [1, 1]} : vector<7x32xf32> to vector<7x8xf32>
    %533 = arith.truncf %532 : vector<7x8xf32> to vector<7x8xbf16>
    %cst_272 = arith.constant dense<0.000000e+00> : vector<7x7xf32>
    %534 = tpu.matmul %531, %533, %cst_272 {dimension_numbers = #tpu.dot_dimension_numbers<[1], [1], [0], [0], [0, 0, 1, 0], [], []>} : vector<7x8xbf16>, vector<7x8xbf16>, vector<7x7xf32> -> vector<7x7xf32>
    %cst_273 = arith.constant 0.353553385 : f32
    %535 = vector.broadcast %cst_273 : f32 to vector<7x7xf32>
    %536 = arith.mulf %534, %535 : vector<7x7xf32>
    %537 = arith.addf %536, %469 : vector<7x7xf32>
    %cst_274 = arith.constant dense<0xFF800000> : vector<7xf32>
    %538 = vector.multi_reduction <maximumf>, %537, %cst_274 [1] : vector<7x7xf32> to vector<7xf32>
    %539 = vector.shape_cast %538 : vector<7xf32> to vector<7x1xf32>
    %540 = vector.broadcast %539 : vector<7x1xf32> to vector<7x7xf32>
    %541 = arith.subf %537, %540 : vector<7x7xf32>
    %542 = math.exp %541 : vector<7x7xf32>
    %cst_275 = arith.constant dense<0.000000e+00> : vector<7xf32>
    %543 = vector.multi_reduction <add>, %542, %cst_275 [1] : vector<7x7xf32> to vector<7xf32>
    %544 = vector.shape_cast %543 : vector<7xf32> to vector<7x1xf32>
    %545 = tpu.reciprocal %544 {approx = true} : vector<7x1xf32> -> vector<7x1xf32>
    %546 = vector.broadcast %545 : vector<7x1xf32> to vector<7x7xf32>
    %547 = arith.mulf %542, %546 : vector<7x7xf32>
    %548 = vector.extract_strided_slice %507 {offsets = [0, 8], sizes = [7, 8], strides = [1, 1]} : vector<7x32xf32> to vector<7x8xf32>
    %549 = arith.truncf %547 : vector<7x7xf32> to vector<7x7xbf16>
    %550 = arith.truncf %548 : vector<7x8xf32> to vector<7x8xbf16>
    %cst_276 = arith.constant dense<0.000000e+00> : vector<7x8xf32>
    %551 = tpu.matmul %549, %550, %cst_276 {dimension_numbers = #tpu.dot_dimension_numbers<[1], [0], [0], [1], [0, 0, 1, 1], [], []>} : vector<7x7xbf16>, vector<7x8xbf16>, vector<7x8xf32> -> vector<7x8xf32>
    %552 = vector.extract_strided_slice %505 {offsets = [0, 16], sizes = [7, 8], strides = [1, 1]} : vector<7x32xf32> to vector<7x8xf32>
    %553 = arith.truncf %552 : vector<7x8xf32> to vector<7x8xbf16>
    %554 = vector.extract_strided_slice %506 {offsets = [0, 16], sizes = [7, 8], strides = [1, 1]} : vector<7x32xf32> to vector<7x8xf32>
    %555 = arith.truncf %554 : vector<7x8xf32> to vector<7x8xbf16>
    %cst_277 = arith.constant dense<0.000000e+00> : vector<7x7xf32>
    %556 = tpu.matmul %553, %555, %cst_277 {dimension_numbers = #tpu.dot_dimension_numbers<[1], [1], [0], [0], [0, 0, 1, 0], [], []>} : vector<7x8xbf16>, vector<7x8xbf16>, vector<7x7xf32> -> vector<7x7xf32>
    %cst_278 = arith.constant 0.353553385 : f32
    %557 = vector.broadcast %cst_278 : f32 to vector<7x7xf32>
    %558 = arith.mulf %556, %557 : vector<7x7xf32>
    %559 = arith.addf %558, %469 : vector<7x7xf32>
    %cst_279 = arith.constant dense<0xFF800000> : vector<7xf32>
    %560 = vector.multi_reduction <maximumf>, %559, %cst_279 [1] : vector<7x7xf32> to vector<7xf32>
    %561 = vector.shape_cast %560 : vector<7xf32> to vector<7x1xf32>
    %562 = vector.broadcast %561 : vector<7x1xf32> to vector<7x7xf32>
    %563 = arith.subf %559, %562 : vector<7x7xf32>
    %564 = math.exp %563 : vector<7x7xf32>
    %cst_280 = arith.constant dense<0.000000e+00> : vector<7xf32>
    %565 = vector.multi_reduction <add>, %564, %cst_280 [1] : vector<7x7xf32> to vector<7xf32>
    %566 = vector.shape_cast %565 : vector<7xf32> to vector<7x1xf32>
    %567 = tpu.reciprocal %566 {approx = true} : vector<7x1xf32> -> vector<7x1xf32>
    %568 = vector.broadcast %567 : vector<7x1xf32> to vector<7x7xf32>
    %569 = arith.mulf %564, %568 : vector<7x7xf32>
    %570 = vector.extract_strided_slice %507 {offsets = [0, 16], sizes = [7, 8], strides = [1, 1]} : vector<7x32xf32> to vector<7x8xf32>
    %571 = arith.truncf %569 : vector<7x7xf32> to vector<7x7xbf16>
    %572 = arith.truncf %570 : vector<7x8xf32> to vector<7x8xbf16>
    %cst_281 = arith.constant dense<0.000000e+00> : vector<7x8xf32>
    %573 = tpu.matmul %571, %572, %cst_281 {dimension_numbers = #tpu.dot_dimension_numbers<[1], [0], [0], [1], [0, 0, 1, 1], [], []>} : vector<7x7xbf16>, vector<7x8xbf16>, vector<7x8xf32> -> vector<7x8xf32>
    %574 = vector.extract_strided_slice %505 {offsets = [0, 24], sizes = [7, 8], strides = [1, 1]} : vector<7x32xf32> to vector<7x8xf32>
    %575 = arith.truncf %574 : vector<7x8xf32> to vector<7x8xbf16>
    %576 = vector.extract_strided_slice %506 {offsets = [0, 24], sizes = [7, 8], strides = [1, 1]} : vector<7x32xf32> to vector<7x8xf32>
    %577 = arith.truncf %576 : vector<7x8xf32> to vector<7x8xbf16>
    %cst_282 = arith.constant dense<0.000000e+00> : vector<7x7xf32>
    %578 = tpu.matmul %575, %577, %cst_282 {dimension_numbers = #tpu.dot_dimension_numbers<[1], [1], [0], [0], [0, 0, 1, 0], [], []>} : vector<7x8xbf16>, vector<7x8xbf16>, vector<7x7xf32> -> vector<7x7xf32>
    %cst_283 = arith.constant 0.353553385 : f32
    %579 = vector.broadcast %cst_283 : f32 to vector<7x7xf32>
    %580 = arith.mulf %578, %579 : vector<7x7xf32>
    %581 = arith.addf %580, %469 : vector<7x7xf32>
    %cst_284 = arith.constant dense<0xFF800000> : vector<7xf32>
    %582 = vector.multi_reduction <maximumf>, %581, %cst_284 [1] : vector<7x7xf32> to vector<7xf32>
    %583 = vector.shape_cast %582 : vector<7xf32> to vector<7x1xf32>
    %584 = vector.broadcast %583 : vector<7x1xf32> to vector<7x7xf32>
    %585 = arith.subf %581, %584 : vector<7x7xf32>
    %586 = math.exp %585 : vector<7x7xf32>
    %cst_285 = arith.constant dense<0.000000e+00> : vector<7xf32>
    %587 = vector.multi_reduction <add>, %586, %cst_285 [1] : vector<7x7xf32> to vector<7xf32>
    %588 = vector.shape_cast %587 : vector<7xf32> to vector<7x1xf32>
    %589 = tpu.reciprocal %588 {approx = true} : vector<7x1xf32> -> vector<7x1xf32>
    %590 = vector.broadcast %589 : vector<7x1xf32> to vector<7x7xf32>
    %591 = arith.mulf %586, %590 : vector<7x7xf32>
    %592 = vector.extract_strided_slice %507 {offsets = [0, 24], sizes = [7, 8], strides = [1, 1]} : vector<7x32xf32> to vector<7x8xf32>
    %593 = arith.truncf %591 : vector<7x7xf32> to vector<7x7xbf16>
    %594 = arith.truncf %592 : vector<7x8xf32> to vector<7x8xbf16>
    %cst_286 = arith.constant dense<0.000000e+00> : vector<7x8xf32>
    %595 = tpu.matmul %593, %594, %cst_286 {dimension_numbers = #tpu.dot_dimension_numbers<[1], [0], [0], [1], [0, 0, 1, 1], [], []>} : vector<7x7xbf16>, vector<7x8xbf16>, vector<7x8xf32> -> vector<7x8xf32>
    %596 = tpu.concatenate %529, %551, %573, %595 in 1 : vector<7x8xf32>, vector<7x8xf32>, vector<7x8xf32>, vector<7x8xf32> -> vector<7x32xf32>
    %597 = arith.truncf %596 : vector<7x32xf32> to vector<7x32xbf16>
    %598 = arith.truncf %22 : vector<32x32xf32> to vector<32x32xbf16>
    %cst_287 = arith.constant dense<0.000000e+00> : vector<7x32xf32>
    %599 = tpu.matmul %597, %598, %cst_287 {dimension_numbers = #tpu.dot_dimension_numbers<[1], [0], [0], [1], [0, 0, 1, 1], [], []>} : vector<7x32xbf16>, vector<32x32xbf16>, vector<7x32xf32> -> vector<7x32xf32>
    %600 = vector.broadcast %20 : vector<1x32xf32> to vector<7x32xf32>
    %601 = arith.addf %599, %600 : vector<7x32xf32>
    %602 = arith.addf %477, %601 : vector<7x32xf32>
    %cst_288 = arith.constant dense<0.000000e+00> : vector<7xf32>
    %603 = vector.multi_reduction <add>, %602, %cst_288 [1] : vector<7x32xf32> to vector<7xf32>
    %604 = vector.shape_cast %603 : vector<7xf32> to vector<7x1xf32>
    %cst_289 = arith.constant 3.200000e+01 : f32
    %605 = vector.broadcast %cst_289 : f32 to vector<7x1xf32>
    %606 = arith.divf %604, %605 : vector<7x1xf32>
    %607 = vector.broadcast %606 : vector<7x1xf32> to vector<7x32xf32>
    %608 = arith.subf %602, %607 : vector<7x32xf32>
    %609 = arith.mulf %608, %608 : vector<7x32xf32>
    %cst_290 = arith.constant dense<0.000000e+00> : vector<7xf32>
    %610 = vector.multi_reduction <add>, %609, %cst_290 [1] : vector<7x32xf32> to vector<7xf32>
    %611 = vector.shape_cast %610 : vector<7xf32> to vector<7x1xf32>
    %cst_291 = arith.constant 3.200000e+01 : f32
    %612 = vector.broadcast %cst_291 : f32 to vector<7x1xf32>
    %613 = arith.divf %611, %612 : vector<7x1xf32>
    %614 = vector.broadcast %606 : vector<7x1xf32> to vector<7x32xf32>
    %615 = arith.subf %602, %614 : vector<7x32xf32>
    %cst_292 = arith.constant 9.99999997E-7 : f32
    %616 = vector.broadcast %cst_292 : f32 to vector<7x1xf32>
    %617 = arith.addf %613, %616 : vector<7x1xf32>
    %618 = math.rsqrt %617 : vector<7x1xf32>
    %619 = vector.broadcast %618 : vector<7x1xf32> to vector<7x32xf32>
    %620 = arith.mulf %615, %619 : vector<7x32xf32>
    %621 = vector.broadcast %17 : vector<1x32xf32> to vector<7x32xf32>
    %622 = arith.mulf %620, %621 : vector<7x32xf32>
    %623 = vector.broadcast %16 : vector<1x32xf32> to vector<7x32xf32>
    %624 = arith.addf %622, %623 : vector<7x32xf32>
    %625 = arith.truncf %624 : vector<7x32xf32> to vector<7x32xbf16>
    %626 = arith.truncf %9 : vector<32x32xf32> to vector<32x32xbf16>
    %cst_293 = arith.constant dense<0.000000e+00> : vector<7x32xf32>
    %627 = tpu.matmul %625, %626, %cst_293 {dimension_numbers = #tpu.dot_dimension_numbers<[1], [0], [0], [1], [0, 0, 1, 1], [], []>} : vector<7x32xbf16>, vector<32x32xbf16>, vector<7x32xf32> -> vector<7x32xf32>
    %628 = vector.broadcast %6 : vector<1x32xf32> to vector<7x32xf32>
    %629 = arith.addf %627, %628 : vector<7x32xf32>
    %630 = arith.truncf %456 : vector<24x32xf32> to vector<24x32xbf16>
    %631 = arith.truncf %7 : vector<32x64xf32> to vector<32x64xbf16>
    %cst_294 = arith.constant dense<0.000000e+00> : vector<24x64xf32>
    %632 = tpu.matmul %630, %631, %cst_294 {dimension_numbers = #tpu.dot_dimension_numbers<[1], [0], [0], [1], [0, 0, 1, 1], [], []>} : vector<24x32xbf16>, vector<32x64xbf16>, vector<24x64xf32> -> vector<24x64xf32>
    %633 = vector.broadcast %4 : vector<1x64xf32> to vector<24x64xf32>
    %634 = arith.addf %632, %633 : vector<24x64xf32>
    %635 = vector.extract_strided_slice %634 {offsets = [0, 0], sizes = [24, 32], strides = [1, 1]} : vector<24x64xf32> to vector<24x32xf32>
    %636 = vector.extract_strided_slice %634 {offsets = [0, 32], sizes = [24, 32], strides = [1, 1]} : vector<24x64xf32> to vector<24x32xf32>
    %637 = vector.extract_strided_slice %629 {offsets = [0, 0], sizes = [7, 8], strides = [1, 1]} : vector<7x32xf32> to vector<7x8xf32>
    %638 = arith.truncf %637 : vector<7x8xf32> to vector<7x8xbf16>
    %639 = vector.extract_strided_slice %635 {offsets = [0, 0], sizes = [24, 8], strides = [1, 1]} : vector<24x32xf32> to vector<24x8xf32>
    %640 = arith.truncf %639 : vector<24x8xf32> to vector<24x8xbf16>
    %cst_295 = arith.constant dense<0.000000e+00> : vector<7x24xf32>
    %641 = tpu.matmul %638, %640, %cst_295 {dimension_numbers = #tpu.dot_dimension_numbers<[1], [1], [0], [0], [0, 0, 1, 0], [], []>} : vector<7x8xbf16>, vector<24x8xbf16>, vector<7x24xf32> -> vector<7x24xf32>
    %cst_296 = arith.constant 0.353553385 : f32
    %642 = vector.broadcast %cst_296 : f32 to vector<7x24xf32>
    %643 = arith.mulf %641, %642 : vector<7x24xf32>
    %644 = arith.addf %643, %475 : vector<7x24xf32>
    %cst_297 = arith.constant dense<0xFF800000> : vector<7xf32>
    %645 = vector.multi_reduction <maximumf>, %644, %cst_297 [1] : vector<7x24xf32> to vector<7xf32>
    %646 = vector.shape_cast %645 : vector<7xf32> to vector<7x1xf32>
    %647 = vector.broadcast %646 : vector<7x1xf32> to vector<7x24xf32>
    %648 = arith.subf %644, %647 : vector<7x24xf32>
    %649 = math.exp %648 : vector<7x24xf32>
    %cst_298 = arith.constant dense<0.000000e+00> : vector<7xf32>
    %650 = vector.multi_reduction <add>, %649, %cst_298 [1] : vector<7x24xf32> to vector<7xf32>
    %651 = vector.shape_cast %650 : vector<7xf32> to vector<7x1xf32>
    %652 = tpu.reciprocal %651 {approx = true} : vector<7x1xf32> -> vector<7x1xf32>
    %653 = vector.broadcast %652 : vector<7x1xf32> to vector<7x24xf32>
    %654 = arith.mulf %649, %653 : vector<7x24xf32>
    %655 = vector.extract_strided_slice %636 {offsets = [0, 0], sizes = [24, 8], strides = [1, 1]} : vector<24x32xf32> to vector<24x8xf32>
    %656 = arith.truncf %654 : vector<7x24xf32> to vector<7x24xbf16>
    %657 = arith.truncf %655 : vector<24x8xf32> to vector<24x8xbf16>
    %cst_299 = arith.constant dense<0.000000e+00> : vector<7x8xf32>
    %658 = tpu.matmul %656, %657, %cst_299 {dimension_numbers = #tpu.dot_dimension_numbers<[1], [0], [0], [1], [0, 0, 1, 1], [], []>} : vector<7x24xbf16>, vector<24x8xbf16>, vector<7x8xf32> -> vector<7x8xf32>
    %659 = vector.extract_strided_slice %629 {offsets = [0, 8], sizes = [7, 8], strides = [1, 1]} : vector<7x32xf32> to vector<7x8xf32>
    %660 = arith.truncf %659 : vector<7x8xf32> to vector<7x8xbf16>
    %661 = vector.extract_strided_slice %635 {offsets = [0, 8], sizes = [24, 8], strides = [1, 1]} : vector<24x32xf32> to vector<24x8xf32>
    %662 = arith.truncf %661 : vector<24x8xf32> to vector<24x8xbf16>
    %cst_300 = arith.constant dense<0.000000e+00> : vector<7x24xf32>
    %663 = tpu.matmul %660, %662, %cst_300 {dimension_numbers = #tpu.dot_dimension_numbers<[1], [1], [0], [0], [0, 0, 1, 0], [], []>} : vector<7x8xbf16>, vector<24x8xbf16>, vector<7x24xf32> -> vector<7x24xf32>
    %cst_301 = arith.constant 0.353553385 : f32
    %664 = vector.broadcast %cst_301 : f32 to vector<7x24xf32>
    %665 = arith.mulf %663, %664 : vector<7x24xf32>
    %666 = arith.addf %665, %475 : vector<7x24xf32>
    %cst_302 = arith.constant dense<0xFF800000> : vector<7xf32>
    %667 = vector.multi_reduction <maximumf>, %666, %cst_302 [1] : vector<7x24xf32> to vector<7xf32>
    %668 = vector.shape_cast %667 : vector<7xf32> to vector<7x1xf32>
    %669 = vector.broadcast %668 : vector<7x1xf32> to vector<7x24xf32>
    %670 = arith.subf %666, %669 : vector<7x24xf32>
    %671 = math.exp %670 : vector<7x24xf32>
    %cst_303 = arith.constant dense<0.000000e+00> : vector<7xf32>
    %672 = vector.multi_reduction <add>, %671, %cst_303 [1] : vector<7x24xf32> to vector<7xf32>
    %673 = vector.shape_cast %672 : vector<7xf32> to vector<7x1xf32>
    %674 = tpu.reciprocal %673 {approx = true} : vector<7x1xf32> -> vector<7x1xf32>
    %675 = vector.broadcast %674 : vector<7x1xf32> to vector<7x24xf32>
    %676 = arith.mulf %671, %675 : vector<7x24xf32>
    %677 = vector.extract_strided_slice %636 {offsets = [0, 8], sizes = [24, 8], strides = [1, 1]} : vector<24x32xf32> to vector<24x8xf32>
    %678 = arith.truncf %676 : vector<7x24xf32> to vector<7x24xbf16>
    %679 = arith.truncf %677 : vector<24x8xf32> to vector<24x8xbf16>
    %cst_304 = arith.constant dense<0.000000e+00> : vector<7x8xf32>
    %680 = tpu.matmul %678, %679, %cst_304 {dimension_numbers = #tpu.dot_dimension_numbers<[1], [0], [0], [1], [0, 0, 1, 1], [], []>} : vector<7x24xbf16>, vector<24x8xbf16>, vector<7x8xf32> -> vector<7x8xf32>
    %681 = vector.extract_strided_slice %629 {offsets = [0, 16], sizes = [7, 8], strides = [1, 1]} : vector<7x32xf32> to vector<7x8xf32>
    %682 = arith.truncf %681 : vector<7x8xf32> to vector<7x8xbf16>
    %683 = vector.extract_strided_slice %635 {offsets = [0, 16], sizes = [24, 8], strides = [1, 1]} : vector<24x32xf32> to vector<24x8xf32>
    %684 = arith.truncf %683 : vector<24x8xf32> to vector<24x8xbf16>
    %cst_305 = arith.constant dense<0.000000e+00> : vector<7x24xf32>
    %685 = tpu.matmul %682, %684, %cst_305 {dimension_numbers = #tpu.dot_dimension_numbers<[1], [1], [0], [0], [0, 0, 1, 0], [], []>} : vector<7x8xbf16>, vector<24x8xbf16>, vector<7x24xf32> -> vector<7x24xf32>
    %cst_306 = arith.constant 0.353553385 : f32
    %686 = vector.broadcast %cst_306 : f32 to vector<7x24xf32>
    %687 = arith.mulf %685, %686 : vector<7x24xf32>
    %688 = arith.addf %687, %475 : vector<7x24xf32>
    %cst_307 = arith.constant dense<0xFF800000> : vector<7xf32>
    %689 = vector.multi_reduction <maximumf>, %688, %cst_307 [1] : vector<7x24xf32> to vector<7xf32>
    %690 = vector.shape_cast %689 : vector<7xf32> to vector<7x1xf32>
    %691 = vector.broadcast %690 : vector<7x1xf32> to vector<7x24xf32>
    %692 = arith.subf %688, %691 : vector<7x24xf32>
    %693 = math.exp %692 : vector<7x24xf32>
    %cst_308 = arith.constant dense<0.000000e+00> : vector<7xf32>
    %694 = vector.multi_reduction <add>, %693, %cst_308 [1] : vector<7x24xf32> to vector<7xf32>
    %695 = vector.shape_cast %694 : vector<7xf32> to vector<7x1xf32>
    %696 = tpu.reciprocal %695 {approx = true} : vector<7x1xf32> -> vector<7x1xf32>
    %697 = vector.broadcast %696 : vector<7x1xf32> to vector<7x24xf32>
    %698 = arith.mulf %693, %697 : vector<7x24xf32>
    %699 = vector.extract_strided_slice %636 {offsets = [0, 16], sizes = [24, 8], strides = [1, 1]} : vector<24x32xf32> to vector<24x8xf32>
    %700 = arith.truncf %698 : vector<7x24xf32> to vector<7x24xbf16>
    %701 = arith.truncf %699 : vector<24x8xf32> to vector<24x8xbf16>
    %cst_309 = arith.constant dense<0.000000e+00> : vector<7x8xf32>
    %702 = tpu.matmul %700, %701, %cst_309 {dimension_numbers = #tpu.dot_dimension_numbers<[1], [0], [0], [1], [0, 0, 1, 1], [], []>} : vector<7x24xbf16>, vector<24x8xbf16>, vector<7x8xf32> -> vector<7x8xf32>
    %703 = vector.extract_strided_slice %629 {offsets = [0, 24], sizes = [7, 8], strides = [1, 1]} : vector<7x32xf32> to vector<7x8xf32>
    %704 = arith.truncf %703 : vector<7x8xf32> to vector<7x8xbf16>
    %705 = vector.extract_strided_slice %635 {offsets = [0, 24], sizes = [24, 8], strides = [1, 1]} : vector<24x32xf32> to vector<24x8xf32>
    %706 = arith.truncf %705 : vector<24x8xf32> to vector<24x8xbf16>
    %cst_310 = arith.constant dense<0.000000e+00> : vector<7x24xf32>
    %707 = tpu.matmul %704, %706, %cst_310 {dimension_numbers = #tpu.dot_dimension_numbers<[1], [1], [0], [0], [0, 0, 1, 0], [], []>} : vector<7x8xbf16>, vector<24x8xbf16>, vector<7x24xf32> -> vector<7x24xf32>
    %cst_311 = arith.constant 0.353553385 : f32
    %708 = vector.broadcast %cst_311 : f32 to vector<7x24xf32>
    %709 = arith.mulf %707, %708 : vector<7x24xf32>
    %710 = arith.addf %709, %475 : vector<7x24xf32>
    %cst_312 = arith.constant dense<0xFF800000> : vector<7xf32>
    %711 = vector.multi_reduction <maximumf>, %710, %cst_312 [1] : vector<7x24xf32> to vector<7xf32>
    %712 = vector.shape_cast %711 : vector<7xf32> to vector<7x1xf32>
    %713 = vector.broadcast %712 : vector<7x1xf32> to vector<7x24xf32>
    %714 = arith.subf %710, %713 : vector<7x24xf32>
    %715 = math.exp %714 : vector<7x24xf32>
    %cst_313 = arith.constant dense<0.000000e+00> : vector<7xf32>
    %716 = vector.multi_reduction <add>, %715, %cst_313 [1] : vector<7x24xf32> to vector<7xf32>
    %717 = vector.shape_cast %716 : vector<7xf32> to vector<7x1xf32>
    %718 = tpu.reciprocal %717 {approx = true} : vector<7x1xf32> -> vector<7x1xf32>
    %719 = vector.broadcast %718 : vector<7x1xf32> to vector<7x24xf32>
    %720 = arith.mulf %715, %719 : vector<7x24xf32>
    %721 = vector.extract_strided_slice %636 {offsets = [0, 24], sizes = [24, 8], strides = [1, 1]} : vector<24x32xf32> to vector<24x8xf32>
    %722 = arith.truncf %720 : vector<7x24xf32> to vector<7x24xbf16>
    %723 = arith.truncf %721 : vector<24x8xf32> to vector<24x8xbf16>
    %cst_314 = arith.constant dense<0.000000e+00> : vector<7x8xf32>
    %724 = tpu.matmul %722, %723, %cst_314 {dimension_numbers = #tpu.dot_dimension_numbers<[1], [0], [0], [1], [0, 0, 1, 1], [], []>} : vector<7x24xbf16>, vector<24x8xbf16>, vector<7x8xf32> -> vector<7x8xf32>
    %725 = tpu.concatenate %658, %680, %702, %724 in 1 : vector<7x8xf32>, vector<7x8xf32>, vector<7x8xf32>, vector<7x8xf32> -> vector<7x32xf32>
    %726 = arith.truncf %725 : vector<7x32xf32> to vector<7x32xbf16>
    %727 = arith.truncf %8 : vector<32x32xf32> to vector<32x32xbf16>
    %cst_315 = arith.constant dense<0.000000e+00> : vector<7x32xf32>
    %728 = tpu.matmul %726, %727, %cst_315 {dimension_numbers = #tpu.dot_dimension_numbers<[1], [0], [0], [1], [0, 0, 1, 1], [], []>} : vector<7x32xbf16>, vector<32x32xbf16>, vector<7x32xf32> -> vector<7x32xf32>
    %729 = vector.broadcast %5 : vector<1x32xf32> to vector<7x32xf32>
    %730 = arith.addf %728, %729 : vector<7x32xf32>
    %731 = arith.addf %602, %730 : vector<7x32xf32>
    %cst_316 = arith.constant dense<0.000000e+00> : vector<7xf32>
    %732 = vector.multi_reduction <add>, %731, %cst_316 [1] : vector<7x32xf32> to vector<7xf32>
    %733 = vector.shape_cast %732 : vector<7xf32> to vector<7x1xf32>
    %cst_317 = arith.constant 3.200000e+01 : f32
    %734 = vector.broadcast %cst_317 : f32 to vector<7x1xf32>
    %735 = arith.divf %733, %734 : vector<7x1xf32>
    %736 = vector.broadcast %735 : vector<7x1xf32> to vector<7x32xf32>
    %737 = arith.subf %731, %736 : vector<7x32xf32>
    %738 = arith.mulf %737, %737 : vector<7x32xf32>
    %cst_318 = arith.constant dense<0.000000e+00> : vector<7xf32>
    %739 = vector.multi_reduction <add>, %738, %cst_318 [1] : vector<7x32xf32> to vector<7xf32>
    %740 = vector.shape_cast %739 : vector<7xf32> to vector<7x1xf32>
    %cst_319 = arith.constant 3.200000e+01 : f32
    %741 = vector.broadcast %cst_319 : f32 to vector<7x1xf32>
    %742 = arith.divf %740, %741 : vector<7x1xf32>
    %743 = vector.broadcast %735 : vector<7x1xf32> to vector<7x32xf32>
    %744 = arith.subf %731, %743 : vector<7x32xf32>
    %cst_320 = arith.constant 9.99999997E-7 : f32
    %745 = vector.broadcast %cst_320 : f32 to vector<7x1xf32>
    %746 = arith.addf %742, %745 : vector<7x1xf32>
    %747 = math.rsqrt %746 : vector<7x1xf32>
    %748 = vector.broadcast %747 : vector<7x1xf32> to vector<7x32xf32>
    %749 = arith.mulf %744, %748 : vector<7x32xf32>
    %750 = vector.broadcast %19 : vector<1x32xf32> to vector<7x32xf32>
    %751 = arith.mulf %749, %750 : vector<7x32xf32>
    %752 = vector.broadcast %18 : vector<1x32xf32> to vector<7x32xf32>
    %753 = arith.addf %751, %752 : vector<7x32xf32>
    %754 = arith.truncf %753 : vector<7x32xf32> to vector<7x32xbf16>
    %755 = arith.truncf %12 : vector<32x64xf32> to vector<32x64xbf16>
    %cst_321 = arith.constant dense<0.000000e+00> : vector<7x64xf32>
    %756 = tpu.matmul %754, %755, %cst_321 {dimension_numbers = #tpu.dot_dimension_numbers<[1], [0], [0], [1], [0, 0, 1, 1], [], []>} : vector<7x32xbf16>, vector<32x64xbf16>, vector<7x64xf32> -> vector<7x64xf32>
    %757 = vector.broadcast %10 : vector<1x64xf32> to vector<7x64xf32>
    %758 = arith.addf %756, %757 : vector<7x64xf32>
    %cst_322 = arith.constant 0.000000e+00 : f32
    %759 = vector.broadcast %cst_322 : f32 to vector<7x64xf32>
    %760 = arith.maximumf %758, %759 : vector<7x64xf32>
    %761 = arith.truncf %760 : vector<7x64xf32> to vector<7x64xbf16>
    %762 = arith.truncf %13 : vector<64x32xf32> to vector<64x32xbf16>
    %cst_323 = arith.constant dense<0.000000e+00> : vector<7x32xf32>
    %763 = tpu.matmul %761, %762, %cst_323 {dimension_numbers = #tpu.dot_dimension_numbers<[1], [0], [0], [1], [0, 0, 1, 1], [], []>} : vector<7x64xbf16>, vector<64x32xbf16>, vector<7x32xf32> -> vector<7x32xf32>
    %764 = vector.broadcast %11 : vector<1x32xf32> to vector<7x32xf32>
    %765 = arith.addf %763, %764 : vector<7x32xf32>
    %766 = arith.addf %731, %765 : vector<7x32xf32>
    %cst_324 = arith.constant dense<0.000000e+00> : vector<7xf32>
    %767 = vector.multi_reduction <add>, %766, %cst_324 [1] : vector<7x32xf32> to vector<7xf32>
    %768 = vector.shape_cast %767 : vector<7xf32> to vector<7x1xf32>
    %cst_325 = arith.constant 3.200000e+01 : f32
    %769 = vector.broadcast %cst_325 : f32 to vector<7x1xf32>
    %770 = arith.divf %768, %769 : vector<7x1xf32>
    %771 = vector.broadcast %770 : vector<7x1xf32> to vector<7x32xf32>
    %772 = arith.subf %766, %771 : vector<7x32xf32>
    %773 = arith.mulf %772, %772 : vector<7x32xf32>
    %cst_326 = arith.constant dense<0.000000e+00> : vector<7xf32>
    %774 = vector.multi_reduction <add>, %773, %cst_326 [1] : vector<7x32xf32> to vector<7xf32>
    %775 = vector.shape_cast %774 : vector<7xf32> to vector<7x1xf32>
    %cst_327 = arith.constant 3.200000e+01 : f32
    %776 = vector.broadcast %cst_327 : f32 to vector<7x1xf32>
    %777 = arith.divf %775, %776 : vector<7x1xf32>
    %778 = vector.broadcast %770 : vector<7x1xf32> to vector<7x32xf32>
    %779 = arith.subf %766, %778 : vector<7x32xf32>
    %cst_328 = arith.constant 9.99999997E-7 : f32
    %780 = vector.broadcast %cst_328 : f32 to vector<7x1xf32>
    %781 = arith.addf %777, %780 : vector<7x1xf32>
    %782 = math.rsqrt %781 : vector<7x1xf32>
    %783 = vector.broadcast %782 : vector<7x1xf32> to vector<7x32xf32>
    %784 = arith.mulf %779, %783 : vector<7x32xf32>
    %785 = vector.broadcast %35 : vector<1x32xf32> to vector<7x32xf32>
    %786 = arith.mulf %784, %785 : vector<7x32xf32>
    %787 = vector.broadcast %34 : vector<1x32xf32> to vector<7x32xf32>
    %788 = arith.addf %786, %787 : vector<7x32xf32>
    %789 = arith.truncf %788 : vector<7x32xf32> to vector<7x32xbf16>
    %790 = arith.truncf %43 : vector<32x96xf32> to vector<32x96xbf16>
    %cst_329 = arith.constant dense<0.000000e+00> : vector<7x96xf32>
    %791 = tpu.matmul %789, %790, %cst_329 {dimension_numbers = #tpu.dot_dimension_numbers<[1], [0], [0], [1], [0, 0, 1, 1], [], []>} : vector<7x32xbf16>, vector<32x96xbf16>, vector<7x96xf32> -> vector<7x96xf32>
    %792 = vector.broadcast %41 : vector<1x96xf32> to vector<7x96xf32>
    %793 = arith.addf %791, %792 : vector<7x96xf32>
    %794 = vector.extract_strided_slice %793 {offsets = [0, 0], sizes = [7, 32], strides = [1, 1]} : vector<7x96xf32> to vector<7x32xf32>
    %795 = vector.extract_strided_slice %793 {offsets = [0, 32], sizes = [7, 32], strides = [1, 1]} : vector<7x96xf32> to vector<7x32xf32>
    %796 = vector.extract_strided_slice %793 {offsets = [0, 64], sizes = [7, 32], strides = [1, 1]} : vector<7x96xf32> to vector<7x32xf32>
    %797 = vector.extract_strided_slice %794 {offsets = [0, 0], sizes = [7, 8], strides = [1, 1]} : vector<7x32xf32> to vector<7x8xf32>
    %798 = arith.truncf %797 : vector<7x8xf32> to vector<7x8xbf16>
    %799 = vector.extract_strided_slice %795 {offsets = [0, 0], sizes = [7, 8], strides = [1, 1]} : vector<7x32xf32> to vector<7x8xf32>
    %800 = arith.truncf %799 : vector<7x8xf32> to vector<7x8xbf16>
    %cst_330 = arith.constant dense<0.000000e+00> : vector<7x7xf32>
    %801 = tpu.matmul %798, %800, %cst_330 {dimension_numbers = #tpu.dot_dimension_numbers<[1], [1], [0], [0], [0, 0, 1, 0], [], []>} : vector<7x8xbf16>, vector<7x8xbf16>, vector<7x7xf32> -> vector<7x7xf32>
    %cst_331 = arith.constant 0.353553385 : f32
    %802 = vector.broadcast %cst_331 : f32 to vector<7x7xf32>
    %803 = arith.mulf %801, %802 : vector<7x7xf32>
    %804 = arith.addf %803, %469 : vector<7x7xf32>
    %cst_332 = arith.constant dense<0xFF800000> : vector<7xf32>
    %805 = vector.multi_reduction <maximumf>, %804, %cst_332 [1] : vector<7x7xf32> to vector<7xf32>
    %806 = vector.shape_cast %805 : vector<7xf32> to vector<7x1xf32>
    %807 = vector.broadcast %806 : vector<7x1xf32> to vector<7x7xf32>
    %808 = arith.subf %804, %807 : vector<7x7xf32>
    %809 = math.exp %808 : vector<7x7xf32>
    %cst_333 = arith.constant dense<0.000000e+00> : vector<7xf32>
    %810 = vector.multi_reduction <add>, %809, %cst_333 [1] : vector<7x7xf32> to vector<7xf32>
    %811 = vector.shape_cast %810 : vector<7xf32> to vector<7x1xf32>
    %812 = tpu.reciprocal %811 {approx = true} : vector<7x1xf32> -> vector<7x1xf32>
    %813 = vector.broadcast %812 : vector<7x1xf32> to vector<7x7xf32>
    %814 = arith.mulf %809, %813 : vector<7x7xf32>
    %815 = vector.extract_strided_slice %796 {offsets = [0, 0], sizes = [7, 8], strides = [1, 1]} : vector<7x32xf32> to vector<7x8xf32>
    %816 = arith.truncf %814 : vector<7x7xf32> to vector<7x7xbf16>
    %817 = arith.truncf %815 : vector<7x8xf32> to vector<7x8xbf16>
    %cst_334 = arith.constant dense<0.000000e+00> : vector<7x8xf32>
    %818 = tpu.matmul %816, %817, %cst_334 {dimension_numbers = #tpu.dot_dimension_numbers<[1], [0], [0], [1], [0, 0, 1, 1], [], []>} : vector<7x7xbf16>, vector<7x8xbf16>, vector<7x8xf32> -> vector<7x8xf32>
    %819 = vector.extract_strided_slice %794 {offsets = [0, 8], sizes = [7, 8], strides = [1, 1]} : vector<7x32xf32> to vector<7x8xf32>
    %820 = arith.truncf %819 : vector<7x8xf32> to vector<7x8xbf16>
    %821 = vector.extract_strided_slice %795 {offsets = [0, 8], sizes = [7, 8], strides = [1, 1]} : vector<7x32xf32> to vector<7x8xf32>
    %822 = arith.truncf %821 : vector<7x8xf32> to vector<7x8xbf16>
    %cst_335 = arith.constant dense<0.000000e+00> : vector<7x7xf32>
    %823 = tpu.matmul %820, %822, %cst_335 {dimension_numbers = #tpu.dot_dimension_numbers<[1], [1], [0], [0], [0, 0, 1, 0], [], []>} : vector<7x8xbf16>, vector<7x8xbf16>, vector<7x7xf32> -> vector<7x7xf32>
    %cst_336 = arith.constant 0.353553385 : f32
    %824 = vector.broadcast %cst_336 : f32 to vector<7x7xf32>
    %825 = arith.mulf %823, %824 : vector<7x7xf32>
    %826 = arith.addf %825, %469 : vector<7x7xf32>
    %cst_337 = arith.constant dense<0xFF800000> : vector<7xf32>
    %827 = vector.multi_reduction <maximumf>, %826, %cst_337 [1] : vector<7x7xf32> to vector<7xf32>
    %828 = vector.shape_cast %827 : vector<7xf32> to vector<7x1xf32>
    %829 = vector.broadcast %828 : vector<7x1xf32> to vector<7x7xf32>
    %830 = arith.subf %826, %829 : vector<7x7xf32>
    %831 = math.exp %830 : vector<7x7xf32>
    %cst_338 = arith.constant dense<0.000000e+00> : vector<7xf32>
    %832 = vector.multi_reduction <add>, %831, %cst_338 [1] : vector<7x7xf32> to vector<7xf32>
    %833 = vector.shape_cast %832 : vector<7xf32> to vector<7x1xf32>
    %834 = tpu.reciprocal %833 {approx = true} : vector<7x1xf32> -> vector<7x1xf32>
    %835 = vector.broadcast %834 : vector<7x1xf32> to vector<7x7xf32>
    %836 = arith.mulf %831, %835 : vector<7x7xf32>
    %837 = vector.extract_strided_slice %796 {offsets = [0, 8], sizes = [7, 8], strides = [1, 1]} : vector<7x32xf32> to vector<7x8xf32>
    %838 = arith.truncf %836 : vector<7x7xf32> to vector<7x7xbf16>
    %839 = arith.truncf %837 : vector<7x8xf32> to vector<7x8xbf16>
    %cst_339 = arith.constant dense<0.000000e+00> : vector<7x8xf32>
    %840 = tpu.matmul %838, %839, %cst_339 {dimension_numbers = #tpu.dot_dimension_numbers<[1], [0], [0], [1], [0, 0, 1, 1], [], []>} : vector<7x7xbf16>, vector<7x8xbf16>, vector<7x8xf32> -> vector<7x8xf32>
    %841 = vector.extract_strided_slice %794 {offsets = [0, 16], sizes = [7, 8], strides = [1, 1]} : vector<7x32xf32> to vector<7x8xf32>
    %842 = arith.truncf %841 : vector<7x8xf32> to vector<7x8xbf16>
    %843 = vector.extract_strided_slice %795 {offsets = [0, 16], sizes = [7, 8], strides = [1, 1]} : vector<7x32xf32> to vector<7x8xf32>
    %844 = arith.truncf %843 : vector<7x8xf32> to vector<7x8xbf16>
    %cst_340 = arith.constant dense<0.000000e+00> : vector<7x7xf32>
    %845 = tpu.matmul %842, %844, %cst_340 {dimension_numbers = #tpu.dot_dimension_numbers<[1], [1], [0], [0], [0, 0, 1, 0], [], []>} : vector<7x8xbf16>, vector<7x8xbf16>, vector<7x7xf32> -> vector<7x7xf32>
    %cst_341 = arith.constant 0.353553385 : f32
    %846 = vector.broadcast %cst_341 : f32 to vector<7x7xf32>
    %847 = arith.mulf %845, %846 : vector<7x7xf32>
    %848 = arith.addf %847, %469 : vector<7x7xf32>
    %cst_342 = arith.constant dense<0xFF800000> : vector<7xf32>
    %849 = vector.multi_reduction <maximumf>, %848, %cst_342 [1] : vector<7x7xf32> to vector<7xf32>
    %850 = vector.shape_cast %849 : vector<7xf32> to vector<7x1xf32>
    %851 = vector.broadcast %850 : vector<7x1xf32> to vector<7x7xf32>
    %852 = arith.subf %848, %851 : vector<7x7xf32>
    %853 = math.exp %852 : vector<7x7xf32>
    %cst_343 = arith.constant dense<0.000000e+00> : vector<7xf32>
    %854 = vector.multi_reduction <add>, %853, %cst_343 [1] : vector<7x7xf32> to vector<7xf32>
    %855 = vector.shape_cast %854 : vector<7xf32> to vector<7x1xf32>
    %856 = tpu.reciprocal %855 {approx = true} : vector<7x1xf32> -> vector<7x1xf32>
    %857 = vector.broadcast %856 : vector<7x1xf32> to vector<7x7xf32>
    %858 = arith.mulf %853, %857 : vector<7x7xf32>
    %859 = vector.extract_strided_slice %796 {offsets = [0, 16], sizes = [7, 8], strides = [1, 1]} : vector<7x32xf32> to vector<7x8xf32>
    %860 = arith.truncf %858 : vector<7x7xf32> to vector<7x7xbf16>
    %861 = arith.truncf %859 : vector<7x8xf32> to vector<7x8xbf16>
    %cst_344 = arith.constant dense<0.000000e+00> : vector<7x8xf32>
    %862 = tpu.matmul %860, %861, %cst_344 {dimension_numbers = #tpu.dot_dimension_numbers<[1], [0], [0], [1], [0, 0, 1, 1], [], []>} : vector<7x7xbf16>, vector<7x8xbf16>, vector<7x8xf32> -> vector<7x8xf32>
    %863 = vector.extract_strided_slice %794 {offsets = [0, 24], sizes = [7, 8], strides = [1, 1]} : vector<7x32xf32> to vector<7x8xf32>
    %864 = arith.truncf %863 : vector<7x8xf32> to vector<7x8xbf16>
    %865 = vector.extract_strided_slice %795 {offsets = [0, 24], sizes = [7, 8], strides = [1, 1]} : vector<7x32xf32> to vector<7x8xf32>
    %866 = arith.truncf %865 : vector<7x8xf32> to vector<7x8xbf16>
    %cst_345 = arith.constant dense<0.000000e+00> : vector<7x7xf32>
    %867 = tpu.matmul %864, %866, %cst_345 {dimension_numbers = #tpu.dot_dimension_numbers<[1], [1], [0], [0], [0, 0, 1, 0], [], []>} : vector<7x8xbf16>, vector<7x8xbf16>, vector<7x7xf32> -> vector<7x7xf32>
    %cst_346 = arith.constant 0.353553385 : f32
    %868 = vector.broadcast %cst_346 : f32 to vector<7x7xf32>
    %869 = arith.mulf %867, %868 : vector<7x7xf32>
    %870 = arith.addf %869, %469 : vector<7x7xf32>
    %cst_347 = arith.constant dense<0xFF800000> : vector<7xf32>
    %871 = vector.multi_reduction <maximumf>, %870, %cst_347 [1] : vector<7x7xf32> to vector<7xf32>
    %872 = vector.shape_cast %871 : vector<7xf32> to vector<7x1xf32>
    %873 = vector.broadcast %872 : vector<7x1xf32> to vector<7x7xf32>
    %874 = arith.subf %870, %873 : vector<7x7xf32>
    %875 = math.exp %874 : vector<7x7xf32>
    %cst_348 = arith.constant dense<0.000000e+00> : vector<7xf32>
    %876 = vector.multi_reduction <add>, %875, %cst_348 [1] : vector<7x7xf32> to vector<7xf32>
    %877 = vector.shape_cast %876 : vector<7xf32> to vector<7x1xf32>
    %878 = tpu.reciprocal %877 {approx = true} : vector<7x1xf32> -> vector<7x1xf32>
    %879 = vector.broadcast %878 : vector<7x1xf32> to vector<7x7xf32>
    %880 = arith.mulf %875, %879 : vector<7x7xf32>
    %881 = vector.extract_strided_slice %796 {offsets = [0, 24], sizes = [7, 8], strides = [1, 1]} : vector<7x32xf32> to vector<7x8xf32>
    %882 = arith.truncf %880 : vector<7x7xf32> to vector<7x7xbf16>
    %883 = arith.truncf %881 : vector<7x8xf32> to vector<7x8xbf16>
    %cst_349 = arith.constant dense<0.000000e+00> : vector<7x8xf32>
    %884 = tpu.matmul %882, %883, %cst_349 {dimension_numbers = #tpu.dot_dimension_numbers<[1], [0], [0], [1], [0, 0, 1, 1], [], []>} : vector<7x7xbf16>, vector<7x8xbf16>, vector<7x8xf32> -> vector<7x8xf32>
    %885 = tpu.concatenate %818, %840, %862, %884 in 1 : vector<7x8xf32>, vector<7x8xf32>, vector<7x8xf32>, vector<7x8xf32> -> vector<7x32xf32>
    %886 = arith.truncf %885 : vector<7x32xf32> to vector<7x32xbf16>
    %887 = arith.truncf %42 : vector<32x32xf32> to vector<32x32xbf16>
    %cst_350 = arith.constant dense<0.000000e+00> : vector<7x32xf32>
    %888 = tpu.matmul %886, %887, %cst_350 {dimension_numbers = #tpu.dot_dimension_numbers<[1], [0], [0], [1], [0, 0, 1, 1], [], []>} : vector<7x32xbf16>, vector<32x32xbf16>, vector<7x32xf32> -> vector<7x32xf32>
    %889 = vector.broadcast %40 : vector<1x32xf32> to vector<7x32xf32>
    %890 = arith.addf %888, %889 : vector<7x32xf32>
    %891 = arith.addf %766, %890 : vector<7x32xf32>
    %cst_351 = arith.constant dense<0.000000e+00> : vector<7xf32>
    %892 = vector.multi_reduction <add>, %891, %cst_351 [1] : vector<7x32xf32> to vector<7xf32>
    %893 = vector.shape_cast %892 : vector<7xf32> to vector<7x1xf32>
    %cst_352 = arith.constant 3.200000e+01 : f32
    %894 = vector.broadcast %cst_352 : f32 to vector<7x1xf32>
    %895 = arith.divf %893, %894 : vector<7x1xf32>
    %896 = vector.broadcast %895 : vector<7x1xf32> to vector<7x32xf32>
    %897 = arith.subf %891, %896 : vector<7x32xf32>
    %898 = arith.mulf %897, %897 : vector<7x32xf32>
    %cst_353 = arith.constant dense<0.000000e+00> : vector<7xf32>
    %899 = vector.multi_reduction <add>, %898, %cst_353 [1] : vector<7x32xf32> to vector<7xf32>
    %900 = vector.shape_cast %899 : vector<7xf32> to vector<7x1xf32>
    %cst_354 = arith.constant 3.200000e+01 : f32
    %901 = vector.broadcast %cst_354 : f32 to vector<7x1xf32>
    %902 = arith.divf %900, %901 : vector<7x1xf32>
    %903 = vector.broadcast %895 : vector<7x1xf32> to vector<7x32xf32>
    %904 = arith.subf %891, %903 : vector<7x32xf32>
    %cst_355 = arith.constant 9.99999997E-7 : f32
    %905 = vector.broadcast %cst_355 : f32 to vector<7x1xf32>
    %906 = arith.addf %902, %905 : vector<7x1xf32>
    %907 = math.rsqrt %906 : vector<7x1xf32>
    %908 = vector.broadcast %907 : vector<7x1xf32> to vector<7x32xf32>
    %909 = arith.mulf %904, %908 : vector<7x32xf32>
    %910 = vector.broadcast %37 : vector<1x32xf32> to vector<7x32xf32>
    %911 = arith.mulf %909, %910 : vector<7x32xf32>
    %912 = vector.broadcast %36 : vector<1x32xf32> to vector<7x32xf32>
    %913 = arith.addf %911, %912 : vector<7x32xf32>
    %914 = arith.truncf %913 : vector<7x32xf32> to vector<7x32xbf16>
    %915 = arith.truncf %29 : vector<32x32xf32> to vector<32x32xbf16>
    %cst_356 = arith.constant dense<0.000000e+00> : vector<7x32xf32>
    %916 = tpu.matmul %914, %915, %cst_356 {dimension_numbers = #tpu.dot_dimension_numbers<[1], [0], [0], [1], [0, 0, 1, 1], [], []>} : vector<7x32xbf16>, vector<32x32xbf16>, vector<7x32xf32> -> vector<7x32xf32>
    %917 = vector.broadcast %26 : vector<1x32xf32> to vector<7x32xf32>
    %918 = arith.addf %916, %917 : vector<7x32xf32>
    %919 = arith.truncf %456 : vector<24x32xf32> to vector<24x32xbf16>
    %920 = arith.truncf %27 : vector<32x64xf32> to vector<32x64xbf16>
    %cst_357 = arith.constant dense<0.000000e+00> : vector<24x64xf32>
    %921 = tpu.matmul %919, %920, %cst_357 {dimension_numbers = #tpu.dot_dimension_numbers<[1], [0], [0], [1], [0, 0, 1, 1], [], []>} : vector<24x32xbf16>, vector<32x64xbf16>, vector<24x64xf32> -> vector<24x64xf32>
    %922 = vector.broadcast %24 : vector<1x64xf32> to vector<24x64xf32>
    %923 = arith.addf %921, %922 : vector<24x64xf32>
    %924 = vector.extract_strided_slice %923 {offsets = [0, 0], sizes = [24, 32], strides = [1, 1]} : vector<24x64xf32> to vector<24x32xf32>
    %925 = vector.extract_strided_slice %923 {offsets = [0, 32], sizes = [24, 32], strides = [1, 1]} : vector<24x64xf32> to vector<24x32xf32>
    %926 = vector.extract_strided_slice %918 {offsets = [0, 0], sizes = [7, 8], strides = [1, 1]} : vector<7x32xf32> to vector<7x8xf32>
    %927 = arith.truncf %926 : vector<7x8xf32> to vector<7x8xbf16>
    %928 = vector.extract_strided_slice %924 {offsets = [0, 0], sizes = [24, 8], strides = [1, 1]} : vector<24x32xf32> to vector<24x8xf32>
    %929 = arith.truncf %928 : vector<24x8xf32> to vector<24x8xbf16>
    %cst_358 = arith.constant dense<0.000000e+00> : vector<7x24xf32>
    %930 = tpu.matmul %927, %929, %cst_358 {dimension_numbers = #tpu.dot_dimension_numbers<[1], [1], [0], [0], [0, 0, 1, 0], [], []>} : vector<7x8xbf16>, vector<24x8xbf16>, vector<7x24xf32> -> vector<7x24xf32>
    %cst_359 = arith.constant 0.353553385 : f32
    %931 = vector.broadcast %cst_359 : f32 to vector<7x24xf32>
    %932 = arith.mulf %930, %931 : vector<7x24xf32>
    %933 = arith.addf %932, %475 : vector<7x24xf32>
    %cst_360 = arith.constant dense<0xFF800000> : vector<7xf32>
    %934 = vector.multi_reduction <maximumf>, %933, %cst_360 [1] : vector<7x24xf32> to vector<7xf32>
    %935 = vector.shape_cast %934 : vector<7xf32> to vector<7x1xf32>
    %936 = vector.broadcast %935 : vector<7x1xf32> to vector<7x24xf32>
    %937 = arith.subf %933, %936 : vector<7x24xf32>
    %938 = math.exp %937 : vector<7x24xf32>
    %cst_361 = arith.constant dense<0.000000e+00> : vector<7xf32>
    %939 = vector.multi_reduction <add>, %938, %cst_361 [1] : vector<7x24xf32> to vector<7xf32>
    %940 = vector.shape_cast %939 : vector<7xf32> to vector<7x1xf32>
    %941 = tpu.reciprocal %940 {approx = true} : vector<7x1xf32> -> vector<7x1xf32>
    %942 = vector.broadcast %941 : vector<7x1xf32> to vector<7x24xf32>
    %943 = arith.mulf %938, %942 : vector<7x24xf32>
    %944 = vector.extract_strided_slice %925 {offsets = [0, 0], sizes = [24, 8], strides = [1, 1]} : vector<24x32xf32> to vector<24x8xf32>
    %945 = arith.truncf %943 : vector<7x24xf32> to vector<7x24xbf16>
    %946 = arith.truncf %944 : vector<24x8xf32> to vector<24x8xbf16>
    %cst_362 = arith.constant dense<0.000000e+00> : vector<7x8xf32>
    %947 = tpu.matmul %945, %946, %cst_362 {dimension_numbers = #tpu.dot_dimension_numbers<[1], [0], [0], [1], [0, 0, 1, 1], [], []>} : vector<7x24xbf16>, vector<24x8xbf16>, vector<7x8xf32> -> vector<7x8xf32>
    %948 = vector.extract_strided_slice %918 {offsets = [0, 8], sizes = [7, 8], strides = [1, 1]} : vector<7x32xf32> to vector<7x8xf32>
    %949 = arith.truncf %948 : vector<7x8xf32> to vector<7x8xbf16>
    %950 = vector.extract_strided_slice %924 {offsets = [0, 8], sizes = [24, 8], strides = [1, 1]} : vector<24x32xf32> to vector<24x8xf32>
    %951 = arith.truncf %950 : vector<24x8xf32> to vector<24x8xbf16>
    %cst_363 = arith.constant dense<0.000000e+00> : vector<7x24xf32>
    %952 = tpu.matmul %949, %951, %cst_363 {dimension_numbers = #tpu.dot_dimension_numbers<[1], [1], [0], [0], [0, 0, 1, 0], [], []>} : vector<7x8xbf16>, vector<24x8xbf16>, vector<7x24xf32> -> vector<7x24xf32>
    %cst_364 = arith.constant 0.353553385 : f32
    %953 = vector.broadcast %cst_364 : f32 to vector<7x24xf32>
    %954 = arith.mulf %952, %953 : vector<7x24xf32>
    %955 = arith.addf %954, %475 : vector<7x24xf32>
    %cst_365 = arith.constant dense<0xFF800000> : vector<7xf32>
    %956 = vector.multi_reduction <maximumf>, %955, %cst_365 [1] : vector<7x24xf32> to vector<7xf32>
    %957 = vector.shape_cast %956 : vector<7xf32> to vector<7x1xf32>
    %958 = vector.broadcast %957 : vector<7x1xf32> to vector<7x24xf32>
    %959 = arith.subf %955, %958 : vector<7x24xf32>
    %960 = math.exp %959 : vector<7x24xf32>
    %cst_366 = arith.constant dense<0.000000e+00> : vector<7xf32>
    %961 = vector.multi_reduction <add>, %960, %cst_366 [1] : vector<7x24xf32> to vector<7xf32>
    %962 = vector.shape_cast %961 : vector<7xf32> to vector<7x1xf32>
    %963 = tpu.reciprocal %962 {approx = true} : vector<7x1xf32> -> vector<7x1xf32>
    %964 = vector.broadcast %963 : vector<7x1xf32> to vector<7x24xf32>
    %965 = arith.mulf %960, %964 : vector<7x24xf32>
    %966 = vector.extract_strided_slice %925 {offsets = [0, 8], sizes = [24, 8], strides = [1, 1]} : vector<24x32xf32> to vector<24x8xf32>
    %967 = arith.truncf %965 : vector<7x24xf32> to vector<7x24xbf16>
    %968 = arith.truncf %966 : vector<24x8xf32> to vector<24x8xbf16>
    %cst_367 = arith.constant dense<0.000000e+00> : vector<7x8xf32>
    %969 = tpu.matmul %967, %968, %cst_367 {dimension_numbers = #tpu.dot_dimension_numbers<[1], [0], [0], [1], [0, 0, 1, 1], [], []>} : vector<7x24xbf16>, vector<24x8xbf16>, vector<7x8xf32> -> vector<7x8xf32>
    %970 = vector.extract_strided_slice %918 {offsets = [0, 16], sizes = [7, 8], strides = [1, 1]} : vector<7x32xf32> to vector<7x8xf32>
    %971 = arith.truncf %970 : vector<7x8xf32> to vector<7x8xbf16>
    %972 = vector.extract_strided_slice %924 {offsets = [0, 16], sizes = [24, 8], strides = [1, 1]} : vector<24x32xf32> to vector<24x8xf32>
    %973 = arith.truncf %972 : vector<24x8xf32> to vector<24x8xbf16>
    %cst_368 = arith.constant dense<0.000000e+00> : vector<7x24xf32>
    %974 = tpu.matmul %971, %973, %cst_368 {dimension_numbers = #tpu.dot_dimension_numbers<[1], [1], [0], [0], [0, 0, 1, 0], [], []>} : vector<7x8xbf16>, vector<24x8xbf16>, vector<7x24xf32> -> vector<7x24xf32>
    %cst_369 = arith.constant 0.353553385 : f32
    %975 = vector.broadcast %cst_369 : f32 to vector<7x24xf32>
    %976 = arith.mulf %974, %975 : vector<7x24xf32>
    %977 = arith.addf %976, %475 : vector<7x24xf32>
    %cst_370 = arith.constant dense<0xFF800000> : vector<7xf32>
    %978 = vector.multi_reduction <maximumf>, %977, %cst_370 [1] : vector<7x24xf32> to vector<7xf32>
    %979 = vector.shape_cast %978 : vector<7xf32> to vector<7x1xf32>
    %980 = vector.broadcast %979 : vector<7x1xf32> to vector<7x24xf32>
    %981 = arith.subf %977, %980 : vector<7x24xf32>
    %982 = math.exp %981 : vector<7x24xf32>
    %cst_371 = arith.constant dense<0.000000e+00> : vector<7xf32>
    %983 = vector.multi_reduction <add>, %982, %cst_371 [1] : vector<7x24xf32> to vector<7xf32>
    %984 = vector.shape_cast %983 : vector<7xf32> to vector<7x1xf32>
    %985 = tpu.reciprocal %984 {approx = true} : vector<7x1xf32> -> vector<7x1xf32>
    %986 = vector.broadcast %985 : vector<7x1xf32> to vector<7x24xf32>
    %987 = arith.mulf %982, %986 : vector<7x24xf32>
    %988 = vector.extract_strided_slice %925 {offsets = [0, 16], sizes = [24, 8], strides = [1, 1]} : vector<24x32xf32> to vector<24x8xf32>
    %989 = arith.truncf %987 : vector<7x24xf32> to vector<7x24xbf16>
    %990 = arith.truncf %988 : vector<24x8xf32> to vector<24x8xbf16>
    %cst_372 = arith.constant dense<0.000000e+00> : vector<7x8xf32>
    %991 = tpu.matmul %989, %990, %cst_372 {dimension_numbers = #tpu.dot_dimension_numbers<[1], [0], [0], [1], [0, 0, 1, 1], [], []>} : vector<7x24xbf16>, vector<24x8xbf16>, vector<7x8xf32> -> vector<7x8xf32>
    %992 = vector.extract_strided_slice %918 {offsets = [0, 24], sizes = [7, 8], strides = [1, 1]} : vector<7x32xf32> to vector<7x8xf32>
    %993 = arith.truncf %992 : vector<7x8xf32> to vector<7x8xbf16>
    %994 = vector.extract_strided_slice %924 {offsets = [0, 24], sizes = [24, 8], strides = [1, 1]} : vector<24x32xf32> to vector<24x8xf32>
    %995 = arith.truncf %994 : vector<24x8xf32> to vector<24x8xbf16>
    %cst_373 = arith.constant dense<0.000000e+00> : vector<7x24xf32>
    %996 = tpu.matmul %993, %995, %cst_373 {dimension_numbers = #tpu.dot_dimension_numbers<[1], [1], [0], [0], [0, 0, 1, 0], [], []>} : vector<7x8xbf16>, vector<24x8xbf16>, vector<7x24xf32> -> vector<7x24xf32>
    %cst_374 = arith.constant 0.353553385 : f32
    %997 = vector.broadcast %cst_374 : f32 to vector<7x24xf32>
    %998 = arith.mulf %996, %997 : vector<7x24xf32>
    %999 = arith.addf %998, %475 : vector<7x24xf32>
    %cst_375 = arith.constant dense<0xFF800000> : vector<7xf32>
    %1000 = vector.multi_reduction <maximumf>, %999, %cst_375 [1] : vector<7x24xf32> to vector<7xf32>
    %1001 = vector.shape_cast %1000 : vector<7xf32> to vector<7x1xf32>
    %1002 = vector.broadcast %1001 : vector<7x1xf32> to vector<7x24xf32>
    %1003 = arith.subf %999, %1002 : vector<7x24xf32>
    %1004 = math.exp %1003 : vector<7x24xf32>
    %cst_376 = arith.constant dense<0.000000e+00> : vector<7xf32>
    %1005 = vector.multi_reduction <add>, %1004, %cst_376 [1] : vector<7x24xf32> to vector<7xf32>
    %1006 = vector.shape_cast %1005 : vector<7xf32> to vector<7x1xf32>
    %1007 = tpu.reciprocal %1006 {approx = true} : vector<7x1xf32> -> vector<7x1xf32>
    %1008 = vector.broadcast %1007 : vector<7x1xf32> to vector<7x24xf32>
    %1009 = arith.mulf %1004, %1008 : vector<7x24xf32>
    %1010 = vector.extract_strided_slice %925 {offsets = [0, 24], sizes = [24, 8], strides = [1, 1]} : vector<24x32xf32> to vector<24x8xf32>
    %1011 = arith.truncf %1009 : vector<7x24xf32> to vector<7x24xbf16>
    %1012 = arith.truncf %1010 : vector<24x8xf32> to vector<24x8xbf16>
    %cst_377 = arith.constant dense<0.000000e+00> : vector<7x8xf32>
    %1013 = tpu.matmul %1011, %1012, %cst_377 {dimension_numbers = #tpu.dot_dimension_numbers<[1], [0], [0], [1], [0, 0, 1, 1], [], []>} : vector<7x24xbf16>, vector<24x8xbf16>, vector<7x8xf32> -> vector<7x8xf32>
    %1014 = tpu.concatenate %947, %969, %991, %1013 in 1 : vector<7x8xf32>, vector<7x8xf32>, vector<7x8xf32>, vector<7x8xf32> -> vector<7x32xf32>
    %1015 = arith.truncf %1014 : vector<7x32xf32> to vector<7x32xbf16>
    %1016 = arith.truncf %28 : vector<32x32xf32> to vector<32x32xbf16>
    %cst_378 = arith.constant dense<0.000000e+00> : vector<7x32xf32>
    %1017 = tpu.matmul %1015, %1016, %cst_378 {dimension_numbers = #tpu.dot_dimension_numbers<[1], [0], [0], [1], [0, 0, 1, 1], [], []>} : vector<7x32xbf16>, vector<32x32xbf16>, vector<7x32xf32> -> vector<7x32xf32>
    %1018 = vector.broadcast %25 : vector<1x32xf32> to vector<7x32xf32>
    %1019 = arith.addf %1017, %1018 : vector<7x32xf32>
    %1020 = arith.addf %891, %1019 : vector<7x32xf32>
    %cst_379 = arith.constant dense<0.000000e+00> : vector<7xf32>
    %1021 = vector.multi_reduction <add>, %1020, %cst_379 [1] : vector<7x32xf32> to vector<7xf32>
    %1022 = vector.shape_cast %1021 : vector<7xf32> to vector<7x1xf32>
    %cst_380 = arith.constant 3.200000e+01 : f32
    %1023 = vector.broadcast %cst_380 : f32 to vector<7x1xf32>
    %1024 = arith.divf %1022, %1023 : vector<7x1xf32>
    %1025 = vector.broadcast %1024 : vector<7x1xf32> to vector<7x32xf32>
    %1026 = arith.subf %1020, %1025 : vector<7x32xf32>
    %1027 = arith.mulf %1026, %1026 : vector<7x32xf32>
    %cst_381 = arith.constant dense<0.000000e+00> : vector<7xf32>
    %1028 = vector.multi_reduction <add>, %1027, %cst_381 [1] : vector<7x32xf32> to vector<7xf32>
    %1029 = vector.shape_cast %1028 : vector<7xf32> to vector<7x1xf32>
    %cst_382 = arith.constant 3.200000e+01 : f32
    %1030 = vector.broadcast %cst_382 : f32 to vector<7x1xf32>
    %1031 = arith.divf %1029, %1030 : vector<7x1xf32>
    %1032 = vector.broadcast %1024 : vector<7x1xf32> to vector<7x32xf32>
    %1033 = arith.subf %1020, %1032 : vector<7x32xf32>
    %cst_383 = arith.constant 9.99999997E-7 : f32
    %1034 = vector.broadcast %cst_383 : f32 to vector<7x1xf32>
    %1035 = arith.addf %1031, %1034 : vector<7x1xf32>
    %1036 = math.rsqrt %1035 : vector<7x1xf32>
    %1037 = vector.broadcast %1036 : vector<7x1xf32> to vector<7x32xf32>
    %1038 = arith.mulf %1033, %1037 : vector<7x32xf32>
    %1039 = vector.broadcast %39 : vector<1x32xf32> to vector<7x32xf32>
    %1040 = arith.mulf %1038, %1039 : vector<7x32xf32>
    %1041 = vector.broadcast %38 : vector<1x32xf32> to vector<7x32xf32>
    %1042 = arith.addf %1040, %1041 : vector<7x32xf32>
    %1043 = arith.truncf %1042 : vector<7x32xf32> to vector<7x32xbf16>
    %1044 = arith.truncf %32 : vector<32x64xf32> to vector<32x64xbf16>
    %cst_384 = arith.constant dense<0.000000e+00> : vector<7x64xf32>
    %1045 = tpu.matmul %1043, %1044, %cst_384 {dimension_numbers = #tpu.dot_dimension_numbers<[1], [0], [0], [1], [0, 0, 1, 1], [], []>} : vector<7x32xbf16>, vector<32x64xbf16>, vector<7x64xf32> -> vector<7x64xf32>
    %1046 = vector.broadcast %30 : vector<1x64xf32> to vector<7x64xf32>
    %1047 = arith.addf %1045, %1046 : vector<7x64xf32>
    %cst_385 = arith.constant 0.000000e+00 : f32
    %1048 = vector.broadcast %cst_385 : f32 to vector<7x64xf32>
    %1049 = arith.maximumf %1047, %1048 : vector<7x64xf32>
    %1050 = arith.truncf %1049 : vector<7x64xf32> to vector<7x64xbf16>
    %1051 = arith.truncf %33 : vector<64x32xf32> to vector<64x32xbf16>
    %cst_386 = arith.constant dense<0.000000e+00> : vector<7x32xf32>
    %1052 = tpu.matmul %1050, %1051, %cst_386 {dimension_numbers = #tpu.dot_dimension_numbers<[1], [0], [0], [1], [0, 0, 1, 1], [], []>} : vector<7x64xbf16>, vector<64x32xbf16>, vector<7x32xf32> -> vector<7x32xf32>
    %1053 = vector.broadcast %31 : vector<1x32xf32> to vector<7x32xf32>
    %1054 = arith.addf %1052, %1053 : vector<7x32xf32>
    %1055 = arith.addf %1020, %1054 : vector<7x32xf32>
    %cst_387 = arith.constant dense<0.000000e+00> : vector<7xf32>
    %1056 = vector.multi_reduction <add>, %1055, %cst_387 [1] : vector<7x32xf32> to vector<7xf32>
    %1057 = vector.shape_cast %1056 : vector<7xf32> to vector<7x1xf32>
    %cst_388 = arith.constant 3.200000e+01 : f32
    %1058 = vector.broadcast %cst_388 : f32 to vector<7x1xf32>
    %1059 = arith.divf %1057, %1058 : vector<7x1xf32>
    %1060 = vector.broadcast %1059 : vector<7x1xf32> to vector<7x32xf32>
    %1061 = arith.subf %1055, %1060 : vector<7x32xf32>
    %1062 = arith.mulf %1061, %1061 : vector<7x32xf32>
    %cst_389 = arith.constant dense<0.000000e+00> : vector<7xf32>
    %1063 = vector.multi_reduction <add>, %1062, %cst_389 [1] : vector<7x32xf32> to vector<7xf32>
    %1064 = vector.shape_cast %1063 : vector<7xf32> to vector<7x1xf32>
    %cst_390 = arith.constant 3.200000e+01 : f32
    %1065 = vector.broadcast %cst_390 : f32 to vector<7x1xf32>
    %1066 = arith.divf %1064, %1065 : vector<7x1xf32>
    %1067 = vector.broadcast %1059 : vector<7x1xf32> to vector<7x32xf32>
    %1068 = arith.subf %1055, %1067 : vector<7x32xf32>
    %cst_391 = arith.constant 9.99999997E-7 : f32
    %1069 = vector.broadcast %cst_391 : f32 to vector<7x1xf32>
    %1070 = arith.addf %1066, %1069 : vector<7x1xf32>
    %1071 = math.rsqrt %1070 : vector<7x1xf32>
    %1072 = vector.broadcast %1071 : vector<7x1xf32> to vector<7x32xf32>
    %1073 = arith.mulf %1068, %1072 : vector<7x32xf32>
    %1074 = vector.broadcast %45 : vector<1x32xf32> to vector<7x32xf32>
    %1075 = arith.mulf %1073, %1074 : vector<7x32xf32>
    %1076 = vector.broadcast %44 : vector<1x32xf32> to vector<7x32xf32>
    %1077 = arith.addf %1075, %1076 : vector<7x32xf32>
    %1078 = arith.truncf %1077 : vector<7x32xf32> to vector<7x32xbf16>
    %1079 = arith.truncf %73 : vector<32x30xf32> to vector<32x30xbf16>
    %cst_392 = arith.constant dense<0.000000e+00> : vector<7x30xf32>
    %1080 = tpu.matmul %1078, %1079, %cst_392 {dimension_numbers = #tpu.dot_dimension_numbers<[1], [0], [0], [1], [0, 0, 1, 1], [], []>} : vector<7x32xbf16>, vector<32x30xbf16>, vector<7x30xf32> -> vector<7x30xf32>
    %1081 = vector.broadcast %72 : vector<1x30xf32> to vector<7x30xf32>
    %1082 = arith.addf %1080, %1081 : vector<7x30xf32>
    %cst_393 = arith.constant dense<0xFF800000> : vector<7xf32>
    %1083 = vector.multi_reduction <maximumf>, %1082, %cst_393 [1] : vector<7x30xf32> to vector<7xf32>
    %1084 = vector.shape_cast %1083 : vector<7xf32> to vector<7x1xf32>
    %1085 = vector.broadcast %1084 : vector<7x1xf32> to vector<7x30xf32>
    %1086 = arith.subf %1082, %1085 : vector<7x30xf32>
    %1087 = math.exp %1086 : vector<7x30xf32>
    %cst_394 = arith.constant dense<0.000000e+00> : vector<7xf32>
    %1088 = vector.multi_reduction <add>, %1087, %cst_394 [1] : vector<7x30xf32> to vector<7xf32>
    %1089 = vector.shape_cast %1088 : vector<7xf32> to vector<7x1xf32>
    %1090 = math.log %1089 : vector<7x1xf32>
    %1091 = vector.broadcast %1084 : vector<7x1xf32> to vector<7x30xf32>
    %1092 = arith.subf %1082, %1091 : vector<7x30xf32>
    %1093 = vector.broadcast %1090 : vector<7x1xf32> to vector<7x30xf32>
    %1094 = arith.subf %1092, %1093 : vector<7x30xf32>
    %c0_395 = arith.constant 0 : index
    %c0_396 = arith.constant 0 : index
    %c0_397 = arith.constant 0 : index
    %1095 = vector.load %arg82[%c0_395, %c0_396, %c0_397] : memref<1x7x30xf32, #tpu.memory_space<vmem>>, vector<1x7x30xf32>
    %1096 = vector.shape_cast %1095 : vector<1x7x30xf32> to vector<7x30xf32>
    %1097 = vector.shape_cast %1094 : vector<7x30xf32> to vector<1x7x30xf32>
    tpu.vector_store %arg82[%c0_395, %c0_396, %c0_397], %1097 {strides = array<i32>} : memref<1x7x30xf32, #tpu.memory_space<vmem>>, vector<1x7x30xf32>,
    %c0_398 = arith.constant 0 : index
    %c0_399 = arith.constant 0 : index
    %c0_400 = arith.constant 0 : index
    %1098 = vector.load %arg83[%c0_398, %c0_399, %c0_400] : memref<1x1x8xf32, #tpu.memory_space<vmem>>, vector<1x1x8xf32>
    %1099 = vector.shape_cast %1098 : vector<1x1x8xf32> to vector<1x8xf32>
    %1100 = vector.shape_cast %92 : vector<1x8xf32> to vector<1x1x8xf32>
    tpu.vector_store %arg83[%c0_398, %c0_399, %c0_400], %1100 {strides = array<i32>} : memref<1x1x8xf32, #tpu.memory_space<vmem>>, vector<1x1x8xf32>,
    return
  }
  func.func @transform_0(%arg0: i32) -> (i32, i32, i32) {
    %c0_i32 = arith.constant 0 : i32
    %c0_i32_0 = arith.constant 0 : i32
    %c0_i32_1 = arith.constant 0 : i32
    return %arg0, %c0_i32, %c0_i32_0 : i32, i32, i32
  }
  func.func @transform_1(%arg0: i32) -> (i32, i32, i32) {
    %c0_i32 = arith.constant 0 : i32
    %c0_i32_0 = arith.constant 0 : i32
    %c0_i32_1 = arith.constant 0 : i32
    return %arg0, %c0_i32, %c0_i32_0 : i32, i32, i32
  }
  func.func @transform_2(%arg0: i32) -> (i32, i32, i32) {
    %c0_i32 = arith.constant 0 : i32
    %c0_i32_0 = arith.constant 0 : i32
    %c0_i32_1 = arith.constant 0 : i32
    return %arg0, %c0_i32, %c0_i32_0 : i32, i32, i32
  }
  func.func @transform_3(%arg0: i32) -> (i32, i32) {
    %c0_i32 = arith.constant 0 : i32
    %c0_i32_0 = arith.constant 0 : i32
    %c0_i32_1 = arith.constant 0 : i32
    return %c0_i32, %c0_i32_0 : i32, i32
  }
  func.func @transform_4(%arg0: i32) -> (i32, i32) {
    %c0_i32 = arith.constant 0 : i32
    %c0_i32_0 = arith.constant 0 : i32
    %c0_i32_1 = arith.constant 0 : i32
    return %c0_i32, %c0_i32_0 : i32, i32
  }
  func.func @transform_5(%arg0: i32) -> (i32, i32) {
    %c0_i32 = arith.constant 0 : i32
    %c0_i32_0 = arith.constant 0 : i32
    %c0_i32_1 = arith.constant 0 : i32
    return %c0_i32, %c0_i32_0 : i32, i32
  }
  func.func @transform_6(%arg0: i32) -> (i32, i32) {
    %c0_i32 = arith.constant 0 : i32
    %c0_i32_0 = arith.constant 0 : i32
    %c0_i32_1 = arith.constant 0 : i32
    return %c0_i32, %c0_i32_0 : i32, i32
  }
  func.func @transform_7(%arg0: i32) -> (i32, i32) {
    %c0_i32 = arith.constant 0 : i32
    %c0_i32_0 = arith.constant 0 : i32
    %c0_i32_1 = arith.constant 0 : i32
    return %c0_i32, %c0_i32_0 : i32, i32
  }
  func.func @transform_8(%arg0: i32) -> (i32, i32) {
    %c0_i32 = arith.constant 0 : i32
    %c0_i32_0 = arith.constant 0 : i32
    %c0_i32_1 = arith.constant 0 : i32
    return %c0_i32, %c0_i32_0 : i32, i32
  }
  func.func @transform_9(%arg0: i32) -> (i32, i32) {
    %c0_i32 = arith.constant 0 : i32
    %c0_i32_0 = arith.constant 0 : i32
    %c0_i32_1 = arith.constant 0 : i32
    return %c0_i32, %c0_i32_0 : i32, i32
  }
  func.func @transform_10(%arg0: i32) -> (i32, i32) {
    %c0_i32 = arith.constant 0 : i32
    %c0_i32_0 = arith.constant 0 : i32
    %c0_i32_1 = arith.constant 0 : i32
    return %c0_i32, %c0_i32_0 : i32, i32
  }
  func.func @transform_11(%arg0: i32) -> (i32, i32) {
    %c0_i32 = arith.constant 0 : i32
    %c0_i32_0 = arith.constant 0 : i32
    %c0_i32_1 = arith.constant 0 : i32
    return %c0_i32, %c0_i32_0 : i32, i32
  }
  func.func @transform_12(%arg0: i32) -> (i32, i32) {
    %c0_i32 = arith.constant 0 : i32
    %c0_i32_0 = arith.constant 0 : i32
    %c0_i32_1 = arith.constant 0 : i32
    return %c0_i32, %c0_i32_0 : i32, i32
  }
  func.func @transform_13(%arg0: i32) -> (i32, i32) {
    %c0_i32 = arith.constant 0 : i32
    %c0_i32_0 = arith.constant 0 : i32
    %c0_i32_1 = arith.constant 0 : i32
    return %c0_i32, %c0_i32_0 : i32, i32
  }
  func.func @transform_14(%arg0: i32) -> (i32, i32) {
    %c0_i32 = arith.constant 0 : i32
    %c0_i32_0 = arith.constant 0 : i32
    %c0_i32_1 = arith.constant 0 : i32
    return %c0_i32, %c0_i32_0 : i32, i32
  }
  func.func @transform_15(%arg0: i32) -> (i32, i32) {
    %c0_i32 = arith.constant 0 : i32
    %c0_i32_0 = arith.constant 0 : i32
    %c0_i32_1 = arith.constant 0 : i32
    return %c0_i32, %c0_i32_0 : i32, i32
  }
  func.func @transform_16(%arg0: i32) -> (i32, i32) {
    %c0_i32 = arith.constant 0 : i32
    %c0_i32_0 = arith.constant 0 : i32
    %c0_i32_1 = arith.constant 0 : i32
    return %c0_i32, %c0_i32_0 : i32, i32
  }
  func.func @transform_17(%arg0: i32) -> (i32, i32) {
    %c0_i32 = arith.constant 0 : i32
    %c0_i32_0 = arith.constant 0 : i32
    %c0_i32_1 = arith.constant 0 : i32
    return %c0_i32, %c0_i32_0 : i32, i32
  }
  func.func @transform_18(%arg0: i32) -> (i32, i32) {
    %c0_i32 = arith.constant 0 : i32
    %c0_i32_0 = arith.constant 0 : i32
    %c0_i32_1 = arith.constant 0 : i32
    return %c0_i32, %c0_i32_0 : i32, i32
  }
  func.func @transform_19(%arg0: i32) -> (i32, i32) {
    %c0_i32 = arith.constant 0 : i32
    %c0_i32_0 = arith.constant 0 : i32
    %c0_i32_1 = arith.constant 0 : i32
    return %c0_i32, %c0_i32_0 : i32, i32
  }
  func.func @transform_20(%arg0: i32) -> (i32, i32) {
    %c0_i32 = arith.constant 0 : i32
    %c0_i32_0 = arith.constant 0 : i32
    %c0_i32_1 = arith.constant 0 : i32
    return %c0_i32, %c0_i32_0 : i32, i32
  }
  func.func @transform_21(%arg0: i32) -> (i32, i32) {
    %c0_i32 = arith.constant 0 : i32
    %c0_i32_0 = arith.constant 0 : i32
    %c0_i32_1 = arith.constant 0 : i32
    return %c0_i32, %c0_i32_0 : i32, i32
  }
  func.func @transform_22(%arg0: i32) -> (i32, i32) {
    %c0_i32 = arith.constant 0 : i32
    %c0_i32_0 = arith.constant 0 : i32
    %c0_i32_1 = arith.constant 0 : i32
    return %c0_i32, %c0_i32_0 : i32, i32
  }
  func.func @transform_23(%arg0: i32) -> (i32, i32) {
    %c0_i32 = arith.constant 0 : i32
    %c0_i32_0 = arith.constant 0 : i32
    %c0_i32_1 = arith.constant 0 : i32
    return %c0_i32, %c0_i32_0 : i32, i32
  }
  func.func @transform_24(%arg0: i32) -> (i32, i32) {
    %c0_i32 = arith.constant 0 : i32
    %c0_i32_0 = arith.constant 0 : i32
    %c0_i32_1 = arith.constant 0 : i32
    return %c0_i32, %c0_i32_0 : i32, i32
  }
  func.func @transform_25(%arg0: i32) -> (i32, i32) {
    %c0_i32 = arith.constant 0 : i32
    %c0_i32_0 = arith.constant 0 : i32
    %c0_i32_1 = arith.constant 0 : i32
    return %c0_i32, %c0_i32_0 : i32, i32
  }
  func.func @transform_26(%arg0: i32) -> (i32, i32) {
    %c0_i32 = arith.constant 0 : i32
    %c0_i32_0 = arith.constant 0 : i32
    %c0_i32_1 = arith.constant 0 : i32
    return %c0_i32, %c0_i32_0 : i32, i32
  }
  func.func @transform_27(%arg0: i32) -> (i32, i32) {
    %c0_i32 = arith.constant 0 : i32
    %c0_i32_0 = arith.constant 0 : i32
    %c0_i32_1 = arith.constant 0 : i32
    return %c0_i32, %c0_i32_0 : i32, i32
  }
  func.func @transform_28(%arg0: i32) -> (i32, i32) {
    %c0_i32 = arith.constant 0 : i32
    %c0_i32_0 = arith.constant 0 : i32
    %c0_i32_1 = arith.constant 0 : i32
    return %c0_i32, %c0_i32_0 : i32, i32
  }
  func.func @transform_29(%arg0: i32) -> (i32, i32) {
    %c0_i32 = arith.constant 0 : i32
    %c0_i32_0 = arith.constant 0 : i32
    %c0_i32_1 = arith.constant 0 : i32
    return %c0_i32, %c0_i32_0 : i32, i32
  }
  func.func @transform_30(%arg0: i32) -> (i32, i32) {
    %c0_i32 = arith.constant 0 : i32
    %c0_i32_0 = arith.constant 0 : i32
    %c0_i32_1 = arith.constant 0 : i32
    return %c0_i32, %c0_i32_0 : i32, i32
  }
  func.func @transform_31(%arg0: i32) -> (i32, i32) {
    %c0_i32 = arith.constant 0 : i32
    %c0_i32_0 = arith.constant 0 : i32
    %c0_i32_1 = arith.constant 0 : i32
    return %c0_i32, %c0_i32_0 : i32, i32
  }
  func.func @transform_32(%arg0: i32) -> (i32, i32) {
    %c0_i32 = arith.constant 0 : i32
    %c0_i32_0 = arith.constant 0 : i32
    %c0_i32_1 = arith.constant 0 : i32
    return %c0_i32, %c0_i32_0 : i32, i32
  }
  func.func @transform_33(%arg0: i32) -> (i32, i32) {
    %c0_i32 = arith.constant 0 : i32
    %c0_i32_0 = arith.constant 0 : i32
    %c0_i32_1 = arith.constant 0 : i32
    return %c0_i32, %c0_i32_0 : i32, i32
  }
  func.func @transform_34(%arg0: i32) -> (i32, i32) {
    %c0_i32 = arith.constant 0 : i32
    %c0_i32_0 = arith.constant 0 : i32
    %c0_i32_1 = arith.constant 0 : i32
    return %c0_i32, %c0_i32_0 : i32, i32
  }
  func.func @transform_35(%arg0: i32) -> (i32, i32) {
    %c0_i32 = arith.constant 0 : i32
    %c0_i32_0 = arith.constant 0 : i32
    %c0_i32_1 = arith.constant 0 : i32
    return %c0_i32, %c0_i32_0 : i32, i32
  }
  func.func @transform_36(%arg0: i32) -> (i32, i32) {
    %c0_i32 = arith.constant 0 : i32
    %c0_i32_0 = arith.constant 0 : i32
    %c0_i32_1 = arith.constant 0 : i32
    return %c0_i32, %c0_i32_0 : i32, i32
  }
  func.func @transform_37(%arg0: i32) -> (i32, i32) {
    %c0_i32 = arith.constant 0 : i32
    %c0_i32_0 = arith.constant 0 : i32
    %c0_i32_1 = arith.constant 0 : i32
    return %c0_i32, %c0_i32_0 : i32, i32
  }
  func.func @transform_38(%arg0: i32) -> (i32, i32) {
    %c0_i32 = arith.constant 0 : i32
    %c0_i32_0 = arith.constant 0 : i32
    %c0_i32_1 = arith.constant 0 : i32
    return %c0_i32, %c0_i32_0 : i32, i32
  }
  func.func @transform_39(%arg0: i32) -> (i32, i32) {
    %c0_i32 = arith.constant 0 : i32
    %c0_i32_0 = arith.constant 0 : i32
    %c0_i32_1 = arith.constant 0 : i32
    return %c0_i32, %c0_i32_0 : i32, i32
  }
  func.func @transform_40(%arg0: i32) -> (i32, i32) {
    %c0_i32 = arith.constant 0 : i32
    %c0_i32_0 = arith.constant 0 : i32
    %c0_i32_1 = arith.constant 0 : i32
    return %c0_i32, %c0_i32_0 : i32, i32
  }
  func.func @transform_41(%arg0: i32) -> (i32, i32) {
    %c0_i32 = arith.constant 0 : i32
    %c0_i32_0 = arith.constant 0 : i32
    %c0_i32_1 = arith.constant 0 : i32
    return %c0_i32, %c0_i32_0 : i32, i32
  }
  func.func @transform_42(%arg0: i32) -> (i32, i32) {
    %c0_i32 = arith.constant 0 : i32
    %c0_i32_0 = arith.constant 0 : i32
    %c0_i32_1 = arith.constant 0 : i32
    return %c0_i32, %c0_i32_0 : i32, i32
  }
  func.func @transform_43(%arg0: i32) -> (i32, i32) {
    %c0_i32 = arith.constant 0 : i32
    %c0_i32_0 = arith.constant 0 : i32
    %c0_i32_1 = arith.constant 0 : i32
    return %c0_i32, %c0_i32_0 : i32, i32
  }
  func.func @transform_44(%arg0: i32) -> (i32, i32) {
    %c0_i32 = arith.constant 0 : i32
    %c0_i32_0 = arith.constant 0 : i32
    %c0_i32_1 = arith.constant 0 : i32
    return %c0_i32, %c0_i32_0 : i32, i32
  }
  func.func @transform_45(%arg0: i32) -> (i32, i32) {
    %c0_i32 = arith.constant 0 : i32
    %c0_i32_0 = arith.constant 0 : i32
    %c0_i32_1 = arith.constant 0 : i32
    return %c0_i32, %c0_i32_0 : i32, i32
  }
  func.func @transform_46(%arg0: i32) -> (i32, i32) {
    %c0_i32 = arith.constant 0 : i32
    %c0_i32_0 = arith.constant 0 : i32
    %c0_i32_1 = arith.constant 0 : i32
    return %c0_i32, %c0_i32_0 : i32, i32
  }
  func.func @transform_47(%arg0: i32) -> (i32, i32) {
    %c0_i32 = arith.constant 0 : i32
    %c0_i32_0 = arith.constant 0 : i32
    %c0_i32_1 = arith.constant 0 : i32
    return %c0_i32, %c0_i32_0 : i32, i32
  }
  func.func @transform_48(%arg0: i32) -> (i32, i32) {
    %c0_i32 = arith.constant 0 : i32
    %c0_i32_0 = arith.constant 0 : i32
    %c0_i32_1 = arith.constant 0 : i32
    return %c0_i32, %c0_i32_0 : i32, i32
  }
  func.func @transform_49(%arg0: i32) -> (i32, i32) {
    %c0_i32 = arith.constant 0 : i32
    %c0_i32_0 = arith.constant 0 : i32
    %c0_i32_1 = arith.constant 0 : i32
    return %c0_i32, %c0_i32_0 : i32, i32
  }
  func.func @transform_50(%arg0: i32) -> (i32, i32) {
    %c0_i32 = arith.constant 0 : i32
    %c0_i32_0 = arith.constant 0 : i32
    %c0_i32_1 = arith.constant 0 : i32
    return %c0_i32, %c0_i32_0 : i32, i32
  }
  func.func @transform_51(%arg0: i32) -> (i32, i32) {
    %c0_i32 = arith.constant 0 : i32
    %c0_i32_0 = arith.constant 0 : i32
    %c0_i32_1 = arith.constant 0 : i32
    return %c0_i32, %c0_i32_0 : i32, i32
  }
  func.func @transform_52(%arg0: i32) -> (i32, i32) {
    %c0_i32 = arith.constant 0 : i32
    %c0_i32_0 = arith.constant 0 : i32
    %c0_i32_1 = arith.constant 0 : i32
    return %c0_i32, %c0_i32_0 : i32, i32
  }
  func.func @transform_53(%arg0: i32) -> (i32, i32) {
    %c0_i32 = arith.constant 0 : i32
    %c0_i32_0 = arith.constant 0 : i32
    %c0_i32_1 = arith.constant 0 : i32
    return %c0_i32, %c0_i32_0 : i32, i32
  }
  func.func @transform_54(%arg0: i32) -> (i32, i32) {
    %c0_i32 = arith.constant 0 : i32
    %c0_i32_0 = arith.constant 0 : i32
    %c0_i32_1 = arith.constant 0 : i32
    return %c0_i32, %c0_i32_0 : i32, i32
  }
  func.func @transform_55(%arg0: i32) -> (i32, i32) {
    %c0_i32 = arith.constant 0 : i32
    %c0_i32_0 = arith.constant 0 : i32
    %c0_i32_1 = arith.constant 0 : i32
    return %c0_i32, %c0_i32_0 : i32, i32
  }
  func.func @transform_56(%arg0: i32) -> (i32, i32) {
    %c0_i32 = arith.constant 0 : i32
    %c0_i32_0 = arith.constant 0 : i32
    %c0_i32_1 = arith.constant 0 : i32
    return %c0_i32, %c0_i32_0 : i32, i32
  }
  func.func @transform_57(%arg0: i32) -> (i32, i32) {
    %c0_i32 = arith.constant 0 : i32
    %c0_i32_0 = arith.constant 0 : i32
    %c0_i32_1 = arith.constant 0 : i32
    return %c0_i32, %c0_i32_0 : i32, i32
  }
  func.func @transform_58(%arg0: i32) -> (i32, i32) {
    %c0_i32 = arith.constant 0 : i32
    %c0_i32_0 = arith.constant 0 : i32
    %c0_i32_1 = arith.constant 0 : i32
    return %c0_i32, %c0_i32_0 : i32, i32
  }
  func.func @transform_59(%arg0: i32) -> (i32, i32) {
    %c0_i32 = arith.constant 0 : i32
    %c0_i32_0 = arith.constant 0 : i32
    %c0_i32_1 = arith.constant 0 : i32
    return %c0_i32, %c0_i32_0 : i32, i32
  }
  func.func @transform_60(%arg0: i32) -> (i32, i32) {
    %c0_i32 = arith.constant 0 : i32
    %c0_i32_0 = arith.constant 0 : i32
    %c0_i32_1 = arith.constant 0 : i32
    return %c0_i32, %c0_i32_0 : i32, i32
  }
  func.func @transform_61(%arg0: i32) -> (i32, i32) {
    %c0_i32 = arith.constant 0 : i32
    %c0_i32_0 = arith.constant 0 : i32
    %c0_i32_1 = arith.constant 0 : i32
    return %c0_i32, %c0_i32_0 : i32, i32
  }
  func.func @transform_62(%arg0: i32) -> (i32, i32) {
    %c0_i32 = arith.constant 0 : i32
    %c0_i32_0 = arith.constant 0 : i32
    %c0_i32_1 = arith.constant 0 : i32
    return %c0_i32, %c0_i32_0 : i32, i32
  }
  func.func @transform_63(%arg0: i32) -> (i32, i32) {
    %c0_i32 = arith.constant 0 : i32
    %c0_i32_0 = arith.constant 0 : i32
    %c0_i32_1 = arith.constant 0 : i32
    return %c0_i32, %c0_i32_0 : i32, i32
  }
  func.func @transform_64(%arg0: i32) -> (i32, i32) {
    %c0_i32 = arith.constant 0 : i32
    %c0_i32_0 = arith.constant 0 : i32
    %c0_i32_1 = arith.constant 0 : i32
    return %c0_i32, %c0_i32_0 : i32, i32
  }
  func.func @transform_65(%arg0: i32) -> (i32, i32) {
    %c0_i32 = arith.constant 0 : i32
    %c0_i32_0 = arith.constant 0 : i32
    %c0_i32_1 = arith.constant 0 : i32
    return %c0_i32, %c0_i32_0 : i32, i32
  }
  func.func @transform_66(%arg0: i32) -> (i32, i32) {
    %c0_i32 = arith.constant 0 : i32
    %c0_i32_0 = arith.constant 0 : i32
    %c0_i32_1 = arith.constant 0 : i32
    return %c0_i32, %c0_i32_0 : i32, i32
  }
  func.func @transform_67(%arg0: i32) -> (i32, i32) {
    %c0_i32 = arith.constant 0 : i32
    %c0_i32_0 = arith.constant 0 : i32
    %c0_i32_1 = arith.constant 0 : i32
    return %c0_i32, %c0_i32_0 : i32, i32
  }
  func.func @transform_68(%arg0: i32) -> (i32, i32) {
    %c0_i32 = arith.constant 0 : i32
    %c0_i32_0 = arith.constant 0 : i32
    %c0_i32_1 = arith.constant 0 : i32
    return %c0_i32, %c0_i32_0 : i32, i32
  }
  func.func @transform_69(%arg0: i32) -> (i32, i32) {
    %c0_i32 = arith.constant 0 : i32
    %c0_i32_0 = arith.constant 0 : i32
    %c0_i32_1 = arith.constant 0 : i32
    return %c0_i32, %c0_i32_0 : i32, i32
  }
  func.func @transform_70(%arg0: i32) -> (i32, i32) {
    %c0_i32 = arith.constant 0 : i32
    %c0_i32_0 = arith.constant 0 : i32
    %c0_i32_1 = arith.constant 0 : i32
    return %c0_i32, %c0_i32_0 : i32, i32
  }
  func.func @transform_71(%arg0: i32) -> (i32, i32) {
    %c0_i32 = arith.constant 0 : i32
    %c0_i32_0 = arith.constant 0 : i32
    %c0_i32_1 = arith.constant 0 : i32
    return %c0_i32, %c0_i32_0 : i32, i32
  }
  func.func @transform_72(%arg0: i32) -> (i32, i32) {
    %c0_i32 = arith.constant 0 : i32
    %c0_i32_0 = arith.constant 0 : i32
    %c0_i32_1 = arith.constant 0 : i32
    return %c0_i32, %c0_i32_0 : i32, i32
  }
  func.func @transform_73(%arg0: i32) -> (i32, i32) {
    %c0_i32 = arith.constant 0 : i32
    %c0_i32_0 = arith.constant 0 : i32
    %c0_i32_1 = arith.constant 0 : i32
    return %c0_i32, %c0_i32_0 : i32, i32
  }
  func.func @transform_74(%arg0: i32) -> (i32, i32) {
    %c0_i32 = arith.constant 0 : i32
    %c0_i32_0 = arith.constant 0 : i32
    %c0_i32_1 = arith.constant 0 : i32
    return %c0_i32, %c0_i32_0 : i32, i32
  }
  func.func @transform_75(%arg0: i32) -> (i32, i32) {
    %c0_i32 = arith.constant 0 : i32
    %c0_i32_0 = arith.constant 0 : i32
    %c0_i32_1 = arith.constant 0 : i32
    return %c0_i32, %c0_i32_0 : i32, i32
  }
  func.func @transform_76(%arg0: i32) -> (i32, i32) {
    %c0_i32 = arith.constant 0 : i32
    %c0_i32_0 = arith.constant 0 : i32
    %c0_i32_1 = arith.constant 0 : i32
    return %c0_i32, %c0_i32_0 : i32, i32
  }
  func.func @transform_77(%arg0: i32) -> (i32, i32) {
    %c0_i32 = arith.constant 0 : i32
    %c0_i32_0 = arith.constant 0 : i32
    %c0_i32_1 = arith.constant 0 : i32
    return %c0_i32, %c0_i32_0 : i32, i32
  }
  func.func @transform_78(%arg0: i32) -> (i32, i32) {
    %c0_i32 = arith.constant 0 : i32
    %c0_i32_0 = arith.constant 0 : i32
    %c0_i32_1 = arith.constant 0 : i32
    return %c0_i32, %c0_i32_0 : i32, i32
  }
  func.func @transform_79(%arg0: i32) -> (i32, i32) {
    %c0_i32 = arith.constant 0 : i32
    %c0_i32_0 = arith.constant 0 : i32
    %c0_i32_1 = arith.constant 0 : i32
    return %c0_i32, %c0_i32_0 : i32, i32
  }
  func.func @transform_80(%arg0: i32) -> (i32, i32) {
    %c0_i32 = arith.constant 0 : i32
    %c0_i32_0 = arith.constant 0 : i32
    %c0_i32_1 = arith.constant 0 : i32
    return %c0_i32, %c0_i32_0 : i32, i32
  }
  func.func @transform_81(%arg0: i32) -> (i32, i32, i32) {
    %c0_i32 = arith.constant 0 : i32
    %c0_i32_0 = arith.constant 0 : i32
    %c0_i32_1 = arith.constant 0 : i32
    return %arg0, %c0_i32, %c0_i32_0 : i32, i32, i32
  }
  func.func @transform_82(%arg0: i32) -> (i32, i32, i32) {
    %c0_i32 = arith.constant 0 : i32
    %c0_i32_0 = arith.constant 0 : i32
    %c0_i32_1 = arith.constant 0 : i32
    return %arg0, %c0_i32, %c0_i32_0 : i32, i32, i32
  }
}

</mosaic_0001>

<llo_original>
// kernel: lamrg_v7_forward.1
$region0: #{lamrg_v7_forward.1}
  #allocation0 [shape = 'u32[]', space=smem, size = 0x4, offset = 0x4, fixed_abs, tag = 'smem constant byte address 0x4 - core index']
  #allocation1 [shape = 'u32[72,128]{1,0:T(1,128)}', space=vmem, size = 0x9000, scoped, tag = 'internal scratch']
  #allocation2 [shape = 'f32[24,64]{1,0:T(8,128)}', space=vmem, size = 0x3000, scoped, tag = 'scratch operand']
  %s0 = inlined_call_operand.smem [shape: u32[83], index: -1, kind: input, shape index: {}]
  %s1 = sld [smem:[%s0]]
  %s2 = scalar_lea.smem %s0, 1
  %s3 = sld [smem:[%s2]]
  %s4 = scalar_lea.smem %s0, 2
  %s5 = sld [smem:[%s4]]
  %s6 = scalar_lea.smem %s0, 3
  %s7 = sld [smem:[%s6]]
  %s8 = scalar_lea.smem %s0, 4
  %s9 = sld [smem:[%s8]]
  %s10 = scalar_lea.smem %s0, 5
  %s11 = sld [smem:[%s10]]
  %s12 = scalar_lea.smem %s0, 6
  %s13 = sld [smem:[%s12]]
  %s14 = scalar_lea.smem %s0, 7
  %s15 = sld [smem:[%s14]]
  %s16 = scalar_lea.smem %s0, 8
  %s17 = sld [smem:[%s16]]
  %s18 = scalar_lea.smem %s0, 9
  %s19 = sld [smem:[%s18]]
  %s20 = scalar_lea.smem %s0, 10
  %s21 = sld [smem:[%s20]]
  %s22 = scalar_lea.smem %s0, 11
  %s23 = sld [smem:[%s22]]
  %s24 = scalar_lea.smem %s0, 12
  %s25 = sld [smem:[%s24]]
  %s26 = scalar_lea.smem %s0, 13
  %s27 = sld [smem:[%s26]]
  %s28 = scalar_lea.smem %s0, 14
  %s29 = sld [smem:[%s28]]
  %s30 = scalar_lea.smem %s0, 15
  %s31 = sld [smem:[%s30]]
  %s32 = scalar_lea.smem %s0, 16
  %s33 = sld [smem:[%s32]]
  %s34 = scalar_lea.smem %s0, 17
  %s35 = sld [smem:[%s34]]
  %s36 = scalar_lea.smem %s0, 18
  %s37 = sld [smem:[%s36]]
  %s38 = scalar_lea.smem %s0, 19
  %s39 = sld [smem:[%s38]]
  %s40 = scalar_lea.smem %s0, 20
  %s41 = sld [smem:[%s40]]
  %s42 = scalar_lea.smem %s0, 21
  %s43 = sld [smem:[%s42]]
  %s44 = scalar_lea.smem %s0, 22
  %s45 = sld [smem:[%s44]]
  %s46 = scalar_lea.smem %s0, 23
  %s47 = sld [smem:[%s46]]
  %s48 = scalar_lea.smem %s0, 24
  %s49 = sld [smem:[%s48]]
  %s50 = scalar_lea.smem %s0, 25
  %s51 = sld [smem:[%s50]]
  %s52 = scalar_lea.smem %s0, 26
  %s53 = sld [smem:[%s52]]
  %s54 = scalar_lea.smem %s0, 27
  %s55 = sld [smem:[%s54]]
  %s56 = scalar_lea.smem %s0, 28
  %s57 = sld [smem:[%s56]]
  %s58 = scalar_lea.smem %s0, 29
  %s59 = sld [smem:[%s58]]
  %s60 = scalar_lea.smem %s0, 30
  %s61 = sld [smem:[%s60]]
  %s62 = scalar_lea.smem %s0, 31
  %s63 = sld [smem:[%s62]]
  %s64 = scalar_lea.smem %s0, 32
  %s65 = sld [smem:[%s64]]
  %s66 = scalar_lea.smem %s0, 33
  %s67 = sld [smem:[%s66]]
  %s68 = scalar_lea.smem %s0, 34
  %s69 = sld [smem:[%s68]]
  %s70 = scalar_lea.smem %s0, 35
  %s71 = sld [smem:[%s70]]
  %s72 = scalar_lea.smem %s0, 36
  %s73 = sld [smem:[%s72]]
  %s74 = scalar_lea.smem %s0, 37
  %s75 = sld [smem:[%s74]]
  %s76 = scalar_lea.smem %s0, 38
  %s77 = sld [smem:[%s76]]
  %s78 = scalar_lea.smem %s0, 39
  %s79 = sld [smem:[%s78]]
  %s80 = scalar_lea.smem %s0, 40
  %s81 = sld [smem:[%s80]]
  %s82 = scalar_lea.smem %s0, 41
  %s83 = sld [smem:[%s82]]
  %s84 = scalar_lea.smem %s0, 42
  %s85 = sld [smem:[%s84]]
  %s86 = scalar_lea.smem %s0, 43
  %s87 = sld [smem:[%s86]]
  %s88 = scalar_lea.smem %s0, 44
  %s89 = sld [smem:[%s88]]
  %s90 = scalar_lea.smem %s0, 45
  %s91 = sld [smem:[%s90]]
  %s92 = scalar_lea.smem %s0, 46
  %s93 = sld [smem:[%s92]]
  %s94 = scalar_lea.smem %s0, 47
  %s95 = sld [smem:[%s94]]
  %s96 = scalar_lea.smem %s0, 48
  %s97 = sld [smem:[%s96]]
  %s98 = scalar_lea.smem %s0, 49
  %s99 = sld [smem:[%s98]]
  %s100 = scalar_lea.smem %s0, 50
  %s101 = sld [smem:[%s100]]
  %s102 = scalar_lea.smem %s0, 51
  %s103 = sld [smem:[%s102]]
  %s104 = scalar_lea.smem %s0, 52
  %s105 = sld [smem:[%s104]]
  %s106 = scalar_lea.smem %s0, 53
  %s107 = sld [smem:[%s106]]
  %s108 = scalar_lea.smem %s0, 54
  %s109 = sld [smem:[%s108]]
  %s110 = scalar_lea.smem %s0, 55
  %s111 = sld [smem:[%s110]]
  %s112 = scalar_lea.smem %s0, 56
  %s113 = sld [smem:[%s112]]
  %s114 = scalar_lea.smem %s0, 57
  %s115 = sld [smem:[%s114]]
  %s116 = scalar_lea.smem %s0, 58
  %s117 = sld [smem:[%s116]]
  %s118 = scalar_lea.smem %s0, 59
  %s119 = sld [smem:[%s118]]
  %s120 = scalar_lea.smem %s0, 60
  %s121 = sld [smem:[%s120]]
  %s122 = scalar_lea.smem %s0, 61
  %s123 = sld [smem:[%s122]]
  %s124 = scalar_lea.smem %s0, 62
  %s125 = sld [smem:[%s124]]
  %s126 = scalar_lea.smem %s0, 63
  %s127 = sld [smem:[%s126]]
  %s128 = scalar_lea.smem %s0, 64
  %s129 = sld [smem:[%s128]]
  %s130 = scalar_lea.smem %s0, 65
  %s131 = sld [smem:[%s130]]
  %s132 = scalar_lea.smem %s0, 66
  %s133 = sld [smem:[%s132]]
  %s134 = scalar_lea.smem %s0, 67
  %s135 = sld [smem:[%s134]]
  %s136 = scalar_lea.smem %s0, 68
  %s137 = sld [smem:[%s136]]
  %s138 = scalar_lea.smem %s0, 69
  %s139 = sld [smem:[%s138]]
  %s140 = scalar_lea.smem %s0, 70
  %s141 = sld [smem:[%s140]]
  %s142 = scalar_lea.smem %s0, 71
  %s143 = sld [smem:[%s142]]
  %s144 = scalar_lea.smem %s0, 72
  %s145 = sld [smem:[%s144]]
  %s146 = scalar_lea.smem %s0, 73
  %s147 = sld [smem:[%s146]]
  %s148 = scalar_lea.smem %s0, 74
  %s149 = sld [smem:[%s148]]
  %s150 = scalar_lea.smem %s0, 75
  %s151 = sld [smem:[%s150]]
  %s152 = scalar_lea.smem %s0, 76
  %s153 = sld [smem:[%s152]]
  %s154 = scalar_lea.smem %s0, 77
  %s155 = sld [smem:[%s154]]
  %s156 = scalar_lea.smem %s0, 78
  %s157 = sld [smem:[%s156]]
  %s158 = scalar_lea.smem %s0, 79
  %s159 = sld [smem:[%s158]]
  %s160 = scalar_lea.smem %s0, 80
  %s161 = sld [smem:[%s160]]
  %s162 = scalar_lea.smem %s0, 81
  %s163 = sld [smem:[%s162]]
  %s164 = scalar_lea.smem %s0, 82
  %s165 = sld [smem:[%s164]]
  %166 = xla_tuple %s163, %s165
  %s167 = sld [smem:[#allocation0]]
  $region525: #{lamrg_v7_forward.1} parent=0
    _
  %s169 = ssub.s32 1, %s167
  %s170 = scalar_select 0, %s169, %s167
  $region1: #{lamrg_v7_forward.1} parent=0
    #allocation3 [shape = 'u8[512]{0}', space=vmem, size = 0x400, scoped, tag = 'input window, operand 21, single buffered']
    #allocation4 [shape = 's32[2]{0}', space=sflag, size = 0x8, scoped, tag = 'scoped memory for lamrg_v7_forward.1']
    #allocation5 [shape = 's32[2]{0}', space=sflag, size = 0x8, scoped, tag = 'scoped memory for lamrg_v7_forward.1']
    #allocation6 [shape = 'u8[512]{0}', space=vmem, size = 0x400, scoped, tag = 'input window, operand 22, single buffered']
    #allocation7 [shape = 's32[1]{0}', space=sflag, size = 0x4, scoped, tag = 'scoped memory for lamrg_v7_forward.1']
    #allocation8 [shape = 'u8[512]{0}', space=vmem, size = 0x400, scoped, tag = 'input window, operand 23, single buffered']
    #allocation9 [shape = 'u8[512]{0}', space=vmem, size = 0x400, scoped, tag = 'input window, operand 24, single buffered']
    #allocation10 [shape = 's32[1]{0}', space=sflag, size = 0x4, scoped, tag = 'scoped memory for lamrg_v7_forward.1']
    #allocation11 [shape = 'u8[512]{0}', space=vmem, size = 0x400, scoped, tag = 'input window, operand 27, single buffered']
    #allocation12 [shape = 'u8[512]{0}', space=vmem, size = 0x400, scoped, tag = 'input window, operand 28, single buffered']
    #allocation13 [shape = 's32[1]{0}', space=sflag, size = 0x4, scoped, tag = 'scoped memory for lamrg_v7_forward.1']
    #allocation14 [shape = 'u8[512]{0}', space=vmem, size = 0x400, scoped, tag = 'input window, operand 29, single buffered']
    #allocation15 [shape = 'u8[512]{0}', space=vmem, size = 0x400, scoped, tag = 'input window, operand 33, single buffered']
    #allocation16 [shape = 's32[1]{0}', space=sflag, size = 0x4, scoped, tag = 'scoped memory for lamrg_v7_forward.1']
    #allocation17 [shape = 'u8[512]{0}', space=vmem, size = 0x400, scoped, tag = 'input window, operand 34, single buffered']
    #allocation18 [shape = 'u8[512]{0}', space=vmem, size = 0x400, scoped, tag = 'input window, operand 37, single buffered']
    #allocation19 [shape = 's32[1]{0}', space=sflag, size = 0x4, scoped, tag = 'scoped memory for lamrg_v7_forward.1']
    #allocation20 [shape = 'u8[512]{0}', space=vmem, size = 0x400, scoped, tag = 'input window, operand 38, single buffered']
    #allocation21 [shape = 'u8[512]{0}', space=vmem, size = 0x400, scoped, tag = 'input window, operand 39, single buffered']
    #allocation22 [shape = 's32[1]{0}', space=sflag, size = 0x4, scoped, tag = 'scoped memory for lamrg_v7_forward.1']
    #allocation23 [shape = 'u8[512]{0}', space=vmem, size = 0x400, scoped, tag = 'input window, operand 40, single buffered']
    #allocation24 [shape = 'u8[512]{0}', space=vmem, size = 0x400, scoped, tag = 'input window, operand 41, single buffered']
    #allocation25 [shape = 's32[1]{0}', space=sflag, size = 0x4, scoped, tag = 'scoped memory for lamrg_v7_forward.1']
    #allocation26 [shape = 'u8[512]{0}', space=vmem, size = 0x400, scoped, tag = 'input window, operand 42, single buffered']
    #allocation27 [shape = 'u8[512]{0}', space=vmem, size = 0x400, scoped, tag = 'input window, operand 43, single buffered']
    #allocation28 [shape = 's32[1]{0}', space=sflag, size = 0x4, scoped, tag = 'scoped memory for lamrg_v7_forward.1']
    #allocation29 [shape = 'u8[512]{0}', space=vmem, size = 0x400, scoped, tag = 'input window, operand 44, single buffered']
    #allocation30 [shape = 'u8[512]{0}', space=vmem, size = 0x400, scoped, tag = 'input window, operand 47, single buffered']
    #allocation31 [shape = 's32[1]{0}', space=sflag, size = 0x4, scoped, tag = 'scoped memory for lamrg_v7_forward.1']
    #allocation32 [shape = 'u8[512]{0}', space=vmem, size = 0x400, scoped, tag = 'input window, operand 48, single buffered']
    #allocation33 [shape = 'u8[512]{0}', space=vmem, size = 0x400, scoped, tag = 'input window, operand 49, single buffered']
    #allocation34 [shape = 's32[1]{0}', space=sflag, size = 0x4, scoped, tag = 'scoped memory for lamrg_v7_forward.1']
    #allocation35 [shape = 'u8[512]{0}', space=vmem, size = 0x400, scoped, tag = 'input window, operand 50, single buffered']
    #allocation36 [shape = 'u8[512]{0}', space=vmem, size = 0x400, scoped, tag = 'input window, operand 53, single buffered']
    #allocation37 [shape = 's32[1]{0}', space=sflag, size = 0x4, scoped, tag = 'scoped memory for lamrg_v7_forward.1']
    #allocation38 [shape = 'u8[512]{0}', space=vmem, size = 0x400, scoped, tag = 'input window, operand 54, single buffered']
    #allocation39 [shape = 'u8[512]{0}', space=vmem, size = 0x400, scoped, tag = 'input window, operand 57, single buffered']
    #allocation40 [shape = 's32[1]{0}', space=sflag, size = 0x4, scoped, tag = 'scoped memory for lamrg_v7_forward.1']
    #allocation41 [shape = 'u8[512]{0}', space=vmem, size = 0x400, scoped, tag = 'input window, operand 58, single buffered']
    #allocation42 [shape = 'u8[512]{0}', space=vmem, size = 0x400, scoped, tag = 'input window, operand 59, single buffered']
    #allocation43 [shape = 's32[1]{0}', space=sflag, size = 0x4, scoped, tag = 'scoped memory for lamrg_v7_forward.1']
    #allocation44 [shape = 'u8[512]{0}', space=vmem, size = 0x400, scoped, tag = 'input window, operand 60, single buffered']
    #allocation45 [shape = 'u8[512]{0}', space=vmem, size = 0x400, scoped, tag = 'input window, operand 61, single buffered']
    #allocation46 [shape = 's32[1]{0}', space=sflag, size = 0x4, scoped, tag = 'scoped memory for lamrg_v7_forward.1']
    #allocation47 [shape = 'u8[512]{0}', space=vmem, size = 0x400, scoped, tag = 'input window, operand 62, single buffered']
    #allocation48 [shape = 'u8[512]{0}', space=vmem, size = 0x400, scoped, tag = 'input window, operand 65, single buffered']
    #allocation49 [shape = 's32[1]{0}', space=sflag, size = 0x4, scoped, tag = 'scoped memory for lamrg_v7_forward.1']
    #allocation50 [shape = 'u8[512]{0}', space=vmem, size = 0x400, scoped, tag = 'input window, operand 66, single buffered']
    #allocation51 [shape = 'u8[512]{0}', space=vmem, size = 0x400, scoped, tag = 'input window, operand 69, single buffered']
    #allocation52 [shape = 's32[1]{0}', space=sflag, size = 0x4, scoped, tag = 'scoped memory for lamrg_v7_forward.1']
    #allocation53 [shape = 'u8[512]{0}', space=vmem, size = 0x400, scoped, tag = 'input window, operand 70, single buffered']
    #allocation54 [shape = 'u8[512]{0}', space=vmem, size = 0x400, scoped, tag = 'input window, operand 71, single buffered']
    #allocation55 [shape = 's32[1]{0}', space=sflag, size = 0x4, scoped, tag = 'scoped memory for lamrg_v7_forward.1']
    #allocation56 [shape = 'u8[512]{0}', space=vmem, size = 0x400, scoped, tag = 'input window, operand 72, single buffered']
    #allocation57 [shape = 'u8[512]{0}', space=vmem, size = 0x400, scoped, tag = 'input window, operand 73, single buffered']
    #allocation58 [shape = 's32[1]{0}', space=sflag, size = 0x4, scoped, tag = 'scoped memory for lamrg_v7_forward.1']
    #allocation59 [shape = 'u8[512]{0}', space=vmem, size = 0x400, scoped, tag = 'input window, operand 74, single buffered']
    #allocation60 [shape = 'u8[512]{0}', space=vmem, size = 0x400, scoped, tag = 'input window, operand 75, single buffered']
    #allocation61 [shape = 's32[1]{0}', space=sflag, size = 0x4, scoped, tag = 'scoped memory for lamrg_v7_forward.1']
    #allocation62 [shape = 'u8[512]{0}', space=vmem, size = 0x400, scoped, tag = 'input window, operand 77, single buffered']
    #allocation63 [shape = 'u8[512]{0}', space=vmem, size = 0x400, scoped, tag = 'input window, operand 79, single buffered']
    #allocation64 [shape = 's32[1]{0}', space=sflag, size = 0x4, scoped, tag = 'scoped memory for lamrg_v7_forward.1']
    #allocation65 [shape = 'u8[1024]{0}', space=vmem, size = 0x400, scoped, tag = 'output window, operand 1']
    %171 = vsyncpa [#allocation4], 0
    %172 = vsyncpa [#allocation7], 0
    %173 = vsyncpa [#allocation10], 0
    %174 = vsyncpa [#allocation13], 0
    %175 = vsyncpa [#allocation16], 0
    %176 = vsyncpa [#allocation19], 0
    %177 = vsyncpa [#allocation22], 0
    %178 = vsyncpa [#allocation25], 0
    %179 = vsyncpa [#allocation28], 0
    %180 = vsyncpa [#allocation31], 0
    %181 = vsyncpa [#allocation34], 0
    %182 = vsyncpa [#allocation37], 0
    %183 = vsyncpa [#allocation40], 0
    %184 = vsyncpa [#allocation43], 0
    %185 = vsyncpa [#allocation46], 0
    %186 = vsyncpa [#allocation49], 0
    %187 = vsyncpa [#allocation52], 0
    %188 = vsyncpa [#allocation55], 0
    %189 = vsyncpa [#allocation58], 0
    %190 = vsyncpa [#allocation61], 0
    %191 = vsyncpa [#allocation64], 0
    %192 = vsyncpa [#allocation5], 0
    %s193 = scalar_lea.sflag [#allocation5], 1
    %194 = vsyncpa %s193, 0
    loop: start=0, step=1, limit=4
    $region2: #{lamrg_v7_forward.1} parent=1 // loop_pre_header
      _
    $region3: #{lamrg_v7_forward.1} parent=1 // loop_header
      %s196 = sphi 0, %s200
      %p197 = scmp.ge.s32.totalorder %s196, 4
      %s206 = sphi 0, %s208
      %s209 = sphi 0, %s206
      %s210 = sphi 0, %s209
      %s226 = sphi 0, %s210
      %s232 = sphi 0, %s234
      %s235 = sphi 0, %s232
      %s236 = sphi 0, %s235
      %s252 = sphi 0, %s236
      %s258 = sphi 0, %s260
      %s261 = sphi 0, %s258
      %s262 = sphi 0, %s261
      %s278 = sphi 0, %s262
      %s282 = sphi 0, %s282
      %s284 = sphi 0, %s282
      %s285 = sphi 0, %s284
      %s299 = sphi 0, %s285
      %s303 = sphi 0, %s303
      %s305 = sphi 0, %s303
      %s306 = sphi 0, %s305
      %s320 = sphi 0, %s306
      %s324 = sphi 0, %s324
      %s326 = sphi 0, %s324
      %s327 = sphi 0, %s326
      %s341 = sphi 0, %s327
      %s345 = sphi 0, %s345
      %s347 = sphi 0, %s345
      %s348 = sphi 0, %s347
      %s362 = sphi 0, %s348
      %s366 = sphi 0, %s366
      %s368 = sphi 0, %s366
      %s369 = sphi 0, %s368
      %s383 = sphi 0, %s369
      %s387 = sphi 0, %s387
      %s389 = sphi 0, %s387
      %s390 = sphi 0, %s389
      %s404 = sphi 0, %s390
      %s408 = sphi 0, %s408
      %s410 = sphi 0, %s408
      %s411 = sphi 0, %s410
      %s425 = sphi 0, %s411
      %s429 = sphi 0, %s429
      %s431 = sphi 0, %s429
      %s432 = sphi 0, %s431
      %s446 = sphi 0, %s432
      %s450 = sphi 0, %s450
      %s452 = sphi 0, %s450
      %s453 = sphi 0, %s452
      %s467 = sphi 0, %s453
      %s471 = sphi 0, %s471
      %s473 = sphi 0, %s471
      %s474 = sphi 0, %s473
      %s488 = sphi 0, %s474
      %s492 = sphi 0, %s492
      %s494 = sphi 0, %s492
      %s495 = sphi 0, %s494
      %s509 = sphi 0, %s495
      %s513 = sphi 0, %s513
      %s515 = sphi 0, %s513
      %s516 = sphi 0, %s515
      %s530 = sphi 0, %s516
      %s534 = sphi 0, %s534
      %s536 = sphi 0, %s534
      %s537 = sphi 0, %s536
      %s551 = sphi 0, %s537
      %s555 = sphi 0, %s555
      %s557 = sphi 0, %s555
      %s558 = sphi 0, %s557
      %s572 = sphi 0, %s558
      %s576 = sphi 0, %s576
      %s578 = sphi 0, %s576
      %s579 = sphi 0, %s578
      %s593 = sphi 0, %s579
      %s597 = sphi 0, %s597
      %s599 = sphi 0, %s597
      %s600 = sphi 0, %s599
      %s614 = sphi 0, %s600
      %s618 = sphi 0, %s618
      %s620 = sphi 0, %s618
      %s621 = sphi 0, %s620
      %s635 = sphi 0, %s621
      %s639 = sphi 0, %s639
      %s641 = sphi 0, %s639
      %s642 = sphi 0, %s641
      %s656 = sphi 0, %s642
      %s660 = sphi 0, %s660
      %s662 = sphi 0, %s660
      %s663 = sphi 0, %s662
      %s677 = sphi 0, %s663
      %s681 = sphi 0, %s681
      %s683 = sphi 0, %s681
      %s684 = sphi 0, %s683
      %s698 = sphi 0, %s684
      %s702 = sphi 0, %s702
      %s704 = sphi 0, %s702
      %s705 = sphi 0, %s704
      %s719 = sphi 0, %s705
      %s723 = sphi 0, %s723
      %s725 = sphi 0, %s723
      %s726 = sphi 0, %s725
      %s740 = sphi 0, %s726
      %s744 = sphi 0, %s744
      %s746 = sphi 0, %s744
      %s747 = sphi 0, %s746
      %s761 = sphi 0, %s747
      %s765 = sphi 0, %s765
      %s767 = sphi 0, %s765
      %s768 = sphi 0, %s767
      %s782 = sphi 0, %s768
      %s786 = sphi 0, %s786
      %s788 = sphi 0, %s786
      %s789 = sphi 0, %s788
      %s803 = sphi 0, %s789
      %s807 = sphi 0, %s807
      %s809 = sphi 0, %s807
      %s810 = sphi 0, %s809
      %s824 = sphi 0, %s810
      %s828 = sphi 0, %s828
      %s830 = sphi 0, %s828
      %s831 = sphi 0, %s830
      %s845 = sphi 0, %s831
      %s849 = sphi 0, %s849
      %s851 = sphi 0, %s849
      %s852 = sphi 0, %s851
      %s866 = sphi 0, %s852
      %s870 = sphi 0, %s870
      %s872 = sphi 0, %s870
      %s873 = sphi 0, %s872
      %s887 = sphi 0, %s873
      %s891 = sphi 0, %s891
      %s893 = sphi 0, %s891
      %s894 = sphi 0, %s893
      %s908 = sphi 0, %s894
      %s912 = sphi 0, %s912
      %s914 = sphi 0, %s912
      %s915 = sphi 0, %s914
      %s929 = sphi 0, %s915
      %s933 = sphi 0, %s933
      %s935 = sphi 0, %s933
      %s936 = sphi 0, %s935
      %s950 = sphi 0, %s936
      %s954 = sphi 0, %s954
      %s956 = sphi 0, %s954
      %s957 = sphi 0, %s956
      %s971 = sphi 0, %s957
      %s975 = sphi 0, %s975
      %s977 = sphi 0, %s975
      %s978 = sphi 0, %s977
      %s992 = sphi 0, %s978
      %s996 = sphi 0, %s996
      %s998 = sphi 0, %s996
      %s999 = sphi 0, %s998
      %s1013 = sphi 0, %s999
      %s1017 = sphi 0, %s1017
      %s1019 = sphi 0, %s1017
      %s1020 = sphi 0, %s1019
      %s1034 = sphi 0, %s1020
      %s1038 = sphi 0, %s1038
      %s1040 = sphi 0, %s1038
      %s1041 = sphi 0, %s1040
      %s1055 = sphi 0, %s1041
      %s1059 = sphi 0, %s1059
      %s1061 = sphi 0, %s1059
      %s1062 = sphi 0, %s1061
      %s1076 = sphi 0, %s1062
      %s1080 = sphi 0, %s1080
      %s1082 = sphi 0, %s1080
      %s1083 = sphi 0, %s1082
      %s1097 = sphi 0, %s1083
      %s1101 = sphi 0, %s1101
      %s1103 = sphi 0, %s1101
      %s1104 = sphi 0, %s1103
      %s1118 = sphi 0, %s1104
      %s1122 = sphi 0, %s1122
      %s1124 = sphi 0, %s1122
      %s1125 = sphi 0, %s1124
      %s1139 = sphi 0, %s1125
      %s1143 = sphi 0, %s1143
      %s1145 = sphi 0, %s1143
      %s1146 = sphi 0, %s1145
      %s1160 = sphi 0, %s1146
      %s1164 = sphi 0, %s1164
      %s1166 = sphi 0, %s1164
      %s1167 = sphi 0, %s1166
      %s1181 = sphi 0, %s1167
      %s1185 = sphi 0, %s1185
      %s1187 = sphi 0, %s1185
      %s1188 = sphi 0, %s1187
      %s1202 = sphi 0, %s1188
      %s1206 = sphi 0, %s1206
      %s1208 = sphi 0, %s1206
      %s1209 = sphi 0, %s1208
      %s1223 = sphi 0, %s1209
      %s1227 = sphi 0, %s1227
      %s1229 = sphi 0, %s1227
      %s1230 = sphi 0, %s1229
      %s1244 = sphi 0, %s1230
      %s1248 = sphi 0, %s1248
      %s1250 = sphi 0, %s1248
      %s1251 = sphi 0, %s1250
      %s1265 = sphi 0, %s1251
      %s1269 = sphi 0, %s1269
      %s1271 = sphi 0, %s1269
      %s1272 = sphi 0, %s1271
      %s1286 = sphi 0, %s1272
      %s1290 = sphi 0, %s1290
      %s1292 = sphi 0, %s1290
      %s1293 = sphi 0, %s1292
      %s1307 = sphi 0, %s1293
      %s1311 = sphi 0, %s1311
      %s1313 = sphi 0, %s1311
      %s1314 = sphi 0, %s1313
      %s1328 = sphi 0, %s1314
      %s1332 = sphi 0, %s1332
      %s1334 = sphi 0, %s1332
      %s1335 = sphi 0, %s1334
      %s1349 = sphi 0, %s1335
      %s1353 = sphi 0, %s1353
      %s1355 = sphi 0, %s1353
      %s1356 = sphi 0, %s1355
      %s1370 = sphi 0, %s1356
      %s1374 = sphi 0, %s1374
      %s1376 = sphi 0, %s1374
      %s1377 = sphi 0, %s1376
      %s1391 = sphi 0, %s1377
      %s1395 = sphi 0, %s1395
      %s1397 = sphi 0, %s1395
      %s1398 = sphi 0, %s1397
      %s1412 = sphi 0, %s1398
      %s1416 = sphi 0, %s1416
      %s1418 = sphi 0, %s1416
      %s1419 = sphi 0, %s1418
      %s1433 = sphi 0, %s1419
      %s1437 = sphi 0, %s1437
      %s1439 = sphi 0, %s1437
      %s1440 = sphi 0, %s1439
      %s1454 = sphi 0, %s1440
      %s1458 = sphi 0, %s1458
      %s1460 = sphi 0, %s1458
      %s1461 = sphi 0, %s1460
      %s1475 = sphi 0, %s1461
      %s1479 = sphi 0, %s1479
      %s1481 = sphi 0, %s1479
      %s1482 = sphi 0, %s1481
      %s1496 = sphi 0, %s1482
      %s1500 = sphi 0, %s1500
      %s1502 = sphi 0, %s1500
      %s1503 = sphi 0, %s1502
      %s1517 = sphi 0, %s1503
      %s1521 = sphi 0, %s1521
      %s1523 = sphi 0, %s1521
      %s1524 = sphi 0, %s1523
      %s1538 = sphi 0, %s1524
      %s1542 = sphi 0, %s1542
      %s1544 = sphi 0, %s1542
      %s1545 = sphi 0, %s1544
      %s1559 = sphi 0, %s1545
      %s1563 = sphi 0, %s1563
      %s1565 = sphi 0, %s1563
      %s1566 = sphi 0, %s1565
      %s1580 = sphi 0, %s1566
      %s1584 = sphi 0, %s1584
      %s1586 = sphi 0, %s1584
      %s1587 = sphi 0, %s1586
      %s1601 = sphi 0, %s1587
      %s1605 = sphi 0, %s1605
      %s1607 = sphi 0, %s1605
      %s1608 = sphi 0, %s1607
      %s1622 = sphi 0, %s1608
      %s1626 = sphi 0, %s1626
      %s1628 = sphi 0, %s1626
      %s1629 = sphi 0, %s1628
      %s1643 = sphi 0, %s1629
      %s1647 = sphi 0, %s1647
      %s1649 = sphi 0, %s1647
      %s1650 = sphi 0, %s1649
      %s1664 = sphi 0, %s1650
      %s1668 = sphi 0, %s1668
      %s1670 = sphi 0, %s1668
      %s1671 = sphi 0, %s1670
      %s1685 = sphi 0, %s1671
      %s1689 = sphi 0, %s1689
      %s1691 = sphi 0, %s1689
      %s1692 = sphi 0, %s1691
      %s1706 = sphi 0, %s1692
      %s1710 = sphi 0, %s1710
      %s1712 = sphi 0, %s1710
      %s1713 = sphi 0, %s1712
      %s1727 = sphi 0, %s1713
      %s1731 = sphi 0, %s1731
      %s1733 = sphi 0, %s1731
      %s1734 = sphi 0, %s1733
      %s1748 = sphi 0, %s1734
      %s1752 = sphi 0, %s1752
      %s1754 = sphi 0, %s1752
      %s1755 = sphi 0, %s1754
      %s1769 = sphi 0, %s1755
      %s1773 = sphi 0, %s1773
      %s1775 = sphi 0, %s1773
      %s1776 = sphi 0, %s1775
      %s1790 = sphi 0, %s1776
      %s1794 = sphi 0, %s1794
      %s1796 = sphi 0, %s1794
      %s1797 = sphi 0, %s1796
      %s1811 = sphi 0, %s1797
      %s1815 = sphi 0, %s1815
      %s1817 = sphi 0, %s1815
      %s1818 = sphi 0, %s1817
      %s1832 = sphi 0, %s1818
      %s1836 = sphi 0, %s1836
      %s1838 = sphi 0, %s1836
      %s1839 = sphi 0, %s1838
      %s1853 = sphi 0, %s1839
      %s1857 = sphi 0, %s1857
      %s1859 = sphi 0, %s1857
      %s1860 = sphi 0, %s1859
      %s1874 = sphi 0, %s1860
      %s1878 = sphi 0, %s1878
      %s1880 = sphi 0, %s1878
      %s1881 = sphi 0, %s1880
      %s1895 = sphi 0, %s1881
      %s1899 = sphi 0, %s1899
      %s1901 = sphi 0, %s1899
      %s1902 = sphi 0, %s1901
      %s1916 = sphi 0, %s1902
      %s1922 = sphi 0, %s1924
      %s1925 = sphi 0, %s1922
      %s1926 = sphi 0, %s1925
      %s1942 = sphi 0, %s1926
      %s1948 = sphi 0, %s1950
      %s1951 = sphi 0, %s1948
      %s1952 = sphi 0, %s1951
      %s1968 = sphi 0, %s1952
    $region4: #{lamrg_v7_forward.1} parent=1 // loop_header_branch
      %199 = sbr.rel (%p197) target = $region8
    $region5: #{lamrg_v7_forward.1} parent=1 // loop_body
      %s201 = ssub.s32 %s196, 1
      %s202 = ssub.s32 %s196, 2
      %s203 = sadd.s32 %s196, 1
      %s204 = ssub.s32 %s196, %s203
      %p205 = scmp.eq.s32.totalorder %s204, 0
      %s207 = sadd.s32 %s206, 1
      %s208 = scalar_select %p205, %s206, %s207
      %p211 = pneg %p205
      %p212 = scmp.eq.s32.totalorder %s196, 1
      %p213 = por %p211, %p212
      %p214 = scmp.ne.s32.totalorder %s206, %s209
      %p215 = scmp.eq.s32.totalorder %s196, 0
      %p216 = por %p214, %p215
      %p217 = scmp.ne.s32.totalorder %s206, %s209
      %p218 = scmp.eq.s32.totalorder %s201, 1
      %p219 = por %p217, %p218
      %p220 = scmp.ne.s32.totalorder %s209, %s210
      %p221 = scmp.eq.s32.totalorder %s201, 0
      %p222 = por %p220, %p221
      %p223 = scmp.ne.s32.totalorder %s209, %s210
      %p224 = scmp.eq.s32.totalorder %s202, 1
      %p225 = por %p223, %p224
      %p227 = scmp.ne.s32.totalorder %s210, %s226
      %p228 = scmp.eq.s32.totalorder %s202, 0
      %p229 = por %p227, %p228
      %s230 = ssub.s32 %s196, %s203
      %p231 = scmp.eq.s32.totalorder %s230, 0
      %s233 = sadd.s32 %s232, 1
      %s234 = scalar_select %p231, %s232, %s233
      %p237 = pneg %p231
      %p238 = scmp.eq.s32.totalorder %s196, 1
      %p239 = por %p237, %p238
      %p240 = scmp.ne.s32.totalorder %s232, %s235
      %p241 = scmp.eq.s32.totalorder %s196, 0
      %p242 = por %p240, %p241
      %p243 = scmp.ne.s32.totalorder %s232, %s235
      %p244 = scmp.eq.s32.totalorder %s201, 1
      %p245 = por %p243, %p244
      %p246 = scmp.ne.s32.totalorder %s235, %s236
      %p247 = scmp.eq.s32.totalorder %s201, 0
      %p248 = por %p246, %p247
      %p249 = scmp.ne.s32.totalorder %s235, %s236
      %p250 = scmp.eq.s32.totalorder %s202, 1
      %p251 = por %p249, %p250
      %p253 = scmp.ne.s32.totalorder %s236, %s252
      %p254 = scmp.eq.s32.totalorder %s202, 0
      %p255 = por %p253, %p254
      %s256 = ssub.s32 %s196, %s203
      %p257 = scmp.eq.s32.totalorder %s256, 0
      %s259 = sadd.s32 %s258, 1
      %s260 = scalar_select %p257, %s258, %s259
      %p263 = pneg %p257
      %p264 = scmp.eq.s32.totalorder %s196, 1
      %p265 = por %p263, %p264
      %p266 = scmp.ne.s32.totalorder %s258, %s261
      %p267 = scmp.eq.s32.totalorder %s196, 0
      %p268 = por %p266, %p267
      %p269 = scmp.ne.s32.totalorder %s258, %s261
      %p270 = scmp.eq.s32.totalorder %s201, 1
      %p271 = por %p269, %p270
      %p272 = scmp.ne.s32.totalorder %s261, %s262
      %p273 = scmp.eq.s32.totalorder %s201, 0
      %p274 = por %p272, %p273
      %p275 = scmp.ne.s32.totalorder %s261, %s262
      %p276 = scmp.eq.s32.totalorder %s202, 1
      %p277 = por %p275, %p276
      %p279 = scmp.ne.s32.totalorder %s262, %s278
      %p280 = scmp.eq.s32.totalorder %s202, 0
      %p281 = por %p279, %p280
      %s283 = sadd.s32 %s282, 1
      %p286 = scmp.eq.s32.totalorder %s196, 1
      %p287 = scmp.ne.s32.totalorder %s282, %s284
      %p288 = scmp.eq.s32.totalorder %s196, 0
      %p289 = por %p287, %p288
      %p290 = scmp.ne.s32.totalorder %s282, %s284
      %p291 = scmp.eq.s32.totalorder %s201, 1
      %p292 = por %p290, %p291
      %p293 = scmp.ne.s32.totalorder %s284, %s285
      %p294 = scmp.eq.s32.totalorder %s201, 0
      %p295 = por %p293, %p294
      %p296 = scmp.ne.s32.totalorder %s284, %s285
      %p297 = scmp.eq.s32.totalorder %s202, 1
      %p298 = por %p296, %p297
      %p300 = scmp.ne.s32.totalorder %s285, %s299
      %p301 = scmp.eq.s32.totalorder %s202, 0
      %p302 = por %p300, %p301
      %s304 = sadd.s32 %s303, 1
      %p307 = scmp.eq.s32.totalorder %s196, 1
      %p308 = scmp.ne.s32.totalorder %s303, %s305
      %p309 = scmp.eq.s32.totalorder %s196, 0
      %p310 = por %p308, %p309
      %p311 = scmp.ne.s32.totalorder %s303, %s305
      %p312 = scmp.eq.s32.totalorder %s201, 1
      %p313 = por %p311, %p312
      %p314 = scmp.ne.s32.totalorder %s305, %s306
      %p315 = scmp.eq.s32.totalorder %s201, 0
      %p316 = por %p314, %p315
      %p317 = scmp.ne.s32.totalorder %s305, %s306
      %p318 = scmp.eq.s32.totalorder %s202, 1
      %p319 = por %p317, %p318
      %p321 = scmp.ne.s32.totalorder %s306, %s320
      %p322 = scmp.eq.s32.totalorder %s202, 0
      %p323 = por %p321, %p322
      %s325 = sadd.s32 %s324, 1
      %p328 = scmp.eq.s32.totalorder %s196, 1
      %p329 = scmp.ne.s32.totalorder %s324, %s326
      %p330 = scmp.eq.s32.totalorder %s196, 0
      %p331 = por %p329, %p330
      %p332 = scmp.ne.s32.totalorder %s324, %s326
      %p333 = scmp.eq.s32.totalorder %s201, 1
      %p334 = por %p332, %p333
      %p335 = scmp.ne.s32.totalorder %s326, %s327
      %p336 = scmp.eq.s32.totalorder %s201, 0
      %p337 = por %p335, %p336
      %p338 = scmp.ne.s32.totalorder %s326, %s327
      %p339 = scmp.eq.s32.totalorder %s202, 1
      %p340 = por %p338, %p339
      %p342 = scmp.ne.s32.totalorder %s327, %s341
      %p343 = scmp.eq.s32.totalorder %s202, 0
      %p344 = por %p342, %p343
      %s346 = sadd.s32 %s345, 1
      %p349 = scmp.eq.s32.totalorder %s196, 1
      %p350 = scmp.ne.s32.totalorder %s345, %s347
      %p351 = scmp.eq.s32.totalorder %s196, 0
      %p352 = por %p350, %p351
      %p353 = scmp.ne.s32.totalorder %s345, %s347
      %p354 = scmp.eq.s32.totalorder %s201, 1
      %p355 = por %p353, %p354
      %p356 = scmp.ne.s32.totalorder %s347, %s348
      %p357 = scmp.eq.s32.totalorder %s201, 0
      %p358 = por %p356, %p357
      %p359 = scmp.ne.s32.totalorder %s347, %s348
      %p360 = scmp.eq.s32.totalorder %s202, 1
      %p361 = por %p359, %p360
      %p363 = scmp.ne.s32.totalorder %s348, %s362
      %p364 = scmp.eq.s32.totalorder %s202, 0
      %p365 = por %p363, %p364
      %s367 = sadd.s32 %s366, 1
      %p370 = scmp.eq.s32.totalorder %s196, 1
      %p371 = scmp.ne.s32.totalorder %s366, %s368
      %p372 = scmp.eq.s32.totalorder %s196, 0
      %p373 = por %p371, %p372
      %p374 = scmp.ne.s32.totalorder %s366, %s368
      %p375 = scmp.eq.s32.totalorder %s201, 1
      %p376 = por %p374, %p375
      %p377 = scmp.ne.s32.totalorder %s368, %s369
      %p378 = scmp.eq.s32.totalorder %s201, 0
      %p379 = por %p377, %p378
      %p380 = scmp.ne.s32.totalorder %s368, %s369
      %p381 = scmp.eq.s32.totalorder %s202, 1
      %p382 = por %p380, %p381
      %p384 = scmp.ne.s32.totalorder %s369, %s383
      %p385 = scmp.eq.s32.totalorder %s202, 0
      %p386 = por %p384, %p385
      %s388 = sadd.s32 %s387, 1
      %p391 = scmp.eq.s32.totalorder %s196, 1
      %p392 = scmp.ne.s32.totalorder %s387, %s389
      %p393 = scmp.eq.s32.totalorder %s196, 0
      %p394 = por %p392, %p393
      %p395 = scmp.ne.s32.totalorder %s387, %s389
      %p396 = scmp.eq.s32.totalorder %s201, 1
      %p397 = por %p395, %p396
      %p398 = scmp.ne.s32.totalorder %s389, %s390
      %p399 = scmp.eq.s32.totalorder %s201, 0
      %p400 = por %p398, %p399
      %p401 = scmp.ne.s32.totalorder %s389, %s390
      %p402 = scmp.eq.s32.totalorder %s202, 1
      %p403 = por %p401, %p402
      %p405 = scmp.ne.s32.totalorder %s390, %s404
      %p406 = scmp.eq.s32.totalorder %s202, 0
      %p407 = por %p405, %p406
      %s409 = sadd.s32 %s408, 1
      %p412 = scmp.eq.s32.totalorder %s196, 1
      %p413 = scmp.ne.s32.totalorder %s408, %s410
      %p414 = scmp.eq.s32.totalorder %s196, 0
      %p415 = por %p413, %p414
      %p416 = scmp.ne.s32.totalorder %s408, %s410
      %p417 = scmp.eq.s32.totalorder %s201, 1
      %p418 = por %p416, %p417
      %p419 = scmp.ne.s32.totalorder %s410, %s411
      %p420 = scmp.eq.s32.totalorder %s201, 0
      %p421 = por %p419, %p420
      %p422 = scmp.ne.s32.totalorder %s410, %s411
      %p423 = scmp.eq.s32.totalorder %s202, 1
      %p424 = por %p422, %p423
      %p426 = scmp.ne.s32.totalorder %s411, %s425
      %p427 = scmp.eq.s32.totalorder %s202, 0
      %p428 = por %p426, %p427
      %s430 = sadd.s32 %s429, 1
      %p433 = scmp.eq.s32.totalorder %s196, 1
      %p434 = scmp.ne.s32.totalorder %s429, %s431
      %p435 = scmp.eq.s32.totalorder %s196, 0
      %p436 = por %p434, %p435
      %p437 = scmp.ne.s32.totalorder %s429, %s431
      %p438 = scmp.eq.s32.totalorder %s201, 1
      %p439 = por %p437, %p438
      %p440 = scmp.ne.s32.totalorder %s431, %s432
      %p441 = scmp.eq.s32.totalorder %s201, 0
      %p442 = por %p440, %p441
      %p443 = scmp.ne.s32.totalorder %s431, %s432
      %p444 = scmp.eq.s32.totalorder %s202, 1
      %p445 = por %p443, %p444
      %p447 = scmp.ne.s32.totalorder %s432, %s446
      %p448 = scmp.eq.s32.totalorder %s202, 0
      %p449 = por %p447, %p448
      %s451 = sadd.s32 %s450, 1
      %p454 = scmp.eq.s32.totalorder %s196, 1
      %p455 = scmp.ne.s32.totalorder %s450, %s452
      %p456 = scmp.eq.s32.totalorder %s196, 0
      %p457 = por %p455, %p456
      %p458 = scmp.ne.s32.totalorder %s450, %s452
      %p459 = scmp.eq.s32.totalorder %s201, 1
      %p460 = por %p458, %p459
      %p461 = scmp.ne.s32.totalorder %s452, %s453
      %p462 = scmp.eq.s32.totalorder %s201, 0
      %p463 = por %p461, %p462
      %p464 = scmp.ne.s32.totalorder %s452, %s453
      %p465 = scmp.eq.s32.totalorder %s202, 1
      %p466 = por %p464, %p465
      %p468 = scmp.ne.s32.totalorder %s453, %s467
      %p469 = scmp.eq.s32.totalorder %s202, 0
      %p470 = por %p468, %p469
      %s472 = sadd.s32 %s471, 1
      %p475 = scmp.eq.s32.totalorder %s196, 1
      %p476 = scmp.ne.s32.totalorder %s471, %s473
      %p477 = scmp.eq.s32.totalorder %s196, 0
      %p478 = por %p476, %p477
      %p479 = scmp.ne.s32.totalorder %s471, %s473
      %p480 = scmp.eq.s32.totalorder %s201, 1
      %p481 = por %p479, %p480
      %p482 = scmp.ne.s32.totalorder %s473, %s474
      %p483 = scmp.eq.s32.totalorder %s201, 0
      %p484 = por %p482, %p483
      %p485 = scmp.ne.s32.totalorder %s473, %s474
      %p486 = scmp.eq.s32.totalorder %s202, 1
      %p487 = por %p485, %p486
      %p489 = scmp.ne.s32.totalorder %s474, %s488
      %p490 = scmp.eq.s32.totalorder %s202, 0
      %p491 = por %p489, %p490
      %s493 = sadd.s32 %s492, 1
      %p496 = scmp.eq.s32.totalorder %s196, 1
      %p497 = scmp.ne.s32.totalorder %s492, %s494
      %p498 = scmp.eq.s32.totalorder %s196, 0
      %p499 = por %p497, %p498
      %p500 = scmp.ne.s32.totalorder %s492, %s494
      %p501 = scmp.eq.s32.totalorder %s201, 1
      %p502 = por %p500, %p501
      %p503 = scmp.ne.s32.totalorder %s494, %s495
      %p504 = scmp.eq.s32.totalorder %s201, 0
      %p505 = por %p503, %p504
      %p506 = scmp.ne.s32.totalorder %s494, %s495
      %p507 = scmp.eq.s32.totalorder %s202, 1
      %p508 = por %p506, %p507
      %p510 = scmp.ne.s32.totalorder %s495, %s509
      %p511 = scmp.eq.s32.totalorder %s202, 0
      %p512 = por %p510, %p511
      %s514 = sadd.s32 %s513, 1
      %p517 = scmp.eq.s32.totalorder %s196, 1
      %p518 = scmp.ne.s32.totalorder %s513, %s515
      %p519 = scmp.eq.s32.totalorder %s196, 0
      %p520 = por %p518, %p519
      %p521 = scmp.ne.s32.totalorder %s513, %s515
      %p522 = scmp.eq.s32.totalorder %s201, 1
      %p523 = por %p521, %p522
      %p524 = scmp.ne.s32.totalorder %s515, %s516
      %p525 = scmp.eq.s32.totalorder %s201, 0
      %p526 = por %p524, %p525
      %p527 = scmp.ne.s32.totalorder %s515, %s516
      %p528 = scmp.eq.s32.totalorder %s202, 1
      %p529 = por %p527, %p528
      %p531 = scmp.ne.s32.totalorder %s516, %s530
      %p532 = scmp.eq.s32.totalorder %s202, 0
      %p533 = por %p531, %p532
      %s535 = sadd.s32 %s534, 1
      %p538 = scmp.eq.s32.totalorder %s196, 1
      %p539 = scmp.ne.s32.totalorder %s534, %s536
      %p540 = scmp.eq.s32.totalorder %s196, 0
      %p541 = por %p539, %p540
      %p542 = scmp.ne.s32.totalorder %s534, %s536
      %p543 = scmp.eq.s32.totalorder %s201, 1
      %p544 = por %p542, %p543
      %p545 = scmp.ne.s32.totalorder %s536, %s537
      %p546 = scmp.eq.s32.totalorder %s201, 0
      %p547 = por %p545, %p546
      %p548 = scmp.ne.s32.totalorder %s536, %s537
      %p549 = scmp.eq.s32.totalorder %s202, 1
      %p550 = por %p548, %p549
      %p552 = scmp.ne.s32.totalorder %s537, %s551
      %p553 = scmp.eq.s32.totalorder %s202, 0
      %p554 = por %p552, %p553
      %s556 = sadd.s32 %s555, 1
      %p559 = scmp.eq.s32.totalorder %s196, 1
      %p560 = scmp.ne.s32.totalorder %s555, %s557
      %p561 = scmp.eq.s32.totalorder %s196, 0
      %p562 = por %p560, %p561
      %p563 = scmp.ne.s32.totalorder %s555, %s557
      %p564 = scmp.eq.s32.totalorder %s201, 1
      %p565 = por %p563, %p564
      %p566 = scmp.ne.s32.totalorder %s557, %s558
      %p567 = scmp.eq.s32.totalorder %s201, 0
      %p568 = por %p566, %p567
      %p569 = scmp.ne.s32.totalorder %s557, %s558
      %p570 = scmp.eq.s32.totalorder %s202, 1
      %p571 = por %p569, %p570
      %p573 = scmp.ne.s32.totalorder %s558, %s572
      %p574 = scmp.eq.s32.totalorder %s202, 0
      %p575 = por %p573, %p574
      %s577 = sadd.s32 %s576, 1
      %p580 = scmp.eq.s32.totalorder %s196, 1
      %p581 = scmp.ne.s32.totalorder %s576, %s578
      %p582 = scmp.eq.s32.totalorder %s196, 0
      %p583 = por %p581, %p582
      %p584 = scmp.ne.s32.totalorder %s576, %s578
      %p585 = scmp.eq.s32.totalorder %s201, 1
      %p586 = por %p584, %p585
      %p587 = scmp.ne.s32.totalorder %s578, %s579
      %p588 = scmp.eq.s32.totalorder %s201, 0
      %p589 = por %p587, %p588
      %p590 = scmp.ne.s32.totalorder %s578, %s579
      %p591 = scmp.eq.s32.totalorder %s202, 1
      %p592 = por %p590, %p591
      %p594 = scmp.ne.s32.totalorder %s579, %s593
      %p595 = scmp.eq.s32.totalorder %s202, 0
      %p596 = por %p594, %p595
      %s598 = sadd.s32 %s597, 1
      %p601 = scmp.eq.s32.totalorder %s196, 1
      %p602 = scmp.ne.s32.totalorder %s597, %s599
      %p603 = scmp.eq.s32.totalorder %s196, 0
      %p604 = por %p602, %p603
      %p605 = scmp.ne.s32.totalorder %s597, %s599
      %p606 = scmp.eq.s32.totalorder %s201, 1
      %p607 = por %p605, %p606
      %p608 = scmp.ne.s32.totalorder %s599, %s600
      %p609 = scmp.eq.s32.totalorder %s201, 0
      %p610 = por %p608, %p609
      %p611 = scmp.ne.s32.totalorder %s599, %s600
      %p612 = scmp.eq.s32.totalorder %s202, 1
      %p613 = por %p611, %p612
      %p615 = scmp.ne.s32.totalorder %s600, %s614
      %p616 = scmp.eq.s32.totalorder %s202, 0
      %p617 = por %p615, %p616
      %s619 = sadd.s32 %s618, 1
      %p622 = scmp.eq.s32.totalorder %s196, 1
      %p623 = scmp.ne.s32.totalorder %s618, %s620
      %p624 = scmp.eq.s32.totalorder %s196, 0
      %p625 = por %p623, %p624
      %p626 = scmp.ne.s32.totalorder %s618, %s620
      %p627 = scmp.eq.s32.totalorder %s201, 1
      %p628 = por %p626, %p627
      %p629 = scmp.ne.s32.totalorder %s620, %s621
      %p630 = scmp.eq.s32.totalorder %s201, 0
      %p631 = por %p629, %p630
      %p632 = scmp.ne.s32.totalorder %s620, %s621
      %p633 = scmp.eq.s32.totalorder %s202, 1
      %p634 = por %p632, %p633
      %p636 = scmp.ne.s32.totalorder %s621, %s635
      %p637 = scmp.eq.s32.totalorder %s202, 0
      %p638 = por %p636, %p637
      %s640 = sadd.s32 %s639, 1
      %p643 = scmp.eq.s32.totalorder %s196, 1
      %p644 = scmp.ne.s32.totalorder %s639, %s641
      %p645 = scmp.eq.s32.totalorder %s196, 0
      %p646 = por %p644, %p645
      %p647 = scmp.ne.s32.totalorder %s639, %s641
      %p648 = scmp.eq.s32.totalorder %s201, 1
      %p649 = por %p647, %p648
      %p650 = scmp.ne.s32.totalorder %s641, %s642
      %p651 = scmp.eq.s32.totalorder %s201, 0
      %p652 = por %p650, %p651
      %p653 = scmp.ne.s32.totalorder %s641, %s642
      %p654 = scmp.eq.s32.totalorder %s202, 1
      %p655 = por %p653, %p654
      %p657 = scmp.ne.s32.totalorder %s642, %s656
      %p658 = scmp.eq.s32.totalorder %s202, 0
      %p659 = por %p657, %p658
      %s661 = sadd.s32 %s660, 1
      %p664 = scmp.eq.s32.totalorder %s196, 1
      %p665 = scmp.ne.s32.totalorder %s660, %s662
      %p666 = scmp.eq.s32.totalorder %s196, 0
      %p667 = por %p665, %p666
      %p668 = scmp.ne.s32.totalorder %s660, %s662
      %p669 = scmp.eq.s32.totalorder %s201, 1
      %p670 = por %p668, %p669
      %p671 = scmp.ne.s32.totalorder %s662, %s663
      %p672 = scmp.eq.s32.totalorder %s201, 0
      %p673 = por %p671, %p672
      %p674 = scmp.ne.s32.totalorder %s662, %s663
      %p675 = scmp.eq.s32.totalorder %s202, 1
      %p676 = por %p674, %p675
      %p678 = scmp.ne.s32.totalorder %s663, %s677
      %p679 = scmp.eq.s32.totalorder %s202, 0
      %p680 = por %p678, %p679
      %s682 = sadd.s32 %s681, 1
      %p685 = scmp.eq.s32.totalorder %s196, 1
      %p686 = scmp.ne.s32.totalorder %s681, %s683
      %p687 = scmp.eq.s32.totalorder %s196, 0
      %p688 = por %p686, %p687
      %p689 = scmp.ne.s32.totalorder %s681, %s683
      %p690 = scmp.eq.s32.totalorder %s201, 1
      %p691 = por %p689, %p690
      %p692 = scmp.ne.s32.totalorder %s683, %s684
      %p693 = scmp.eq.s32.totalorder %s201, 0
      %p694 = por %p692, %p693
      %p695 = scmp.ne.s32.totalorder %s683, %s684
      %p696 = scmp.eq.s32.totalorder %s202, 1
      %p697 = por %p695, %p696
      %p699 = scmp.ne.s32.totalorder %s684, %s698
      %p700 = scmp.eq.s32.totalorder %s202, 0
      %p701 = por %p699, %p700
      %s703 = sadd.s32 %s702, 1
      %p706 = scmp.eq.s32.totalorder %s196, 1
      %p707 = scmp.ne.s32.totalorder %s702, %s704
      %p708 = scmp.eq.s32.totalorder %s196, 0
      %p709 = por %p707, %p708
      %p710 = scmp.ne.s32.totalorder %s702, %s704
      %p711 = scmp.eq.s32.totalorder %s201, 1
      %p712 = por %p710, %p711
      %p713 = scmp.ne.s32.totalorder %s704, %s705
      %p714 = scmp.eq.s32.totalorder %s201, 0
      %p715 = por %p713, %p714
      %p716 = scmp.ne.s32.totalorder %s704, %s705
      %p717 = scmp.eq.s32.totalorder %s202, 1
      %p718 = por %p716, %p717
      %p720 = scmp.ne.s32.totalorder %s705, %s719
      %p721 = scmp.eq.s32.totalorder %s202, 0
      %p722 = por %p720, %p721
      %s724 = sadd.s32 %s723, 1
      %p727 = scmp.eq.s32.totalorder %s196, 1
      %p728 = scmp.ne.s32.totalorder %s723, %s725
      %p729 = scmp.eq.s32.totalorder %s196, 0
      %p730 = por %p728, %p729
      %p731 = scmp.ne.s32.totalorder %s723, %s725
      %p732 = scmp.eq.s32.totalorder %s201, 1
      %p733 = por %p731, %p732
      %p734 = scmp.ne.s32.totalorder %s725, %s726
      %p735 = scmp.eq.s32.totalorder %s201, 0
      %p736 = por %p734, %p735
      %p737 = scmp.ne.s32.totalorder %s725, %s726
      %p738 = scmp.eq.s32.totalorder %s202, 1
      %p739 = por %p737, %p738
      %p741 = scmp.ne.s32.totalorder %s726, %s740
      %p742 = scmp.eq.s32.totalorder %s202, 0
      %p743 = por %p741, %p742
      %s745 = sadd.s32 %s744, 1
      %p748 = scmp.eq.s32.totalorder %s196, 1
      %p749 = scmp.ne.s32.totalorder %s744, %s746
      %p750 = scmp.eq.s32.totalorder %s196, 0
      %p751 = por %p749, %p750
      %p752 = scmp.ne.s32.totalorder %s744, %s746
      %p753 = scmp.eq.s32.totalorder %s201, 1
      %p754 = por %p752, %p753
      %p755 = scmp.ne.s32.totalorder %s746, %s747
      %p756 = scmp.eq.s32.totalorder %s201, 0
      %p757 = por %p755, %p756
      %p758 = scmp.ne.s32.totalorder %s746, %s747
      %p759 = scmp.eq.s32.totalorder %s202, 1
      %p760 = por %p758, %p759
      %p762 = scmp.ne.s32.totalorder %s747, %s761
      %p763 = scmp.eq.s32.totalorder %s202, 0
      %p764 = por %p762, %p763
      %s766 = sadd.s32 %s765, 1
      %p769 = scmp.eq.s32.totalorder %s196, 1
      %p770 = scmp.ne.s32.totalorder %s765, %s767
      %p771 = scmp.eq.s32.totalorder %s196, 0
      %p772 = por %p770, %p771
      %p773 = scmp.ne.s32.totalorder %s765, %s767
      %p774 = scmp.eq.s32.totalorder %s201, 1
      %p775 = por %p773, %p774
      %p776 = scmp.ne.s32.totalorder %s767, %s768
      %p777 = scmp.eq.s32.totalorder %s201, 0
      %p778 = por %p776, %p777
      %p779 = scmp.ne.s32.totalorder %s767, %s768
      %p780 = scmp.eq.s32.totalorder %s202, 1
      %p781 = por %p779, %p780
      %p783 = scmp.ne.s32.totalorder %s768, %s782
      %p784 = scmp.eq.s32.totalorder %s202, 0
      %p785 = por %p783, %p784
      %s787 = sadd.s32 %s786, 1
      %p790 = scmp.eq.s32.totalorder %s196, 1
      %p791 = scmp.ne.s32.totalorder %s786, %s788
      %p792 = scmp.eq.s32.totalorder %s196, 0
      %p793 = por %p791, %p792
      %p794 = scmp.ne.s32.totalorder %s786, %s788
      %p795 = scmp.eq.s32.totalorder %s201, 1
      %p796 = por %p794, %p795
      %p797 = scmp.ne.s32.totalorder %s788, %s789
      %p798 = scmp.eq.s32.totalorder %s201, 0
      %p799 = por %p797, %p798
      %p800 = scmp.ne.s32.totalorder %s788, %s789
      %p801 = scmp.eq.s32.totalorder %s202, 1
      %p802 = por %p800, %p801
      %p804 = scmp.ne.s32.totalorder %s789, %s803
      %p805 = scmp.eq.s32.totalorder %s202, 0
      %p806 = por %p804, %p805
      %s808 = sadd.s32 %s807, 1
      %p811 = scmp.eq.s32.totalorder %s196, 1
      %p812 = scmp.ne.s32.totalorder %s807, %s809
      %p813 = scmp.eq.s32.totalorder %s196, 0
      %p814 = por %p812, %p813
      %p815 = scmp.ne.s32.totalorder %s807, %s809
      %p816 = scmp.eq.s32.totalorder %s201, 1
      %p817 = por %p815, %p816
      %p818 = scmp.ne.s32.totalorder %s809, %s810
      %p819 = scmp.eq.s32.totalorder %s201, 0
      %p820 = por %p818, %p819
      %p821 = scmp.ne.s32.totalorder %s809, %s810
      %p822 = scmp.eq.s32.totalorder %s202, 1
      %p823 = por %p821, %p822
      %p825 = scmp.ne.s32.totalorder %s810, %s824
      %p826 = scmp.eq.s32.totalorder %s202, 0
      %p827 = por %p825, %p826
      %s829 = sadd.s32 %s828, 1
      %p832 = scmp.eq.s32.totalorder %s196, 1
      %p833 = scmp.ne.s32.totalorder %s828, %s830
      %p834 = scmp.eq.s32.totalorder %s196, 0
      %p835 = por %p833, %p834
      %p836 = scmp.ne.s32.totalorder %s828, %s830
      %p837 = scmp.eq.s32.totalorder %s201, 1
      %p838 = por %p836, %p837
      %p839 = scmp.ne.s32.totalorder %s830, %s831
      %p840 = scmp.eq.s32.totalorder %s201, 0
      %p841 = por %p839, %p840
      %p842 = scmp.ne.s32.totalorder %s830, %s831
      %p843 = scmp.eq.s32.totalorder %s202, 1
      %p844 = por %p842, %p843
      %p846 = scmp.ne.s32.totalorder %s831, %s845
      %p847 = scmp.eq.s32.totalorder %s202, 0
      %p848 = por %p846, %p847
      %s850 = sadd.s32 %s849, 1
      %p853 = scmp.eq.s32.totalorder %s196, 1
      %p854 = scmp.ne.s32.totalorder %s849, %s851
      %p855 = scmp.eq.s32.totalorder %s196, 0
      %p856 = por %p854, %p855
      %p857 = scmp.ne.s32.totalorder %s849, %s851
      %p858 = scmp.eq.s32.totalorder %s201, 1
      %p859 = por %p857, %p858
      %p860 = scmp.ne.s32.totalorder %s851, %s852
      %p861 = scmp.eq.s32.totalorder %s201, 0
      %p862 = por %p860, %p861
      %p863 = scmp.ne.s32.totalorder %s851, %s852
      %p864 = scmp.eq.s32.totalorder %s202, 1
      %p865 = por %p863, %p864
      %p867 = scmp.ne.s32.totalorder %s852, %s866
      %p868 = scmp.eq.s32.totalorder %s202, 0
      %p869 = por %p867, %p868
      %s871 = sadd.s32 %s870, 1
      %p874 = scmp.eq.s32.totalorder %s196, 1
      %p875 = scmp.ne.s32.totalorder %s870, %s872
      %p876 = scmp.eq.s32.totalorder %s196, 0
      %p877 = por %p875, %p876
      %p878 = scmp.ne.s32.totalorder %s870, %s872
      %p879 = scmp.eq.s32.totalorder %s201, 1
      %p880 = por %p878, %p879
      %p881 = scmp.ne.s32.totalorder %s872, %s873
      %p882 = scmp.eq.s32.totalorder %s201, 0
      %p883 = por %p881, %p882
      %p884 = scmp.ne.s32.totalorder %s872, %s873
      %p885 = scmp.eq.s32.totalorder %s202, 1
      %p886 = por %p884, %p885
      %p888 = scmp.ne.s32.totalorder %s873, %s887
      %p889 = scmp.eq.s32.totalorder %s202, 0
      %p890 = por %p888, %p889
      %s892 = sadd.s32 %s891, 1
      %p895 = scmp.eq.s32.totalorder %s196, 1
      %p896 = scmp.ne.s32.totalorder %s891, %s893
      %p897 = scmp.eq.s32.totalorder %s196, 0
      %p898 = por %p896, %p897
      %p899 = scmp.ne.s32.totalorder %s891, %s893
      %p900 = scmp.eq.s32.totalorder %s201, 1
      %p901 = por %p899, %p900
      %p902 = scmp.ne.s32.totalorder %s893, %s894
      %p903 = scmp.eq.s32.totalorder %s201, 0
      %p904 = por %p902, %p903
      %p905 = scmp.ne.s32.totalorder %s893, %s894
      %p906 = scmp.eq.s32.totalorder %s202, 1
      %p907 = por %p905, %p906
      %p909 = scmp.ne.s32.totalorder %s894, %s908
      %p910 = scmp.eq.s32.totalorder %s202, 0
      %p911 = por %p909, %p910
      %s913 = sadd.s32 %s912, 1
      %p916 = scmp.eq.s32.totalorder %s196, 1
      %p917 = scmp.ne.s32.totalorder %s912, %s914
      %p918 = scmp.eq.s32.totalorder %s196, 0
      %p919 = por %p917, %p918
      %p920 = scmp.ne.s32.totalorder %s912, %s914
      %p921 = scmp.eq.s32.totalorder %s201, 1
      %p922 = por %p920, %p921
      %p923 = scmp.ne.s32.totalorder %s914, %s915
      %p924 = scmp.eq.s32.totalorder %s201, 0
      %p925 = por %p923, %p924
      %p926 = scmp.ne.s32.totalorder %s914, %s915
      %p927 = scmp.eq.s32.totalorder %s202, 1
      %p928 = por %p926, %p927
      %p930 = scmp.ne.s32.totalorder %s915, %s929
      %p931 = scmp.eq.s32.totalorder %s202, 0
      %p932 = por %p930, %p931
      %s934 = sadd.s32 %s933, 1
      %p937 = scmp.eq.s32.totalorder %s196, 1
      %p938 = scmp.ne.s32.totalorder %s933, %s935
      %p939 = scmp.eq.s32.totalorder %s196, 0
      %p940 = por %p938, %p939
      %p941 = scmp.ne.s32.totalorder %s933, %s935
      %p942 = scmp.eq.s32.totalorder %s201, 1
      %p943 = por %p941, %p942
      %p944 = scmp.ne.s32.totalorder %s935, %s936
      %p945 = scmp.eq.s32.totalorder %s201, 0
      %p946 = por %p944, %p945
      %p947 = scmp.ne.s32.totalorder %s935, %s936
      %p948 = scmp.eq.s32.totalorder %s202, 1
      %p949 = por %p947, %p948
      %p951 = scmp.ne.s32.totalorder %s936, %s950
      %p952 = scmp.eq.s32.totalorder %s202, 0
      %p953 = por %p951, %p952
      %s955 = sadd.s32 %s954, 1
      %p958 = scmp.eq.s32.totalorder %s196, 1
      %p959 = scmp.ne.s32.totalorder %s954, %s956
      %p960 = scmp.eq.s32.totalorder %s196, 0
      %p961 = por %p959, %p960
      %p962 = scmp.ne.s32.totalorder %s954, %s956
      %p963 = scmp.eq.s32.totalorder %s201, 1
      %p964 = por %p962, %p963
      %p965 = scmp.ne.s32.totalorder %s956, %s957
      %p966 = scmp.eq.s32.totalorder %s201, 0
      %p967 = por %p965, %p966
      %p968 = scmp.ne.s32.totalorder %s956, %s957
      %p969 = scmp.eq.s32.totalorder %s202, 1
      %p970 = por %p968, %p969
      %p972 = scmp.ne.s32.totalorder %s957, %s971
      %p973 = scmp.eq.s32.totalorder %s202, 0
      %p974 = por %p972, %p973
      %s976 = sadd.s32 %s975, 1
      %p979 = scmp.eq.s32.totalorder %s196, 1
      %p980 = scmp.ne.s32.totalorder %s975, %s977
      %p981 = scmp.eq.s32.totalorder %s196, 0
      %p982 = por %p980, %p981
      %p983 = scmp.ne.s32.totalorder %s975, %s977
      %p984 = scmp.eq.s32.totalorder %s201, 1
      %p985 = por %p983, %p984
      %p986 = scmp.ne.s32.totalorder %s977, %s978
      %p987 = scmp.eq.s32.totalorder %s201, 0
      %p988 = por %p986, %p987
      %p989 = scmp.ne.s32.totalorder %s977, %s978
      %p990 = scmp.eq.s32.totalorder %s202, 1
      %p991 = por %p989, %p990
      %p993 = scmp.ne.s32.totalorder %s978, %s992
      %p994 = scmp.eq.s32.totalorder %s202, 0
      %p995 = por %p993, %p994
      %s997 = sadd.s32 %s996, 1
      %p1000 = scmp.eq.s32.totalorder %s196, 1
      %p1001 = scmp.ne.s32.totalorder %s996, %s998
      %p1002 = scmp.eq.s32.totalorder %s196, 0
      %p1003 = por %p1001, %p1002
      %p1004 = scmp.ne.s32.totalorder %s996, %s998
      %p1005 = scmp.eq.s32.totalorder %s201, 1
      %p1006 = por %p1004, %p1005
      %p1007 = scmp.ne.s32.totalorder %s998, %s999
      %p1008 = scmp.eq.s32.totalorder %s201, 0
      %p1009 = por %p1007, %p1008
      %p1010 = scmp.ne.s32.totalorder %s998, %s999
      %p1011 = scmp.eq.s32.totalorder %s202, 1
      %p1012 = por %p1010, %p1011
      %p1014 = scmp.ne.s32.totalorder %s999, %s1013
      %p1015 = scmp.eq.s32.totalorder %s202, 0
      %p1016 = por %p1014, %p1015
      %s1018 = sadd.s32 %s1017, 1
      %p1021 = scmp.eq.s32.totalorder %s196, 1
      %p1022 = scmp.ne.s32.totalorder %s1017, %s1019
      %p1023 = scmp.eq.s32.totalorder %s196, 0
      %p1024 = por %p1022, %p1023
      %p1025 = scmp.ne.s32.totalorder %s1017, %s1019
      %p1026 = scmp.eq.s32.totalorder %s201, 1
      %p1027 = por %p1025, %p1026
      %p1028 = scmp.ne.s32.totalorder %s1019, %s1020
      %p1029 = scmp.eq.s32.totalorder %s201, 0
      %p1030 = por %p1028, %p1029
      %p1031 = scmp.ne.s32.totalorder %s1019, %s1020
      %p1032 = scmp.eq.s32.totalorder %s202, 1
      %p1033 = por %p1031, %p1032
      %p1035 = scmp.ne.s32.totalorder %s1020, %s1034
      %p1036 = scmp.eq.s32.totalorder %s202, 0
      %p1037 = por %p1035, %p1036
      %s1039 = sadd.s32 %s1038, 1
      %p1042 = scmp.eq.s32.totalorder %s196, 1
      %p1043 = scmp.ne.s32.totalorder %s1038, %s1040
      %p1044 = scmp.eq.s32.totalorder %s196, 0
      %p1045 = por %p1043, %p1044
      %p1046 = scmp.ne.s32.totalorder %s1038, %s1040
      %p1047 = scmp.eq.s32.totalorder %s201, 1
      %p1048 = por %p1046, %p1047
      %p1049 = scmp.ne.s32.totalorder %s1040, %s1041
      %p1050 = scmp.eq.s32.totalorder %s201, 0
      %p1051 = por %p1049, %p1050
      %p1052 = scmp.ne.s32.totalorder %s1040, %s1041
      %p1053 = scmp.eq.s32.totalorder %s202, 1
      %p1054 = por %p1052, %p1053
      %p1056 = scmp.ne.s32.totalorder %s1041, %s1055
      %p1057 = scmp.eq.s32.totalorder %s202, 0
      %p1058 = por %p1056, %p1057
      %s1060 = sadd.s32 %s1059, 1
      %p1063 = scmp.eq.s32.totalorder %s196, 1
      %p1064 = scmp.ne.s32.totalorder %s1059, %s1061
      %p1065 = scmp.eq.s32.totalorder %s196, 0
      %p1066 = por %p1064, %p1065
      %p1067 = scmp.ne.s32.totalorder %s1059, %s1061
      %p1068 = scmp.eq.s32.totalorder %s201, 1
      %p1069 = por %p1067, %p1068
      %p1070 = scmp.ne.s32.totalorder %s1061, %s1062
      %p1071 = scmp.eq.s32.totalorder %s201, 0
      %p1072 = por %p1070, %p1071
      %p1073 = scmp.ne.s32.totalorder %s1061, %s1062
      %p1074 = scmp.eq.s32.totalorder %s202, 1
      %p1075 = por %p1073, %p1074
      %p1077 = scmp.ne.s32.totalorder %s1062, %s1076
      %p1078 = scmp.eq.s32.totalorder %s202, 0
      %p1079 = por %p1077, %p1078
      %s1081 = sadd.s32 %s1080, 1
      %p1084 = scmp.eq.s32.totalorder %s196, 1
      %p1085 = scmp.ne.s32.totalorder %s1080, %s1082
      %p1086 = scmp.eq.s32.totalorder %s196, 0
      %p1087 = por %p1085, %p1086
      %p1088 = scmp.ne.s32.totalorder %s1080, %s1082
      %p1089 = scmp.eq.s32.totalorder %s201, 1
      %p1090 = por %p1088, %p1089
      %p1091 = scmp.ne.s32.totalorder %s1082, %s1083
      %p1092 = scmp.eq.s32.totalorder %s201, 0
      %p1093 = por %p1091, %p1092
      %p1094 = scmp.ne.s32.totalorder %s1082, %s1083
      %p1095 = scmp.eq.s32.totalorder %s202, 1
      %p1096 = por %p1094, %p1095
      %p1098 = scmp.ne.s32.totalorder %s1083, %s1097
      %p1099 = scmp.eq.s32.totalorder %s202, 0
      %p1100 = por %p1098, %p1099
      %s1102 = sadd.s32 %s1101, 1
      %p1105 = scmp.eq.s32.totalorder %s196, 1
      %p1106 = scmp.ne.s32.totalorder %s1101, %s1103
      %p1107 = scmp.eq.s32.totalorder %s196, 0
      %p1108 = por %p1106, %p1107
      %p1109 = scmp.ne.s32.totalorder %s1101, %s1103
      %p1110 = scmp.eq.s32.totalorder %s201, 1
      %p1111 = por %p1109, %p1110
      %p1112 = scmp.ne.s32.totalorder %s1103, %s1104
      %p1113 = scmp.eq.s32.totalorder %s201, 0
      %p1114 = por %p1112, %p1113
      %p1115 = scmp.ne.s32.totalorder %s1103, %s1104
      %p1116 = scmp.eq.s32.totalorder %s202, 1
      %p1117 = por %p1115, %p1116
      %p1119 = scmp.ne.s32.totalorder %s1104, %s1118
      %p1120 = scmp.eq.s32.totalorder %s202, 0
      %p1121 = por %p1119, %p1120
      %s1123 = sadd.s32 %s1122, 1
      %p1126 = scmp.eq.s32.totalorder %s196, 1
      %p1127 = scmp.ne.s32.totalorder %s1122, %s1124
      %p1128 = scmp.eq.s32.totalorder %s196, 0
      %p1129 = por %p1127, %p1128
      %p1130 = scmp.ne.s32.totalorder %s1122, %s1124
      %p1131 = scmp.eq.s32.totalorder %s201, 1
      %p1132 = por %p1130, %p1131
      %p1133 = scmp.ne.s32.totalorder %s1124, %s1125
      %p1134 = scmp.eq.s32.totalorder %s201, 0
      %p1135 = por %p1133, %p1134
      %p1136 = scmp.ne.s32.totalorder %s1124, %s1125
      %p1137 = scmp.eq.s32.totalorder %s202, 1
      %p1138 = por %p1136, %p1137
      %p1140 = scmp.ne.s32.totalorder %s1125, %s1139
      %p1141 = scmp.eq.s32.totalorder %s202, 0
      %p1142 = por %p1140, %p1141
      %s1144 = sadd.s32 %s1143, 1
      %p1147 = scmp.eq.s32.totalorder %s196, 1
      %p1148 = scmp.ne.s32.totalorder %s1143, %s1145
      %p1149 = scmp.eq.s32.totalorder %s196, 0
      %p1150 = por %p1148, %p1149
      %p1151 = scmp.ne.s32.totalorder %s1143, %s1145
      %p1152 = scmp.eq.s32.totalorder %s201, 1
      %p1153 = por %p1151, %p1152
      %p1154 = scmp.ne.s32.totalorder %s1145, %s1146
      %p1155 = scmp.eq.s32.totalorder %s201, 0
      %p1156 = por %p1154, %p1155
      %p1157 = scmp.ne.s32.totalorder %s1145, %s1146
      %p1158 = scmp.eq.s32.totalorder %s202, 1
      %p1159 = por %p1157, %p1158
      %p1161 = scmp.ne.s32.totalorder %s1146, %s1160
      %p1162 = scmp.eq.s32.totalorder %s202, 0
      %p1163 = por %p1161, %p1162
      %s1165 = sadd.s32 %s1164, 1
      %p1168 = scmp.eq.s32.totalorder %s196, 1
      %p1169 = scmp.ne.s32.totalorder %s1164, %s1166
      %p1170 = scmp.eq.s32.totalorder %s196, 0
      %p1171 = por %p1169, %p1170
      %p1172 = scmp.ne.s32.totalorder %s1164, %s1166
      %p1173 = scmp.eq.s32.totalorder %s201, 1
      %p1174 = por %p1172, %p1173
      %p1175 = scmp.ne.s32.totalorder %s1166, %s1167
      %p1176 = scmp.eq.s32.totalorder %s201, 0
      %p1177 = por %p1175, %p1176
      %p1178 = scmp.ne.s32.totalorder %s1166, %s1167
      %p1179 = scmp.eq.s32.totalorder %s202, 1
      %p1180 = por %p1178, %p1179
      %p1182 = scmp.ne.s32.totalorder %s1167, %s1181
      %p1183 = scmp.eq.s32.totalorder %s202, 0
      %p1184 = por %p1182, %p1183
      %s1186 = sadd.s32 %s1185, 1
      %p1189 = scmp.eq.s32.totalorder %s196, 1
      %p1190 = scmp.ne.s32.totalorder %s1185, %s1187
      %p1191 = scmp.eq.s32.totalorder %s196, 0
      %p1192 = por %p1190, %p1191
      %p1193 = scmp.ne.s32.totalorder %s1185, %s1187
      %p1194 = scmp.eq.s32.totalorder %s201, 1
      %p1195 = por %p1193, %p1194
      %p1196 = scmp.ne.s32.totalorder %s1187, %s1188
      %p1197 = scmp.eq.s32.totalorder %s201, 0
      %p1198 = por %p1196, %p1197
      %p1199 = scmp.ne.s32.totalorder %s1187, %s1188
      %p1200 = scmp.eq.s32.totalorder %s202, 1
      %p1201 = por %p1199, %p1200
      %p1203 = scmp.ne.s32.totalorder %s1188, %s1202
      %p1204 = scmp.eq.s32.totalorder %s202, 0
      %p1205 = por %p1203, %p1204
      %s1207 = sadd.s32 %s1206, 1
      %p1210 = scmp.eq.s32.totalorder %s196, 1
      %p1211 = scmp.ne.s32.totalorder %s1206, %s1208
      %p1212 = scmp.eq.s32.totalorder %s196, 0
      %p1213 = por %p1211, %p1212
      %p1214 = scmp.ne.s32.totalorder %s1206, %s1208
      %p1215 = scmp.eq.s32.totalorder %s201, 1
      %p1216 = por %p1214, %p1215
      %p1217 = scmp.ne.s32.totalorder %s1208, %s1209
      %p1218 = scmp.eq.s32.totalorder %s201, 0
      %p1219 = por %p1217, %p1218
      %p1220 = scmp.ne.s32.totalorder %s1208, %s1209
      %p1221 = scmp.eq.s32.totalorder %s202, 1
      %p1222 = por %p1220, %p1221
      %p1224 = scmp.ne.s32.totalorder %s1209, %s1223
      %p1225 = scmp.eq.s32.totalorder %s202, 0
      %p1226 = por %p1224, %p1225
      %s1228 = sadd.s32 %s1227, 1
      %p1231 = scmp.eq.s32.totalorder %s196, 1
      %p1232 = scmp.ne.s32.totalorder %s1227, %s1229
      %p1233 = scmp.eq.s32.totalorder %s196, 0
      %p1234 = por %p1232, %p1233
      %p1235 = scmp.ne.s32.totalorder %s1227, %s1229
      %p1236 = scmp.eq.s32.totalorder %s201, 1
      %p1237 = por %p1235, %p1236
      %p1238 = scmp.ne.s32.totalorder %s1229, %s1230
      %p1239 = scmp.eq.s32.totalorder %s201, 0
      %p1240 = por %p1238, %p1239
      %p1241 = scmp.ne.s32.totalorder %s1229, %s1230
      %p1242 = scmp.eq.s32.totalorder %s202, 1
      %p1243 = por %p1241, %p1242
      %p1245 = scmp.ne.s32.totalorder %s1230, %s1244
      %p1246 = scmp.eq.s32.totalorder %s202, 0
      %p1247 = por %p1245, %p1246
      %s1249 = sadd.s32 %s1248, 1
      %p1252 = scmp.eq.s32.totalorder %s196, 1
      %p1253 = scmp.ne.s32.totalorder %s1248, %s1250
      %p1254 = scmp.eq.s32.totalorder %s196, 0
      %p1255 = por %p1253, %p1254
      %p1256 = scmp.ne.s32.totalorder %s1248, %s1250
      %p1257 = scmp.eq.s32.totalorder %s201, 1
      %p1258 = por %p1256, %p1257
      %p1259 = scmp.ne.s32.totalorder %s1250, %s1251
      %p1260 = scmp.eq.s32.totalorder %s201, 0
      %p1261 = por %p1259, %p1260
      %p1262 = scmp.ne.s32.totalorder %s1250, %s1251
      %p1263 = scmp.eq.s32.totalorder %s202, 1
      %p1264 = por %p1262, %p1263
      %p1266 = scmp.ne.s32.totalorder %s1251, %s1265
      %p1267 = scmp.eq.s32.totalorder %s202, 0
      %p1268 = por %p1266, %p1267
      %s1270 = sadd.s32 %s1269, 1
      %p1273 = scmp.eq.s32.totalorder %s196, 1
      %p1274 = scmp.ne.s32.totalorder %s1269, %s1271
      %p1275 = scmp.eq.s32.totalorder %s196, 0
      %p1276 = por %p1274, %p1275
      %p1277 = scmp.ne.s32.totalorder %s1269, %s1271
      %p1278 = scmp.eq.s32.totalorder %s201, 1
      %p1279 = por %p1277, %p1278
      %p1280 = scmp.ne.s32.totalorder %s1271, %s1272
      %p1281 = scmp.eq.s32.totalorder %s201, 0
      %p1282 = por %p1280, %p1281
      %p1283 = scmp.ne.s32.totalorder %s1271, %s1272
      %p1284 = scmp.eq.s32.totalorder %s202, 1
      %p1285 = por %p1283, %p1284
      %p1287 = scmp.ne.s32.totalorder %s1272, %s1286
      %p1288 = scmp.eq.s32.totalorder %s202, 0
      %p1289 = por %p1287, %p1288
      %s1291 = sadd.s32 %s1290, 1
      %p1294 = scmp.eq.s32.totalorder %s196, 1
      %p1295 = scmp.ne.s32.totalorder %s1290, %s1292
      %p1296 = scmp.eq.s32.totalorder %s196, 0
      %p1297 = por %p1295, %p1296
      %p1298 = scmp.ne.s32.totalorder %s1290, %s1292
      %p1299 = scmp.eq.s32.totalorder %s201, 1
      %p1300 = por %p1298, %p1299
      %p1301 = scmp.ne.s32.totalorder %s1292, %s1293
      %p1302 = scmp.eq.s32.totalorder %s201, 0
      %p1303 = por %p1301, %p1302
      %p1304 = scmp.ne.s32.totalorder %s1292, %s1293
      %p1305 = scmp.eq.s32.totalorder %s202, 1
      %p1306 = por %p1304, %p1305
      %p1308 = scmp.ne.s32.totalorder %s1293, %s1307
      %p1309 = scmp.eq.s32.totalorder %s202, 0
      %p1310 = por %p1308, %p1309
      %s1312 = sadd.s32 %s1311, 1
      %p1315 = scmp.eq.s32.totalorder %s196, 1
      %p1316 = scmp.ne.s32.totalorder %s1311, %s1313
      %p1317 = scmp.eq.s32.totalorder %s196, 0
      %p1318 = por %p1316, %p1317
      %p1319 = scmp.ne.s32.totalorder %s1311, %s1313
      %p1320 = scmp.eq.s32.totalorder %s201, 1
      %p1321 = por %p1319, %p1320
      %p1322 = scmp.ne.s32.totalorder %s1313, %s1314
      %p1323 = scmp.eq.s32.totalorder %s201, 0
      %p1324 = por %p1322, %p1323
      %p1325 = scmp.ne.s32.totalorder %s1313, %s1314
      %p1326 = scmp.eq.s32.totalorder %s202, 1
      %p1327 = por %p1325, %p1326
      %p1329 = scmp.ne.s32.totalorder %s1314, %s1328
      %p1330 = scmp.eq.s32.totalorder %s202, 0
      %p1331 = por %p1329, %p1330
      %s1333 = sadd.s32 %s1332, 1
      %p1336 = scmp.eq.s32.totalorder %s196, 1
      %p1337 = scmp.ne.s32.totalorder %s1332, %s1334
      %p1338 = scmp.eq.s32.totalorder %s196, 0
      %p1339 = por %p1337, %p1338
      %p1340 = scmp.ne.s32.totalorder %s1332, %s1334
      %p1341 = scmp.eq.s32.totalorder %s201, 1
      %p1342 = por %p1340, %p1341
      %p1343 = scmp.ne.s32.totalorder %s1334, %s1335
      %p1344 = scmp.eq.s32.totalorder %s201, 0
      %p1345 = por %p1343, %p1344
      %p1346 = scmp.ne.s32.totalorder %s1334, %s1335
      %p1347 = scmp.eq.s32.totalorder %s202, 1
      %p1348 = por %p1346, %p1347
      %p1350 = scmp.ne.s32.totalorder %s1335, %s1349
      %p1351 = scmp.eq.s32.totalorder %s202, 0
      %p1352 = por %p1350, %p1351
      %s1354 = sadd.s32 %s1353, 1
      %p1357 = scmp.eq.s32.totalorder %s196, 1
      %p1358 = scmp.ne.s32.totalorder %s1353, %s1355
      %p1359 = scmp.eq.s32.totalorder %s196, 0
      %p1360 = por %p1358, %p1359
      %p1361 = scmp.ne.s32.totalorder %s1353, %s1355
      %p1362 = scmp.eq.s32.totalorder %s201, 1
      %p1363 = por %p1361, %p1362
      %p1364 = scmp.ne.s32.totalorder %s1355, %s1356
      %p1365 = scmp.eq.s32.totalorder %s201, 0
      %p1366 = por %p1364, %p1365
      %p1367 = scmp.ne.s32.totalorder %s1355, %s1356
      %p1368 = scmp.eq.s32.totalorder %s202, 1
      %p1369 = por %p1367, %p1368
      %p1371 = scmp.ne.s32.totalorder %s1356, %s1370
      %p1372 = scmp.eq.s32.totalorder %s202, 0
      %p1373 = por %p1371, %p1372
      %s1375 = sadd.s32 %s1374, 1
      %p1378 = scmp.eq.s32.totalorder %s196, 1
      %p1379 = scmp.ne.s32.totalorder %s1374, %s1376
      %p1380 = scmp.eq.s32.totalorder %s196, 0
      %p1381 = por %p1379, %p1380
      %p1382 = scmp.ne.s32.totalorder %s1374, %s1376
      %p1383 = scmp.eq.s32.totalorder %s201, 1
      %p1384 = por %p1382, %p1383
      %p1385 = scmp.ne.s32.totalorder %s1376, %s1377
      %p1386 = scmp.eq.s32.totalorder %s201, 0
      %p1387 = por %p1385, %p1386
      %p1388 = scmp.ne.s32.totalorder %s1376, %s1377
      %p1389 = scmp.eq.s32.totalorder %s202, 1
      %p1390 = por %p1388, %p1389
      %p1392 = scmp.ne.s32.totalorder %s1377, %s1391
      %p1393 = scmp.eq.s32.totalorder %s202, 0
      %p1394 = por %p1392, %p1393
      %s1396 = sadd.s32 %s1395, 1
      %p1399 = scmp.eq.s32.totalorder %s196, 1
      %p1400 = scmp.ne.s32.totalorder %s1395, %s1397
      %p1401 = scmp.eq.s32.totalorder %s196, 0
      %p1402 = por %p1400, %p1401
      %p1403 = scmp.ne.s32.totalorder %s1395, %s1397
      %p1404 = scmp.eq.s32.totalorder %s201, 1
      %p1405 = por %p1403, %p1404
      %p1406 = scmp.ne.s32.totalorder %s1397, %s1398
      %p1407 = scmp.eq.s32.totalorder %s201, 0
      %p1408 = por %p1406, %p1407
      %p1409 = scmp.ne.s32.totalorder %s1397, %s1398
      %p1410 = scmp.eq.s32.totalorder %s202, 1
      %p1411 = por %p1409, %p1410
      %p1413 = scmp.ne.s32.totalorder %s1398, %s1412
      %p1414 = scmp.eq.s32.totalorder %s202, 0
      %p1415 = por %p1413, %p1414
      %s1417 = sadd.s32 %s1416, 1
      %p1420 = scmp.eq.s32.totalorder %s196, 1
      %p1421 = scmp.ne.s32.totalorder %s1416, %s1418
      %p1422 = scmp.eq.s32.totalorder %s196, 0
      %p1423 = por %p1421, %p1422
      %p1424 = scmp.ne.s32.totalorder %s1416, %s1418
      %p1425 = scmp.eq.s32.totalorder %s201, 1
      %p1426 = por %p1424, %p1425
      %p1427 = scmp.ne.s32.totalorder %s1418, %s1419
      %p1428 = scmp.eq.s32.totalorder %s201, 0
      %p1429 = por %p1427, %p1428
      %p1430 = scmp.ne.s32.totalorder %s1418, %s1419
      %p1431 = scmp.eq.s32.totalorder %s202, 1
      %p1432 = por %p1430, %p1431
      %p1434 = scmp.ne.s32.totalorder %s1419, %s1433
      %p1435 = scmp.eq.s32.totalorder %s202, 0
      %p1436 = por %p1434, %p1435
      %s1438 = sadd.s32 %s1437, 1
      %p1441 = scmp.eq.s32.totalorder %s196, 1
      %p1442 = scmp.ne.s32.totalorder %s1437, %s1439
      %p1443 = scmp.eq.s32.totalorder %s196, 0
      %p1444 = por %p1442, %p1443
      %p1445 = scmp.ne.s32.totalorder %s1437, %s1439
      %p1446 = scmp.eq.s32.totalorder %s201, 1
      %p1447 = por %p1445, %p1446
      %p1448 = scmp.ne.s32.totalorder %s1439, %s1440
      %p1449 = scmp.eq.s32.totalorder %s201, 0
      %p1450 = por %p1448, %p1449
      %p1451 = scmp.ne.s32.totalorder %s1439, %s1440
      %p1452 = scmp.eq.s32.totalorder %s202, 1
      %p1453 = por %p1451, %p1452
      %p1455 = scmp.ne.s32.totalorder %s1440, %s1454
      %p1456 = scmp.eq.s32.totalorder %s202, 0
      %p1457 = por %p1455, %p1456
      %s1459 = sadd.s32 %s1458, 1
      %p1462 = scmp.eq.s32.totalorder %s196, 1
      %p1463 = scmp.ne.s32.totalorder %s1458, %s1460
      %p1464 = scmp.eq.s32.totalorder %s196, 0
      %p1465 = por %p1463, %p1464
      %p1466 = scmp.ne.s32.totalorder %s1458, %s1460
      %p1467 = scmp.eq.s32.totalorder %s201, 1
      %p1468 = por %p1466, %p1467
      %p1469 = scmp.ne.s32.totalorder %s1460, %s1461
      %p1470 = scmp.eq.s32.totalorder %s201, 0
      %p1471 = por %p1469, %p1470
      %p1472 = scmp.ne.s32.totalorder %s1460, %s1461
      %p1473 = scmp.eq.s32.totalorder %s202, 1
      %p1474 = por %p1472, %p1473
      %p1476 = scmp.ne.s32.totalorder %s1461, %s1475
      %p1477 = scmp.eq.s32.totalorder %s202, 0
      %p1478 = por %p1476, %p1477
      %s1480 = sadd.s32 %s1479, 1
      %p1483 = scmp.eq.s32.totalorder %s196, 1
      %p1484 = scmp.ne.s32.totalorder %s1479, %s1481
      %p1485 = scmp.eq.s32.totalorder %s196, 0
      %p1486 = por %p1484, %p1485
      %p1487 = scmp.ne.s32.totalorder %s1479, %s1481
      %p1488 = scmp.eq.s32.totalorder %s201, 1
      %p1489 = por %p1487, %p1488
      %p1490 = scmp.ne.s32.totalorder %s1481, %s1482
      %p1491 = scmp.eq.s32.totalorder %s201, 0
      %p1492 = por %p1490, %p1491
      %p1493 = scmp.ne.s32.totalorder %s1481, %s1482
      %p1494 = scmp.eq.s32.totalorder %s202, 1
      %p1495 = por %p1493, %p1494
      %p1497 = scmp.ne.s32.totalorder %s1482, %s1496
      %p1498 = scmp.eq.s32.totalorder %s202, 0
      %p1499 = por %p1497, %p1498
      %s1501 = sadd.s32 %s1500, 1
      %p1504 = scmp.eq.s32.totalorder %s196, 1
      %p1505 = scmp.ne.s32.totalorder %s1500, %s1502
      %p1506 = scmp.eq.s32.totalorder %s196, 0
      %p1507 = por %p1505, %p1506
      %p1508 = scmp.ne.s32.totalorder %s1500, %s1502
      %p1509 = scmp.eq.s32.totalorder %s201, 1
      %p1510 = por %p1508, %p1509
      %p1511 = scmp.ne.s32.totalorder %s1502, %s1503
      %p1512 = scmp.eq.s32.totalorder %s201, 0
      %p1513 = por %p1511, %p1512
      %p1514 = scmp.ne.s32.totalorder %s1502, %s1503
      %p1515 = scmp.eq.s32.totalorder %s202, 1
      %p1516 = por %p1514, %p1515
      %p1518 = scmp.ne.s32.totalorder %s1503, %s1517
      %p1519 = scmp.eq.s32.totalorder %s202, 0
      %p1520 = por %p1518, %p1519
      %s1522 = sadd.s32 %s1521, 1
      %p1525 = scmp.eq.s32.totalorder %s196, 1
      %p1526 = scmp.ne.s32.totalorder %s1521, %s1523
      %p1527 = scmp.eq.s32.totalorder %s196, 0
      %p1528 = por %p1526, %p1527
      %p1529 = scmp.ne.s32.totalorder %s1521, %s1523
      %p1530 = scmp.eq.s32.totalorder %s201, 1
      %p1531 = por %p1529, %p1530
      %p1532 = scmp.ne.s32.totalorder %s1523, %s1524
      %p1533 = scmp.eq.s32.totalorder %s201, 0
      %p1534 = por %p1532, %p1533
      %p1535 = scmp.ne.s32.totalorder %s1523, %s1524
      %p1536 = scmp.eq.s32.totalorder %s202, 1
      %p1537 = por %p1535, %p1536
      %p1539 = scmp.ne.s32.totalorder %s1524, %s1538
      %p1540 = scmp.eq.s32.totalorder %s202, 0
      %p1541 = por %p1539, %p1540
      %s1543 = sadd.s32 %s1542, 1
      %p1546 = scmp.eq.s32.totalorder %s196, 1
      %p1547 = scmp.ne.s32.totalorder %s1542, %s1544
      %p1548 = scmp.eq.s32.totalorder %s196, 0
      %p1549 = por %p1547, %p1548
      %p1550 = scmp.ne.s32.totalorder %s1542, %s1544
      %p1551 = scmp.eq.s32.totalorder %s201, 1
      %p1552 = por %p1550, %p1551
      %p1553 = scmp.ne.s32.totalorder %s1544, %s1545
      %p1554 = scmp.eq.s32.totalorder %s201, 0
      %p1555 = por %p1553, %p1554
      %p1556 = scmp.ne.s32.totalorder %s1544, %s1545
      %p1557 = scmp.eq.s32.totalorder %s202, 1
      %p1558 = por %p1556, %p1557
      %p1560 = scmp.ne.s32.totalorder %s1545, %s1559
      %p1561 = scmp.eq.s32.totalorder %s202, 0
      %p1562 = por %p1560, %p1561
      %s1564 = sadd.s32 %s1563, 1
      %p1567 = scmp.eq.s32.totalorder %s196, 1
      %p1568 = scmp.ne.s32.totalorder %s1563, %s1565
      %p1569 = scmp.eq.s32.totalorder %s196, 0
      %p1570 = por %p1568, %p1569
      %p1571 = scmp.ne.s32.totalorder %s1563, %s1565
      %p1572 = scmp.eq.s32.totalorder %s201, 1
      %p1573 = por %p1571, %p1572
      %p1574 = scmp.ne.s32.totalorder %s1565, %s1566
      %p1575 = scmp.eq.s32.totalorder %s201, 0
      %p1576 = por %p1574, %p1575
      %p1577 = scmp.ne.s32.totalorder %s1565, %s1566
      %p1578 = scmp.eq.s32.totalorder %s202, 1
      %p1579 = por %p1577, %p1578
      %p1581 = scmp.ne.s32.totalorder %s1566, %s1580
      %p1582 = scmp.eq.s32.totalorder %s202, 0
      %p1583 = por %p1581, %p1582
      %s1585 = sadd.s32 %s1584, 1
      %p1588 = scmp.eq.s32.totalorder %s196, 1
      %p1589 = scmp.ne.s32.totalorder %s1584, %s1586
      %p1590 = scmp.eq.s32.totalorder %s196, 0
      %p1591 = por %p1589, %p1590
      %p1592 = scmp.ne.s32.totalorder %s1584, %s1586
      %p1593 = scmp.eq.s32.totalorder %s201, 1
      %p1594 = por %p1592, %p1593
      %p1595 = scmp.ne.s32.totalorder %s1586, %s1587
      %p1596 = scmp.eq.s32.totalorder %s201, 0
      %p1597 = por %p1595, %p1596
      %p1598 = scmp.ne.s32.totalorder %s1586, %s1587
      %p1599 = scmp.eq.s32.totalorder %s202, 1
      %p1600 = por %p1598, %p1599
      %p1602 = scmp.ne.s32.totalorder %s1587, %s1601
      %p1603 = scmp.eq.s32.totalorder %s202, 0
      %p1604 = por %p1602, %p1603
      %s1606 = sadd.s32 %s1605, 1
      %p1609 = scmp.eq.s32.totalorder %s196, 1
      %p1610 = scmp.ne.s32.totalorder %s1605, %s1607
      %p1611 = scmp.eq.s32.totalorder %s196, 0
      %p1612 = por %p1610, %p1611
      %p1613 = scmp.ne.s32.totalorder %s1605, %s1607
      %p1614 = scmp.eq.s32.totalorder %s201, 1
      %p1615 = por %p1613, %p1614
      %p1616 = scmp.ne.s32.totalorder %s1607, %s1608
      %p1617 = scmp.eq.s32.totalorder %s201, 0
      %p1618 = por %p1616, %p1617
      %p1619 = scmp.ne.s32.totalorder %s1607, %s1608
      %p1620 = scmp.eq.s32.totalorder %s202, 1
      %p1621 = por %p1619, %p1620
      %p1623 = scmp.ne.s32.totalorder %s1608, %s1622
      %p1624 = scmp.eq.s32.totalorder %s202, 0
      %p1625 = por %p1623, %p1624
      %s1627 = sadd.s32 %s1626, 1
      %p1630 = scmp.eq.s32.totalorder %s196, 1
      %p1631 = scmp.ne.s32.totalorder %s1626, %s1628
      %p1632 = scmp.eq.s32.totalorder %s196, 0
      %p1633 = por %p1631, %p1632
      %p1634 = scmp.ne.s32.totalorder %s1626, %s1628
      %p1635 = scmp.eq.s32.totalorder %s201, 1
      %p1636 = por %p1634, %p1635
      %p1637 = scmp.ne.s32.totalorder %s1628, %s1629
      %p1638 = scmp.eq.s32.totalorder %s201, 0
      %p1639 = por %p1637, %p1638
      %p1640 = scmp.ne.s32.totalorder %s1628, %s1629
      %p1641 = scmp.eq.s32.totalorder %s202, 1
      %p1642 = por %p1640, %p1641
      %p1644 = scmp.ne.s32.totalorder %s1629, %s1643
      %p1645 = scmp.eq.s32.totalorder %s202, 0
      %p1646 = por %p1644, %p1645
      %s1648 = sadd.s32 %s1647, 1
      %p1651 = scmp.eq.s32.totalorder %s196, 1
      %p1652 = scmp.ne.s32.totalorder %s1647, %s1649
      %p1653 = scmp.eq.s32.totalorder %s196, 0
      %p1654 = por %p1652, %p1653
      %p1655 = scmp.ne.s32.totalorder %s1647, %s1649
      %p1656 = scmp.eq.s32.totalorder %s201, 1
      %p1657 = por %p1655, %p1656
      %p1658 = scmp.ne.s32.totalorder %s1649, %s1650
      %p1659 = scmp.eq.s32.totalorder %s201, 0
      %p1660 = por %p1658, %p1659
      %p1661 = scmp.ne.s32.totalorder %s1649, %s1650
      %p1662 = scmp.eq.s32.totalorder %s202, 1
      %p1663 = por %p1661, %p1662
      %p1665 = scmp.ne.s32.totalorder %s1650, %s1664
      %p1666 = scmp.eq.s32.totalorder %s202, 0
      %p1667 = por %p1665, %p1666
      %s1669 = sadd.s32 %s1668, 1
      %p1672 = scmp.eq.s32.totalorder %s196, 1
      %p1673 = scmp.ne.s32.totalorder %s1668, %s1670
      %p1674 = scmp.eq.s32.totalorder %s196, 0
      %p1675 = por %p1673, %p1674
      %p1676 = scmp.ne.s32.totalorder %s1668, %s1670
      %p1677 = scmp.eq.s32.totalorder %s201, 1
      %p1678 = por %p1676, %p1677
      %p1679 = scmp.ne.s32.totalorder %s1670, %s1671
      %p1680 = scmp.eq.s32.totalorder %s201, 0
      %p1681 = por %p1679, %p1680
      %p1682 = scmp.ne.s32.totalorder %s1670, %s1671
      %p1683 = scmp.eq.s32.totalorder %s202, 1
      %p1684 = por %p1682, %p1683
      %p1686 = scmp.ne.s32.totalorder %s1671, %s1685
      %p1687 = scmp.eq.s32.totalorder %s202, 0
      %p1688 = por %p1686, %p1687
      %s1690 = sadd.s32 %s1689, 1
      %p1693 = scmp.eq.s32.totalorder %s196, 1
      %p1694 = scmp.ne.s32.totalorder %s1689, %s1691
      %p1695 = scmp.eq.s32.totalorder %s196, 0
      %p1696 = por %p1694, %p1695
      %p1697 = scmp.ne.s32.totalorder %s1689, %s1691
      %p1698 = scmp.eq.s32.totalorder %s201, 1
      %p1699 = por %p1697, %p1698
      %p1700 = scmp.ne.s32.totalorder %s1691, %s1692
      %p1701 = scmp.eq.s32.totalorder %s201, 0
      %p1702 = por %p1700, %p1701
      %p1703 = scmp.ne.s32.totalorder %s1691, %s1692
      %p1704 = scmp.eq.s32.totalorder %s202, 1
      %p1705 = por %p1703, %p1704
      %p1707 = scmp.ne.s32.totalorder %s1692, %s1706
      %p1708 = scmp.eq.s32.totalorder %s202, 0
      %p1709 = por %p1707, %p1708
      %s1711 = sadd.s32 %s1710, 1
      %p1714 = scmp.eq.s32.totalorder %s196, 1
      %p1715 = scmp.ne.s32.totalorder %s1710, %s1712
      %p1716 = scmp.eq.s32.totalorder %s196, 0
      %p1717 = por %p1715, %p1716
      %p1718 = scmp.ne.s32.totalorder %s1710, %s1712
      %p1719 = scmp.eq.s32.totalorder %s201, 1
      %p1720 = por %p1718, %p1719
      %p1721 = scmp.ne.s32.totalorder %s1712, %s1713
      %p1722 = scmp.eq.s32.totalorder %s201, 0
      %p1723 = por %p1721, %p1722
      %p1724 = scmp.ne.s32.totalorder %s1712, %s1713
      %p1725 = scmp.eq.s32.totalorder %s202, 1
      %p1726 = por %p1724, %p1725
      %p1728 = scmp.ne.s32.totalorder %s1713, %s1727
      %p1729 = scmp.eq.s32.totalorder %s202, 0
      %p1730 = por %p1728, %p1729
      %s1732 = sadd.s32 %s1731, 1
      %p1735 = scmp.eq.s32.totalorder %s196, 1
      %p1736 = scmp.ne.s32.totalorder %s1731, %s1733
      %p1737 = scmp.eq.s32.totalorder %s196, 0
      %p1738 = por %p1736, %p1737
      %p1739 = scmp.ne.s32.totalorder %s1731, %s1733
      %p1740 = scmp.eq.s32.totalorder %s201, 1
      %p1741 = por %p1739, %p1740
      %p1742 = scmp.ne.s32.totalorder %s1733, %s1734
      %p1743 = scmp.eq.s32.totalorder %s201, 0
      %p1744 = por %p1742, %p1743
      %p1745 = scmp.ne.s32.totalorder %s1733, %s1734
      %p1746 = scmp.eq.s32.totalorder %s202, 1
      %p1747 = por %p1745, %p1746
      %p1749 = scmp.ne.s32.totalorder %s1734, %s1748
      %p1750 = scmp.eq.s32.totalorder %s202, 0
      %p1751 = por %p1749, %p1750
      %s1753 = sadd.s32 %s1752, 1
      %p1756 = scmp.eq.s32.totalorder %s196, 1
      %p1757 = scmp.ne.s32.totalorder %s1752, %s1754
      %p1758 = scmp.eq.s32.totalorder %s196, 0
      %p1759 = por %p1757, %p1758
      %p1760 = scmp.ne.s32.totalorder %s1752, %s1754
      %p1761 = scmp.eq.s32.totalorder %s201, 1
      %p1762 = por %p1760, %p1761
      %p1763 = scmp.ne.s32.totalorder %s1754, %s1755
      %p1764 = scmp.eq.s32.totalorder %s201, 0
      %p1765 = por %p1763, %p1764
      %p1766 = scmp.ne.s32.totalorder %s1754, %s1755
      %p1767 = scmp.eq.s32.totalorder %s202, 1
      %p1768 = por %p1766, %p1767
      %p1770 = scmp.ne.s32.totalorder %s1755, %s1769
      %p1771 = scmp.eq.s32.totalorder %s202, 0
      %p1772 = por %p1770, %p1771
      %s1774 = sadd.s32 %s1773, 1
      %p1777 = scmp.eq.s32.totalorder %s196, 1
      %p1778 = scmp.ne.s32.totalorder %s1773, %s1775
      %p1779 = scmp.eq.s32.totalorder %s196, 0
      %p1780 = por %p1778, %p1779
      %p1781 = scmp.ne.s32.totalorder %s1773, %s1775
      %p1782 = scmp.eq.s32.totalorder %s201, 1
      %p1783 = por %p1781, %p1782
      %p1784 = scmp.ne.s32.totalorder %s1775, %s1776
      %p1785 = scmp.eq.s32.totalorder %s201, 0
      %p1786 = por %p1784, %p1785
      %p1787 = scmp.ne.s32.totalorder %s1775, %s1776
      %p1788 = scmp.eq.s32.totalorder %s202, 1
      %p1789 = por %p1787, %p1788
      %p1791 = scmp.ne.s32.totalorder %s1776, %s1790
      %p1792 = scmp.eq.s32.totalorder %s202, 0
      %p1793 = por %p1791, %p1792
      %s1795 = sadd.s32 %s1794, 1
      %p1798 = scmp.eq.s32.totalorder %s196, 1
      %p1799 = scmp.ne.s32.totalorder %s1794, %s1796
      %p1800 = scmp.eq.s32.totalorder %s196, 0
      %p1801 = por %p1799, %p1800
      %p1802 = scmp.ne.s32.totalorder %s1794, %s1796
      %p1803 = scmp.eq.s32.totalorder %s201, 1
      %p1804 = por %p1802, %p1803
      %p1805 = scmp.ne.s32.totalorder %s1796, %s1797
      %p1806 = scmp.eq.s32.totalorder %s201, 0
      %p1807 = por %p1805, %p1806
      %p1808 = scmp.ne.s32.totalorder %s1796, %s1797
      %p1809 = scmp.eq.s32.totalorder %s202, 1
      %p1810 = por %p1808, %p1809
      %p1812 = scmp.ne.s32.totalorder %s1797, %s1811
      %p1813 = scmp.eq.s32.totalorder %s202, 0
      %p1814 = por %p1812, %p1813
      %s1816 = sadd.s32 %s1815, 1
      %p1819 = scmp.eq.s32.totalorder %s196, 1
      %p1820 = scmp.ne.s32.totalorder %s1815, %s1817
      %p1821 = scmp.eq.s32.totalorder %s196, 0
      %p1822 = por %p1820, %p1821
      %p1823 = scmp.ne.s32.totalorder %s1815, %s1817
      %p1824 = scmp.eq.s32.totalorder %s201, 1
      %p1825 = por %p1823, %p1824
      %p1826 = scmp.ne.s32.totalorder %s1817, %s1818
      %p1827 = scmp.eq.s32.totalorder %s201, 0
      %p1828 = por %p1826, %p1827
      %p1829 = scmp.ne.s32.totalorder %s1817, %s1818
      %p1830 = scmp.eq.s32.totalorder %s202, 1
      %p1831 = por %p1829, %p1830
      %p1833 = scmp.ne.s32.totalorder %s1818, %s1832
      %p1834 = scmp.eq.s32.totalorder %s202, 0
      %p1835 = por %p1833, %p1834
      %s1837 = sadd.s32 %s1836, 1
      %p1840 = scmp.eq.s32.totalorder %s196, 1
      %p1841 = scmp.ne.s32.totalorder %s1836, %s1838
      %p1842 = scmp.eq.s32.totalorder %s196, 0
      %p1843 = por %p1841, %p1842
      %p1844 = scmp.ne.s32.totalorder %s1836, %s1838
      %p1845 = scmp.eq.s32.totalorder %s201, 1
      %p1846 = por %p1844, %p1845
      %p1847 = scmp.ne.s32.totalorder %s1838, %s1839
      %p1848 = scmp.eq.s32.totalorder %s201, 0
      %p1849 = por %p1847, %p1848
      %p1850 = scmp.ne.s32.totalorder %s1838, %s1839
      %p1851 = scmp.eq.s32.totalorder %s202, 1
      %p1852 = por %p1850, %p1851
      %p1854 = scmp.ne.s32.totalorder %s1839, %s1853
      %p1855 = scmp.eq.s32.totalorder %s202, 0
      %p1856 = por %p1854, %p1855
      %s1858 = sadd.s32 %s1857, 1
      %p1861 = scmp.eq.s32.totalorder %s196, 1
      %p1862 = scmp.ne.s32.totalorder %s1857, %s1859
      %p1863 = scmp.eq.s32.totalorder %s196, 0
      %p1864 = por %p1862, %p1863
      %p1865 = scmp.ne.s32.totalorder %s1857, %s1859
      %p1866 = scmp.eq.s32.totalorder %s201, 1
      %p1867 = por %p1865, %p1866
      %p1868 = scmp.ne.s32.totalorder %s1859, %s1860
      %p1869 = scmp.eq.s32.totalorder %s201, 0
      %p1870 = por %p1868, %p1869
      %p1871 = scmp.ne.s32.totalorder %s1859, %s1860
      %p1872 = scmp.eq.s32.totalorder %s202, 1
      %p1873 = por %p1871, %p1872
      %p1875 = scmp.ne.s32.totalorder %s1860, %s1874
      %p1876 = scmp.eq.s32.totalorder %s202, 0
      %p1877 = por %p1875, %p1876
      %s1879 = sadd.s32 %s1878, 1
      %p1882 = scmp.eq.s32.totalorder %s196, 1
      %p1883 = scmp.ne.s32.totalorder %s1878, %s1880
      %p1884 = scmp.eq.s32.totalorder %s196, 0
      %p1885 = por %p1883, %p1884
      %p1886 = scmp.ne.s32.totalorder %s1878, %s1880
      %p1887 = scmp.eq.s32.totalorder %s201, 1
      %p1888 = por %p1886, %p1887
      %p1889 = scmp.ne.s32.totalorder %s1880, %s1881
      %p1890 = scmp.eq.s32.totalorder %s201, 0
      %p1891 = por %p1889, %p1890
      %p1892 = scmp.ne.s32.totalorder %s1880, %s1881
      %p1893 = scmp.eq.s32.totalorder %s202, 1
      %p1894 = por %p1892, %p1893
      %p1896 = scmp.ne.s32.totalorder %s1881, %s1895
      %p1897 = scmp.eq.s32.totalorder %s202, 0
      %p1898 = por %p1896, %p1897
      %s1900 = sadd.s32 %s1899, 1
      %p1903 = scmp.eq.s32.totalorder %s196, 1
      %p1904 = scmp.ne.s32.totalorder %s1899, %s1901
      %p1905 = scmp.eq.s32.totalorder %s196, 0
      %p1906 = por %p1904, %p1905
      %p1907 = scmp.ne.s32.totalorder %s1899, %s1901
      %p1908 = scmp.eq.s32.totalorder %s201, 1
      %p1909 = por %p1907, %p1908
      %p1910 = scmp.ne.s32.totalorder %s1901, %s1902
      %p1911 = scmp.eq.s32.totalorder %s201, 0
      %p1912 = por %p1910, %p1911
      %p1913 = scmp.ne.s32.totalorder %s1901, %s1902
      %p1914 = scmp.eq.s32.totalorder %s202, 1
      %p1915 = por %p1913, %p1914
      %p1917 = scmp.ne.s32.totalorder %s1902, %s1916
      %p1918 = scmp.eq.s32.totalorder %s202, 0
      %p1919 = por %p1917, %p1918
      %s1920 = ssub.s32 %s196, %s203
      %p1921 = scmp.eq.s32.totalorder %s1920, 0
      %s1923 = sadd.s32 %s1922, 1
      %s1924 = scalar_select %p1921, %s1922, %s1923
      %p1927 = pneg %p1921
      %p1928 = scmp.eq.s32.totalorder %s196, 1
      %p1929 = por %p1927, %p1928
      %p1930 = scmp.ne.s32.totalorder %s1922, %s1925
      %p1931 = scmp.eq.s32.totalorder %s196, 0
      %p1932 = por %p1930, %p1931
      %p1933 = scmp.ne.s32.totalorder %s1922, %s1925
      %p1934 = scmp.eq.s32.totalorder %s201, 1
      %p1935 = por %p1933, %p1934
      %p1936 = scmp.ne.s32.totalorder %s1925, %s1926
      %p1937 = scmp.eq.s32.totalorder %s201, 0
      %p1938 = por %p1936, %p1937
      %p1939 = scmp.ne.s32.totalorder %s1925, %s1926
      %p1940 = scmp.eq.s32.totalorder %s202, 1
      %p1941 = por %p1939, %p1940
      %p1943 = scmp.ne.s32.totalorder %s1926, %s1942
      %p1944 = scmp.eq.s32.totalorder %s202, 0
      %p1945 = por %p1943, %p1944
      %s1946 = ssub.s32 %s196, %s203
      %p1947 = scmp.eq.s32.totalorder %s1946, 0
      %s1949 = sadd.s32 %s1948, 1
      %s1950 = scalar_select %p1947, %s1948, %s1949
      %p1953 = pneg %p1947
      %p1954 = scmp.eq.s32.totalorder %s196, 1
      %p1955 = por %p1953, %p1954
      %p1956 = scmp.ne.s32.totalorder %s1948, %s1951
      %p1957 = scmp.eq.s32.totalorder %s196, 0
      %p1958 = por %p1956, %p1957
      %p1959 = scmp.ne.s32.totalorder %s1948, %s1951
      %p1960 = scmp.eq.s32.totalorder %s201, 1
      %p1961 = por %p1959, %p1960
      %p1962 = scmp.ne.s32.totalorder %s1951, %s1952
      %p1963 = scmp.eq.s32.totalorder %s201, 0
      %p1964 = por %p1962, %p1963
      %p1965 = scmp.ne.s32.totalorder %s1951, %s1952
      %p1966 = scmp.eq.s32.totalorder %s202, 1
      %p1967 = por %p1965, %p1966
      %p1969 = scmp.ne.s32.totalorder %s1952, %s1968
      %p1970 = scmp.eq.s32.totalorder %s202, 0
      %p1971 = por %p1969, %p1970
      %p1972 = scmp.le.s32.totalorder 1, %s196
      %p1973 = scmp.lt.s32.totalorder %s196, 3
      %p1974 = pnand %p1972, %p1973
      %p1975 = pneg %p1974
      // Predicated region
      $region9: #{lamrg_v7_forward.1} parent=5 // pred_check
        _
      $region10: #{lamrg_v7_forward.1} parent=5 // pred_check_branch
        %1977 = sbr.rel (%p1974) target = $region12
      $region11: #{lamrg_v7_forward.1} parent=5 // pred_region
        %s1978 = ssub.s32 %s196, 1
        // Predicated region
        $region13: #{lamrg_v7_forward.1} parent=11 // pred_check
          %p1979 = pneg %p295
        $region14: #{lamrg_v7_forward.1} parent=11 // pred_check_branch
          %1981 = sbr.rel (%p1979) target = $region16
        $region15: #{lamrg_v7_forward.1} parent=11 // pred_region
          _
        $region16: #{lamrg_v7_forward.1} parent=11 // pred_fallthru
          _
        // Predicated region
        $region17: #{lamrg_v7_forward.1} parent=11 // pred_check
          %p1982 = pneg %p316
        $region18: #{lamrg_v7_forward.1} parent=11 // pred_check_branch
          %1984 = sbr.rel (%p1982) target = $region20
        $region19: #{lamrg_v7_forward.1} parent=11 // pred_region
          _
        $region20: #{lamrg_v7_forward.1} parent=11 // pred_fallthru
          _
        // Predicated region
        $region21: #{lamrg_v7_forward.1} parent=11 // pred_check
          %p1985 = pneg %p337
        $region22: #{lamrg_v7_forward.1} parent=11 // pred_check_branch
          %1987 = sbr.rel (%p1985) target = $region24
        $region23: #{lamrg_v7_forward.1} parent=11 // pred_region
          _
        $region24: #{lamrg_v7_forward.1} parent=11 // pred_fallthru
          _
        // Predicated region
        $region25: #{lamrg_v7_forward.1} parent=11 // pred_check
          %p1988 = pneg %p358
        $region26: #{lamrg_v7_forward.1} parent=11 // pred_check_branch
          %1990 = sbr.rel (%p1988) target = $region28
        $region27: #{lamrg_v7_forward.1} parent=11 // pred_region
          _
        $region28: #{lamrg_v7_forward.1} parent=11 // pred_fallthru
          _
        // Predicated region
        $region29: #{lamrg_v7_forward.1} parent=11 // pred_check
          %p1991 = pneg %p379
        $region30: #{lamrg_v7_forward.1} parent=11 // pred_check_branch
          %1993 = sbr.rel (%p1991) target = $region32
        $region31: #{lamrg_v7_forward.1} parent=11 // pred_region
          _
        $region32: #{lamrg_v7_forward.1} parent=11 // pred_fallthru
          _
        // Predicated region
        $region33: #{lamrg_v7_forward.1} parent=11 // pred_check
          %p1994 = pneg %p400
        $region34: #{lamrg_v7_forward.1} parent=11 // pred_check_branch
          %1996 = sbr.rel (%p1994) target = $region36
        $region35: #{lamrg_v7_forward.1} parent=11 // pred_region
          _
        $region36: #{lamrg_v7_forward.1} parent=11 // pred_fallthru
          _
        // Predicated region
        $region37: #{lamrg_v7_forward.1} parent=11 // pred_check
          %p1997 = pneg %p421
        $region38: #{lamrg_v7_forward.1} parent=11 // pred_check_branch
          %1999 = sbr.rel (%p1997) target = $region40
        $region39: #{lamrg_v7_forward.1} parent=11 // pred_region
          _
        $region40: #{lamrg_v7_forward.1} parent=11 // pred_fallthru
          _
        // Predicated region
        $region41: #{lamrg_v7_forward.1} parent=11 // pred_check
          %p2000 = pneg %p442
        $region42: #{lamrg_v7_forward.1} parent=11 // pred_check_branch
          %2002 = sbr.rel (%p2000) target = $region44
        $region43: #{lamrg_v7_forward.1} parent=11 // pred_region
          _
        $region44: #{lamrg_v7_forward.1} parent=11 // pred_fallthru
          _
        // Predicated region
        $region45: #{lamrg_v7_forward.1} parent=11 // pred_check
          %p2003 = pneg %p463
        $region46: #{lamrg_v7_forward.1} parent=11 // pred_check_branch
          %2005 = sbr.rel (%p2003) target = $region48
        $region47: #{lamrg_v7_forward.1} parent=11 // pred_region
          _
        $region48: #{lamrg_v7_forward.1} parent=11 // pred_fallthru
          _
        // Predicated region
        $region49: #{lamrg_v7_forward.1} parent=11 // pred_check
          %p2006 = pneg %p484
        $region50: #{lamrg_v7_forward.1} parent=11 // pred_check_branch
          %2008 = sbr.rel (%p2006) target = $region52
        $region51: #{lamrg_v7_forward.1} parent=11 // pred_region
          _
        $region52: #{lamrg_v7_forward.1} parent=11 // pred_fallthru
          _
        // Predicated region
        $region53: #{lamrg_v7_forward.1} parent=11 // pred_check
          %p2009 = pneg %p505
        $region54: #{lamrg_v7_forward.1} parent=11 // pred_check_branch
          %2011 = sbr.rel (%p2009) target = $region56
        $region55: #{lamrg_v7_forward.1} parent=11 // pred_region
          _
        $region56: #{lamrg_v7_forward.1} parent=11 // pred_fallthru
          _
        // Predicated region
        $region57: #{lamrg_v7_forward.1} parent=11 // pred_check
          %p2012 = pneg %p526
        $region58: #{lamrg_v7_forward.1} parent=11 // pred_check_branch
          %2014 = sbr.rel (%p2012) target = $region60
        $region59: #{lamrg_v7_forward.1} parent=11 // pred_region
          _
        $region60: #{lamrg_v7_forward.1} parent=11 // pred_fallthru
          _
        // Predicated region
        $region61: #{lamrg_v7_forward.1} parent=11 // pred_check
          %p2015 = pneg %p547
        $region62: #{lamrg_v7_forward.1} parent=11 // pred_check_branch
          %2017 = sbr.rel (%p2015) target = $region64
        $region63: #{lamrg_v7_forward.1} parent=11 // pred_region
          _
        $region64: #{lamrg_v7_forward.1} parent=11 // pred_fallthru
          _
        // Predicated region
        $region65: #{lamrg_v7_forward.1} parent=11 // pred_check
          %p2018 = pneg %p568
        $region66: #{lamrg_v7_forward.1} parent=11 // pred_check_branch
          %2020 = sbr.rel (%p2018) target = $region68
        $region67: #{lamrg_v7_forward.1} parent=11 // pred_region
          _
        $region68: #{lamrg_v7_forward.1} parent=11 // pred_fallthru
          _
        // Predicated region
        $region69: #{lamrg_v7_forward.1} parent=11 // pred_check
          %p2021 = pneg %p589
        $region70: #{lamrg_v7_forward.1} parent=11 // pred_check_branch
          %2023 = sbr.rel (%p2021) target = $region72
        $region71: #{lamrg_v7_forward.1} parent=11 // pred_region
          _
        $region72: #{lamrg_v7_forward.1} parent=11 // pred_fallthru
          _
        // Predicated region
        $region73: #{lamrg_v7_forward.1} parent=11 // pred_check
          %p2024 = pneg %p610
        $region74: #{lamrg_v7_forward.1} parent=11 // pred_check_branch
          %2026 = sbr.rel (%p2024) target = $region76
        $region75: #{lamrg_v7_forward.1} parent=11 // pred_region
          _
        $region76: #{lamrg_v7_forward.1} parent=11 // pred_fallthru
          _
        // Predicated region
        $region77: #{lamrg_v7_forward.1} parent=11 // pred_check
          %p2027 = pneg %p631
        $region78: #{lamrg_v7_forward.1} parent=11 // pred_check_branch
          %2029 = sbr.rel (%p2027) target = $region80
        $region79: #{lamrg_v7_forward.1} parent=11 // pred_region
          _
        $region80: #{lamrg_v7_forward.1} parent=11 // pred_fallthru
          _
        // Predicated region
        $region81: #{lamrg_v7_forward.1} parent=11 // pred_check
          %p2030 = pneg %p652
        $region82: #{lamrg_v7_forward.1} parent=11 // pred_check_branch
          %2032 = sbr.rel (%p2030) target = $region84
        $region83: #{lamrg_v7_forward.1} parent=11 // pred_region
          _
        $region84: #{lamrg_v7_forward.1} parent=11 // pred_fallthru
          _
        // Predicated region
        $region85: #{lamrg_v7_forward.1} parent=11 // pred_check
          %p2033 = pneg %p673
        $region86: #{lamrg_v7_forward.1} parent=11 // pred_check_branch
          %2035 = sbr.rel (%p2033) target = $region88
        $region87: #{lamrg_v7_forward.1} parent=11 // pred_region
          %2037 = vsyncadd [#allocation4], 0
          %s2039 = sshll.u32 %s43, 4
          %s2040 = int_to_ptr.hbm [resolvable:$true] %s2039
          %s2041 = sshll.u32 [#allocation3], 4
          %s2042 = int_to_ptr.vmem [resolvable:$true] %s2041
          %2044 = dma.hbm_to_vmem [thread:$0]  %s2040, 16, %s2042, [#allocation4]
        $region88: #{lamrg_v7_forward.1} parent=11 // pred_fallthru
          _
        // Predicated region
        $region89: #{lamrg_v7_forward.1} parent=11 // pred_check
          %p2045 = pneg %p694
        $region90: #{lamrg_v7_forward.1} parent=11 // pred_check_branch
          %2047 = sbr.rel (%p2045) target = $region92
        $region91: #{lamrg_v7_forward.1} parent=11 // pred_region
          %2049 = vsyncadd [#allocation7], 0
          %s2051 = sshll.u32 %s45, 4
          %s2052 = int_to_ptr.hbm [resolvable:$true] %s2051
          %s2053 = sshll.u32 [#allocation6], 4
          %s2054 = int_to_ptr.vmem [resolvable:$true] %s2053
          %2056 = dma.hbm_to_vmem [thread:$0]  %s2052, 16, %s2054, [#allocation7]
        $region92: #{lamrg_v7_forward.1} parent=11 // pred_fallthru
          _
        // Predicated region
        $region93: #{lamrg_v7_forward.1} parent=11 // pred_check
          %p2057 = pneg %p715
        $region94: #{lamrg_v7_forward.1} parent=11 // pred_check_branch
          %2059 = sbr.rel (%p2057) target = $region96
        $region95: #{lamrg_v7_forward.1} parent=11 // pred_region
          %2061 = vsyncadd [#allocation7], 0
          %s2063 = sshll.u32 %s47, 4
          %s2064 = int_to_ptr.hbm [resolvable:$true] %s2063
          %s2065 = sshll.u32 [#allocation8], 4
          %s2066 = int_to_ptr.vmem [resolvable:$true] %s2065
          %2068 = dma.hbm_to_vmem [thread:$0]  %s2064, 16, %s2066, [#allocation7]
        $region96: #{lamrg_v7_forward.1} parent=11 // pred_fallthru
          _
        // Predicated region
        $region97: #{lamrg_v7_forward.1} parent=11 // pred_check
          %p2069 = pneg %p736
        $region98: #{lamrg_v7_forward.1} parent=11 // pred_check_branch
          %2071 = sbr.rel (%p2069) target = $region100
        $region99: #{lamrg_v7_forward.1} parent=11 // pred_region
          %2073 = vsyncadd [#allocation10], 0
          %s2075 = sshll.u32 %s49, 4
          %s2076 = int_to_ptr.hbm [resolvable:$true] %s2075
          %s2077 = sshll.u32 [#allocation9], 4
          %s2078 = int_to_ptr.vmem [resolvable:$true] %s2077
          %2080 = dma.hbm_to_vmem [thread:$0]  %s2076, 16, %s2078, [#allocation10]
        $region100: #{lamrg_v7_forward.1} parent=11 // pred_fallthru
          _
        // Predicated region
        $region101: #{lamrg_v7_forward.1} parent=11 // pred_check
          %p2081 = pneg %p757
        $region102: #{lamrg_v7_forward.1} parent=11 // pred_check_branch
          %2083 = sbr.rel (%p2081) target = $region104
        $region103: #{lamrg_v7_forward.1} parent=11 // pred_region
          _
        $region104: #{lamrg_v7_forward.1} parent=11 // pred_fallthru
          _
        // Predicated region
        $region105: #{lamrg_v7_forward.1} parent=11 // pred_check
          %p2084 = pneg %p778
        $region106: #{lamrg_v7_forward.1} parent=11 // pred_check_branch
          %2086 = sbr.rel (%p2084) target = $region108
        $region107: #{lamrg_v7_forward.1} parent=11 // pred_region
          _
        $region108: #{lamrg_v7_forward.1} parent=11 // pred_fallthru
          _
        // Predicated region
        $region109: #{lamrg_v7_forward.1} parent=11 // pred_check
          %p2087 = pneg %p799
        $region110: #{lamrg_v7_forward.1} parent=11 // pred_check_branch
          %2089 = sbr.rel (%p2087) target = $region112
        $region111: #{lamrg_v7_forward.1} parent=11 // pred_region
          %2091 = vsyncadd [#allocation10], 0
          %s2093 = sshll.u32 %s55, 4
          %s2094 = int_to_ptr.hbm [resolvable:$true] %s2093
          %s2095 = sshll.u32 [#allocation11], 4
          %s2096 = int_to_ptr.vmem [resolvable:$true] %s2095
          %2098 = dma.hbm_to_vmem [thread:$0]  %s2094, 16, %s2096, [#allocation10]
        $region112: #{lamrg_v7_forward.1} parent=11 // pred_fallthru
          _
        // Predicated region
        $region113: #{lamrg_v7_forward.1} parent=11 // pred_check
          %p2099 = pneg %p820
        $region114: #{lamrg_v7_forward.1} parent=11 // pred_check_branch
          %2101 = sbr.rel (%p2099) target = $region116
        $region115: #{lamrg_v7_forward.1} parent=11 // pred_region
          %2103 = vsyncadd [#allocation13], 0
          %s2105 = sshll.u32 %s57, 4
          %s2106 = int_to_ptr.hbm [resolvable:$true] %s2105
          %s2107 = sshll.u32 [#allocation12], 4
          %s2108 = int_to_ptr.vmem [resolvable:$true] %s2107
          %2110 = dma.hbm_to_vmem [thread:$0]  %s2106, 16, %s2108, [#allocation13]
        $region116: #{lamrg_v7_forward.1} parent=11 // pred_fallthru
          _
        // Predicated region
        $region117: #{lamrg_v7_forward.1} parent=11 // pred_check
          %p2111 = pneg %p841
        $region118: #{lamrg_v7_forward.1} parent=11 // pred_check_branch
          %2113 = sbr.rel (%p2111) target = $region120
        $region119: #{lamrg_v7_forward.1} parent=11 // pred_region
          %2115 = vsyncadd [#allocation13], 0
          %s2117 = sshll.u32 %s59, 4
          %s2118 = int_to_ptr.hbm [resolvable:$true] %s2117
          %s2119 = sshll.u32 [#allocation14], 4
          %s2120 = int_to_ptr.vmem [resolvable:$true] %s2119
          %2122 = dma.hbm_to_vmem [thread:$0]  %s2118, 16, %s2120, [#allocation13]
        $region120: #{lamrg_v7_forward.1} parent=11 // pred_fallthru
          _
        // Predicated region
        $region121: #{lamrg_v7_forward.1} parent=11 // pred_check
          %p2123 = pneg %p862
        $region122: #{lamrg_v7_forward.1} parent=11 // pred_check_branch
          %2125 = sbr.rel (%p2123) target = $region124
        $region123: #{lamrg_v7_forward.1} parent=11 // pred_region
          _
        $region124: #{lamrg_v7_forward.1} parent=11 // pred_fallthru
          _
        // Predicated region
        $region125: #{lamrg_v7_forward.1} parent=11 // pred_check
          %p2126 = pneg %p883
        $region126: #{lamrg_v7_forward.1} parent=11 // pred_check_branch
          %2128 = sbr.rel (%p2126) target = $region128
        $region127: #{lamrg_v7_forward.1} parent=11 // pred_region
          _
        $region128: #{lamrg_v7_forward.1} parent=11 // pred_fallthru
          _
        // Predicated region
        $region129: #{lamrg_v7_forward.1} parent=11 // pred_check
          %p2129 = pneg %p904
        $region130: #{lamrg_v7_forward.1} parent=11 // pred_check_branch
          %2131 = sbr.rel (%p2129) target = $region132
        $region131: #{lamrg_v7_forward.1} parent=11 // pred_region
          _
        $region132: #{lamrg_v7_forward.1} parent=11 // pred_fallthru
          _
        // Predicated region
        $region133: #{lamrg_v7_forward.1} parent=11 // pred_check
          %p2132 = pneg %p925
        $region134: #{lamrg_v7_forward.1} parent=11 // pred_check_branch
          %2134 = sbr.rel (%p2132) target = $region136
        $region135: #{lamrg_v7_forward.1} parent=11 // pred_region
          %2136 = vsyncadd [#allocation16], 0
          %s2138 = sshll.u32 %s67, 4
          %s2139 = int_to_ptr.hbm [resolvable:$true] %s2138
          %s2140 = sshll.u32 [#allocation15], 4
          %s2141 = int_to_ptr.vmem [resolvable:$true] %s2140
          %2143 = dma.hbm_to_vmem [thread:$0]  %s2139, 16, %s2141, [#allocation16]
        $region136: #{lamrg_v7_forward.1} parent=11 // pred_fallthru
          _
        // Predicated region
        $region137: #{lamrg_v7_forward.1} parent=11 // pred_check
          %p2144 = pneg %p946
        $region138: #{lamrg_v7_forward.1} parent=11 // pred_check_branch
          %2146 = sbr.rel (%p2144) target = $region140
        $region139: #{lamrg_v7_forward.1} parent=11 // pred_region
          %2148 = vsyncadd [#allocation16], 0
          %s2150 = sshll.u32 %s69, 4
          %s2151 = int_to_ptr.hbm [resolvable:$true] %s2150
          %s2152 = sshll.u32 [#allocation17], 4
          %s2153 = int_to_ptr.vmem [resolvable:$true] %s2152
          %2155 = dma.hbm_to_vmem [thread:$0]  %s2151, 16, %s2153, [#allocation16]
        $region140: #{lamrg_v7_forward.1} parent=11 // pred_fallthru
          _
        // Predicated region
        $region141: #{lamrg_v7_forward.1} parent=11 // pred_check
          %p2156 = pneg %p967
        $region142: #{lamrg_v7_forward.1} parent=11 // pred_check_branch
          %2158 = sbr.rel (%p2156) target = $region144
        $region143: #{lamrg_v7_forward.1} parent=11 // pred_region
          _
        $region144: #{lamrg_v7_forward.1} parent=11 // pred_fallthru
          _
        // Predicated region
        $region145: #{lamrg_v7_forward.1} parent=11 // pred_check
          %p2159 = pneg %p988
        $region146: #{lamrg_v7_forward.1} parent=11 // pred_check_branch
          %2161 = sbr.rel (%p2159) target = $region148
        $region147: #{lamrg_v7_forward.1} parent=11 // pred_region
          _
        $region148: #{lamrg_v7_forward.1} parent=11 // pred_fallthru
          _
        // Predicated region
        $region149: #{lamrg_v7_forward.1} parent=11 // pred_check
          %p2162 = pneg %p1009
        $region150: #{lamrg_v7_forward.1} parent=11 // pred_check_branch
          %2164 = sbr.rel (%p2162) target = $region152
        $region151: #{lamrg_v7_forward.1} parent=11 // pred_region
          %2166 = vsyncadd [#allocation19], 0
          %s2168 = sshll.u32 %s75, 4
          %s2169 = int_to_ptr.hbm [resolvable:$true] %s2168
          %s2170 = sshll.u32 [#allocation18], 4
          %s2171 = int_to_ptr.vmem [resolvable:$true] %s2170
          %2173 = dma.hbm_to_vmem [thread:$0]  %s2169, 16, %s2171, [#allocation19]
        $region152: #{lamrg_v7_forward.1} parent=11 // pred_fallthru
          _
        // Predicated region
        $region153: #{lamrg_v7_forward.1} parent=11 // pred_check
          %p2174 = pneg %p1030
        $region154: #{lamrg_v7_forward.1} parent=11 // pred_check_branch
          %2176 = sbr.rel (%p2174) target = $region156
        $region155: #{lamrg_v7_forward.1} parent=11 // pred_region
          %2178 = vsyncadd [#allocation19], 0
          %s2180 = sshll.u32 %s77, 4
          %s2181 = int_to_ptr.hbm [resolvable:$true] %s2180
          %s2182 = sshll.u32 [#allocation20], 4
          %s2183 = int_to_ptr.vmem [resolvable:$true] %s2182
          %2185 = dma.hbm_to_vmem [thread:$0]  %s2181, 16, %s2183, [#allocation19]
        $region156: #{lamrg_v7_forward.1} parent=11 // pred_fallthru
          _
        // Predicated region
        $region157: #{lamrg_v7_forward.1} parent=11 // pred_check
          %p2186 = pneg %p1051
        $region158: #{lamrg_v7_forward.1} parent=11 // pred_check_branch
          %2188 = sbr.rel (%p2186) target = $region160
        $region159: #{lamrg_v7_forward.1} parent=11 // pred_region
          %2190 = vsyncadd [#allocation22], 0
          %s2192 = sshll.u32 %s79, 4
          %s2193 = int_to_ptr.hbm [resolvable:$true] %s2192
          %s2194 = sshll.u32 [#allocation21], 4
          %s2195 = int_to_ptr.vmem [resolvable:$true] %s2194
          %2197 = dma.hbm_to_vmem [thread:$0]  %s2193, 16, %s2195, [#allocation22]
        $region160: #{lamrg_v7_forward.1} parent=11 // pred_fallthru
          _
        // Predicated region
        $region161: #{lamrg_v7_forward.1} parent=11 // pred_check
          %p2198 = pneg %p1072
        $region162: #{lamrg_v7_forward.1} parent=11 // pred_check_branch
          %2200 = sbr.rel (%p2198) target = $region164
        $region163: #{lamrg_v7_forward.1} parent=11 // pred_region
          %2202 = vsyncadd [#allocation22], 0
          %s2204 = sshll.u32 %s81, 4
          %s2205 = int_to_ptr.hbm [resolvable:$true] %s2204
          %s2206 = sshll.u32 [#allocation23], 4
          %s2207 = int_to_ptr.vmem [resolvable:$true] %s2206
          %2209 = dma.hbm_to_vmem [thread:$0]  %s2205, 16, %s2207, [#allocation22]
        $region164: #{lamrg_v7_forward.1} parent=11 // pred_fallthru
          _
        // Predicated region
        $region165: #{lamrg_v7_forward.1} parent=11 // pred_check
          %p2210 = pneg %p1093
        $region166: #{lamrg_v7_forward.1} parent=11 // pred_check_branch
          %2212 = sbr.rel (%p2210) target = $region168
        $region167: #{lamrg_v7_forward.1} parent=11 // pred_region
          %2214 = vsyncadd [#allocation25], 0
          %s2216 = sshll.u32 %s83, 4
          %s2217 = int_to_ptr.hbm [resolvable:$true] %s2216
          %s2218 = sshll.u32 [#allocation24], 4
          %s2219 = int_to_ptr.vmem [resolvable:$true] %s2218
          %2221 = dma.hbm_to_vmem [thread:$0]  %s2217, 16, %s2219, [#allocation25]
        $region168: #{lamrg_v7_forward.1} parent=11 // pred_fallthru
          _
        // Predicated region
        $region169: #{lamrg_v7_forward.1} parent=11 // pred_check
          %p2222 = pneg %p1114
        $region170: #{lamrg_v7_forward.1} parent=11 // pred_check_branch
          %2224 = sbr.rel (%p2222) target = $region172
        $region171: #{lamrg_v7_forward.1} parent=11 // pred_region
          %2226 = vsyncadd [#allocation25], 0
          %s2228 = sshll.u32 %s85, 4
          %s2229 = int_to_ptr.hbm [resolvable:$true] %s2228
          %s2230 = sshll.u32 [#allocation26], 4
          %s2231 = int_to_ptr.vmem [resolvable:$true] %s2230
          %2233 = dma.hbm_to_vmem [thread:$0]  %s2229, 16, %s2231, [#allocation25]
        $region172: #{lamrg_v7_forward.1} parent=11 // pred_fallthru
          _
        // Predicated region
        $region173: #{lamrg_v7_forward.1} parent=11 // pred_check
          %p2234 = pneg %p1135
        $region174: #{lamrg_v7_forward.1} parent=11 // pred_check_branch
          %2236 = sbr.rel (%p2234) target = $region176
        $region175: #{lamrg_v7_forward.1} parent=11 // pred_region
          %2238 = vsyncadd [#allocation28], 0
          %s2240 = sshll.u32 %s87, 4
          %s2241 = int_to_ptr.hbm [resolvable:$true] %s2240
          %s2242 = sshll.u32 [#allocation27], 4
          %s2243 = int_to_ptr.vmem [resolvable:$true] %s2242
          %2245 = dma.hbm_to_vmem [thread:$0]  %s2241, 16, %s2243, [#allocation28]
        $region176: #{lamrg_v7_forward.1} parent=11 // pred_fallthru
          _
        // Predicated region
        $region177: #{lamrg_v7_forward.1} parent=11 // pred_check
          %p2246 = pneg %p1156
        $region178: #{lamrg_v7_forward.1} parent=11 // pred_check_branch
          %2248 = sbr.rel (%p2246) target = $region180
        $region179: #{lamrg_v7_forward.1} parent=11 // pred_region
          %2250 = vsyncadd [#allocation28], 0
          %s2252 = sshll.u32 %s89, 4
          %s2253 = int_to_ptr.hbm [resolvable:$true] %s2252
          %s2254 = sshll.u32 [#allocation29], 4
          %s2255 = int_to_ptr.vmem [resolvable:$true] %s2254
          %2257 = dma.hbm_to_vmem [thread:$0]  %s2253, 16, %s2255, [#allocation28]
        $region180: #{lamrg_v7_forward.1} parent=11 // pred_fallthru
          _
        // Predicated region
        $region181: #{lamrg_v7_forward.1} parent=11 // pred_check
          %p2258 = pneg %p1177
        $region182: #{lamrg_v7_forward.1} parent=11 // pred_check_branch
          %2260 = sbr.rel (%p2258) target = $region184
        $region183: #{lamrg_v7_forward.1} parent=11 // pred_region
          _
        $region184: #{lamrg_v7_forward.1} parent=11 // pred_fallthru
          _
        // Predicated region
        $region185: #{lamrg_v7_forward.1} parent=11 // pred_check
          %p2261 = pneg %p1198
        $region186: #{lamrg_v7_forward.1} parent=11 // pred_check_branch
          %2263 = sbr.rel (%p2261) target = $region188
        $region187: #{lamrg_v7_forward.1} parent=11 // pred_region
          _
        $region188: #{lamrg_v7_forward.1} parent=11 // pred_fallthru
          _
        // Predicated region
        $region189: #{lamrg_v7_forward.1} parent=11 // pred_check
          %p2264 = pneg %p1219
        $region190: #{lamrg_v7_forward.1} parent=11 // pred_check_branch
          %2266 = sbr.rel (%p2264) target = $region192
        $region191: #{lamrg_v7_forward.1} parent=11 // pred_region
          %2268 = vsyncadd [#allocation31], 0
          %s2270 = sshll.u32 %s95, 4
          %s2271 = int_to_ptr.hbm [resolvable:$true] %s2270
          %s2272 = sshll.u32 [#allocation30], 4
          %s2273 = int_to_ptr.vmem [resolvable:$true] %s2272
          %2275 = dma.hbm_to_vmem [thread:$0]  %s2271, 16, %s2273, [#allocation31]
        $region192: #{lamrg_v7_forward.1} parent=11 // pred_fallthru
          _
        // Predicated region
        $region193: #{lamrg_v7_forward.1} parent=11 // pred_check
          %p2276 = pneg %p1240
        $region194: #{lamrg_v7_forward.1} parent=11 // pred_check_branch
          %2278 = sbr.rel (%p2276) target = $region196
        $region195: #{lamrg_v7_forward.1} parent=11 // pred_region
          %2280 = vsyncadd [#allocation31], 0
          %s2282 = sshll.u32 %s97, 4
          %s2283 = int_to_ptr.hbm [resolvable:$true] %s2282
          %s2284 = sshll.u32 [#allocation32], 4
          %s2285 = int_to_ptr.vmem [resolvable:$true] %s2284
          %2287 = dma.hbm_to_vmem [thread:$0]  %s2283, 16, %s2285, [#allocation31]
        $region196: #{lamrg_v7_forward.1} parent=11 // pred_fallthru
          _
        // Predicated region
        $region197: #{lamrg_v7_forward.1} parent=11 // pred_check
          %p2288 = pneg %p1261
        $region198: #{lamrg_v7_forward.1} parent=11 // pred_check_branch
          %2290 = sbr.rel (%p2288) target = $region200
        $region199: #{lamrg_v7_forward.1} parent=11 // pred_region
          %2292 = vsyncadd [#allocation34], 0
          %s2294 = sshll.u32 %s99, 4
          %s2295 = int_to_ptr.hbm [resolvable:$true] %s2294
          %s2296 = sshll.u32 [#allocation33], 4
          %s2297 = int_to_ptr.vmem [resolvable:$true] %s2296
          %2299 = dma.hbm_to_vmem [thread:$0]  %s2295, 16, %s2297, [#allocation34]
        $region200: #{lamrg_v7_forward.1} parent=11 // pred_fallthru
          _
        // Predicated region
        $region201: #{lamrg_v7_forward.1} parent=11 // pred_check
          %p2300 = pneg %p1282
        $region202: #{lamrg_v7_forward.1} parent=11 // pred_check_branch
          %2302 = sbr.rel (%p2300) target = $region204
        $region203: #{lamrg_v7_forward.1} parent=11 // pred_region
          %2304 = vsyncadd [#allocation34], 0
          %s2306 = sshll.u32 %s101, 4
          %s2307 = int_to_ptr.hbm [resolvable:$true] %s2306
          %s2308 = sshll.u32 [#allocation35], 4
          %s2309 = int_to_ptr.vmem [resolvable:$true] %s2308
          %2311 = dma.hbm_to_vmem [thread:$0]  %s2307, 16, %s2309, [#allocation34]
        $region204: #{lamrg_v7_forward.1} parent=11 // pred_fallthru
          _
        // Predicated region
        $region205: #{lamrg_v7_forward.1} parent=11 // pred_check
          %p2312 = pneg %p1303
        $region206: #{lamrg_v7_forward.1} parent=11 // pred_check_branch
          %2314 = sbr.rel (%p2312) target = $region208
        $region207: #{lamrg_v7_forward.1} parent=11 // pred_region
          _
        $region208: #{lamrg_v7_forward.1} parent=11 // pred_fallthru
          _
        // Predicated region
        $region209: #{lamrg_v7_forward.1} parent=11 // pred_check
          %p2315 = pneg %p1324
        $region210: #{lamrg_v7_forward.1} parent=11 // pred_check_branch
          %2317 = sbr.rel (%p2315) target = $region212
        $region211: #{lamrg_v7_forward.1} parent=11 // pred_region
          _
        $region212: #{lamrg_v7_forward.1} parent=11 // pred_fallthru
          _
        // Predicated region
        $region213: #{lamrg_v7_forward.1} parent=11 // pred_check
          %p2318 = pneg %p1345
        $region214: #{lamrg_v7_forward.1} parent=11 // pred_check_branch
          %2320 = sbr.rel (%p2318) target = $region216
        $region215: #{lamrg_v7_forward.1} parent=11 // pred_region
          %2322 = vsyncadd [#allocation37], 0
          %s2324 = sshll.u32 %s107, 4
          %s2325 = int_to_ptr.hbm [resolvable:$true] %s2324
          %s2326 = sshll.u32 [#allocation36], 4
          %s2327 = int_to_ptr.vmem [resolvable:$true] %s2326
          %2329 = dma.hbm_to_vmem [thread:$0]  %s2325, 16, %s2327, [#allocation37]
        $region216: #{lamrg_v7_forward.1} parent=11 // pred_fallthru
          _
        // Predicated region
        $region217: #{lamrg_v7_forward.1} parent=11 // pred_check
          %p2330 = pneg %p1366
        $region218: #{lamrg_v7_forward.1} parent=11 // pred_check_branch
          %2332 = sbr.rel (%p2330) target = $region220
        $region219: #{lamrg_v7_forward.1} parent=11 // pred_region
          %2334 = vsyncadd [#allocation37], 0
          %s2336 = sshll.u32 %s109, 4
          %s2337 = int_to_ptr.hbm [resolvable:$true] %s2336
          %s2338 = sshll.u32 [#allocation38], 4
          %s2339 = int_to_ptr.vmem [resolvable:$true] %s2338
          %2341 = dma.hbm_to_vmem [thread:$0]  %s2337, 16, %s2339, [#allocation37]
        $region220: #{lamrg_v7_forward.1} parent=11 // pred_fallthru
          _
        // Predicated region
        $region221: #{lamrg_v7_forward.1} parent=11 // pred_check
          %p2342 = pneg %p1387
        $region222: #{lamrg_v7_forward.1} parent=11 // pred_check_branch
          %2344 = sbr.rel (%p2342) target = $region224
        $region223: #{lamrg_v7_forward.1} parent=11 // pred_region
          _
        $region224: #{lamrg_v7_forward.1} parent=11 // pred_fallthru
          _
        // Predicated region
        $region225: #{lamrg_v7_forward.1} parent=11 // pred_check
          %p2345 = pneg %p1408
        $region226: #{lamrg_v7_forward.1} parent=11 // pred_check_branch
          %2347 = sbr.rel (%p2345) target = $region228
        $region227: #{lamrg_v7_forward.1} parent=11 // pred_region
          _
        $region228: #{lamrg_v7_forward.1} parent=11 // pred_fallthru
          _
        // Predicated region
        $region229: #{lamrg_v7_forward.1} parent=11 // pred_check
          %p2348 = pneg %p1429
        $region230: #{lamrg_v7_forward.1} parent=11 // pred_check_branch
          %2350 = sbr.rel (%p2348) target = $region232
        $region231: #{lamrg_v7_forward.1} parent=11 // pred_region
          %2352 = vsyncadd [#allocation40], 0
          %s2354 = sshll.u32 %s115, 4
          %s2355 = int_to_ptr.hbm [resolvable:$true] %s2354
          %s2356 = sshll.u32 [#allocation39], 4
          %s2357 = int_to_ptr.vmem [resolvable:$true] %s2356
          %2359 = dma.hbm_to_vmem [thread:$0]  %s2355, 16, %s2357, [#allocation40]
        $region232: #{lamrg_v7_forward.1} parent=11 // pred_fallthru
          _
        // Predicated region
        $region233: #{lamrg_v7_forward.1} parent=11 // pred_check
          %p2360 = pneg %p1450
        $region234: #{lamrg_v7_forward.1} parent=11 // pred_check_branch
          %2362 = sbr.rel (%p2360) target = $region236
        $region235: #{lamrg_v7_forward.1} parent=11 // pred_region
          %2364 = vsyncadd [#allocation40], 0
          %s2366 = sshll.u32 %s117, 4
          %s2367 = int_to_ptr.hbm [resolvable:$true] %s2366
          %s2368 = sshll.u32 [#allocation41], 4
          %s2369 = int_to_ptr.vmem [resolvable:$true] %s2368
          %2371 = dma.hbm_to_vmem [thread:$0]  %s2367, 16, %s2369, [#allocation40]
        $region236: #{lamrg_v7_forward.1} parent=11 // pred_fallthru
          _
        // Predicated region
        $region237: #{lamrg_v7_forward.1} parent=11 // pred_check
          %p2372 = pneg %p1471
        $region238: #{lamrg_v7_forward.1} parent=11 // pred_check_branch
          %2374 = sbr.rel (%p2372) target = $region240
        $region239: #{lamrg_v7_forward.1} parent=11 // pred_region
          %2376 = vsyncadd [#allocation43], 0
          %s2378 = sshll.u32 %s119, 4
          %s2379 = int_to_ptr.hbm [resolvable:$true] %s2378
          %s2380 = sshll.u32 [#allocation42], 4
          %s2381 = int_to_ptr.vmem [resolvable:$true] %s2380
          %2383 = dma.hbm_to_vmem [thread:$0]  %s2379, 16, %s2381, [#allocation43]
        $region240: #{lamrg_v7_forward.1} parent=11 // pred_fallthru
          _
        // Predicated region
        $region241: #{lamrg_v7_forward.1} parent=11 // pred_check
          %p2384 = pneg %p1492
        $region242: #{lamrg_v7_forward.1} parent=11 // pred_check_branch
          %2386 = sbr.rel (%p2384) target = $region244
        $region243: #{lamrg_v7_forward.1} parent=11 // pred_region
          %2388 = vsyncadd [#allocation43], 0
          %s2390 = sshll.u32 %s121, 4
          %s2391 = int_to_ptr.hbm [resolvable:$true] %s2390
          %s2392 = sshll.u32 [#allocation44], 4
          %s2393 = int_to_ptr.vmem [resolvable:$true] %s2392
          %2395 = dma.hbm_to_vmem [thread:$0]  %s2391, 16, %s2393, [#allocation43]
        $region244: #{lamrg_v7_forward.1} parent=11 // pred_fallthru
          _
        // Predicated region
        $region245: #{lamrg_v7_forward.1} parent=11 // pred_check
          %p2396 = pneg %p1513
        $region246: #{lamrg_v7_forward.1} parent=11 // pred_check_branch
          %2398 = sbr.rel (%p2396) target = $region248
        $region247: #{lamrg_v7_forward.1} parent=11 // pred_region
          %2400 = vsyncadd [#allocation46], 0
          %s2402 = sshll.u32 %s123, 4
          %s2403 = int_to_ptr.hbm [resolvable:$true] %s2402
          %s2404 = sshll.u32 [#allocation45], 4
          %s2405 = int_to_ptr.vmem [resolvable:$true] %s2404
          %2407 = dma.hbm_to_vmem [thread:$0]  %s2403, 16, %s2405, [#allocation46]
        $region248: #{lamrg_v7_forward.1} parent=11 // pred_fallthru
          _
        // Predicated region
        $region249: #{lamrg_v7_forward.1} parent=11 // pred_check
          %p2408 = pneg %p1534
        $region250: #{lamrg_v7_forward.1} parent=11 // pred_check_branch
          %2410 = sbr.rel (%p2408) target = $region252
        $region251: #{lamrg_v7_forward.1} parent=11 // pred_region
          %2412 = vsyncadd [#allocation46], 0
          %s2414 = sshll.u32 %s125, 4
          %s2415 = int_to_ptr.hbm [resolvable:$true] %s2414
          %s2416 = sshll.u32 [#allocation47], 4
          %s2417 = int_to_ptr.vmem [resolvable:$true] %s2416
          %2419 = dma.hbm_to_vmem [thread:$0]  %s2415, 16, %s2417, [#allocation46]
        $region252: #{lamrg_v7_forward.1} parent=11 // pred_fallthru
          _
        // Predicated region
        $region253: #{lamrg_v7_forward.1} parent=11 // pred_check
          %p2420 = pneg %p1555
        $region254: #{lamrg_v7_forward.1} parent=11 // pred_check_branch
          %2422 = sbr.rel (%p2420) target = $region256
        $region255: #{lamrg_v7_forward.1} parent=11 // pred_region
          _
        $region256: #{lamrg_v7_forward.1} parent=11 // pred_fallthru
          _
        // Predicated region
        $region257: #{lamrg_v7_forward.1} parent=11 // pred_check
          %p2423 = pneg %p1576
        $region258: #{lamrg_v7_forward.1} parent=11 // pred_check_branch
          %2425 = sbr.rel (%p2423) target = $region260
        $region259: #{lamrg_v7_forward.1} parent=11 // pred_region
          _
        $region260: #{lamrg_v7_forward.1} parent=11 // pred_fallthru
          _
        // Predicated region
        $region261: #{lamrg_v7_forward.1} parent=11 // pred_check
          %p2426 = pneg %p1597
        $region262: #{lamrg_v7_forward.1} parent=11 // pred_check_branch
          %2428 = sbr.rel (%p2426) target = $region264
        $region263: #{lamrg_v7_forward.1} parent=11 // pred_region
          %2430 = vsyncadd [#allocation49], 0
          %s2432 = sshll.u32 %s131, 4
          %s2433 = int_to_ptr.hbm [resolvable:$true] %s2432
          %s2434 = sshll.u32 [#allocation48], 4
          %s2435 = int_to_ptr.vmem [resolvable:$true] %s2434
          %2437 = dma.hbm_to_vmem [thread:$0]  %s2433, 16, %s2435, [#allocation49]
        $region264: #{lamrg_v7_forward.1} parent=11 // pred_fallthru
          _
        // Predicated region
        $region265: #{lamrg_v7_forward.1} parent=11 // pred_check
          %p2438 = pneg %p1618
        $region266: #{lamrg_v7_forward.1} parent=11 // pred_check_branch
          %2440 = sbr.rel (%p2438) target = $region268
        $region267: #{lamrg_v7_forward.1} parent=11 // pred_region
          %2442 = vsyncadd [#allocation49], 0
          %s2444 = sshll.u32 %s133, 4
          %s2445 = int_to_ptr.hbm [resolvable:$true] %s2444
          %s2446 = sshll.u32 [#allocation50], 4
          %s2447 = int_to_ptr.vmem [resolvable:$true] %s2446
          %2449 = dma.hbm_to_vmem [thread:$0]  %s2445, 16, %s2447, [#allocation49]
        $region268: #{lamrg_v7_forward.1} parent=11 // pred_fallthru
          _
        // Predicated region
        $region269: #{lamrg_v7_forward.1} parent=11 // pred_check
          %p2450 = pneg %p1639
        $region270: #{lamrg_v7_forward.1} parent=11 // pred_check_branch
          %2452 = sbr.rel (%p2450) target = $region272
        $region271: #{lamrg_v7_forward.1} parent=11 // pred_region
          _
        $region272: #{lamrg_v7_forward.1} parent=11 // pred_fallthru
          _
        // Predicated region
        $region273: #{lamrg_v7_forward.1} parent=11 // pred_check
          %p2453 = pneg %p1660
        $region274: #{lamrg_v7_forward.1} parent=11 // pred_check_branch
          %2455 = sbr.rel (%p2453) target = $region276
        $region275: #{lamrg_v7_forward.1} parent=11 // pred_region
          _
        $region276: #{lamrg_v7_forward.1} parent=11 // pred_fallthru
          _
        // Predicated region
        $region277: #{lamrg_v7_forward.1} parent=11 // pred_check
          %p2456 = pneg %p1681
        $region278: #{lamrg_v7_forward.1} parent=11 // pred_check_branch
          %2458 = sbr.rel (%p2456) target = $region280
        $region279: #{lamrg_v7_forward.1} parent=11 // pred_region
          %2460 = vsyncadd [#allocation52], 0
          %s2462 = sshll.u32 %s139, 4
          %s2463 = int_to_ptr.hbm [resolvable:$true] %s2462
          %s2464 = sshll.u32 [#allocation51], 4
          %s2465 = int_to_ptr.vmem [resolvable:$true] %s2464
          %2467 = dma.hbm_to_vmem [thread:$0]  %s2463, 16, %s2465, [#allocation52]
        $region280: #{lamrg_v7_forward.1} parent=11 // pred_fallthru
          _
        // Predicated region
        $region281: #{lamrg_v7_forward.1} parent=11 // pred_check
          %p2468 = pneg %p1702
        $region282: #{lamrg_v7_forward.1} parent=11 // pred_check_branch
          %2470 = sbr.rel (%p2468) target = $region284
        $region283: #{lamrg_v7_forward.1} parent=11 // pred_region
          %2472 = vsyncadd [#allocation52], 0
          %s2474 = sshll.u32 %s141, 4
          %s2475 = int_to_ptr.hbm [resolvable:$true] %s2474
          %s2476 = sshll.u32 [#allocation53], 4
          %s2477 = int_to_ptr.vmem [resolvable:$true] %s2476
          %2479 = dma.hbm_to_vmem [thread:$0]  %s2475, 16, %s2477, [#allocation52]
        $region284: #{lamrg_v7_forward.1} parent=11 // pred_fallthru
          _
        // Predicated region
        $region285: #{lamrg_v7_forward.1} parent=11 // pred_check
          %p2480 = pneg %p1723
        $region286: #{lamrg_v7_forward.1} parent=11 // pred_check_branch
          %2482 = sbr.rel (%p2480) target = $region288
        $region287: #{lamrg_v7_forward.1} parent=11 // pred_region
          %2484 = vsyncadd [#allocation55], 0
          %s2486 = sshll.u32 %s143, 4
          %s2487 = int_to_ptr.hbm [resolvable:$true] %s2486
          %s2488 = sshll.u32 [#allocation54], 4
          %s2489 = int_to_ptr.vmem [resolvable:$true] %s2488
          %2491 = dma.hbm_to_vmem [thread:$0]  %s2487, 16, %s2489, [#allocation55]
        $region288: #{lamrg_v7_forward.1} parent=11 // pred_fallthru
          _
        // Predicated region
        $region289: #{lamrg_v7_forward.1} parent=11 // pred_check
          %p2492 = pneg %p1744
        $region290: #{lamrg_v7_forward.1} parent=11 // pred_check_branch
          %2494 = sbr.rel (%p2492) target = $region292
        $region291: #{lamrg_v7_forward.1} parent=11 // pred_region
          %2496 = vsyncadd [#allocation55], 0
          %s2498 = sshll.u32 %s145, 4
          %s2499 = int_to_ptr.hbm [resolvable:$true] %s2498
          %s2500 = sshll.u32 [#allocation56], 4
          %s2501 = int_to_ptr.vmem [resolvable:$true] %s2500
          %2503 = dma.hbm_to_vmem [thread:$0]  %s2499, 16, %s2501, [#allocation55]
        $region292: #{lamrg_v7_forward.1} parent=11 // pred_fallthru
          _
        // Predicated region
        $region293: #{lamrg_v7_forward.1} parent=11 // pred_check
          %p2504 = pneg %p1765
        $region294: #{lamrg_v7_forward.1} parent=11 // pred_check_branch
          %2506 = sbr.rel (%p2504) target = $region296
        $region295: #{lamrg_v7_forward.1} parent=11 // pred_region
          %2508 = vsyncadd [#allocation58], 0
          %s2510 = sshll.u32 %s147, 4
          %s2511 = int_to_ptr.hbm [resolvable:$true] %s2510
          %s2512 = sshll.u32 [#allocation57], 4
          %s2513 = int_to_ptr.vmem [resolvable:$true] %s2512
          %2515 = dma.hbm_to_vmem [thread:$0]  %s2511, 16, %s2513, [#allocation58]
        $region296: #{lamrg_v7_forward.1} parent=11 // pred_fallthru
          _
        // Predicated region
        $region297: #{lamrg_v7_forward.1} parent=11 // pred_check
          %p2516 = pneg %p1786
        $region298: #{lamrg_v7_forward.1} parent=11 // pred_check_branch
          %2518 = sbr.rel (%p2516) target = $region300
        $region299: #{lamrg_v7_forward.1} parent=11 // pred_region
          %2520 = vsyncadd [#allocation58], 0
          %s2522 = sshll.u32 %s149, 4
          %s2523 = int_to_ptr.hbm [resolvable:$true] %s2522
          %s2524 = sshll.u32 [#allocation59], 4
          %s2525 = int_to_ptr.vmem [resolvable:$true] %s2524
          %2527 = dma.hbm_to_vmem [thread:$0]  %s2523, 16, %s2525, [#allocation58]
        $region300: #{lamrg_v7_forward.1} parent=11 // pred_fallthru
          _
        // Predicated region
        $region301: #{lamrg_v7_forward.1} parent=11 // pred_check
          %p2528 = pneg %p1807
        $region302: #{lamrg_v7_forward.1} parent=11 // pred_check_branch
          %2530 = sbr.rel (%p2528) target = $region304
        $region303: #{lamrg_v7_forward.1} parent=11 // pred_region
          %2532 = vsyncadd [#allocation61], 0
          %s2534 = sshll.u32 %s151, 4
          %s2535 = int_to_ptr.hbm [resolvable:$true] %s2534
          %s2536 = sshll.u32 [#allocation60], 4
          %s2537 = int_to_ptr.vmem [resolvable:$true] %s2536
          %2539 = dma.hbm_to_vmem [thread:$0]  %s2535, 16, %s2537, [#allocation61]
        $region304: #{lamrg_v7_forward.1} parent=11 // pred_fallthru
          _
        // Predicated region
        $region305: #{lamrg_v7_forward.1} parent=11 // pred_check
          %p2540 = pneg %p1828
        $region306: #{lamrg_v7_forward.1} parent=11 // pred_check_branch
          %2542 = sbr.rel (%p2540) target = $region308
        $region307: #{lamrg_v7_forward.1} parent=11 // pred_region
          _
        $region308: #{lamrg_v7_forward.1} parent=11 // pred_fallthru
          _
        // Predicated region
        $region309: #{lamrg_v7_forward.1} parent=11 // pred_check
          %p2543 = pneg %p1849
        $region310: #{lamrg_v7_forward.1} parent=11 // pred_check_branch
          %2545 = sbr.rel (%p2543) target = $region312
        $region311: #{lamrg_v7_forward.1} parent=11 // pred_region
          %2547 = vsyncadd [#allocation61], 0
          %s2549 = sshll.u32 %s155, 4
          %s2550 = int_to_ptr.hbm [resolvable:$true] %s2549
          %s2551 = sshll.u32 [#allocation62], 4
          %s2552 = int_to_ptr.vmem [resolvable:$true] %s2551
          %2554 = dma.hbm_to_vmem [thread:$0]  %s2550, 16, %s2552, [#allocation61]
        $region312: #{lamrg_v7_forward.1} parent=11 // pred_fallthru
          _
        // Predicated region
        $region313: #{lamrg_v7_forward.1} parent=11 // pred_check
          %p2555 = pneg %p1870
        $region314: #{lamrg_v7_forward.1} parent=11 // pred_check_branch
          %2557 = sbr.rel (%p2555) target = $region316
        $region315: #{lamrg_v7_forward.1} parent=11 // pred_region
          _
        $region316: #{lamrg_v7_forward.1} parent=11 // pred_fallthru
          _
        // Predicated region
        $region317: #{lamrg_v7_forward.1} parent=11 // pred_check
          %p2558 = pneg %p1891
        $region318: #{lamrg_v7_forward.1} parent=11 // pred_check_branch
          %2560 = sbr.rel (%p2558) target = $region320
        $region319: #{lamrg_v7_forward.1} parent=11 // pred_region
          %2562 = vsyncadd [#allocation64], 0
          %s2564 = sshll.u32 %s159, 4
          %s2565 = int_to_ptr.hbm [resolvable:$true] %s2564
          %s2566 = sshll.u32 [#allocation63], 4
          %s2567 = int_to_ptr.vmem [resolvable:$true] %s2566
          %2569 = dma.hbm_to_vmem [thread:$0]  %s2565, 16, %s2567, [#allocation64]
        $region320: #{lamrg_v7_forward.1} parent=11 // pred_fallthru
          _
        // Predicated region
        $region321: #{lamrg_v7_forward.1} parent=11 // pred_check
          %p2570 = pneg %p1912
        $region322: #{lamrg_v7_forward.1} parent=11 // pred_check_branch
          %2572 = sbr.rel (%p2570) target = $region324
        $region323: #{lamrg_v7_forward.1} parent=11 // pred_region
          _
        $region324: #{lamrg_v7_forward.1} parent=11 // pred_fallthru
          _
      $region12: #{lamrg_v7_forward.1} parent=5 // pred_fallthru
        _
      %p2573 = scmp.lt.s32.totalorder %s196, 2
      // Predicated region
      $region325: #{lamrg_v7_forward.1} parent=5 // pred_check
        %p2574 = pneg %p2573
      $region326: #{lamrg_v7_forward.1} parent=5 // pred_check_branch
        %2576 = sbr.rel (%p2574) target = $region328
      $region327: #{lamrg_v7_forward.1} parent=5 // pred_region
        // Predicated region
        $region329: #{lamrg_v7_forward.1} parent=327 // pred_check
          %p2577 = pneg %p216
        $region330: #{lamrg_v7_forward.1} parent=327 // pred_check_branch
          %2579 = sbr.rel (%p2577) target = $region332
        $region331: #{lamrg_v7_forward.1} parent=327 // pred_region
          %p2580 = scmp.lt.s32.totalorder %s196, 1
          %s2581 = scalar_select %p2580, %s196, 1
          %s2582 = smul.addr %s2581, 2
          %s2583 = smul.addr %s2582, 8
          %s2584 = scalar_lea.vmem %s1, %s2583
        $region332: #{lamrg_v7_forward.1} parent=327 // pred_fallthru
          _
        // Predicated region
        $region333: #{lamrg_v7_forward.1} parent=327 // pred_check
          %p2585 = pneg %p242
        $region334: #{lamrg_v7_forward.1} parent=327 // pred_check_branch
          %2587 = sbr.rel (%p2585) target = $region336
        $region335: #{lamrg_v7_forward.1} parent=327 // pred_region
          %p2588 = scmp.lt.s32.totalorder %s196, 1
          %s2589 = scalar_select %p2588, %s196, 1
          %s2590 = smul.addr %s2589, 8
          %s2591 = scalar_lea.vmem %s3, %s2590
        $region336: #{lamrg_v7_forward.1} parent=327 // pred_fallthru
          _
        // Predicated region
        $region337: #{lamrg_v7_forward.1} parent=327 // pred_check
          %p2592 = pneg %p268
        $region338: #{lamrg_v7_forward.1} parent=327 // pred_check_branch
          %2594 = sbr.rel (%p2592) target = $region340
        $region339: #{lamrg_v7_forward.1} parent=327 // pred_region
          %p2595 = scmp.lt.s32.totalorder %s196, 1
          %s2596 = scalar_select %p2595, %s196, 1
          %s2597 = scalar_lea.vmem %s5, %s2596
        $region340: #{lamrg_v7_forward.1} parent=327 // pred_fallthru
          _
      $region328: #{lamrg_v7_forward.1} parent=5 // pred_fallthru
        _
      %p2598 = scmp.le.s32.totalorder 1, %s196
      %p2599 = scmp.lt.s32.totalorder %s196, 3
      %p2600 = pnand %p2598, %p2599
      %p2601 = pneg %p2600
      // Predicated region
      $region341: #{lamrg_v7_forward.1} parent=5 // pred_check
        _
      $region342: #{lamrg_v7_forward.1} parent=5 // pred_check_branch
        %2603 = sbr.rel (%p2600) target = $region344
      $region343: #{lamrg_v7_forward.1} parent=5 // pred_region
        %s2604 = ssub.s32 %s196, 1
        // Predicated region
        $region345: #{lamrg_v7_forward.1} parent=343 // pred_check
          %p2605 = pneg %p673
        $region346: #{lamrg_v7_forward.1} parent=343 // pred_check_branch
          %2607 = sbr.rel (%p2605) target = $region348
        $region347: #{lamrg_v7_forward.1} parent=343 // pred_region
          %2609 = dma.done [#allocation4], 16
        $region348: #{lamrg_v7_forward.1} parent=343 // pred_fallthru
          _
        // Predicated region
        $region349: #{lamrg_v7_forward.1} parent=343 // pred_check
          %p2610 = pneg %p694
        $region350: #{lamrg_v7_forward.1} parent=343 // pred_check_branch
          %2612 = sbr.rel (%p2610) target = $region352
        $region351: #{lamrg_v7_forward.1} parent=343 // pred_region
          %2614 = dma.done [#allocation7], 16
        $region352: #{lamrg_v7_forward.1} parent=343 // pred_fallthru
          _
        // Predicated region
        $region353: #{lamrg_v7_forward.1} parent=343 // pred_check
          %p2615 = pneg %p715
        $region354: #{lamrg_v7_forward.1} parent=343 // pred_check_branch
          %2617 = sbr.rel (%p2615) target = $region356
        $region355: #{lamrg_v7_forward.1} parent=343 // pred_region
          %2619 = dma.done [#allocation7], 16
        $region356: #{lamrg_v7_forward.1} parent=343 // pred_fallthru
          _
        // Predicated region
        $region357: #{lamrg_v7_forward.1} parent=343 // pred_check
          %p2620 = pneg %p736
        $region358: #{lamrg_v7_forward.1} parent=343 // pred_check_branch
          %2622 = sbr.rel (%p2620) target = $region360
        $region359: #{lamrg_v7_forward.1} parent=343 // pred_region
          %2624 = dma.done [#allocation10], 16
        $region360: #{lamrg_v7_forward.1} parent=343 // pred_fallthru
          _
        // Predicated region
        $region361: #{lamrg_v7_forward.1} parent=343 // pred_check
          %p2625 = pneg %p799
        $region362: #{lamrg_v7_forward.1} parent=343 // pred_check_branch
          %2627 = sbr.rel (%p2625) target = $region364
        $region363: #{lamrg_v7_forward.1} parent=343 // pred_region
          %2629 = dma.done [#allocation10], 16
        $region364: #{lamrg_v7_forward.1} parent=343 // pred_fallthru
          _
        // Predicated region
        $region365: #{lamrg_v7_forward.1} parent=343 // pred_check
          %p2630 = pneg %p820
        $region366: #{lamrg_v7_forward.1} parent=343 // pred_check_branch
          %2632 = sbr.rel (%p2630) target = $region368
        $region367: #{lamrg_v7_forward.1} parent=343 // pred_region
          %2634 = dma.done [#allocation13], 16
        $region368: #{lamrg_v7_forward.1} parent=343 // pred_fallthru
          _
        // Predicated region
        $region369: #{lamrg_v7_forward.1} parent=343 // pred_check
          %p2635 = pneg %p841
        $region370: #{lamrg_v7_forward.1} parent=343 // pred_check_branch
          %2637 = sbr.rel (%p2635) target = $region372
        $region371: #{lamrg_v7_forward.1} parent=343 // pred_region
          %2639 = dma.done [#allocation13], 16
        $region372: #{lamrg_v7_forward.1} parent=343 // pred_fallthru
          _
        // Predicated region
        $region373: #{lamrg_v7_forward.1} parent=343 // pred_check
          %p2640 = pneg %p925
        $region374: #{lamrg_v7_forward.1} parent=343 // pred_check_branch
          %2642 = sbr.rel (%p2640) target = $region376
        $region375: #{lamrg_v7_forward.1} parent=343 // pred_region
          %2644 = dma.done [#allocation16], 16
        $region376: #{lamrg_v7_forward.1} parent=343 // pred_fallthru
          _
        // Predicated region
        $region377: #{lamrg_v7_forward.1} parent=343 // pred_check
          %p2645 = pneg %p946
        $region378: #{lamrg_v7_forward.1} parent=343 // pred_check_branch
          %2647 = sbr.rel (%p2645) target = $region380
        $region379: #{lamrg_v7_forward.1} parent=343 // pred_region
          %2649 = dma.done [#allocation16], 16
        $region380: #{lamrg_v7_forward.1} parent=343 // pred_fallthru
          _
        // Predicated region
        $region381: #{lamrg_v7_forward.1} parent=343 // pred_check
          %p2650 = pneg %p1009
        $region382: #{lamrg_v7_forward.1} parent=343 // pred_check_branch
          %2652 = sbr.rel (%p2650) target = $region384
        $region383: #{lamrg_v7_forward.1} parent=343 // pred_region
          %2654 = dma.done [#allocation19], 16
        $region384: #{lamrg_v7_forward.1} parent=343 // pred_fallthru
          _
        // Predicated region
        $region385: #{lamrg_v7_forward.1} parent=343 // pred_check
          %p2655 = pneg %p1030
        $region386: #{lamrg_v7_forward.1} parent=343 // pred_check_branch
          %2657 = sbr.rel (%p2655) target = $region388
        $region387: #{lamrg_v7_forward.1} parent=343 // pred_region
          %2659 = dma.done [#allocation19], 16
        $region388: #{lamrg_v7_forward.1} parent=343 // pred_fallthru
          _
        // Predicated region
        $region389: #{lamrg_v7_forward.1} parent=343 // pred_check
          %p2660 = pneg %p1051
        $region390: #{lamrg_v7_forward.1} parent=343 // pred_check_branch
          %2662 = sbr.rel (%p2660) target = $region392
        $region391: #{lamrg_v7_forward.1} parent=343 // pred_region
          %2664 = dma.done [#allocation22], 16
        $region392: #{lamrg_v7_forward.1} parent=343 // pred_fallthru
          _
        // Predicated region
        $region393: #{lamrg_v7_forward.1} parent=343 // pred_check
          %p2665 = pneg %p1072
        $region394: #{lamrg_v7_forward.1} parent=343 // pred_check_branch
          %2667 = sbr.rel (%p2665) target = $region396
        $region395: #{lamrg_v7_forward.1} parent=343 // pred_region
          %2669 = dma.done [#allocation22], 16
        $region396: #{lamrg_v7_forward.1} parent=343 // pred_fallthru
          _
        // Predicated region
        $region397: #{lamrg_v7_forward.1} parent=343 // pred_check
          %p2670 = pneg %p1093
        $region398: #{lamrg_v7_forward.1} parent=343 // pred_check_branch
          %2672 = sbr.rel (%p2670) target = $region400
        $region399: #{lamrg_v7_forward.1} parent=343 // pred_region
          %2674 = dma.done [#allocation25], 16
        $region400: #{lamrg_v7_forward.1} parent=343 // pred_fallthru
          _
        // Predicated region
        $region401: #{lamrg_v7_forward.1} parent=343 // pred_check
          %p2675 = pneg %p1114
        $region402: #{lamrg_v7_forward.1} parent=343 // pred_check_branch
          %2677 = sbr.rel (%p2675) target = $region404
        $region403: #{lamrg_v7_forward.1} parent=343 // pred_region
          %2679 = dma.done [#allocation25], 16
        $region404: #{lamrg_v7_forward.1} parent=343 // pred_fallthru
          _
        // Predicated region
        $region405: #{lamrg_v7_forward.1} parent=343 // pred_check
          %p2680 = pneg %p1135
        $region406: #{lamrg_v7_forward.1} parent=343 // pred_check_branch
          %2682 = sbr.rel (%p2680) target = $region408
        $region407: #{lamrg_v7_forward.1} parent=343 // pred_region
          %2684 = dma.done [#allocation28], 16
        $region408: #{lamrg_v7_forward.1} parent=343 // pred_fallthru
          _
        // Predicated region
        $region409: #{lamrg_v7_forward.1} parent=343 // pred_check
          %p2685 = pneg %p1156
        $region410: #{lamrg_v7_forward.1} parent=343 // pred_check_branch
          %2687 = sbr.rel (%p2685) target = $region412
        $region411: #{lamrg_v7_forward.1} parent=343 // pred_region
          %2689 = dma.done [#allocation28], 16
        $region412: #{lamrg_v7_forward.1} parent=343 // pred_fallthru
          _
        // Predicated region
        $region413: #{lamrg_v7_forward.1} parent=343 // pred_check
          %p2690 = pneg %p1219
        $region414: #{lamrg_v7_forward.1} parent=343 // pred_check_branch
          %2692 = sbr.rel (%p2690) target = $region416
        $region415: #{lamrg_v7_forward.1} parent=343 // pred_region
          %2694 = dma.done [#allocation31], 16
        $region416: #{lamrg_v7_forward.1} parent=343 // pred_fallthru
          _
        // Predicated region
        $region417: #{lamrg_v7_forward.1} parent=343 // pred_check
          %p2695 = pneg %p1240
        $region418: #{lamrg_v7_forward.1} parent=343 // pred_check_branch
          %2697 = sbr.rel (%p2695) target = $region420
        $region419: #{lamrg_v7_forward.1} parent=343 // pred_region
          %2699 = dma.done [#allocation31], 16
        $region420: #{lamrg_v7_forward.1} parent=343 // pred_fallthru
          _
        // Predicated region
        $region421: #{lamrg_v7_forward.1} parent=343 // pred_check
          %p2700 = pneg %p1261
        $region422: #{lamrg_v7_forward.1} parent=343 // pred_check_branch
          %2702 = sbr.rel (%p2700) target = $region424
        $region423: #{lamrg_v7_forward.1} parent=343 // pred_region
          %2704 = dma.done [#allocation34], 16
        $region424: #{lamrg_v7_forward.1} parent=343 // pred_fallthru
          _
        // Predicated region
        $region425: #{lamrg_v7_forward.1} parent=343 // pred_check
          %p2705 = pneg %p1282
        $region426: #{lamrg_v7_forward.1} parent=343 // pred_check_branch
          %2707 = sbr.rel (%p2705) target = $region428
        $region427: #{lamrg_v7_forward.1} parent=343 // pred_region
          %2709 = dma.done [#allocation34], 16
        $region428: #{lamrg_v7_forward.1} parent=343 // pred_fallthru
          _
        // Predicated region
        $region429: #{lamrg_v7_forward.1} parent=343 // pred_check
          %p2710 = pneg %p1345
        $region430: #{lamrg_v7_forward.1} parent=343 // pred_check_branch
          %2712 = sbr.rel (%p2710) target = $region432
        $region431: #{lamrg_v7_forward.1} parent=343 // pred_region
          %2714 = dma.done [#allocation37], 16
        $region432: #{lamrg_v7_forward.1} parent=343 // pred_fallthru
          _
        // Predicated region
        $region433: #{lamrg_v7_forward.1} parent=343 // pred_check
          %p2715 = pneg %p1366
        $region434: #{lamrg_v7_forward.1} parent=343 // pred_check_branch
          %2717 = sbr.rel (%p2715) target = $region436
        $region435: #{lamrg_v7_forward.1} parent=343 // pred_region
          %2719 = dma.done [#allocation37], 16
        $region436: #{lamrg_v7_forward.1} parent=343 // pred_fallthru
          _
        // Predicated region
        $region437: #{lamrg_v7_forward.1} parent=343 // pred_check
          %p2720 = pneg %p1429
        $region438: #{lamrg_v7_forward.1} parent=343 // pred_check_branch
          %2722 = sbr.rel (%p2720) target = $region440
        $region439: #{lamrg_v7_forward.1} parent=343 // pred_region
          %2724 = dma.done [#allocation40], 16
        $region440: #{lamrg_v7_forward.1} parent=343 // pred_fallthru
          _
        // Predicated region
        $region441: #{lamrg_v7_forward.1} parent=343 // pred_check
          %p2725 = pneg %p1450
        $region442: #{lamrg_v7_forward.1} parent=343 // pred_check_branch
          %2727 = sbr.rel (%p2725) target = $region444
        $region443: #{lamrg_v7_forward.1} parent=343 // pred_region
          %2729 = dma.done [#allocation40], 16
        $region444: #{lamrg_v7_forward.1} parent=343 // pred_fallthru
          _
        // Predicated region
        $region445: #{lamrg_v7_forward.1} parent=343 // pred_check
          %p2730 = pneg %p1471
        $region446: #{lamrg_v7_forward.1} parent=343 // pred_check_branch
          %2732 = sbr.rel (%p2730) target = $region448
        $region447: #{lamrg_v7_forward.1} parent=343 // pred_region
          %2734 = dma.done [#allocation43], 16
        $region448: #{lamrg_v7_forward.1} parent=343 // pred_fallthru
          _
        // Predicated region
        $region449: #{lamrg_v7_forward.1} parent=343 // pred_check
          %p2735 = pneg %p1492
        $region450: #{lamrg_v7_forward.1} parent=343 // pred_check_branch
          %2737 = sbr.rel (%p2735) target = $region452
        $region451: #{lamrg_v7_forward.1} parent=343 // pred_region
          %2739 = dma.done [#allocation43], 16
        $region452: #{lamrg_v7_forward.1} parent=343 // pred_fallthru
          _
        // Predicated region
        $region453: #{lamrg_v7_forward.1} parent=343 // pred_check
          %p2740 = pneg %p1513
        $region454: #{lamrg_v7_forward.1} parent=343 // pred_check_branch
          %2742 = sbr.rel (%p2740) target = $region456
        $region455: #{lamrg_v7_forward.1} parent=343 // pred_region
          %2744 = dma.done [#allocation46], 16
        $region456: #{lamrg_v7_forward.1} parent=343 // pred_fallthru
          _
        // Predicated region
        $region457: #{lamrg_v7_forward.1} parent=343 // pred_check
          %p2745 = pneg %p1534
        $region458: #{lamrg_v7_forward.1} parent=343 // pred_check_branch
          %2747 = sbr.rel (%p2745) target = $region460
        $region459: #{lamrg_v7_forward.1} parent=343 // pred_region
          %2749 = dma.done [#allocation46], 16
        $region460: #{lamrg_v7_forward.1} parent=343 // pred_fallthru
          _
        // Predicated region
        $region461: #{lamrg_v7_forward.1} parent=343 // pred_check
          %p2750 = pneg %p1597
        $region462: #{lamrg_v7_forward.1} parent=343 // pred_check_branch
          %2752 = sbr.rel (%p2750) target = $region464
        $region463: #{lamrg_v7_forward.1} parent=343 // pred_region
          %2754 = dma.done [#allocation49], 16
        $region464: #{lamrg_v7_forward.1} parent=343 // pred_fallthru
          _
        // Predicated region
        $region465: #{lamrg_v7_forward.1} parent=343 // pred_check
          %p2755 = pneg %p1618
        $region466: #{lamrg_v7_forward.1} parent=343 // pred_check_branch
          %2757 = sbr.rel (%p2755) target = $region468
        $region467: #{lamrg_v7_forward.1} parent=343 // pred_region
          %2759 = dma.done [#allocation49], 16
        $region468: #{lamrg_v7_forward.1} parent=343 // pred_fallthru
          _
        // Predicated region
        $region469: #{lamrg_v7_forward.1} parent=343 // pred_check
          %p2760 = pneg %p1681
        $region470: #{lamrg_v7_forward.1} parent=343 // pred_check_branch
          %2762 = sbr.rel (%p2760) target = $region472
        $region471: #{lamrg_v7_forward.1} parent=343 // pred_region
          %2764 = dma.done [#allocation52], 16
        $region472: #{lamrg_v7_forward.1} parent=343 // pred_fallthru
          _
        // Predicated region
        $region473: #{lamrg_v7_forward.1} parent=343 // pred_check
          %p2765 = pneg %p1702
        $region474: #{lamrg_v7_forward.1} parent=343 // pred_check_branch
          %2767 = sbr.rel (%p2765) target = $region476
        $region475: #{lamrg_v7_forward.1} parent=343 // pred_region
          %2769 = dma.done [#allocation52], 16
        $region476: #{lamrg_v7_forward.1} parent=343 // pred_fallthru
          _
        // Predicated region
        $region477: #{lamrg_v7_forward.1} parent=343 // pred_check
          %p2770 = pneg %p1723
        $region478: #{lamrg_v7_forward.1} parent=343 // pred_check_branch
          %2772 = sbr.rel (%p2770) target = $region480
        $region479: #{lamrg_v7_forward.1} parent=343 // pred_region
          %2774 = dma.done [#allocation55], 16
        $region480: #{lamrg_v7_forward.1} parent=343 // pred_fallthru
          _
        // Predicated region
        $region481: #{lamrg_v7_forward.1} parent=343 // pred_check
          %p2775 = pneg %p1744
        $region482: #{lamrg_v7_forward.1} parent=343 // pred_check_branch
          %2777 = sbr.rel (%p2775) target = $region484
        $region483: #{lamrg_v7_forward.1} parent=343 // pred_region
          %2779 = dma.done [#allocation55], 16
        $region484: #{lamrg_v7_forward.1} parent=343 // pred_fallthru
          _
        // Predicated region
        $region485: #{lamrg_v7_forward.1} parent=343 // pred_check
          %p2780 = pneg %p1765
        $region486: #{lamrg_v7_forward.1} parent=343 // pred_check_branch
          %2782 = sbr.rel (%p2780) target = $region488
        $region487: #{lamrg_v7_forward.1} parent=343 // pred_region
          %2784 = dma.done [#allocation58], 16
        $region488: #{lamrg_v7_forward.1} parent=343 // pred_fallthru
          _
        // Predicated region
        $region489: #{lamrg_v7_forward.1} parent=343 // pred_check
          %p2785 = pneg %p1786
        $region490: #{lamrg_v7_forward.1} parent=343 // pred_check_branch
          %2787 = sbr.rel (%p2785) target = $region492
        $region491: #{lamrg_v7_forward.1} parent=343 // pred_region
          %2789 = dma.done [#allocation58], 16
        $region492: #{lamrg_v7_forward.1} parent=343 // pred_fallthru
          _
        // Predicated region
        $region493: #{lamrg_v7_forward.1} parent=343 // pred_check
          %p2790 = pneg %p1807
        $region494: #{lamrg_v7_forward.1} parent=343 // pred_check_branch
          %2792 = sbr.rel (%p2790) target = $region496
        $region495: #{lamrg_v7_forward.1} parent=343 // pred_region
          %2794 = dma.done [#allocation61], 16
        $region496: #{lamrg_v7_forward.1} parent=343 // pred_fallthru
          _
        // Predicated region
        $region497: #{lamrg_v7_forward.1} parent=343 // pred_check
          %p2795 = pneg %p1849
        $region498: #{lamrg_v7_forward.1} parent=343 // pred_check_branch
          %2797 = sbr.rel (%p2795) target = $region500
        $region499: #{lamrg_v7_forward.1} parent=343 // pred_region
          %2799 = dma.done [#allocation61], 16
        $region500: #{lamrg_v7_forward.1} parent=343 // pred_fallthru
          _
        // Predicated region
        $region501: #{lamrg_v7_forward.1} parent=343 // pred_check
          %p2800 = pneg %p1891
        $region502: #{lamrg_v7_forward.1} parent=343 // pred_check_branch
          %2802 = sbr.rel (%p2800) target = $region504
        $region503: #{lamrg_v7_forward.1} parent=343 // pred_region
          %2804 = dma.done [#allocation64], 16
        $region504: #{lamrg_v7_forward.1} parent=343 // pred_fallthru
          _
        %p2805 = scmp.lt.s32.totalorder %s201, 1
        %s2806 = scalar_select %p2805, %s201, 1
        %s2807 = smul.addr %s2806, 2
        %s2808 = smul.addr %s2807, 8
        %s2809 = scalar_lea.vmem %s1, %s2808
        %p2810 = pneg %p222
        %p2811 = pneg %p219
        %p2812 = scmp.lt.s32.totalorder %s201, 1
        %s2813 = scalar_select %p2812, %s201, 1
        %s2814 = smul.addr %s2813, 8
        %s2815 = scalar_lea.vmem %s3, %s2814
        %p2816 = pneg %p248
        %p2817 = pneg %p245
        %p2818 = scmp.lt.s32.totalorder %s201, 1
        %s2819 = scalar_select %p2818, %s201, 1
        %s2820 = scalar_lea.vmem %s5, %s2819
        %p2821 = pneg %p274
        %p2822 = pneg %p271
        %p2823 = pneg %p295
        %p2824 = pneg %p292
        %p2825 = pneg %p316
        %p2826 = pneg %p313
        %p2827 = pneg %p337
        %p2828 = pneg %p334
        %p2829 = pneg %p358
        %p2830 = pneg %p355
        %p2831 = pneg %p379
        %p2832 = pneg %p376
        %p2833 = pneg %p400
        %p2834 = pneg %p397
        %p2835 = pneg %p421
        %p2836 = pneg %p418
        %p2837 = pneg %p442
        %p2838 = pneg %p439
        %p2839 = pneg %p463
        %p2840 = pneg %p460
        %p2841 = pneg %p484
        %p2842 = pneg %p481
        %p2843 = pneg %p505
        %p2844 = pneg %p502
        %p2845 = pneg %p526
        %p2846 = pneg %p523
        %p2847 = pneg %p547
        %p2848 = pneg %p544
        %p2849 = pneg %p568
        %p2850 = pneg %p565
        %p2851 = pneg %p589
        %p2852 = pneg %p586
        %p2853 = pneg %p610
        %p2854 = pneg %p607
        %p2855 = pneg %p631
        %p2856 = pneg %p628
        %p2857 = pneg %p652
        %p2858 = pneg %p649
        %p2859 = pneg %p673
        %p2860 = pneg %p670
        %p2861 = pneg %p694
        %p2862 = pneg %p691
        %p2863 = pneg %p715
        %p2864 = pneg %p712
        %p2865 = pneg %p736
        %p2866 = pneg %p733
        %p2867 = pneg %p757
        %p2868 = pneg %p754
        %p2869 = pneg %p778
        %p2870 = pneg %p775
        %p2871 = pneg %p799
        %p2872 = pneg %p796
        %p2873 = pneg %p820
        %p2874 = pneg %p817
        %p2875 = pneg %p841
        %p2876 = pneg %p838
        %p2877 = pneg %p862
        %p2878 = pneg %p859
        %p2879 = pneg %p883
        %p2880 = pneg %p880
        %p2881 = pneg %p904
        %p2882 = pneg %p901
        %p2883 = pneg %p925
        %p2884 = pneg %p922
        %p2885 = pneg %p946
        %p2886 = pneg %p943
        %p2887 = pneg %p967
        %p2888 = pneg %p964
        %p2889 = pneg %p988
        %p2890 = pneg %p985
        %p2891 = pneg %p1009
        %p2892 = pneg %p1006
        %p2893 = pneg %p1030
        %p2894 = pneg %p1027
        %p2895 = pneg %p1051
        %p2896 = pneg %p1048
        %p2897 = pneg %p1072
        %p2898 = pneg %p1069
        %p2899 = pneg %p1093
        %p2900 = pneg %p1090
        %p2901 = pneg %p1114
        %p2902 = pneg %p1111
        %p2903 = pneg %p1135
        %p2904 = pneg %p1132
        %p2905 = pneg %p1156
        %p2906 = pneg %p1153
        %p2907 = pneg %p1177
        %p2908 = pneg %p1174
        %p2909 = pneg %p1198
        %p2910 = pneg %p1195
        %p2911 = pneg %p1219
        %p2912 = pneg %p1216
        %p2913 = pneg %p1240
        %p2914 = pneg %p1237
        %p2915 = pneg %p1261
        %p2916 = pneg %p1258
        %p2917 = pneg %p1282
        %p2918 = pneg %p1279
        %p2919 = pneg %p1303
        %p2920 = pneg %p1300
        %p2921 = pneg %p1324
        %p2922 = pneg %p1321
        %p2923 = pneg %p1345
        %p2924 = pneg %p1342
        %p2925 = pneg %p1366
        %p2926 = pneg %p1363
        %p2927 = pneg %p1387
        %p2928 = pneg %p1384
        %p2929 = pneg %p1408
        %p2930 = pneg %p1405
        %p2931 = pneg %p1429
        %p2932 = pneg %p1426
        %p2933 = pneg %p1450
        %p2934 = pneg %p1447
        %p2935 = pneg %p1471
        %p2936 = pneg %p1468
        %p2937 = pneg %p1492
        %p2938 = pneg %p1489
        %p2939 = pneg %p1513
        %p2940 = pneg %p1510
        %p2941 = pneg %p1534
        %p2942 = pneg %p1531
        %p2943 = pneg %p1555
        %p2944 = pneg %p1552
        %p2945 = pneg %p1576
        %p2946 = pneg %p1573
        %p2947 = pneg %p1597
        %p2948 = pneg %p1594
        %p2949 = pneg %p1618
        %p2950 = pneg %p1615
        %p2951 = pneg %p1639
        %p2952 = pneg %p1636
        %p2953 = pneg %p1660
        %p2954 = pneg %p1657
        %p2955 = pneg %p1681
        %p2956 = pneg %p1678
        %p2957 = pneg %p1702
        %p2958 = pneg %p1699
        %p2959 = pneg %p1723
        %p2960 = pneg %p1720
        %p2961 = pneg %p1744
        %p2962 = pneg %p1741
        %p2963 = pneg %p1765
        %p2964 = pneg %p1762
        %p2965 = pneg %p1786
        %p2966 = pneg %p1783
        %p2967 = pneg %p1807
        %p2968 = pneg %p1804
        %p2969 = pneg %p1828
        %p2970 = pneg %p1825
        %p2971 = pneg %p1849
        %p2972 = pneg %p1846
        %p2973 = pneg %p1870
        %p2974 = pneg %p1867
        %p2975 = pneg %p1891
        %p2976 = pneg %p1888
        %p2977 = pneg %p1912
        %p2978 = pneg %p1909
        %p2979 = pneg %p1938
        %p2980 = pneg %p1935
        %p2981 = scmp.lt.s32.totalorder %s201, 1
        %s2982 = scalar_select %p2981, %s201, 1
        %s2983 = smul.addr %s2982, 8
        %s2984 = scalar_lea.vmem %s163, %s2983
        %p2985 = pneg %p1964
        %p2986 = pneg %p1961
        %s2987 = sand.u32 %s1951, 1
        %s2988 = scalar_lea.sflag [#allocation5], %s2987
        %s2989 = sand.u32 %s1951, 1
        %s2990 = scalar_lea.vmem [#allocation65], %s2989
        %p2991 = scmp.lt.s32.totalorder %s201, 1
        %s2992 = scalar_select %p2991, %s201, 1
        %s2993 = smul.addr %s2992, 2
        %s2994 = smul.addr %s2993, 8
        %s2995 = scalar_lea.vmem %s1, %s2994
        %p2996 = scmp.lt.s32.totalorder %s201, 1
        %s2997 = scalar_select %p2996, %s201, 1
        %s2998 = smul.addr %s2997, 8
        %s2999 = scalar_lea.vmem %s3, %s2998
        %p3000 = scmp.lt.s32.totalorder %s201, 1
        %s3001 = scalar_select %p3000, %s201, 1
        %s3002 = scalar_lea.vmem %s5, %s3001
        %p3003 = scmp.lt.s32.totalorder %s201, 1
        %s3004 = scalar_select %p3003, %s201, 1
        %s3005 = smul.addr %s3004, 8
        %s3006 = scalar_lea.vmem %s163, %s3005
        %v3008 = vld [vmem:[%s7] sm:$0x1]
        %v3009 = vld [vmem:[%s9] sm:$0xff]
        %v3010 = vld [vmem:[%s9 + $0x8] sm:$0xff]
        %v3011 = vld [vmem:[%s9 + $0x10] sm:$0xff]
        %v3012 = vld [vmem:[%s9 + $0x18] sm:$0xff]
        %v3013 = vld [vmem:[%s9 + $0x20] sm:$0xff]
        %v3014 = vld [vmem:[%s9 + $0x28] sm:$0xff]
        %v3015 = vld [vmem:[%s9 + $0x30] sm:$0xff]
        %v3016 = vld [vmem:[%s9 + $0x38] sm:$0xff]
        %v3017 = vld [vmem:[%s11] sm:$0x1]
        %v3018 = vld [vmem:[%s13] sm:$0xff]
        %v3019 = vld [vmem:[%s13 + $0x8] sm:$0xff]
        %v3020 = vld [vmem:[%s13 + $0x10] sm:$0xff]
        %v3021 = vld [vmem:[%s13 + $0x18] sm:$0xff]
        %v3022 = vld [vmem:[%s13 + $0x20] sm:$0xff]
        %v3023 = vld [vmem:[%s13 + $0x28] sm:$0xff]
        %v3024 = vld [vmem:[%s13 + $0x30] sm:$0xff]
        %v3025 = vld [vmem:[%s13 + $0x38] sm:$0xff]
        %v3026 = vld [vmem:[%s15] sm:$0x1]
        %v3027 = vld [vmem:[%s17] sm:$0x1]
        %v3028 = vld [vmem:[%s19] sm:$0x1]
        %v3029 = vld [vmem:[%s21] sm:$0xff]
        %v3030 = vld [vmem:[%s21 + $0x8] sm:$0xff]
        %v3031 = vld [vmem:[%s21 + $0x10] sm:$0xff]
        %v3032 = vld [vmem:[%s21 + $0x18] sm:$0xff]
        %v3033 = vld [vmem:[%s23] sm:$0xff]
        %v3034 = vld [vmem:[%s23 + $0x8] sm:$0xff]
        %v3035 = vld [vmem:[%s23 + $0x10] sm:$0xff]
        %v3036 = vld [vmem:[%s23 + $0x18] sm:$0xff]
        %v3037 = vld [vmem:[%s25] sm:$0xff]
        %v3038 = vld [vmem:[%s25 + $0x8] sm:$0xff]
        %v3039 = vld [vmem:[%s25 + $0x10] sm:$0xff]
        %v3040 = vld [vmem:[%s25 + $0x18] sm:$0xff]
        %v3041 = vld [vmem:[%s27] sm:$0x1]
        %v3042 = vld [vmem:[%s29] sm:$0x1]
        %v3043 = vld [vmem:[%s31] sm:$0xff]
        %v3044 = vld [vmem:[%s31 + $0x8] sm:$0xff]
        %v3045 = vld [vmem:[%s31 + $0x10] sm:$0xff]
        %v3046 = vld [vmem:[%s31 + $0x18] sm:$0xff]
        %v3047 = vld [vmem:[%s33] sm:$0xff]
        %v3048 = vld [vmem:[%s33 + $0x8] sm:$0xff]
        %v3049 = vld [vmem:[%s33 + $0x10] sm:$0xff]
        %v3050 = vld [vmem:[%s33 + $0x18] sm:$0xff]
        %v3051 = vld [vmem:[%s33 + $0x20] sm:$0xff]
        %v3052 = vld [vmem:[%s33 + $0x28] sm:$0xff]
        %v3053 = vld [vmem:[%s33 + $0x30] sm:$0xff]
        %v3054 = vld [vmem:[%s33 + $0x38] sm:$0xff]
        %v3055 = vld [vmem:[%s35] sm:$0x1]
        %v3056 = vld [vmem:[%s37] sm:$0x1]
        %v3057 = vld [vmem:[%s39] sm:$0x1]
        %v3058 = vld [vmem:[%s41] sm:$0x1]
        %v3059 = vld [vmem:[#allocation3] sm:$0x1]
        %v3060 = vld [vmem:[#allocation6] sm:$0x1]
        %v3061 = vld [vmem:[#allocation8] sm:$0x1]
        %v3062 = vld [vmem:[#allocation9] sm:$0x1]
        %v3063 = vld [vmem:[%s51] sm:$0xff]
        %v3064 = vld [vmem:[%s51 + $0x8] sm:$0xff]
        %v3065 = vld [vmem:[%s51 + $0x10] sm:$0xff]
        %v3066 = vld [vmem:[%s51 + $0x18] sm:$0xff]
        %v3067 = vld [vmem:[%s53] sm:$0xff]
        %v3068 = vld [vmem:[%s53 + $0x8] sm:$0xff]
        %v3069 = vld [vmem:[%s53 + $0x10] sm:$0xff]
        %v3070 = vld [vmem:[%s53 + $0x18] sm:$0xff]
        %v3071 = vld [vmem:[#allocation11] sm:$0x1]
        %v3072 = vld [vmem:[#allocation12] sm:$0x1]
        %v3073 = vld [vmem:[#allocation14] sm:$0x1]
        %v3074 = vld [vmem:[%s61] sm:$0xff]
        %v3075 = vld [vmem:[%s61 + $0x8] sm:$0xff]
        %v3076 = vld [vmem:[%s61 + $0x10] sm:$0xff]
        %v3077 = vld [vmem:[%s61 + $0x18] sm:$0xff]
        %v3078 = vld [vmem:[%s63] sm:$0xff]
        %v3079 = vld [vmem:[%s63 + $0x8] sm:$0xff]
        %v3080 = vld [vmem:[%s63 + $0x10] sm:$0xff]
        %v3081 = vld [vmem:[%s63 + $0x18] sm:$0xff]
        %v3082 = vld [vmem:[%s65] sm:$0xff]
        %v3083 = vld [vmem:[%s65 + $0x8] sm:$0xff]
        %v3084 = vld [vmem:[%s65 + $0x10] sm:$0xff]
        %v3085 = vld [vmem:[%s65 + $0x18] sm:$0xff]
        %v3086 = vld [vmem:[#allocation15] sm:$0x1]
        %v3087 = vld [vmem:[#allocation17] sm:$0x1]
        %v3088 = vld [vmem:[%s71] sm:$0xff]
        %v3089 = vld [vmem:[%s71 + $0x8] sm:$0xff]
        %v3090 = vld [vmem:[%s71 + $0x10] sm:$0xff]
        %v3091 = vld [vmem:[%s71 + $0x18] sm:$0xff]
        %v3092 = vld [vmem:[%s73] sm:$0xff]
        %v3093 = vld [vmem:[%s73 + $0x8] sm:$0xff]
        %v3094 = vld [vmem:[%s73 + $0x10] sm:$0xff]
        %v3095 = vld [vmem:[%s73 + $0x18] sm:$0xff]
        %v3096 = vld [vmem:[%s73 + $0x20] sm:$0xff]
        %v3097 = vld [vmem:[%s73 + $0x28] sm:$0xff]
        %v3098 = vld [vmem:[%s73 + $0x30] sm:$0xff]
        %v3099 = vld [vmem:[%s73 + $0x38] sm:$0xff]
        %v3100 = vld [vmem:[#allocation18] sm:$0x1]
        %v3101 = vld [vmem:[#allocation20] sm:$0x1]
        %v3102 = vld [vmem:[#allocation21] sm:$0x1]
        %v3103 = vld [vmem:[#allocation23] sm:$0x1]
        %v3104 = vld [vmem:[#allocation24] sm:$0x1]
        %v3105 = vld [vmem:[#allocation26] sm:$0x1]
        %v3106 = vld [vmem:[#allocation27] sm:$0x1]
        %v3107 = vld [vmem:[#allocation29] sm:$0x1]
        %v3108 = vld [vmem:[%s91] sm:$0xff]
        %v3109 = vld [vmem:[%s91 + $0x8] sm:$0xff]
        %v3110 = vld [vmem:[%s91 + $0x10] sm:$0xff]
        %v3111 = vld [vmem:[%s91 + $0x18] sm:$0xff]
        %v3112 = vld [vmem:[%s93] sm:$0xff]
        %v3113 = vld [vmem:[%s93 + $0x8] sm:$0xff]
        %v3114 = vld [vmem:[%s93 + $0x10] sm:$0xff]
        %v3115 = vld [vmem:[%s93 + $0x18] sm:$0xff]
        %v3116 = vld [vmem:[#allocation30] sm:$0x1]
        %v3117 = vld [vmem:[#allocation32] sm:$0x1]
        %v3118 = vld [vmem:[#allocation33] sm:$0x1]
        %v3119 = vld [vmem:[#allocation35] sm:$0x1]
        %v3120 = vld [vmem:[%s103] sm:$0xff]
        %v3121 = vld [vmem:[%s103 + $0x8] sm:$0xff]
        %v3122 = vld [vmem:[%s103 + $0x10] sm:$0xff]
        %v3123 = vld [vmem:[%s103 + $0x18] sm:$0xff]
        %v3124 = vld [vmem:[%s105] sm:$0xff]
        %v3125 = vld [vmem:[%s105 + $0x8] sm:$0xff]
        %v3126 = vld [vmem:[%s105 + $0x10] sm:$0xff]
        %v3127 = vld [vmem:[%s105 + $0x18] sm:$0xff]
        %v3128 = vld [vmem:[#allocation36] sm:$0x1]
        %v3129 = vld [vmem:[#allocation38] sm:$0x1]
        %v3130 = vld [vmem:[%s111] sm:$0xff]
        %v3131 = vld [vmem:[%s111 + $0x8] sm:$0xff]
        %v3132 = vld [vmem:[%s111 + $0x10] sm:$0xff]
        %v3133 = vld [vmem:[%s111 + $0x18] sm:$0xff]
        %v3134 = vld [vmem:[%s113] sm:$0xff]
        %v3135 = vld [vmem:[%s113 + $0x8] sm:$0xff]
        %v3136 = vld [vmem:[%s113 + $0x10] sm:$0xff]
        %v3137 = vld [vmem:[%s113 + $0x18] sm:$0xff]
        %v3138 = vld [vmem:[%s113 + $0x20] sm:$0xff]
        %v3139 = vld [vmem:[%s113 + $0x28] sm:$0xff]
        %v3140 = vld [vmem:[%s113 + $0x30] sm:$0xff]
        %v3141 = vld [vmem:[%s113 + $0x38] sm:$0xff]
        %v3142 = vld [vmem:[#allocation39] sm:$0x1]
        %v3143 = vld [vmem:[#allocation41] sm:$0x1]
        %v3144 = vld [vmem:[#allocation42] sm:$0x1]
        %v3145 = vld [vmem:[#allocation44] sm:$0x1]
        %v3146 = vld [vmem:[#allocation45] sm:$0x1]
        %v3147 = vld [vmem:[#allocation47] sm:$0x1]
        %v3148 = vld [vmem:[%s127] sm:$0xff]
        %v3149 = vld [vmem:[%s127 + $0x8] sm:$0xff]
        %v3150 = vld [vmem:[%s127 + $0x10] sm:$0xff]
        %v3151 = vld [vmem:[%s127 + $0x18] sm:$0xff]
        %v3152 = vld [vmem:[%s129] sm:$0xff]
        %v3153 = vld [vmem:[%s129 + $0x8] sm:$0xff]
        %v3154 = vld [vmem:[%s129 + $0x10] sm:$0xff]
        %v3155 = vld [vmem:[%s129 + $0x18] sm:$0xff]
        %v3156 = vld [vmem:[#allocation48] sm:$0x1]
        %v3157 = vld [vmem:[#allocation50] sm:$0x1]
        %v3158 = vld [vmem:[%s135] sm:$0xff]
        %v3159 = vld [vmem:[%s135 + $0x8] sm:$0xff]
        %v3160 = vld [vmem:[%s135 + $0x10] sm:$0xff]
        %v3161 = vld [vmem:[%s135 + $0x18] sm:$0xff]
        %v3162 = vld [vmem:[%s137] sm:$0xff]
        %v3163 = vld [vmem:[%s137 + $0x8] sm:$0xff]
        %v3164 = vld [vmem:[%s137 + $0x10] sm:$0xff]
        %v3165 = vld [vmem:[%s137 + $0x18] sm:$0xff]
        %v3166 = vld [vmem:[%s137 + $0x20] sm:$0xff]
        %v3167 = vld [vmem:[%s137 + $0x28] sm:$0xff]
        %v3168 = vld [vmem:[%s137 + $0x30] sm:$0xff]
        %v3169 = vld [vmem:[%s137 + $0x38] sm:$0xff]
        %v3170 = vld [vmem:[#allocation51] sm:$0x1]
        %v3171 = vld [vmem:[#allocation53] sm:$0x1]
        %v3172 = vld [vmem:[#allocation54] sm:$0x1]
        %v3173 = vld [vmem:[#allocation56] sm:$0x1]
        %v3174 = vld [vmem:[#allocation57] sm:$0x1]
        %v3175 = vld [vmem:[#allocation59] sm:$0x1]
        %v3176 = vld [vmem:[#allocation60] sm:$0x1]
        %v3177 = vld [vmem:[%s153] sm:$0xff]
        %v3178 = vld [vmem:[%s153 + $0x8] sm:$0xff]
        %v3179 = vld [vmem:[%s153 + $0x10] sm:$0xff]
        %v3180 = vld [vmem:[%s153 + $0x18] sm:$0xff]
        %v3181 = vld [vmem:[#allocation62] sm:$0x1]
        %v3182 = vld [vmem:[%s157] sm:$0xff]
        %v3183 = vld [vmem:[#allocation63] sm:$0x1]
        %v3184 = vld [vmem:[%s161] sm:$0xff]
        %v3185 = vld [vmem:[%s161 + $0x8] sm:$0xff]
        %v3186 = vld [vmem:[%s161 + $0x10] sm:$0xff]
        %v3187 = vld [vmem:[%s161 + $0x18] sm:$0xff]
        %v3188 = vld [vmem:[%s161 + $0x20] sm:$0xff]
        %v3189 = vld [vmem:[%s161 + $0x28] sm:$0xff]
        %v3190 = vld [vmem:[%s2995] sm:$0xff]
        %v3191 = vld [vmem:[%s2995 + $0x8] sm:$0xff]
        %v3192 = vpack.c.bf16 %v3191, %v3190
        %v3193 = vpack.c.bf16 %v3185, %v3184
        %v3194 = vpack.c.bf16 %v3187, %v3186
        %v3195 = vpack.c.bf16 %v3189, %v3188
        %v3197 = vperm.slane %v3183, 0
        %vm3199 = vcmask 392192
        %v3201 = vsel %vm3199, %v3192, 0
        %3203 = vmatpush.bf16.msra.mxu0 0
        %3204 = vmatpush.bf16.msra.mxu0 0
        %3205 = vmatpush.bf16.msra.mxu0 0
        %3206 = vmatpush.bf16.msra.mxu0 0
        %3207 = vmatpush.bf16.msra.mxu0 0
        %3208 = vmatpush.bf16.msra.mxu0 %v3195
        %3209 = vmatpush.bf16.msra.mxu0 %v3194
        %3210 = vmatpush.bf16.msra.mxu0 %v3193
        %3211 = vmatmul.bf16.gmra.mxu0 %v3201
        %v3212 = vpop.f32.mrf.mxu0
        %v3213 = vadd.f32 %v3197, %v3212
        %v3214 = vpop.f32.mrf.mxu0
        %v3215 = vadd.f32 %v3197, %v3214
        %3216 = vdwg.mxu0
        %vm3217 = vcmask 523264
        %v3218 = vsel %vm3217, %v3213, 0.0
        %v3219 = vsel %vm3217, %v3215, 0.0
        %v3220 = vadd.f32 %v3218, %v3219
        %v3221 = vrot.slane %v3220, 4
        %v3222 = vadd.f32 %v3220, %v3221
        %v3223 = vrot.slane %v3222, 2
        %v3224 = vadd.f32 %v3222, %v3223
        %v3225 = vrot.slane %v3224, 1
        %v3226 = vadd.f32 %v3224, %v3225
        %v3227 = vrcp.pop 16.0
        %v3228 = vmul.f32 16.0, %v3227
        %v3229 = vsub.f32 1.0, %v3228
        %v3230 = vmul.f32 %v3227, %v3229
        %v3231 = vadd.f32 %v3227, %v3230
        %vm3232 = vweird.f32 %v3227
        %v3233 = vsel %vm3232, %v3227, %v3231
        %v3234 = vmul.f32 %v3226, %v3233
        %v3235 = vpack.c.bf16 %v3234, %v3234
        %v3236 = vpack.c.bf16 %v3019, %v3018
        %v3237 = vpack.c.bf16 %v3021, %v3020
        %v3238 = vpack.c.bf16 %v3023, %v3022
        %v3239 = vpack.c.bf16 %v3025, %v3024
        %v3241 = vsel %vm3217, %v3235, 0
        %3243 = vmatpush.bf16.msra.mxu0 0
        %3244 = vmatpush.bf16.msra.mxu0 0
        %3245 = vmatpush.bf16.msra.mxu0 0
        %3246 = vmatpush.bf16.msra.mxu0 0
        %3247 = vmatpush.bf16.msra.mxu0 %v3239
        %3248 = vmatpush.bf16.msra.mxu0 %v3238
        %3249 = vmatpush.bf16.msra.mxu0 %v3237
        %3250 = vmatpush.bf16.msra.mxu0 %v3236
        %3251 = vmatmul.bf16.gmra.mxu0 %v3241
        %v3252 = vpop.f32.mrf.mxu0
        %v3253 = vadd.f32 %v3017, %v3252
        %v3254 = vpop.f32.mrf.mxu0
        %3255 = vdwg.mxu0
        %v3256 = vpack.c.bf16 %v3253, %v3253
        %v3257 = vpack.c.bf16 %v3182, %v3182
        %vm3258 = vcmask 64512
        %v3260 = vsel %vm3258, %v3256, 0
        %vm3262 = vcmask 1043456
        %v3264 = vsel %vm3262, %v3257, 0
        %3266 = vmatpush.bf16.msra.mxu0 0
        %3267 = vmatpush.bf16.msra.mxu0 0
        %3268 = vmatpush.bf16.msra.mxu0 0
        %3269 = vmatpush.bf16.msra.mxu0 0
        %3270 = vmatpush.bf16.msra.mxu0 0
        %3271 = vmatpush.bf16.msra.mxu0 0
        %3272 = vmatpush.bf16.msra.mxu0 0
        %3273 = vmatpush.bf16.msra.mxu0 %v3264
        %3274 = vmatmul.bf16.gmra.mxu0 %v3260
        %v3275 = vpop.f32.mrf.mxu0
        %v3276 = vadd.f32 %v3181, %v3275
        %v3277 = vpop.f32.mrf.mxu0
        %3278 = vdwg.mxu0
        %3279 = vst.msk [vmem:[#allocation2] sm:$0xff] %vm3217, 0.0
        %3280 = vst.msk [vmem:[#allocation2 + $0x8] sm:$0xff] %vm3217, 0.0
        %3281 = vst.msk [vmem:[#allocation2 + $0x10] sm:$0xff] %vm3217, 0.0
        %3282 = vst.msk [vmem:[#allocation2] sm:$0xff] %vm3217, %v3213
        %3283 = vst.msk [vmem:[#allocation2 + $0x8] sm:$0xff] %vm3217, %v3215
        %vm3284 = vcmask 516096
        %3285 = vst.msk [vmem:[#allocation2 + $0x10] sm:$0x1] %vm3284, %v3276
        %v3286 = vld [vmem:[#allocation2] sm:$0xff]
        %v3287 = vld [vmem:[#allocation2 + $0x8] sm:$0xff]
        %v3288 = vld [vmem:[#allocation2 + $0x10] sm:$0xff]
        %v3289 = vpack.c.bf16 %v3287, %v3286
        %v3290 = vpack.c.bf16 %v3288, %v3288
        %v3291 = vpack.c.bf16 %v3010, %v3009
        %v3292 = vpack.c.bf16 %v3012, %v3011
        %v3293 = vpack.c.bf16 %v3014, %v3013
        %v3294 = vpack.c.bf16 %v3016, %v3015
        %v3296 = vperm.slane %v3008, 0
        %v3299 = vsel %vm3217, %v3289, 0
        %v3302 = vsel %vm3217, %v3290, 0
        %3304 = vmatpush.bf16.msra.mxu0 0
        %3305 = vmatpush.bf16.msra.mxu0 0
        %3306 = vmatpush.bf16.msra.mxu0 0
        %3307 = vmatpush.bf16.msra.mxu0 0
        %3308 = vmatpush.bf16.msra.mxu0 %v3294
        %3309 = vmatpush.bf16.msra.mxu0 %v3293
        %3310 = vmatpush.bf16.msra.mxu0 %v3292
        %3311 = vmatpush.bf16.msra.mxu0 %v3291
        %3312 = vmatmul.bf16.gmra.mxu0 %v3299
        %v3313 = vpop.f32.mrf.mxu0
        %v3314 = vadd.f32 %v3296, %v3313
        %v3315 = vpop.f32.mrf.mxu0
        %v3316 = vadd.f32 %v3296, %v3315
        %3317 = vmatmul.bf16.gmra.mxu0 %v3302
        %v3318 = vpop.f32.mrf.mxu0
        %v3319 = vadd.f32 %v3296, %v3318
        %v3320 = vpop.f32.mrf.mxu0
        %3321 = vdwg.mxu0
        %v3322 = vmax.f32 %v3314, 0.0
        %v3323 = vmax.f32 %v3316, 0.0
        %v3324 = vmax.f32 %v3319, 0.0
        %v3325 = vlaneseq
        %v3326 = vand.u32 %v3325, 127
        %vm3327 = vcmp.lt.s32.totalorder %v3326, 17
        %v3328 = vsel %vm3327, 0.0, -1e+09
        %vm3329 = vcmask 261120
        %v3330 = vsel %vm3329, %v3322, 0.0
        %3331 = vadd.xlane.f32.xlu0 %v3330
        %v3332 = vpop.xlane.xlu0 %3331
        %v3333 = vsel %vm3329, %v3323, 0.0
        %3334 = vadd.xlane.f32.xlu0 %v3333
        %v3335 = vpop.xlane.xlu0 %3334
        %v3336 = vsel %vm3329, %v3324, 0.0
        %3337 = vadd.xlane.f32.xlu0 %v3336
        %v3338 = vpop.xlane.xlu0 %3337
        %v3339 = vrcp.pop 32.0
        %v3340 = vmul.f32 32.0, %v3339
        %v3341 = vsub.f32 1.0, %v3340
        %v3342 = vmul.f32 %v3339, %v3341
        %v3343 = vadd.f32 %v3339, %v3342
        %vm3344 = vweird.f32 %v3339
        %v3345 = vsel %vm3344, %v3339, %v3343
        %v3346 = vmul.f32 %v3332, %v3345
        %v3347 = vmul.f32 %v3335, %v3345
        %v3348 = vmul.f32 %v3338, %v3345
        %v3349 = vsub.f32 %v3322, %v3346
        %v3350 = vsub.f32 %v3323, %v3347
        %v3351 = vsub.f32 %v3324, %v3348
        %v3352 = vmul.f32 %v3349, %v3349
        %v3353 = vmul.f32 %v3350, %v3350
        %v3354 = vmul.f32 %v3351, %v3351
        %v3355 = vsel %vm3329, %v3352, 0.0
        %3356 = vadd.xlane.f32.xlu0 %v3355
        %v3357 = vpop.xlane.xlu0 %3356
        %v3358 = vsel %vm3329, %v3353, 0.0
        %3359 = vadd.xlane.f32.xlu0 %v3358
        %v3360 = vpop.xlane.xlu0 %3359
        %v3361 = vsel %vm3329, %v3354, 0.0
        %3362 = vadd.xlane.f32.xlu0 %v3361
        %v3363 = vpop.xlane.xlu0 %3362
        %v3364 = vmul.f32 %v3357, %v3345
        %v3365 = vmul.f32 %v3360, %v3345
        %v3366 = vmul.f32 %v3363, %v3345
        %v3367 = vadd.f32 %v3364, 1e-06
        %v3368 = vadd.f32 %v3365, 1e-06
        %v3369 = vadd.f32 %v3366, 1e-06
        %v3370 = vrsqrt.pop %v3367
        %v3371 = vmul.f32 %v3370, %v3367
        %v3372 = vmul.f32 %v3371, %v3370
        %v3373 = vmul.f32 0.5, %v3372
        %v3374 = vsub.f32 1.5, %v3373
        %v3375 = vmul.f32 %v3370, %v3374
        %vm3376 = vweird.f32 %v3367
        %vm3377 = vweird.f32 %v3370
        %vm3378 = vmor %vm3376, %vm3377
        %v3379 = vsel %vm3378, %v3370, %v3375
        %v3380 = vrsqrt.pop %v3368
        %v3381 = vmul.f32 %v3380, %v3368
        %v3382 = vmul.f32 %v3381, %v3380
        %v3383 = vmul.f32 0.5, %v3382
        %v3384 = vsub.f32 1.5, %v3383
        %v3385 = vmul.f32 %v3380, %v3384
        %vm3386 = vweird.f32 %v3368
        %vm3387 = vweird.f32 %v3380
        %vm3388 = vmor %vm3386, %vm3387
        %v3389 = vsel %vm3388, %v3380, %v3385
        %v3390 = vrsqrt.pop %v3369
        %v3391 = vmul.f32 %v3390, %v3369
        %v3392 = vmul.f32 %v3391, %v3390
        %v3393 = vmul.f32 0.5, %v3392
        %v3394 = vsub.f32 1.5, %v3393
        %v3395 = vmul.f32 %v3390, %v3394
        %vm3396 = vweird.f32 %v3369
        %vm3397 = vweird.f32 %v3390
        %vm3398 = vmor %vm3396, %vm3397
        %v3399 = vsel %vm3398, %v3390, %v3395
        %v3400 = vmul.f32 %v3349, %v3379
        %v3401 = vmul.f32 %v3350, %v3389
        %v3402 = vmul.f32 %v3351, %v3399
        %v3404 = vperm.slane %v3143, 0
        %v3406 = vmul.f32 %v3400, %v3404
        %v3407 = vmul.f32 %v3401, %v3404
        %v3408 = vmul.f32 %v3402, %v3404
        %v3410 = vperm.slane %v3142, 0
        %v3412 = vadd.f32 %v3406, %v3410
        %v3413 = vadd.f32 %v3407, %v3410
        %v3414 = vadd.f32 %v3408, %v3410
        %v3415 = vpack.c.bf16 %v3413, %v3412
        %v3416 = vpack.c.bf16 %v3414, %v3414
        %v3417 = vpack.c.bf16 %v3125, %v3124
        %v3418 = vpack.c.bf16 %v3127, %v3126
        %v3420 = vperm.slane %v3119, 0
        %v3423 = vsel %vm3329, %v3415, 0
        %v3426 = vsel %vm3329, %v3416, 0
        %3428 = vmatpush.bf16.msra.mxu0 0
        %3429 = vmatpush.bf16.msra.mxu0 0
        %3430 = vmatpush.bf16.msra.mxu0 0
        %3431 = vmatpush.bf16.msra.mxu0 0
        %3432 = vmatpush.bf16.msra.mxu0 0
        %3433 = vmatpush.bf16.msra.mxu0 0
        %3434 = vmatpush.bf16.msra.mxu0 %v3418
        %3435 = vmatpush.bf16.msra.mxu0 %v3417
        %3436 = vmatmul.bf16.gmra.mxu0 %v3423
        %v3437 = vpop.f32.mrf.mxu0
        %v3438 = vadd.f32 %v3420, %v3437
        %v3439 = vpop.f32.mrf.mxu0
        %v3440 = vadd.f32 %v3420, %v3439
        %3441 = vmatmul.bf16.gmra.mxu0 %v3426
        %v3442 = vpop.f32.mrf.mxu0
        %v3443 = vadd.f32 %v3420, %v3442
        %v3444 = vpop.f32.mrf.mxu0
        %3445 = vdwg.mxu0
        %v3446 = vpack.c.bf16 %v3440, %v3438
        %v3447 = vpack.c.bf16 %v3443, %v3443
        %3450 = vrot.lane.b32.xlu0 %v3446, 96
        %v3451 = vpop.permute.xlu0 %3450
        %3452 = vrot.lane.b32.xlu0 %v3447, 96
        %v3453 = vpop.permute.xlu0 %3452
        %v3455 = vsel %vm3258, %v3446, 0
        %v3458 = vsel %vm3258, %v3447, 0
        %v3461 = vsel %vm3258, %v3451, 0
        %v3464 = vsel %vm3258, %v3453, 0
        %3466 = vmatpush.bf16.xpose.msra.mxu0 0
        %3467 = vmatpush.bf16.xpose.msra.mxu0 0
        %3468 = vmatpush.bf16.xpose.msra.mxu0 0
        %3469 = vmatpush.bf16.xpose.msra.mxu0 0
        %3470 = vmatpush.bf16.xpose.msra.mxu0 0
        %3471 = vmatpush.bf16.xpose.msra.mxu0 0
        %3472 = vmatpush.bf16.xpose.msra.mxu0 %v3464
        %3473 = vmatpush.bf16.xpose.msra.mxu0 %v3461
        %3474 = vmatmul.bf16.gmra.mxu0 %v3455
        %v3475 = vpop.f32.mrf.mxu0
        %v3476 = vadd.f32 0.0, %v3475
        %v3477 = vpop.f32.mrf.mxu0
        %v3478 = vadd.f32 0.0, %v3477
        %3479 = vmatmul.bf16.gmra.mxu0 %v3458
        %v3480 = vpop.f32.mrf.mxu0
        %v3481 = vadd.f32 0.0, %v3480
        %v3482 = vpop.f32.mrf.mxu0
        %3483 = vdwg.mxu0
        %v3484 = vmul.f32 %v3476, 0.35355338
        %v3485 = vmul.f32 %v3478, 0.35355338
        %v3486 = vmul.f32 %v3481, 0.35355338
        %v3487 = vadd.f32 %v3484, %v3328
        %v3488 = vadd.f32 %v3485, %v3328
        %v3489 = vadd.f32 %v3486, %v3328
        %vm3490 = vcmask 195584
        %v3491 = vsel %vm3490, %v3487, -inf
        %3492 = vmax.xlane.f32.xlu0 %v3491
        %v3493 = vpop.xlane.xlu0 %3492
        %v3494 = vsel %vm3490, %v3488, -inf
        %3495 = vmax.xlane.f32.xlu0 %v3494
        %v3496 = vpop.xlane.xlu0 %3495
        %v3497 = vsel %vm3490, %v3489, -inf
        %3498 = vmax.xlane.f32.xlu0 %v3497
        %v3499 = vpop.xlane.xlu0 %3498
        %v3500 = vsub.f32 %v3487, %v3493
        %v3501 = vsub.f32 %v3488, %v3496
        %v3502 = vsub.f32 %v3489, %v3499
        %v3503 = vmul.f32 %v3500, 1.442695
        %v3504 = vpow.pop %v3503
        %v3505 = vmul.f32 %v3501, 1.442695
        %v3506 = vpow.pop %v3505
        %v3507 = vmul.f32 %v3502, 1.442695
        %v3508 = vpow.pop %v3507
        %v3509 = vsel %vm3490, %v3504, 0.0
        %3510 = vadd.xlane.f32.xlu0 %v3509
        %v3511 = vpop.xlane.xlu0 %3510
        %v3512 = vsel %vm3490, %v3506, 0.0
        %3513 = vadd.xlane.f32.xlu0 %v3512
        %v3514 = vpop.xlane.xlu0 %3513
        %v3515 = vsel %vm3490, %v3508, 0.0
        %3516 = vadd.xlane.f32.xlu0 %v3515
        %v3517 = vpop.xlane.xlu0 %3516
        %v3518 = vrcp.pop %v3511
        %v3519 = vrcp.pop %v3514
        %v3520 = vrcp.pop %v3517
        %v3521 = vmul.f32 %v3504, %v3518
        %v3522 = vmul.f32 %v3506, %v3519
        %v3523 = vmul.f32 %v3508, %v3520
        %v3524 = vpack.c.bf16 %v3522, %v3521
        %v3525 = vpack.c.bf16 %v3523, %v3523
        %3526 = vrot.lane.b32.xlu0 %v3446, 64
        %v3527 = vpop.permute.xlu0 %3526
        %3528 = vrot.lane.b32.xlu0 %v3447, 64
        %v3529 = vpop.permute.xlu0 %3528
        %v3532 = vsel %vm3490, %v3524, 0
        %v3535 = vsel %vm3490, %v3525, 0
        %v3538 = vsel %vm3262, %v3529, 0
        %3540 = vmatpush.bf16.msra.mxu0 0
        %3541 = vmatpush.bf16.msra.mxu0 0
        %3542 = vmatpush.bf16.msra.mxu0 0
        %3543 = vmatpush.bf16.msra.mxu0 0
        %3544 = vmatpush.bf16.msra.mxu0 0
        %3545 = vmatpush.bf16.msra.mxu0 0
        %3546 = vmatpush.bf16.msra.mxu0 %v3538
        %3547 = vmatpush.bf16.msra.mxu0 %v3527
        %3548 = vmatmul.bf16.gmra.mxu0 %v3532
        %v3549 = vpop.f32.mrf.mxu0
        %v3550 = vadd.f32 0.0, %v3549
        %v3551 = vpop.f32.mrf.mxu0
        %v3552 = vadd.f32 0.0, %v3551
        %3553 = vmatmul.bf16.gmra.mxu0 %v3535
        %v3554 = vpop.f32.mrf.mxu0
        %v3555 = vadd.f32 0.0, %v3554
        %v3556 = vpop.f32.mrf.mxu0
        %3557 = vdwg.mxu0
        %3558 = vrot.lane.b32.xlu0 %v3446, 120
        %v3559 = vpop.permute.xlu0 %3558
        %3560 = vrot.lane.b32.xlu0 %v3447, 120
        %v3561 = vpop.permute.xlu0 %3560
        %3562 = vrot.lane.b32.xlu0 %v3446, 88
        %v3563 = vpop.permute.xlu0 %3562
        %3564 = vrot.lane.b32.xlu0 %v3447, 88
        %v3565 = vpop.permute.xlu0 %3564
        %v3567 = vsel %vm3258, %v3559, 0
        %v3570 = vsel %vm3258, %v3561, 0
        %v3573 = vsel %vm3258, %v3563, 0
        %v3576 = vsel %vm3258, %v3565, 0
        %3578 = vmatpush.bf16.xpose.msra.mxu0 0
        %3579 = vmatpush.bf16.xpose.msra.mxu0 0
        %3580 = vmatpush.bf16.xpose.msra.mxu0 0
        %3581 = vmatpush.bf16.xpose.msra.mxu0 0
        %3582 = vmatpush.bf16.xpose.msra.mxu0 0
        %3583 = vmatpush.bf16.xpose.msra.mxu0 0
        %3584 = vmatpush.bf16.xpose.msra.mxu0 %v3576
        %3585 = vmatpush.bf16.xpose.msra.mxu0 %v3573
        %3586 = vmatmul.bf16.gmra.mxu0 %v3567
        %v3587 = vpop.f32.mrf.mxu0
        %v3588 = vadd.f32 0.0, %v3587
        %v3589 = vpop.f32.mrf.mxu0
        %v3590 = vadd.f32 0.0, %v3589
        %3591 = vmatmul.bf16.gmra.mxu0 %v3570
        %v3592 = vpop.f32.mrf.mxu0
        %v3593 = vadd.f32 0.0, %v3592
        %v3594 = vpop.f32.mrf.mxu0
        %3595 = vdwg.mxu0
        %v3596 = vmul.f32 %v3588, 0.35355338
        %v3597 = vmul.f32 %v3590, 0.35355338
        %v3598 = vmul.f32 %v3593, 0.35355338
        %v3599 = vadd.f32 %v3596, %v3328
        %v3600 = vadd.f32 %v3597, %v3328
        %v3601 = vadd.f32 %v3598, %v3328
        %v3602 = vsel %vm3490, %v3599, -inf
        %3603 = vmax.xlane.f32.xlu0 %v3602
        %v3604 = vpop.xlane.xlu0 %3603
        %v3605 = vsel %vm3490, %v3600, -inf
        %3606 = vmax.xlane.f32.xlu0 %v3605
        %v3607 = vpop.xlane.xlu0 %3606
        %v3608 = vsel %vm3490, %v3601, -inf
        %3609 = vmax.xlane.f32.xlu0 %v3608
        %v3610 = vpop.xlane.xlu0 %3609
        %v3611 = vsub.f32 %v3599, %v3604
        %v3612 = vsub.f32 %v3600, %v3607
        %v3613 = vsub.f32 %v3601, %v3610
        %v3614 = vmul.f32 %v3611, 1.442695
        %v3615 = vpow.pop %v3614
        %v3616 = vmul.f32 %v3612, 1.442695
        %v3617 = vpow.pop %v3616
        %v3618 = vmul.f32 %v3613, 1.442695
        %v3619 = vpow.pop %v3618
        %v3620 = vsel %vm3490, %v3615, 0.0
        %3621 = vadd.xlane.f32.xlu0 %v3620
        %v3622 = vpop.xlane.xlu0 %3621
        %v3623 = vsel %vm3490, %v3617, 0.0
        %3624 = vadd.xlane.f32.xlu0 %v3623
        %v3625 = vpop.xlane.xlu0 %3624
        %v3626 = vsel %vm3490, %v3619, 0.0
        %3627 = vadd.xlane.f32.xlu0 %v3626
        %v3628 = vpop.xlane.xlu0 %3627
        %v3629 = vrcp.pop %v3622
        %v3630 = vrcp.pop %v3625
        %v3631 = vrcp.pop %v3628
        %v3632 = vmul.f32 %v3615, %v3629
        %v3633 = vmul.f32 %v3617, %v3630
        %v3634 = vmul.f32 %v3619, %v3631
        %v3635 = vpack.c.bf16 %v3633, %v3632
        %v3636 = vpack.c.bf16 %v3634, %v3634
        %3637 = vrot.lane.b32.xlu0 %v3446, 56
        %v3638 = vpop.permute.xlu0 %3637
        %3639 = vrot.lane.b32.xlu0 %v3447, 56
        %v3640 = vpop.permute.xlu0 %3639
        %v3643 = vsel %vm3490, %v3635, 0
        %v3646 = vsel %vm3490, %v3636, 0
        %v3649 = vsel %vm3262, %v3640, 0
        %3651 = vmatpush.bf16.msra.mxu0 0
        %3652 = vmatpush.bf16.msra.mxu0 0
        %3653 = vmatpush.bf16.msra.mxu0 0
        %3654 = vmatpush.bf16.msra.mxu0 0
        %3655 = vmatpush.bf16.msra.mxu0 0
        %3656 = vmatpush.bf16.msra.mxu0 0
        %3657 = vmatpush.bf16.msra.mxu0 %v3649
        %3658 = vmatpush.bf16.msra.mxu0 %v3638
        %3659 = vmatmul.bf16.gmra.mxu0 %v3643
        %v3660 = vpop.f32.mrf.mxu0
        %v3661 = vadd.f32 0.0, %v3660
        %v3662 = vpop.f32.mrf.mxu0
        %v3663 = vadd.f32 0.0, %v3662
        %3664 = vmatmul.bf16.gmra.mxu0 %v3646
        %v3665 = vpop.f32.mrf.mxu0
        %v3666 = vadd.f32 0.0, %v3665
        %v3667 = vpop.f32.mrf.mxu0
        %3668 = vdwg.mxu0
        %3669 = vrot.lane.b32.xlu0 %v3446, 112
        %v3670 = vpop.permute.xlu0 %3669
        %3671 = vrot.lane.b32.xlu0 %v3447, 112
        %v3672 = vpop.permute.xlu0 %3671
        %3673 = vrot.lane.b32.xlu0 %v3446, 80
        %v3674 = vpop.permute.xlu0 %3673
        %3675 = vrot.lane.b32.xlu0 %v3447, 80
        %v3676 = vpop.permute.xlu0 %3675
        %v3678 = vsel %vm3258, %v3670, 0
        %v3681 = vsel %vm3258, %v3672, 0
        %v3684 = vsel %vm3258, %v3674, 0
        %v3687 = vsel %vm3258, %v3676, 0
        %3689 = vmatpush.bf16.xpose.msra.mxu0 0
        %3690 = vmatpush.bf16.xpose.msra.mxu0 0
        %3691 = vmatpush.bf16.xpose.msra.mxu0 0
        %3692 = vmatpush.bf16.xpose.msra.mxu0 0
        %3693 = vmatpush.bf16.xpose.msra.mxu0 0
        %3694 = vmatpush.bf16.xpose.msra.mxu0 0
        %3695 = vmatpush.bf16.xpose.msra.mxu0 %v3687
        %3696 = vmatpush.bf16.xpose.msra.mxu0 %v3684
        %3697 = vmatmul.bf16.gmra.mxu0 %v3678
        %v3698 = vpop.f32.mrf.mxu0
        %v3699 = vadd.f32 0.0, %v3698
        %v3700 = vpop.f32.mrf.mxu0
        %v3701 = vadd.f32 0.0, %v3700
        %3702 = vmatmul.bf16.gmra.mxu0 %v3681
        %v3703 = vpop.f32.mrf.mxu0
        %v3704 = vadd.f32 0.0, %v3703
        %v3705 = vpop.f32.mrf.mxu0
        %3706 = vdwg.mxu0
        %v3707 = vmul.f32 %v3699, 0.35355338
        %v3708 = vmul.f32 %v3701, 0.35355338
        %v3709 = vmul.f32 %v3704, 0.35355338
        %v3710 = vadd.f32 %v3707, %v3328
        %v3711 = vadd.f32 %v3708, %v3328
        %v3712 = vadd.f32 %v3709, %v3328
        %v3713 = vsel %vm3490, %v3710, -inf
        %3714 = vmax.xlane.f32.xlu0 %v3713
        %v3715 = vpop.xlane.xlu0 %3714
        %v3716 = vsel %vm3490, %v3711, -inf
        %3717 = vmax.xlane.f32.xlu0 %v3716
        %v3718 = vpop.xlane.xlu0 %3717
        %v3719 = vsel %vm3490, %v3712, -inf
        %3720 = vmax.xlane.f32.xlu0 %v3719
        %v3721 = vpop.xlane.xlu0 %3720
        %v3722 = vsub.f32 %v3710, %v3715
        %v3723 = vsub.f32 %v3711, %v3718
        %v3724 = vsub.f32 %v3712, %v3721
        %v3725 = vmul.f32 %v3722, 1.442695
        %v3726 = vpow.pop %v3725
        %v3727 = vmul.f32 %v3723, 1.442695
        %v3728 = vpow.pop %v3727
        %v3729 = vmul.f32 %v3724, 1.442695
        %v3730 = vpow.pop %v3729
        %v3731 = vsel %vm3490, %v3726, 0.0
        %3732 = vadd.xlane.f32.xlu0 %v3731
        %v3733 = vpop.xlane.xlu0 %3732
        %v3734 = vsel %vm3490, %v3728, 0.0
        %3735 = vadd.xlane.f32.xlu0 %v3734
        %v3736 = vpop.xlane.xlu0 %3735
        %v3737 = vsel %vm3490, %v3730, 0.0
        %3738 = vadd.xlane.f32.xlu0 %v3737
        %v3739 = vpop.xlane.xlu0 %3738
        %v3740 = vrcp.pop %v3733
        %v3741 = vrcp.pop %v3736
        %v3742 = vrcp.pop %v3739
        %v3743 = vmul.f32 %v3726, %v3740
        %v3744 = vmul.f32 %v3728, %v3741
        %v3745 = vmul.f32 %v3730, %v3742
        %v3746 = vpack.c.bf16 %v3744, %v3743
        %v3747 = vpack.c.bf16 %v3745, %v3745
        %3748 = vrot.lane.b32.xlu0 %v3446, 48
        %v3749 = vpop.permute.xlu0 %3748
        %3750 = vrot.lane.b32.xlu0 %v3447, 48
        %v3751 = vpop.permute.xlu0 %3750
        %v3754 = vsel %vm3490, %v3746, 0
        %v3757 = vsel %vm3490, %v3747, 0
        %v3760 = vsel %vm3262, %v3751, 0
        %3762 = vmatpush.bf16.msra.mxu0 0
        %3763 = vmatpush.bf16.msra.mxu0 0
        %3764 = vmatpush.bf16.msra.mxu0 0
        %3765 = vmatpush.bf16.msra.mxu0 0
        %3766 = vmatpush.bf16.msra.mxu0 0
        %3767 = vmatpush.bf16.msra.mxu0 0
        %3768 = vmatpush.bf16.msra.mxu0 %v3760
        %3769 = vmatpush.bf16.msra.mxu0 %v3749
        %3770 = vmatmul.bf16.gmra.mxu0 %v3754
        %v3771 = vpop.f32.mrf.mxu0
        %v3772 = vadd.f32 0.0, %v3771
        %v3773 = vpop.f32.mrf.mxu0
        %v3774 = vadd.f32 0.0, %v3773
        %3775 = vmatmul.bf16.gmra.mxu0 %v3757
        %v3776 = vpop.f32.mrf.mxu0
        %v3777 = vadd.f32 0.0, %v3776
        %v3778 = vpop.f32.mrf.mxu0
        %3779 = vdwg.mxu0
        %3780 = vrot.lane.b32.xlu0 %v3446, 104
        %v3781 = vpop.permute.xlu0 %3780
        %3782 = vrot.lane.b32.xlu0 %v3447, 104
        %v3783 = vpop.permute.xlu0 %3782
        %3784 = vrot.lane.b32.xlu0 %v3446, 72
        %v3785 = vpop.permute.xlu0 %3784
        %3786 = vrot.lane.b32.xlu0 %v3447, 72
        %v3787 = vpop.permute.xlu0 %3786
        %v3789 = vsel %vm3258, %v3781, 0
        %v3792 = vsel %vm3258, %v3783, 0
        %v3795 = vsel %vm3258, %v3785, 0
        %v3798 = vsel %vm3258, %v3787, 0
        %3800 = vmatpush.bf16.xpose.msra.mxu0 0
        %3801 = vmatpush.bf16.xpose.msra.mxu0 0
        %3802 = vmatpush.bf16.xpose.msra.mxu0 0
        %3803 = vmatpush.bf16.xpose.msra.mxu0 0
        %3804 = vmatpush.bf16.xpose.msra.mxu0 0
        %3805 = vmatpush.bf16.xpose.msra.mxu0 0
        %3806 = vmatpush.bf16.xpose.msra.mxu0 %v3798
        %3807 = vmatpush.bf16.xpose.msra.mxu0 %v3795
        %3808 = vmatmul.bf16.gmra.mxu0 %v3789
        %v3809 = vpop.f32.mrf.mxu0
        %v3810 = vadd.f32 0.0, %v3809
        %v3811 = vpop.f32.mrf.mxu0
        %v3812 = vadd.f32 0.0, %v3811
        %3813 = vmatmul.bf16.gmra.mxu0 %v3792
        %v3814 = vpop.f32.mrf.mxu0
        %v3815 = vadd.f32 0.0, %v3814
        %v3816 = vpop.f32.mrf.mxu0
        %3817 = vdwg.mxu0
        %v3818 = vmul.f32 %v3810, 0.35355338
        %v3819 = vmul.f32 %v3812, 0.35355338
        %v3820 = vmul.f32 %v3815, 0.35355338
        %v3821 = vadd.f32 %v3818, %v3328
        %v3822 = vadd.f32 %v3819, %v3328
        %v3823 = vadd.f32 %v3820, %v3328
        %v3824 = vsel %vm3490, %v3821, -inf
        %3825 = vmax.xlane.f32.xlu0 %v3824
        %v3826 = vpop.xlane.xlu0 %3825
        %v3827 = vsel %vm3490, %v3822, -inf
        %3828 = vmax.xlane.f32.xlu0 %v3827
        %v3829 = vpop.xlane.xlu0 %3828
        %v3830 = vsel %vm3490, %v3823, -inf
        %3831 = vmax.xlane.f32.xlu0 %v3830
        %v3832 = vpop.xlane.xlu0 %3831
        %v3833 = vsub.f32 %v3821, %v3826
        %v3834 = vsub.f32 %v3822, %v3829
        %v3835 = vsub.f32 %v3823, %v3832
        %v3836 = vmul.f32 %v3833, 1.442695
        %v3837 = vpow.pop %v3836
        %v3838 = vmul.f32 %v3834, 1.442695
        %v3839 = vpow.pop %v3838
        %v3840 = vmul.f32 %v3835, 1.442695
        %v3841 = vpow.pop %v3840
        %v3842 = vsel %vm3490, %v3837, 0.0
        %3843 = vadd.xlane.f32.xlu0 %v3842
        %v3844 = vpop.xlane.xlu0 %3843
        %v3845 = vsel %vm3490, %v3839, 0.0
        %3846 = vadd.xlane.f32.xlu0 %v3845
        %v3847 = vpop.xlane.xlu0 %3846
        %v3848 = vsel %vm3490, %v3841, 0.0
        %3849 = vadd.xlane.f32.xlu0 %v3848
        %v3850 = vpop.xlane.xlu0 %3849
        %v3851 = vrcp.pop %v3844
        %v3852 = vrcp.pop %v3847
        %v3853 = vrcp.pop %v3850
        %v3854 = vmul.f32 %v3837, %v3851
        %v3855 = vmul.f32 %v3839, %v3852
        %v3856 = vmul.f32 %v3841, %v3853
        %v3857 = vpack.c.bf16 %v3855, %v3854
        %v3858 = vpack.c.bf16 %v3856, %v3856
        %3859 = vrot.lane.b32.xlu0 %v3446, 40
        %v3860 = vpop.permute.xlu0 %3859
        %3861 = vrot.lane.b32.xlu0 %v3447, 40
        %v3862 = vpop.permute.xlu0 %3861
        %v3865 = vsel %vm3490, %v3857, 0
        %v3868 = vsel %vm3490, %v3858, 0
        %v3871 = vsel %vm3262, %v3862, 0
        %3873 = vmatpush.bf16.msra.mxu0 0
        %3874 = vmatpush.bf16.msra.mxu0 0
        %3875 = vmatpush.bf16.msra.mxu0 0
        %3876 = vmatpush.bf16.msra.mxu0 0
        %3877 = vmatpush.bf16.msra.mxu0 0
        %3878 = vmatpush.bf16.msra.mxu0 0
        %3879 = vmatpush.bf16.msra.mxu0 %v3871
        %3880 = vmatpush.bf16.msra.mxu0 %v3860
        %3881 = vmatmul.bf16.gmra.mxu0 %v3865
        %v3882 = vpop.f32.mrf.mxu0
        %v3883 = vadd.f32 0.0, %v3882
        %v3884 = vpop.f32.mrf.mxu0
        %v3885 = vadd.f32 0.0, %v3884
        %3886 = vmatmul.bf16.gmra.mxu0 %v3868
        %v3887 = vpop.f32.mrf.mxu0
        %v3888 = vadd.f32 0.0, %v3887
        %v3889 = vpop.f32.mrf.mxu0
        %3890 = vdwg.mxu0
        %3894 = vrot.lane.b32.xlu0 %v3661, 8
        %v3895 = vpop.permute.xlu0 %3894
        %3896 = vrot.lane.b32.xlu0 %v3663, 8
        %v3897 = vpop.permute.xlu0 %3896
        %3898 = vrot.lane.b32.xlu0 %v3666, 8
        %v3899 = vpop.permute.xlu0 %3898
        %3906 = vrot.lane.b32.xlu0 %v3772, 16
        %v3907 = vpop.permute.xlu0 %3906
        %3908 = vrot.lane.b32.xlu0 %v3774, 16
        %v3909 = vpop.permute.xlu0 %3908
        %3910 = vrot.lane.b32.xlu0 %v3777, 16
        %v3911 = vpop.permute.xlu0 %3910
        %3918 = vrot.lane.b32.xlu0 %v3883, 24
        %v3919 = vpop.permute.xlu0 %3918
        %3920 = vrot.lane.b32.xlu0 %v3885, 24
        %v3921 = vpop.permute.xlu0 %3920
        %3922 = vrot.lane.b32.xlu0 %v3888, 24
        %v3923 = vpop.permute.xlu0 %3922
        %v3927 = vsel %vm3258, %v3550, %v3895
        %v3928 = vsel %vm3258, %v3552, %v3897
        %v3929 = vsel %vm3258, %v3555, %v3899
        %vm3930 = vcmask 130048
        %v3931 = vsel %vm3930, %v3927, %v3907
        %v3932 = vsel %vm3930, %v3928, %v3909
        %v3933 = vsel %vm3930, %v3929, %v3911
        %v3934 = vsel %vm3490, %v3931, %v3919
        %v3935 = vsel %vm3490, %v3932, %v3921
        %v3936 = vsel %vm3490, %v3933, %v3923
        %v3937 = vpack.c.bf16 %v3935, %v3934
        %v3938 = vpack.c.bf16 %v3936, %v3936
        %v3939 = vpack.c.bf16 %v3121, %v3120
        %v3940 = vpack.c.bf16 %v3123, %v3122
        %v3942 = vperm.slane %v3118, 0
        %v3945 = vsel %vm3329, %v3937, 0
        %v3948 = vsel %vm3329, %v3938, 0
        %3950 = vmatpush.bf16.msra.mxu0 0
        %3951 = vmatpush.bf16.msra.mxu0 0
        %3952 = vmatpush.bf16.msra.mxu0 0
        %3953 = vmatpush.bf16.msra.mxu0 0
        %3954 = vmatpush.bf16.msra.mxu0 0
        %3955 = vmatpush.bf16.msra.mxu0 0
        %3956 = vmatpush.bf16.msra.mxu0 %v3940
        %3957 = vmatpush.bf16.msra.mxu0 %v3939
        %3958 = vmatmul.bf16.gmra.mxu0 %v3945
        %v3959 = vpop.f32.mrf.mxu0
        %v3960 = vadd.f32 %v3942, %v3959
        %v3961 = vpop.f32.mrf.mxu0
        %v3962 = vadd.f32 %v3942, %v3961
        %3963 = vmatmul.bf16.gmra.mxu0 %v3948
        %v3964 = vpop.f32.mrf.mxu0
        %v3965 = vadd.f32 %v3942, %v3964
        %v3966 = vpop.f32.mrf.mxu0
        %3967 = vdwg.mxu0
        %v3968 = vadd.f32 %v3322, %v3960
        %v3969 = vadd.f32 %v3323, %v3962
        %v3970 = vadd.f32 %v3324, %v3965
        %v3971 = vsel %vm3329, %v3968, 0.0
        %3972 = vadd.xlane.f32.xlu0 %v3971
        %v3973 = vpop.xlane.xlu0 %3972
        %v3974 = vsel %vm3329, %v3969, 0.0
        %3975 = vadd.xlane.f32.xlu0 %v3974
        %v3976 = vpop.xlane.xlu0 %3975
        %v3977 = vsel %vm3329, %v3970, 0.0
        %3978 = vadd.xlane.f32.xlu0 %v3977
        %v3979 = vpop.xlane.xlu0 %3978
        %v3980 = vmul.f32 %v3973, %v3345
        %v3981 = vmul.f32 %v3976, %v3345
        %v3982 = vmul.f32 %v3979, %v3345
        %v3983 = vsub.f32 %v3968, %v3980
        %v3984 = vsub.f32 %v3969, %v3981
        %v3985 = vsub.f32 %v3970, %v3982
        %v3986 = vmul.f32 %v3983, %v3983
        %v3987 = vmul.f32 %v3984, %v3984
        %v3988 = vmul.f32 %v3985, %v3985
        %v3989 = vsel %vm3329, %v3986, 0.0
        %3990 = vadd.xlane.f32.xlu0 %v3989
        %v3991 = vpop.xlane.xlu0 %3990
        %v3992 = vsel %vm3329, %v3987, 0.0
        %3993 = vadd.xlane.f32.xlu0 %v3992
        %v3994 = vpop.xlane.xlu0 %3993
        %v3995 = vsel %vm3329, %v3988, 0.0
        %3996 = vadd.xlane.f32.xlu0 %v3995
        %v3997 = vpop.xlane.xlu0 %3996
        %v3998 = vmul.f32 %v3991, %v3345
        %v3999 = vmul.f32 %v3994, %v3345
        %v4000 = vmul.f32 %v3997, %v3345
        %v4001 = vadd.f32 %v3998, 1e-06
        %v4002 = vadd.f32 %v3999, 1e-06
        %v4003 = vadd.f32 %v4000, 1e-06
        %v4004 = vrsqrt.pop %v4001
        %v4005 = vmul.f32 %v4004, %v4001
        %v4006 = vmul.f32 %v4005, %v4004
        %v4007 = vmul.f32 0.5, %v4006
        %v4008 = vsub.f32 1.5, %v4007
        %v4009 = vmul.f32 %v4004, %v4008
        %vm4010 = vweird.f32 %v4001
        %vm4011 = vweird.f32 %v4004
        %vm4012 = vmor %vm4010, %vm4011
        %v4013 = vsel %vm4012, %v4004, %v4009
        %v4014 = vrsqrt.pop %v4002
        %v4015 = vmul.f32 %v4014, %v4002
        %v4016 = vmul.f32 %v4015, %v4014
        %v4017 = vmul.f32 0.5, %v4016
        %v4018 = vsub.f32 1.5, %v4017
        %v4019 = vmul.f32 %v4014, %v4018
        %vm4020 = vweird.f32 %v4002
        %vm4021 = vweird.f32 %v4014
        %vm4022 = vmor %vm4020, %vm4021
        %v4023 = vsel %vm4022, %v4014, %v4019
        %v4024 = vrsqrt.pop %v4003
        %v4025 = vmul.f32 %v4024, %v4003
        %v4026 = vmul.f32 %v4025, %v4024
        %v4027 = vmul.f32 0.5, %v4026
        %v4028 = vsub.f32 1.5, %v4027
        %v4029 = vmul.f32 %v4024, %v4028
        %vm4030 = vweird.f32 %v4003
        %vm4031 = vweird.f32 %v4024
        %vm4032 = vmor %vm4030, %vm4031
        %v4033 = vsel %vm4032, %v4024, %v4029
        %v4034 = vmul.f32 %v3983, %v4013
        %v4035 = vmul.f32 %v3984, %v4023
        %v4036 = vmul.f32 %v3985, %v4033
        %v4038 = vperm.slane %v3145, 0
        %v4040 = vmul.f32 %v4034, %v4038
        %v4041 = vmul.f32 %v4035, %v4038
        %v4042 = vmul.f32 %v4036, %v4038
        %v4044 = vperm.slane %v3144, 0
        %v4046 = vadd.f32 %v4040, %v4044
        %v4047 = vadd.f32 %v4041, %v4044
        %v4048 = vadd.f32 %v4042, %v4044
        %v4049 = vpack.c.bf16 %v4047, %v4046
        %v4050 = vpack.c.bf16 %v4048, %v4048
        %v4051 = vpack.c.bf16 %v3131, %v3130
        %v4052 = vpack.c.bf16 %v3133, %v3132
        %v4054 = vperm.slane %v3128, 0
        %v4057 = vsel %vm3329, %v4049, 0
        %v4060 = vsel %vm3329, %v4050, 0
        %4062 = vmatpush.bf16.msra.mxu0 0
        %4063 = vmatpush.bf16.msra.mxu0 0
        %4064 = vmatpush.bf16.msra.mxu0 0
        %4065 = vmatpush.bf16.msra.mxu0 0
        %4066 = vmatpush.bf16.msra.mxu0 0
        %4067 = vmatpush.bf16.msra.mxu0 0
        %4068 = vmatpush.bf16.msra.mxu0 %v4052
        %4069 = vmatpush.bf16.msra.mxu0 %v4051
        %4070 = vmatmul.bf16.gmra.mxu0 %v4057
        %v4071 = vpop.f32.mrf.mxu0
        %v4072 = vadd.f32 %v4054, %v4071
        %v4073 = vpop.f32.mrf.mxu0
        %v4074 = vadd.f32 %v4054, %v4073
        %4075 = vmatmul.bf16.gmra.mxu0 %v4060
        %v4076 = vpop.f32.mrf.mxu0
        %v4077 = vadd.f32 %v4054, %v4076
        %v4078 = vpop.f32.mrf.mxu0
        %4079 = vdwg.mxu0
        %v4080 = vmax.f32 %v4072, 0.0
        %v4081 = vmax.f32 %v4074, 0.0
        %v4082 = vmax.f32 %v4077, 0.0
        %v4083 = vpack.c.bf16 %v4081, %v4080
        %v4084 = vpack.c.bf16 %v4082, %v4082
        %v4085 = vpack.c.bf16 %v3135, %v3134
        %v4086 = vpack.c.bf16 %v3137, %v3136
        %v4087 = vpack.c.bf16 %v3139, %v3138
        %v4088 = vpack.c.bf16 %v3141, %v3140
        %v4090 = vperm.slane %v3129, 0
        %v4093 = vsel %vm3217, %v4083, 0
        %v4096 = vsel %vm3217, %v4084, 0
        %4098 = vmatpush.bf16.msra.mxu0 0
        %4099 = vmatpush.bf16.msra.mxu0 0
        %4100 = vmatpush.bf16.msra.mxu0 0
        %4101 = vmatpush.bf16.msra.mxu0 0
        %4102 = vmatpush.bf16.msra.mxu0 %v4088
        %4103 = vmatpush.bf16.msra.mxu0 %v4087
        %4104 = vmatpush.bf16.msra.mxu0 %v4086
        %4105 = vmatpush.bf16.msra.mxu0 %v4085
        %4106 = vmatmul.bf16.gmra.mxu0 %v4093
        %v4107 = vpop.f32.mrf.mxu0
        %v4108 = vadd.f32 %v4090, %v4107
        %v4109 = vpop.f32.mrf.mxu0
        %v4110 = vadd.f32 %v4090, %v4109
        %4111 = vmatmul.bf16.gmra.mxu0 %v4096
        %v4112 = vpop.f32.mrf.mxu0
        %v4113 = vadd.f32 %v4090, %v4112
        %v4114 = vpop.f32.mrf.mxu0
        %4115 = vdwg.mxu0
        %v4116 = vadd.f32 %v3968, %v4108
        %v4117 = vadd.f32 %v3969, %v4110
        %v4118 = vadd.f32 %v3970, %v4113
        %v4119 = vsel %vm3329, %v4116, 0.0
        %4120 = vadd.xlane.f32.xlu0 %v4119
        %v4121 = vpop.xlane.xlu0 %4120
        %v4122 = vsel %vm3329, %v4117, 0.0
        %4123 = vadd.xlane.f32.xlu0 %v4122
        %v4124 = vpop.xlane.xlu0 %4123
        %v4125 = vsel %vm3329, %v4118, 0.0
        %4126 = vadd.xlane.f32.xlu0 %v4125
        %v4127 = vpop.xlane.xlu0 %4126
        %v4128 = vmul.f32 %v4121, %v3345
        %v4129 = vmul.f32 %v4124, %v3345
        %v4130 = vmul.f32 %v4127, %v3345
        %v4131 = vsub.f32 %v4116, %v4128
        %v4132 = vsub.f32 %v4117, %v4129
        %v4133 = vsub.f32 %v4118, %v4130
        %v4134 = vmul.f32 %v4131, %v4131
        %v4135 = vmul.f32 %v4132, %v4132
        %v4136 = vmul.f32 %v4133, %v4133
        %v4137 = vsel %vm3329, %v4134, 0.0
        %4138 = vadd.xlane.f32.xlu0 %v4137
        %v4139 = vpop.xlane.xlu0 %4138
        %v4140 = vsel %vm3329, %v4135, 0.0
        %4141 = vadd.xlane.f32.xlu0 %v4140
        %v4142 = vpop.xlane.xlu0 %4141
        %v4143 = vsel %vm3329, %v4136, 0.0
        %4144 = vadd.xlane.f32.xlu0 %v4143
        %v4145 = vpop.xlane.xlu0 %4144
        %v4146 = vmul.f32 %v4139, %v3345
        %v4147 = vmul.f32 %v4142, %v3345
        %v4148 = vmul.f32 %v4145, %v3345
        %v4149 = vadd.f32 %v4146, 1e-06
        %v4150 = vadd.f32 %v4147, 1e-06
        %v4151 = vadd.f32 %v4148, 1e-06
        %v4152 = vrsqrt.pop %v4149
        %v4153 = vmul.f32 %v4152, %v4149
        %v4154 = vmul.f32 %v4153, %v4152
        %v4155 = vmul.f32 0.5, %v4154
        %v4156 = vsub.f32 1.5, %v4155
        %v4157 = vmul.f32 %v4152, %v4156
        %vm4158 = vweird.f32 %v4149
        %vm4159 = vweird.f32 %v4152
        %vm4160 = vmor %vm4158, %vm4159
        %v4161 = vsel %vm4160, %v4152, %v4157
        %v4162 = vrsqrt.pop %v4150
        %v4163 = vmul.f32 %v4162, %v4150
        %v4164 = vmul.f32 %v4163, %v4162
        %v4165 = vmul.f32 0.5, %v4164
        %v4166 = vsub.f32 1.5, %v4165
        %v4167 = vmul.f32 %v4162, %v4166
        %vm4168 = vweird.f32 %v4150
        %vm4169 = vweird.f32 %v4162
        %vm4170 = vmor %vm4168, %vm4169
        %v4171 = vsel %vm4170, %v4162, %v4167
        %v4172 = vrsqrt.pop %v4151
        %v4173 = vmul.f32 %v4172, %v4151
        %v4174 = vmul.f32 %v4173, %v4172
        %v4175 = vmul.f32 0.5, %v4174
        %v4176 = vsub.f32 1.5, %v4175
        %v4177 = vmul.f32 %v4172, %v4176
        %vm4178 = vweird.f32 %v4151
        %vm4179 = vweird.f32 %v4172
        %vm4180 = vmor %vm4178, %vm4179
        %v4181 = vsel %vm4180, %v4172, %v4177
        %v4182 = vmul.f32 %v4131, %v4161
        %v4183 = vmul.f32 %v4132, %v4171
        %v4184 = vmul.f32 %v4133, %v4181
        %v4186 = vperm.slane %v3171, 0
        %v4188 = vmul.f32 %v4182, %v4186
        %v4189 = vmul.f32 %v4183, %v4186
        %v4190 = vmul.f32 %v4184, %v4186
        %v4192 = vperm.slane %v3170, 0
        %v4194 = vadd.f32 %v4188, %v4192
        %v4195 = vadd.f32 %v4189, %v4192
        %v4196 = vadd.f32 %v4190, %v4192
        %v4197 = vpack.c.bf16 %v4195, %v4194
        %v4198 = vpack.c.bf16 %v4196, %v4196
        %v4199 = vpack.c.bf16 %v3153, %v3152
        %v4200 = vpack.c.bf16 %v3155, %v3154
        %v4202 = vperm.slane %v3147, 0
        %v4205 = vsel %vm3329, %v4197, 0
        %v4208 = vsel %vm3329, %v4198, 0
        %4210 = vmatpush.bf16.msra.mxu0 0
        %4211 = vmatpush.bf16.msra.mxu0 0
        %4212 = vmatpush.bf16.msra.mxu0 0
        %4213 = vmatpush.bf16.msra.mxu0 0
        %4214 = vmatpush.bf16.msra.mxu0 0
        %4215 = vmatpush.bf16.msra.mxu0 0
        %4216 = vmatpush.bf16.msra.mxu0 %v4200
        %4217 = vmatpush.bf16.msra.mxu0 %v4199
        %4218 = vmatmul.bf16.gmra.mxu0 %v4205
        %v4219 = vpop.f32.mrf.mxu0
        %v4220 = vadd.f32 %v4202, %v4219
        %v4221 = vpop.f32.mrf.mxu0
        %v4222 = vadd.f32 %v4202, %v4221
        %4223 = vmatmul.bf16.gmra.mxu0 %v4208
        %v4224 = vpop.f32.mrf.mxu0
        %v4225 = vadd.f32 %v4202, %v4224
        %v4226 = vpop.f32.mrf.mxu0
        %4227 = vdwg.mxu0
        %v4228 = vpack.c.bf16 %v4222, %v4220
        %v4229 = vpack.c.bf16 %v4225, %v4225
        %4232 = vrot.lane.b32.xlu0 %v4228, 96
        %v4233 = vpop.permute.xlu0 %4232
        %4234 = vrot.lane.b32.xlu0 %v4229, 96
        %v4235 = vpop.permute.xlu0 %4234
        %v4237 = vsel %vm3258, %v4228, 0
        %v4240 = vsel %vm3258, %v4229, 0
        %v4243 = vsel %vm3258, %v4233, 0
        %v4246 = vsel %vm3258, %v4235, 0
        %4248 = vmatpush.bf16.xpose.msra.mxu0 0
        %4249 = vmatpush.bf16.xpose.msra.mxu0 0
        %4250 = vmatpush.bf16.xpose.msra.mxu0 0
        %4251 = vmatpush.bf16.xpose.msra.mxu0 0
        %4252 = vmatpush.bf16.xpose.msra.mxu0 0
        %4253 = vmatpush.bf16.xpose.msra.mxu0 0
        %4254 = vmatpush.bf16.xpose.msra.mxu0 %v4246
        %4255 = vmatpush.bf16.xpose.msra.mxu0 %v4243
        %4256 = vmatmul.bf16.gmra.mxu0 %v4237
        %v4257 = vpop.f32.mrf.mxu0
        %v4258 = vadd.f32 0.0, %v4257
        %v4259 = vpop.f32.mrf.mxu0
        %v4260 = vadd.f32 0.0, %v4259
        %4261 = vmatmul.bf16.gmra.mxu0 %v4240
        %v4262 = vpop.f32.mrf.mxu0
        %v4263 = vadd.f32 0.0, %v4262
        %v4264 = vpop.f32.mrf.mxu0
        %4265 = vdwg.mxu0
        %v4266 = vmul.f32 %v4258, 0.35355338
        %v4267 = vmul.f32 %v4260, 0.35355338
        %v4268 = vmul.f32 %v4263, 0.35355338
        %v4269 = vadd.f32 %v4266, %v3328
        %v4270 = vadd.f32 %v4267, %v3328
        %v4271 = vadd.f32 %v4268, %v3328
        %v4272 = vsel %vm3490, %v4269, -inf
        %4273 = vmax.xlane.f32.xlu0 %v4272
        %v4274 = vpop.xlane.xlu0 %4273
        %v4275 = vsel %vm3490, %v4270, -inf
        %4276 = vmax.xlane.f32.xlu0 %v4275
        %v4277 = vpop.xlane.xlu0 %4276
        %v4278 = vsel %vm3490, %v4271, -inf
        %4279 = vmax.xlane.f32.xlu0 %v4278
        %v4280 = vpop.xlane.xlu0 %4279
        %v4281 = vsub.f32 %v4269, %v4274
        %v4282 = vsub.f32 %v4270, %v4277
        %v4283 = vsub.f32 %v4271, %v4280
        %v4284 = vmul.f32 %v4281, 1.442695
        %v4285 = vpow.pop %v4284
        %v4286 = vmul.f32 %v4282, 1.442695
        %v4287 = vpow.pop %v4286
        %v4288 = vmul.f32 %v4283, 1.442695
        %v4289 = vpow.pop %v4288
        %v4290 = vsel %vm3490, %v4285, 0.0
        %4291 = vadd.xlane.f32.xlu0 %v4290
        %v4292 = vpop.xlane.xlu0 %4291
        %v4293 = vsel %vm3490, %v4287, 0.0
        %4294 = vadd.xlane.f32.xlu0 %v4293
        %v4295 = vpop.xlane.xlu0 %4294
        %v4296 = vsel %vm3490, %v4289, 0.0
        %4297 = vadd.xlane.f32.xlu0 %v4296
        %v4298 = vpop.xlane.xlu0 %4297
        %v4299 = vrcp.pop %v4292
        %v4300 = vrcp.pop %v4295
        %v4301 = vrcp.pop %v4298
        %v4302 = vmul.f32 %v4285, %v4299
        %v4303 = vmul.f32 %v4287, %v4300
        %v4304 = vmul.f32 %v4289, %v4301
        %v4305 = vpack.c.bf16 %v4303, %v4302
        %v4306 = vpack.c.bf16 %v4304, %v4304
        %4307 = vrot.lane.b32.xlu0 %v4228, 64
        %v4308 = vpop.permute.xlu0 %4307
        %4309 = vrot.lane.b32.xlu0 %v4229, 64
        %v4310 = vpop.permute.xlu0 %4309
        %v4313 = vsel %vm3490, %v4305, 0
        %v4316 = vsel %vm3490, %v4306, 0
        %v4319 = vsel %vm3262, %v4310, 0
        %4321 = vmatpush.bf16.msra.mxu0 0
        %4322 = vmatpush.bf16.msra.mxu0 0
        %4323 = vmatpush.bf16.msra.mxu0 0
        %4324 = vmatpush.bf16.msra.mxu0 0
        %4325 = vmatpush.bf16.msra.mxu0 0
        %4326 = vmatpush.bf16.msra.mxu0 0
        %4327 = vmatpush.bf16.msra.mxu0 %v4319
        %4328 = vmatpush.bf16.msra.mxu0 %v4308
        %4329 = vmatmul.bf16.gmra.mxu0 %v4313
        %v4330 = vpop.f32.mrf.mxu0
        %v4331 = vadd.f32 0.0, %v4330
        %v4332 = vpop.f32.mrf.mxu0
        %v4333 = vadd.f32 0.0, %v4332
        %4334 = vmatmul.bf16.gmra.mxu0 %v4316
        %v4335 = vpop.f32.mrf.mxu0
        %v4336 = vadd.f32 0.0, %v4335
        %v4337 = vpop.f32.mrf.mxu0
        %4338 = vdwg.mxu0
        %4339 = vrot.lane.b32.xlu0 %v4228, 120
        %v4340 = vpop.permute.xlu0 %4339
        %4341 = vrot.lane.b32.xlu0 %v4229, 120
        %v4342 = vpop.permute.xlu0 %4341
        %4343 = vrot.lane.b32.xlu0 %v4228, 88
        %v4344 = vpop.permute.xlu0 %4343
        %4345 = vrot.lane.b32.xlu0 %v4229, 88
        %v4346 = vpop.permute.xlu0 %4345
        %v4348 = vsel %vm3258, %v4340, 0
        %v4351 = vsel %vm3258, %v4342, 0
        %v4354 = vsel %vm3258, %v4344, 0
        %v4357 = vsel %vm3258, %v4346, 0
        %4359 = vmatpush.bf16.xpose.msra.mxu0 0
        %4360 = vmatpush.bf16.xpose.msra.mxu0 0
        %4361 = vmatpush.bf16.xpose.msra.mxu0 0
        %4362 = vmatpush.bf16.xpose.msra.mxu0 0
        %4363 = vmatpush.bf16.xpose.msra.mxu0 0
        %4364 = vmatpush.bf16.xpose.msra.mxu0 0
        %4365 = vmatpush.bf16.xpose.msra.mxu0 %v4357
        %4366 = vmatpush.bf16.xpose.msra.mxu0 %v4354
        %4367 = vmatmul.bf16.gmra.mxu0 %v4348
        %v4368 = vpop.f32.mrf.mxu0
        %v4369 = vadd.f32 0.0, %v4368
        %v4370 = vpop.f32.mrf.mxu0
        %v4371 = vadd.f32 0.0, %v4370
        %4372 = vmatmul.bf16.gmra.mxu0 %v4351
        %v4373 = vpop.f32.mrf.mxu0
        %v4374 = vadd.f32 0.0, %v4373
        %v4375 = vpop.f32.mrf.mxu0
        %4376 = vdwg.mxu0
        %v4377 = vmul.f32 %v4369, 0.35355338
        %v4378 = vmul.f32 %v4371, 0.35355338
        %v4379 = vmul.f32 %v4374, 0.35355338
        %v4380 = vadd.f32 %v4377, %v3328
        %v4381 = vadd.f32 %v4378, %v3328
        %v4382 = vadd.f32 %v4379, %v3328
        %v4383 = vsel %vm3490, %v4380, -inf
        %4384 = vmax.xlane.f32.xlu0 %v4383
        %v4385 = vpop.xlane.xlu0 %4384
        %v4386 = vsel %vm3490, %v4381, -inf
        %4387 = vmax.xlane.f32.xlu0 %v4386
        %v4388 = vpop.xlane.xlu0 %4387
        %v4389 = vsel %vm3490, %v4382, -inf
        %4390 = vmax.xlane.f32.xlu0 %v4389
        %v4391 = vpop.xlane.xlu0 %4390
        %v4392 = vsub.f32 %v4380, %v4385
        %v4393 = vsub.f32 %v4381, %v4388
        %v4394 = vsub.f32 %v4382, %v4391
        %v4395 = vmul.f32 %v4392, 1.442695
        %v4396 = vpow.pop %v4395
        %v4397 = vmul.f32 %v4393, 1.442695
        %v4398 = vpow.pop %v4397
        %v4399 = vmul.f32 %v4394, 1.442695
        %v4400 = vpow.pop %v4399
        %v4401 = vsel %vm3490, %v4396, 0.0
        %4402 = vadd.xlane.f32.xlu0 %v4401
        %v4403 = vpop.xlane.xlu0 %4402
        %v4404 = vsel %vm3490, %v4398, 0.0
        %4405 = vadd.xlane.f32.xlu0 %v4404
        %v4406 = vpop.xlane.xlu0 %4405
        %v4407 = vsel %vm3490, %v4400, 0.0
        %4408 = vadd.xlane.f32.xlu0 %v4407
        %v4409 = vpop.xlane.xlu0 %4408
        %v4410 = vrcp.pop %v4403
        %v4411 = vrcp.pop %v4406
        %v4412 = vrcp.pop %v4409
        %v4413 = vmul.f32 %v4396, %v4410
        %v4414 = vmul.f32 %v4398, %v4411
        %v4415 = vmul.f32 %v4400, %v4412
        %v4416 = vpack.c.bf16 %v4414, %v4413
        %v4417 = vpack.c.bf16 %v4415, %v4415
        %4418 = vrot.lane.b32.xlu0 %v4228, 56
        %v4419 = vpop.permute.xlu0 %4418
        %4420 = vrot.lane.b32.xlu0 %v4229, 56
        %v4421 = vpop.permute.xlu0 %4420
        %v4424 = vsel %vm3490, %v4416, 0
        %v4427 = vsel %vm3490, %v4417, 0
        %v4430 = vsel %vm3262, %v4421, 0
        %4432 = vmatpush.bf16.msra.mxu0 0
        %4433 = vmatpush.bf16.msra.mxu0 0
        %4434 = vmatpush.bf16.msra.mxu0 0
        %4435 = vmatpush.bf16.msra.mxu0 0
        %4436 = vmatpush.bf16.msra.mxu0 0
        %4437 = vmatpush.bf16.msra.mxu0 0
        %4438 = vmatpush.bf16.msra.mxu0 %v4430
        %4439 = vmatpush.bf16.msra.mxu0 %v4419
        %4440 = vmatmul.bf16.gmra.mxu0 %v4424
        %v4441 = vpop.f32.mrf.mxu0
        %v4442 = vadd.f32 0.0, %v4441
        %v4443 = vpop.f32.mrf.mxu0
        %v4444 = vadd.f32 0.0, %v4443
        %4445 = vmatmul.bf16.gmra.mxu0 %v4427
        %v4446 = vpop.f32.mrf.mxu0
        %v4447 = vadd.f32 0.0, %v4446
        %v4448 = vpop.f32.mrf.mxu0
        %4449 = vdwg.mxu0
        %4450 = vrot.lane.b32.xlu0 %v4228, 112
        %v4451 = vpop.permute.xlu0 %4450
        %4452 = vrot.lane.b32.xlu0 %v4229, 112
        %v4453 = vpop.permute.xlu0 %4452
        %4454 = vrot.lane.b32.xlu0 %v4228, 80
        %v4455 = vpop.permute.xlu0 %4454
        %4456 = vrot.lane.b32.xlu0 %v4229, 80
        %v4457 = vpop.permute.xlu0 %4456
        %v4459 = vsel %vm3258, %v4451, 0
        %v4462 = vsel %vm3258, %v4453, 0
        %v4465 = vsel %vm3258, %v4455, 0
        %v4468 = vsel %vm3258, %v4457, 0
        %4470 = vmatpush.bf16.xpose.msra.mxu0 0
        %4471 = vmatpush.bf16.xpose.msra.mxu0 0
        %4472 = vmatpush.bf16.xpose.msra.mxu0 0
        %4473 = vmatpush.bf16.xpose.msra.mxu0 0
        %4474 = vmatpush.bf16.xpose.msra.mxu0 0
        %4475 = vmatpush.bf16.xpose.msra.mxu0 0
        %4476 = vmatpush.bf16.xpose.msra.mxu0 %v4468
        %4477 = vmatpush.bf16.xpose.msra.mxu0 %v4465
        %4478 = vmatmul.bf16.gmra.mxu0 %v4459
        %v4479 = vpop.f32.mrf.mxu0
        %v4480 = vadd.f32 0.0, %v4479
        %v4481 = vpop.f32.mrf.mxu0
        %v4482 = vadd.f32 0.0, %v4481
        %4483 = vmatmul.bf16.gmra.mxu0 %v4462
        %v4484 = vpop.f32.mrf.mxu0
        %v4485 = vadd.f32 0.0, %v4484
        %v4486 = vpop.f32.mrf.mxu0
        %4487 = vdwg.mxu0
        %v4488 = vmul.f32 %v4480, 0.35355338
        %v4489 = vmul.f32 %v4482, 0.35355338
        %v4490 = vmul.f32 %v4485, 0.35355338
        %v4491 = vadd.f32 %v4488, %v3328
        %v4492 = vadd.f32 %v4489, %v3328
        %v4493 = vadd.f32 %v4490, %v3328
        %v4494 = vsel %vm3490, %v4491, -inf
        %4495 = vmax.xlane.f32.xlu0 %v4494
        %v4496 = vpop.xlane.xlu0 %4495
        %v4497 = vsel %vm3490, %v4492, -inf
        %4498 = vmax.xlane.f32.xlu0 %v4497
        %v4499 = vpop.xlane.xlu0 %4498
        %v4500 = vsel %vm3490, %v4493, -inf
        %4501 = vmax.xlane.f32.xlu0 %v4500
        %v4502 = vpop.xlane.xlu0 %4501
        %v4503 = vsub.f32 %v4491, %v4496
        %v4504 = vsub.f32 %v4492, %v4499
        %v4505 = vsub.f32 %v4493, %v4502
        %v4506 = vmul.f32 %v4503, 1.442695
        %v4507 = vpow.pop %v4506
        %v4508 = vmul.f32 %v4504, 1.442695
        %v4509 = vpow.pop %v4508
        %v4510 = vmul.f32 %v4505, 1.442695
        %v4511 = vpow.pop %v4510
        %v4512 = vsel %vm3490, %v4507, 0.0
        %4513 = vadd.xlane.f32.xlu0 %v4512
        %v4514 = vpop.xlane.xlu0 %4513
        %v4515 = vsel %vm3490, %v4509, 0.0
        %4516 = vadd.xlane.f32.xlu0 %v4515
        %v4517 = vpop.xlane.xlu0 %4516
        %v4518 = vsel %vm3490, %v4511, 0.0
        %4519 = vadd.xlane.f32.xlu0 %v4518
        %v4520 = vpop.xlane.xlu0 %4519
        %v4521 = vrcp.pop %v4514
        %v4522 = vrcp.pop %v4517
        %v4523 = vrcp.pop %v4520
        %v4524 = vmul.f32 %v4507, %v4521
        %v4525 = vmul.f32 %v4509, %v4522
        %v4526 = vmul.f32 %v4511, %v4523
        %v4527 = vpack.c.bf16 %v4525, %v4524
        %v4528 = vpack.c.bf16 %v4526, %v4526
        %4529 = vrot.lane.b32.xlu0 %v4228, 48
        %v4530 = vpop.permute.xlu0 %4529
        %4531 = vrot.lane.b32.xlu0 %v4229, 48
        %v4532 = vpop.permute.xlu0 %4531
        %v4535 = vsel %vm3490, %v4527, 0
        %v4538 = vsel %vm3490, %v4528, 0
        %v4541 = vsel %vm3262, %v4532, 0
        %4543 = vmatpush.bf16.msra.mxu0 0
        %4544 = vmatpush.bf16.msra.mxu0 0
        %4545 = vmatpush.bf16.msra.mxu0 0
        %4546 = vmatpush.bf16.msra.mxu0 0
        %4547 = vmatpush.bf16.msra.mxu0 0
        %4548 = vmatpush.bf16.msra.mxu0 0
        %4549 = vmatpush.bf16.msra.mxu0 %v4541
        %4550 = vmatpush.bf16.msra.mxu0 %v4530
        %4551 = vmatmul.bf16.gmra.mxu0 %v4535
        %v4552 = vpop.f32.mrf.mxu0
        %v4553 = vadd.f32 0.0, %v4552
        %v4554 = vpop.f32.mrf.mxu0
        %v4555 = vadd.f32 0.0, %v4554
        %4556 = vmatmul.bf16.gmra.mxu0 %v4538
        %v4557 = vpop.f32.mrf.mxu0
        %v4558 = vadd.f32 0.0, %v4557
        %v4559 = vpop.f32.mrf.mxu0
        %4560 = vdwg.mxu0
        %4561 = vrot.lane.b32.xlu0 %v4228, 104
        %v4562 = vpop.permute.xlu0 %4561
        %4563 = vrot.lane.b32.xlu0 %v4229, 104
        %v4564 = vpop.permute.xlu0 %4563
        %4565 = vrot.lane.b32.xlu0 %v4228, 72
        %v4566 = vpop.permute.xlu0 %4565
        %4567 = vrot.lane.b32.xlu0 %v4229, 72
        %v4568 = vpop.permute.xlu0 %4567
        %v4570 = vsel %vm3258, %v4562, 0
        %v4573 = vsel %vm3258, %v4564, 0
        %v4576 = vsel %vm3258, %v4566, 0
        %v4579 = vsel %vm3258, %v4568, 0
        %4581 = vmatpush.bf16.xpose.msra.mxu0 0
        %4582 = vmatpush.bf16.xpose.msra.mxu0 0
        %4583 = vmatpush.bf16.xpose.msra.mxu0 0
        %4584 = vmatpush.bf16.xpose.msra.mxu0 0
        %4585 = vmatpush.bf16.xpose.msra.mxu0 0
        %4586 = vmatpush.bf16.xpose.msra.mxu0 0
        %4587 = vmatpush.bf16.xpose.msra.mxu0 %v4579
        %4588 = vmatpush.bf16.xpose.msra.mxu0 %v4576
        %4589 = vmatmul.bf16.gmra.mxu0 %v4570
        %v4590 = vpop.f32.mrf.mxu0
        %v4591 = vadd.f32 0.0, %v4590
        %v4592 = vpop.f32.mrf.mxu0
        %v4593 = vadd.f32 0.0, %v4592
        %4594 = vmatmul.bf16.gmra.mxu0 %v4573
        %v4595 = vpop.f32.mrf.mxu0
        %v4596 = vadd.f32 0.0, %v4595
        %v4597 = vpop.f32.mrf.mxu0
        %4598 = vdwg.mxu0
        %v4599 = vmul.f32 %v4591, 0.35355338
        %v4600 = vmul.f32 %v4593, 0.35355338
        %v4601 = vmul.f32 %v4596, 0.35355338
        %v4602 = vadd.f32 %v4599, %v3328
        %v4603 = vadd.f32 %v4600, %v3328
        %v4604 = vadd.f32 %v4601, %v3328
        %v4605 = vsel %vm3490, %v4602, -inf
        %4606 = vmax.xlane.f32.xlu0 %v4605
        %v4607 = vpop.xlane.xlu0 %4606
        %v4608 = vsel %vm3490, %v4603, -inf
        %4609 = vmax.xlane.f32.xlu0 %v4608
        %v4610 = vpop.xlane.xlu0 %4609
        %v4611 = vsel %vm3490, %v4604, -inf
        %4612 = vmax.xlane.f32.xlu0 %v4611
        %v4613 = vpop.xlane.xlu0 %4612
        %v4614 = vsub.f32 %v4602, %v4607
        %v4615 = vsub.f32 %v4603, %v4610
        %v4616 = vsub.f32 %v4604, %v4613
        %v4617 = vmul.f32 %v4614, 1.442695
        %v4618 = vpow.pop %v4617
        %v4619 = vmul.f32 %v4615, 1.442695
        %v4620 = vpow.pop %v4619
        %v4621 = vmul.f32 %v4616, 1.442695
        %v4622 = vpow.pop %v4621
        %v4623 = vsel %vm3490, %v4618, 0.0
        %4624 = vadd.xlane.f32.xlu0 %v4623
        %v4625 = vpop.xlane.xlu0 %4624
        %v4626 = vsel %vm3490, %v4620, 0.0
        %4627 = vadd.xlane.f32.xlu0 %v4626
        %v4628 = vpop.xlane.xlu0 %4627
        %v4629 = vsel %vm3490, %v4622, 0.0
        %4630 = vadd.xlane.f32.xlu0 %v4629
        %v4631 = vpop.xlane.xlu0 %4630
        %v4632 = vrcp.pop %v4625
        %v4633 = vrcp.pop %v4628
        %v4634 = vrcp.pop %v4631
        %v4635 = vmul.f32 %v4618, %v4632
        %v4636 = vmul.f32 %v4620, %v4633
        %v4637 = vmul.f32 %v4622, %v4634
        %v4638 = vpack.c.bf16 %v4636, %v4635
        %v4639 = vpack.c.bf16 %v4637, %v4637
        %4640 = vrot.lane.b32.xlu0 %v4228, 40
        %v4641 = vpop.permute.xlu0 %4640
        %4642 = vrot.lane.b32.xlu0 %v4229, 40
        %v4643 = vpop.permute.xlu0 %4642
        %v4646 = vsel %vm3490, %v4638, 0
        %v4649 = vsel %vm3490, %v4639, 0
        %v4652 = vsel %vm3262, %v4643, 0
        %4654 = vmatpush.bf16.msra.mxu0 0
        %4655 = vmatpush.bf16.msra.mxu0 0
        %4656 = vmatpush.bf16.msra.mxu0 0
        %4657 = vmatpush.bf16.msra.mxu0 0
        %4658 = vmatpush.bf16.msra.mxu0 0
        %4659 = vmatpush.bf16.msra.mxu0 0
        %4660 = vmatpush.bf16.msra.mxu0 %v4652
        %4661 = vmatpush.bf16.msra.mxu0 %v4641
        %4662 = vmatmul.bf16.gmra.mxu0 %v4646
        %v4663 = vpop.f32.mrf.mxu0
        %v4664 = vadd.f32 0.0, %v4663
        %v4665 = vpop.f32.mrf.mxu0
        %v4666 = vadd.f32 0.0, %v4665
        %4667 = vmatmul.bf16.gmra.mxu0 %v4649
        %v4668 = vpop.f32.mrf.mxu0
        %v4669 = vadd.f32 0.0, %v4668
        %v4670 = vpop.f32.mrf.mxu0
        %4671 = vdwg.mxu0
        %4675 = vrot.lane.b32.xlu0 %v4442, 8
        %v4676 = vpop.permute.xlu0 %4675
        %4677 = vrot.lane.b32.xlu0 %v4444, 8
        %v4678 = vpop.permute.xlu0 %4677
        %4679 = vrot.lane.b32.xlu0 %v4447, 8
        %v4680 = vpop.permute.xlu0 %4679
        %4687 = vrot.lane.b32.xlu0 %v4553, 16
        %v4688 = vpop.permute.xlu0 %4687
        %4689 = vrot.lane.b32.xlu0 %v4555, 16
        %v4690 = vpop.permute.xlu0 %4689
        %4691 = vrot.lane.b32.xlu0 %v4558, 16
        %v4692 = vpop.permute.xlu0 %4691
        %4699 = vrot.lane.b32.xlu0 %v4664, 24
        %v4700 = vpop.permute.xlu0 %4699
        %4701 = vrot.lane.b32.xlu0 %v4666, 24
        %v4702 = vpop.permute.xlu0 %4701
        %4703 = vrot.lane.b32.xlu0 %v4669, 24
        %v4704 = vpop.permute.xlu0 %4703
        %v4708 = vsel %vm3258, %v4331, %v4676
        %v4709 = vsel %vm3258, %v4333, %v4678
        %v4710 = vsel %vm3258, %v4336, %v4680
        %v4711 = vsel %vm3930, %v4708, %v4688
        %v4712 = vsel %vm3930, %v4709, %v4690
        %v4713 = vsel %vm3930, %v4710, %v4692
        %v4714 = vsel %vm3490, %v4711, %v4700
        %v4715 = vsel %vm3490, %v4712, %v4702
        %v4716 = vsel %vm3490, %v4713, %v4704
        %v4717 = vpack.c.bf16 %v4715, %v4714
        %v4718 = vpack.c.bf16 %v4716, %v4716
        %v4719 = vpack.c.bf16 %v3149, %v3148
        %v4720 = vpack.c.bf16 %v3151, %v3150
        %v4722 = vperm.slane %v3146, 0
        %v4725 = vsel %vm3329, %v4717, 0
        %v4728 = vsel %vm3329, %v4718, 0
        %4730 = vmatpush.bf16.msra.mxu0 0
        %4731 = vmatpush.bf16.msra.mxu0 0
        %4732 = vmatpush.bf16.msra.mxu0 0
        %4733 = vmatpush.bf16.msra.mxu0 0
        %4734 = vmatpush.bf16.msra.mxu0 0
        %4735 = vmatpush.bf16.msra.mxu0 0
        %4736 = vmatpush.bf16.msra.mxu0 %v4720
        %4737 = vmatpush.bf16.msra.mxu0 %v4719
        %4738 = vmatmul.bf16.gmra.mxu0 %v4725
        %v4739 = vpop.f32.mrf.mxu0
        %v4740 = vadd.f32 %v4722, %v4739
        %v4741 = vpop.f32.mrf.mxu0
        %v4742 = vadd.f32 %v4722, %v4741
        %4743 = vmatmul.bf16.gmra.mxu0 %v4728
        %v4744 = vpop.f32.mrf.mxu0
        %v4745 = vadd.f32 %v4722, %v4744
        %v4746 = vpop.f32.mrf.mxu0
        %4747 = vdwg.mxu0
        %v4748 = vadd.f32 %v4116, %v4740
        %v4749 = vadd.f32 %v4117, %v4742
        %v4750 = vadd.f32 %v4118, %v4745
        %v4751 = vsel %vm3329, %v4748, 0.0
        %4752 = vadd.xlane.f32.xlu0 %v4751
        %v4753 = vpop.xlane.xlu0 %4752
        %v4754 = vsel %vm3329, %v4749, 0.0
        %4755 = vadd.xlane.f32.xlu0 %v4754
        %v4756 = vpop.xlane.xlu0 %4755
        %v4757 = vsel %vm3329, %v4750, 0.0
        %4758 = vadd.xlane.f32.xlu0 %v4757
        %v4759 = vpop.xlane.xlu0 %4758
        %v4760 = vmul.f32 %v4753, %v3345
        %v4761 = vmul.f32 %v4756, %v3345
        %v4762 = vmul.f32 %v4759, %v3345
        %v4763 = vsub.f32 %v4748, %v4760
        %v4764 = vsub.f32 %v4749, %v4761
        %v4765 = vsub.f32 %v4750, %v4762
        %v4766 = vmul.f32 %v4763, %v4763
        %v4767 = vmul.f32 %v4764, %v4764
        %v4768 = vmul.f32 %v4765, %v4765
        %v4769 = vsel %vm3329, %v4766, 0.0
        %4770 = vadd.xlane.f32.xlu0 %v4769
        %v4771 = vpop.xlane.xlu0 %4770
        %v4772 = vsel %vm3329, %v4767, 0.0
        %4773 = vadd.xlane.f32.xlu0 %v4772
        %v4774 = vpop.xlane.xlu0 %4773
        %v4775 = vsel %vm3329, %v4768, 0.0
        %4776 = vadd.xlane.f32.xlu0 %v4775
        %v4777 = vpop.xlane.xlu0 %4776
        %v4778 = vmul.f32 %v4771, %v3345
        %v4779 = vmul.f32 %v4774, %v3345
        %v4780 = vmul.f32 %v4777, %v3345
        %v4781 = vadd.f32 %v4778, 1e-06
        %v4782 = vadd.f32 %v4779, 1e-06
        %v4783 = vadd.f32 %v4780, 1e-06
        %v4784 = vrsqrt.pop %v4781
        %v4785 = vmul.f32 %v4784, %v4781
        %v4786 = vmul.f32 %v4785, %v4784
        %v4787 = vmul.f32 0.5, %v4786
        %v4788 = vsub.f32 1.5, %v4787
        %v4789 = vmul.f32 %v4784, %v4788
        %vm4790 = vweird.f32 %v4781
        %vm4791 = vweird.f32 %v4784
        %vm4792 = vmor %vm4790, %vm4791
        %v4793 = vsel %vm4792, %v4784, %v4789
        %v4794 = vrsqrt.pop %v4782
        %v4795 = vmul.f32 %v4794, %v4782
        %v4796 = vmul.f32 %v4795, %v4794
        %v4797 = vmul.f32 0.5, %v4796
        %v4798 = vsub.f32 1.5, %v4797
        %v4799 = vmul.f32 %v4794, %v4798
        %vm4800 = vweird.f32 %v4782
        %vm4801 = vweird.f32 %v4794
        %vm4802 = vmor %vm4800, %vm4801
        %v4803 = vsel %vm4802, %v4794, %v4799
        %v4804 = vrsqrt.pop %v4783
        %v4805 = vmul.f32 %v4804, %v4783
        %v4806 = vmul.f32 %v4805, %v4804
        %v4807 = vmul.f32 0.5, %v4806
        %v4808 = vsub.f32 1.5, %v4807
        %v4809 = vmul.f32 %v4804, %v4808
        %vm4810 = vweird.f32 %v4783
        %vm4811 = vweird.f32 %v4804
        %vm4812 = vmor %vm4810, %vm4811
        %v4813 = vsel %vm4812, %v4804, %v4809
        %v4814 = vmul.f32 %v4763, %v4793
        %v4815 = vmul.f32 %v4764, %v4803
        %v4816 = vmul.f32 %v4765, %v4813
        %v4818 = vperm.slane %v3173, 0
        %v4820 = vmul.f32 %v4814, %v4818
        %v4821 = vmul.f32 %v4815, %v4818
        %v4822 = vmul.f32 %v4816, %v4818
        %v4824 = vperm.slane %v3172, 0
        %v4826 = vadd.f32 %v4820, %v4824
        %v4827 = vadd.f32 %v4821, %v4824
        %v4828 = vadd.f32 %v4822, %v4824
        %v4829 = vpack.c.bf16 %v4827, %v4826
        %v4830 = vpack.c.bf16 %v4828, %v4828
        %v4831 = vpack.c.bf16 %v3159, %v3158
        %v4832 = vpack.c.bf16 %v3161, %v3160
        %v4834 = vperm.slane %v3156, 0
        %v4837 = vsel %vm3329, %v4829, 0
        %v4840 = vsel %vm3329, %v4830, 0
        %4842 = vmatpush.bf16.msra.mxu0 0
        %4843 = vmatpush.bf16.msra.mxu0 0
        %4844 = vmatpush.bf16.msra.mxu0 0
        %4845 = vmatpush.bf16.msra.mxu0 0
        %4846 = vmatpush.bf16.msra.mxu0 0
        %4847 = vmatpush.bf16.msra.mxu0 0
        %4848 = vmatpush.bf16.msra.mxu0 %v4832
        %4849 = vmatpush.bf16.msra.mxu0 %v4831
        %4850 = vmatmul.bf16.gmra.mxu0 %v4837
        %v4851 = vpop.f32.mrf.mxu0
        %v4852 = vadd.f32 %v4834, %v4851
        %v4853 = vpop.f32.mrf.mxu0
        %v4854 = vadd.f32 %v4834, %v4853
        %4855 = vmatmul.bf16.gmra.mxu0 %v4840
        %v4856 = vpop.f32.mrf.mxu0
        %v4857 = vadd.f32 %v4834, %v4856
        %v4858 = vpop.f32.mrf.mxu0
        %4859 = vdwg.mxu0
        %v4860 = vmax.f32 %v4852, 0.0
        %v4861 = vmax.f32 %v4854, 0.0
        %v4862 = vmax.f32 %v4857, 0.0
        %v4863 = vpack.c.bf16 %v4861, %v4860
        %v4864 = vpack.c.bf16 %v4862, %v4862
        %v4865 = vpack.c.bf16 %v3163, %v3162
        %v4866 = vpack.c.bf16 %v3165, %v3164
        %v4867 = vpack.c.bf16 %v3167, %v3166
        %v4868 = vpack.c.bf16 %v3169, %v3168
        %v4870 = vperm.slane %v3157, 0
        %v4873 = vsel %vm3217, %v4863, 0
        %v4876 = vsel %vm3217, %v4864, 0
        %4878 = vmatpush.bf16.msra.mxu0 0
        %4879 = vmatpush.bf16.msra.mxu0 0
        %4880 = vmatpush.bf16.msra.mxu0 0
        %4881 = vmatpush.bf16.msra.mxu0 0
        %4882 = vmatpush.bf16.msra.mxu0 %v4868
        %4883 = vmatpush.bf16.msra.mxu0 %v4867
        %4884 = vmatpush.bf16.msra.mxu0 %v4866
        %4885 = vmatpush.bf16.msra.mxu0 %v4865
        %4886 = vmatmul.bf16.gmra.mxu0 %v4873
        %v4887 = vpop.f32.mrf.mxu0
        %v4888 = vadd.f32 %v4870, %v4887
        %v4889 = vpop.f32.mrf.mxu0
        %v4890 = vadd.f32 %v4870, %v4889
        %4891 = vmatmul.bf16.gmra.mxu0 %v4876
        %v4892 = vpop.f32.mrf.mxu0
        %v4893 = vadd.f32 %v4870, %v4892
        %v4894 = vpop.f32.mrf.mxu0
        %4895 = vdwg.mxu0
        %v4896 = vadd.f32 %v4748, %v4888
        %v4897 = vadd.f32 %v4749, %v4890
        %v4898 = vadd.f32 %v4750, %v4893
        %v4899 = vsel %vm3329, %v4896, 0.0
        %4900 = vadd.xlane.f32.xlu0 %v4899
        %v4901 = vpop.xlane.xlu0 %4900
        %v4902 = vsel %vm3329, %v4897, 0.0
        %4903 = vadd.xlane.f32.xlu0 %v4902
        %v4904 = vpop.xlane.xlu0 %4903
        %v4905 = vsel %vm3329, %v4898, 0.0
        %4906 = vadd.xlane.f32.xlu0 %v4905
        %v4907 = vpop.xlane.xlu0 %4906
        %v4908 = vmul.f32 %v4901, %v3345
        %v4909 = vmul.f32 %v4904, %v3345
        %v4910 = vmul.f32 %v4907, %v3345
        %v4911 = vsub.f32 %v4896, %v4908
        %v4912 = vsub.f32 %v4897, %v4909
        %v4913 = vsub.f32 %v4898, %v4910
        %v4914 = vmul.f32 %v4911, %v4911
        %v4915 = vmul.f32 %v4912, %v4912
        %v4916 = vmul.f32 %v4913, %v4913
        %v4917 = vsel %vm3329, %v4914, 0.0
        %4918 = vadd.xlane.f32.xlu0 %v4917
        %v4919 = vpop.xlane.xlu0 %4918
        %v4920 = vsel %vm3329, %v4915, 0.0
        %4921 = vadd.xlane.f32.xlu0 %v4920
        %v4922 = vpop.xlane.xlu0 %4921
        %v4923 = vsel %vm3329, %v4916, 0.0
        %4924 = vadd.xlane.f32.xlu0 %v4923
        %v4925 = vpop.xlane.xlu0 %4924
        %v4926 = vmul.f32 %v4919, %v3345
        %v4927 = vmul.f32 %v4922, %v3345
        %v4928 = vmul.f32 %v4925, %v3345
        %v4929 = vadd.f32 %v4926, 1e-06
        %v4930 = vadd.f32 %v4927, 1e-06
        %v4931 = vadd.f32 %v4928, 1e-06
        %v4932 = vrsqrt.pop %v4929
        %v4933 = vmul.f32 %v4932, %v4929
        %v4934 = vmul.f32 %v4933, %v4932
        %v4935 = vmul.f32 0.5, %v4934
        %v4936 = vsub.f32 1.5, %v4935
        %v4937 = vmul.f32 %v4932, %v4936
        %vm4938 = vweird.f32 %v4929
        %vm4939 = vweird.f32 %v4932
        %vm4940 = vmor %vm4938, %vm4939
        %v4941 = vsel %vm4940, %v4932, %v4937
        %v4942 = vrsqrt.pop %v4930
        %v4943 = vmul.f32 %v4942, %v4930
        %v4944 = vmul.f32 %v4943, %v4942
        %v4945 = vmul.f32 0.5, %v4944
        %v4946 = vsub.f32 1.5, %v4945
        %v4947 = vmul.f32 %v4942, %v4946
        %vm4948 = vweird.f32 %v4930
        %vm4949 = vweird.f32 %v4942
        %vm4950 = vmor %vm4948, %vm4949
        %v4951 = vsel %vm4950, %v4942, %v4947
        %v4952 = vrsqrt.pop %v4931
        %v4953 = vmul.f32 %v4952, %v4931
        %v4954 = vmul.f32 %v4953, %v4952
        %v4955 = vmul.f32 0.5, %v4954
        %v4956 = vsub.f32 1.5, %v4955
        %v4957 = vmul.f32 %v4952, %v4956
        %vm4958 = vweird.f32 %v4931
        %vm4959 = vweird.f32 %v4952
        %vm4960 = vmor %vm4958, %vm4959
        %v4961 = vsel %vm4960, %v4952, %v4957
        %v4962 = vmul.f32 %v4911, %v4941
        %v4963 = vmul.f32 %v4912, %v4951
        %v4964 = vmul.f32 %v4913, %v4961
        %v4966 = vperm.slane %v3175, 0
        %v4968 = vmul.f32 %v4962, %v4966
        %v4969 = vmul.f32 %v4963, %v4966
        %v4970 = vmul.f32 %v4964, %v4966
        %v4972 = vperm.slane %v3174, 0
        %v4974 = vadd.f32 %v4968, %v4972
        %v4975 = vadd.f32 %v4969, %v4972
        %v4976 = vadd.f32 %v4970, %v4972
        %v4977 = vld [vmem:[%s3002] sm:$0x1]
        %v4978 = vlaneseq
        %v4979 = vshrl.u32 %v4978, 7
        %vm4980 = vcmp.le.s32.totalorder %v3326, %v4979
        %v4982 = vperm.slane %v4977, 0
        %vm4984 = vcmp.gt.f32.partialorder %v4982, 0.5
        %vm4985 = vmand %vm4980, %vm4984
        %v4986 = vsel %vm4985, 0.0, -1e+09
        %v4987 = vld [vmem:[%s2999] sm:$0x7f]
        %vm4988 = vcmask 260096
        %v4989 = vsel %vm4988, %v4987, 0.0
        %4990 = vadd.xlane.f32.xlu0 %v4989
        %v4991 = vpop.xlane.xlu0 %4990
        %v4992 = vmul.f32 %v4991, %v3345
        %v4993 = vsub.f32 %v4987, %v4992
        %v4994 = vmul.f32 %v4993, %v4993
        %v4995 = vsel %vm4988, %v4994, 0.0
        %4996 = vadd.xlane.f32.xlu0 %v4995
        %v4997 = vpop.xlane.xlu0 %4996
        %v4998 = vmul.f32 %v4997, %v3345
        %v4999 = vadd.f32 %v4998, 1e-06
        %v5000 = vrsqrt.pop %v4999
        %v5001 = vmul.f32 %v5000, %v4999
        %v5002 = vmul.f32 %v5001, %v5000
        %v5003 = vmul.f32 0.5, %v5002
        %v5004 = vsub.f32 1.5, %v5003
        %v5005 = vmul.f32 %v5000, %v5004
        %vm5006 = vweird.f32 %v4999
        %vm5007 = vweird.f32 %v5000
        %vm5008 = vmor %vm5006, %vm5007
        %v5009 = vsel %vm5008, %v5000, %v5005
        %v5010 = vmul.f32 %v4993, %v5009
        %v5012 = vperm.slane %v3056, 0
        %v5014 = vmul.f32 %v5010, %v5012
        %v5016 = vperm.slane %v3055, 0
        %v5018 = vadd.f32 %v5014, %v5016
        %v5019 = vpack.c.bf16 %v5018, %v5018
        %v5020 = vpack.c.bf16 %v3068, %v3067
        %v5021 = vpack.c.bf16 %v3070, %v3069
        %v5023 = vperm.slane %v3062, 0
        %v5026 = vsel %vm3329, %v5019, 0
        %5028 = vmatpush.bf16.msra.mxu0 0
        %5029 = vmatpush.bf16.msra.mxu0 0
        %5030 = vmatpush.bf16.msra.mxu0 0
        %5031 = vmatpush.bf16.msra.mxu0 0
        %5032 = vmatpush.bf16.msra.mxu0 0
        %5033 = vmatpush.bf16.msra.mxu0 0
        %5034 = vmatpush.bf16.msra.mxu0 %v5021
        %5035 = vmatpush.bf16.msra.mxu0 %v5020
        %5036 = vmatmul.bf16.gmra.mxu0 %v5026
        %v5037 = vpop.f32.mrf.mxu0
        %v5038 = vadd.f32 %v5023, %v5037
        %v5039 = vpop.f32.mrf.mxu0
        %5040 = vdwg.mxu0
        %v5041 = vpack.c.bf16 %v5038, %v5038
        %5043 = vrot.lane.b32.xlu0 %v5041, 96
        %v5044 = vpop.permute.xlu0 %5043
        %v5046 = vsel %vm3258, %v5041, 0
        %v5049 = vsel %vm3258, %v5044, 0
        %5051 = vmatpush.bf16.xpose.msra.mxu0 0
        %5052 = vmatpush.bf16.xpose.msra.mxu0 0
        %5053 = vmatpush.bf16.xpose.msra.mxu0 0
        %5054 = vmatpush.bf16.xpose.msra.mxu0 0
        %5055 = vmatpush.bf16.xpose.msra.mxu0 0
        %5056 = vmatpush.bf16.xpose.msra.mxu0 0
        %5057 = vmatpush.bf16.xpose.msra.mxu0 0
        %5058 = vmatpush.bf16.xpose.msra.mxu0 %v5049
        %5059 = vmatmul.bf16.gmra.mxu0 %v5046
        %v5060 = vpop.f32.mrf.mxu0
        %v5061 = vadd.f32 0.0, %v5060
        %v5062 = vpop.f32.mrf.mxu0
        %5063 = vdwg.mxu0
        %v5064 = vmul.f32 %v5061, 0.35355338
        %v5065 = vadd.f32 %v5064, %v4986
        %vm5066 = vcmask 55296
        %v5067 = vsel %vm5066, %v5065, -inf
        %5068 = vmax.xlane.f32.xlu0 %v5067
        %v5069 = vpop.xlane.xlu0 %5068
        %v5070 = vsub.f32 %v5065, %v5069
        %v5071 = vmul.f32 %v5070, 1.442695
        %v5072 = vpow.pop %v5071
        %v5073 = vsel %vm5066, %v5072, 0.0
        %5074 = vadd.xlane.f32.xlu0 %v5073
        %v5075 = vpop.xlane.xlu0 %5074
        %v5076 = vrcp.pop %v5075
        %v5077 = vmul.f32 %v5072, %v5076
        %v5078 = vpack.c.bf16 %v5077, %v5077
        %5079 = vrot.lane.b32.xlu0 %v5041, 64
        %v5080 = vpop.permute.xlu0 %5079
        %vm5081 = vcmask 56320
        %v5083 = vsel %vm5081, %v5078, 0
        %vm5085 = vcmask 1042432
        %v5086 = vsel %vm5085, 4294967295, 65535
        %v5087 = vsel %vm3262, %v5086, 0
        %v5089 = vand.u32 %v5080, %v5087
        %5091 = vmatpush.bf16.msra.mxu0 0
        %5092 = vmatpush.bf16.msra.mxu0 0
        %5093 = vmatpush.bf16.msra.mxu0 0
        %5094 = vmatpush.bf16.msra.mxu0 0
        %5095 = vmatpush.bf16.msra.mxu0 0
        %5096 = vmatpush.bf16.msra.mxu0 0
        %5097 = vmatpush.bf16.msra.mxu0 0
        %5098 = vmatpush.bf16.msra.mxu0 %v5089
        %5099 = vmatmul.bf16.gmra.mxu0 %v5083
        %v5100 = vpop.f32.mrf.mxu0
        %v5101 = vadd.f32 0.0, %v5100
        %v5102 = vpop.f32.mrf.mxu0
        %5103 = vdwg.mxu0
        %5104 = vrot.lane.b32.xlu0 %v5041, 120
        %v5105 = vpop.permute.xlu0 %5104
        %5106 = vrot.lane.b32.xlu0 %v5041, 88
        %v5107 = vpop.permute.xlu0 %5106
        %v5109 = vsel %vm3258, %v5105, 0
        %v5112 = vsel %vm3258, %v5107, 0
        %5114 = vmatpush.bf16.xpose.msra.mxu0 0
        %5115 = vmatpush.bf16.xpose.msra.mxu0 0
        %5116 = vmatpush.bf16.xpose.msra.mxu0 0
        %5117 = vmatpush.bf16.xpose.msra.mxu0 0
        %5118 = vmatpush.bf16.xpose.msra.mxu0 0
        %5119 = vmatpush.bf16.xpose.msra.mxu0 0
        %5120 = vmatpush.bf16.xpose.msra.mxu0 0
        %5121 = vmatpush.bf16.xpose.msra.mxu0 %v5112
        %5122 = vmatmul.bf16.gmra.mxu0 %v5109
        %v5123 = vpop.f32.mrf.mxu0
        %v5124 = vadd.f32 0.0, %v5123
        %v5125 = vpop.f32.mrf.mxu0
        %5126 = vdwg.mxu0
        %v5127 = vmul.f32 %v5124, 0.35355338
        %v5128 = vadd.f32 %v5127, %v4986
        %v5129 = vsel %vm5066, %v5128, -inf
        %5130 = vmax.xlane.f32.xlu0 %v5129
        %v5131 = vpop.xlane.xlu0 %5130
        %v5132 = vsub.f32 %v5128, %v5131
        %v5133 = vmul.f32 %v5132, 1.442695
        %v5134 = vpow.pop %v5133
        %v5135 = vsel %vm5066, %v5134, 0.0
        %5136 = vadd.xlane.f32.xlu0 %v5135
        %v5137 = vpop.xlane.xlu0 %5136
        %v5138 = vrcp.pop %v5137
        %v5139 = vmul.f32 %v5134, %v5138
        %v5140 = vpack.c.bf16 %v5139, %v5139
        %5141 = vrot.lane.b32.xlu0 %v5041, 56
        %v5142 = vpop.permute.xlu0 %5141
        %v5144 = vsel %vm5081, %v5140, 0
        %v5147 = vand.u32 %v5142, %v5087
        %5149 = vmatpush.bf16.msra.mxu0 0
        %5150 = vmatpush.bf16.msra.mxu0 0
        %5151 = vmatpush.bf16.msra.mxu0 0
        %5152 = vmatpush.bf16.msra.mxu0 0
        %5153 = vmatpush.bf16.msra.mxu0 0
        %5154 = vmatpush.bf16.msra.mxu0 0
        %5155 = vmatpush.bf16.msra.mxu0 0
        %5156 = vmatpush.bf16.msra.mxu0 %v5147
        %5157 = vmatmul.bf16.gmra.mxu0 %v5144
        %v5158 = vpop.f32.mrf.mxu0
        %v5159 = vadd.f32 0.0, %v5158
        %v5160 = vpop.f32.mrf.mxu0
        %5161 = vdwg.mxu0
        %5162 = vrot.lane.b32.xlu0 %v5041, 112
        %v5163 = vpop.permute.xlu0 %5162
        %5164 = vrot.lane.b32.xlu0 %v5041, 80
        %v5165 = vpop.permute.xlu0 %5164
        %v5167 = vsel %vm3258, %v5163, 0
        %v5170 = vsel %vm3258, %v5165, 0
        %5172 = vmatpush.bf16.xpose.msra.mxu0 0
        %5173 = vmatpush.bf16.xpose.msra.mxu0 0
        %5174 = vmatpush.bf16.xpose.msra.mxu0 0
        %5175 = vmatpush.bf16.xpose.msra.mxu0 0
        %5176 = vmatpush.bf16.xpose.msra.mxu0 0
        %5177 = vmatpush.bf16.xpose.msra.mxu0 0
        %5178 = vmatpush.bf16.xpose.msra.mxu0 0
        %5179 = vmatpush.bf16.xpose.msra.mxu0 %v5170
        %5180 = vmatmul.bf16.gmra.mxu0 %v5167
        %v5181 = vpop.f32.mrf.mxu0
        %v5182 = vadd.f32 0.0, %v5181
        %v5183 = vpop.f32.mrf.mxu0
        %5184 = vdwg.mxu0
        %v5185 = vmul.f32 %v5182, 0.35355338
        %v5186 = vadd.f32 %v5185, %v4986
        %v5187 = vsel %vm5066, %v5186, -inf
        %5188 = vmax.xlane.f32.xlu0 %v5187
        %v5189 = vpop.xlane.xlu0 %5188
        %v5190 = vsub.f32 %v5186, %v5189
        %v5191 = vmul.f32 %v5190, 1.442695
        %v5192 = vpow.pop %v5191
        %v5193 = vsel %vm5066, %v5192, 0.0
        %5194 = vadd.xlane.f32.xlu0 %v5193
        %v5195 = vpop.xlane.xlu0 %5194
        %v5196 = vrcp.pop %v5195
        %v5197 = vmul.f32 %v5192, %v5196
        %v5198 = vpack.c.bf16 %v5197, %v5197
        %5199 = vrot.lane.b32.xlu0 %v5041, 48
        %v5200 = vpop.permute.xlu0 %5199
        %v5202 = vsel %vm5081, %v5198, 0
        %v5205 = vand.u32 %v5200, %v5087
        %5207 = vmatpush.bf16.msra.mxu0 0
        %5208 = vmatpush.bf16.msra.mxu0 0
        %5209 = vmatpush.bf16.msra.mxu0 0
        %5210 = vmatpush.bf16.msra.mxu0 0
        %5211 = vmatpush.bf16.msra.mxu0 0
        %5212 = vmatpush.bf16.msra.mxu0 0
        %5213 = vmatpush.bf16.msra.mxu0 0
        %5214 = vmatpush.bf16.msra.mxu0 %v5205
        %5215 = vmatmul.bf16.gmra.mxu0 %v5202
        %v5216 = vpop.f32.mrf.mxu0
        %v5217 = vadd.f32 0.0, %v5216
        %v5218 = vpop.f32.mrf.mxu0
        %5219 = vdwg.mxu0
        %5220 = vrot.lane.b32.xlu0 %v5041, 104
        %v5221 = vpop.permute.xlu0 %5220
        %5222 = vrot.lane.b32.xlu0 %v5041, 72
        %v5223 = vpop.permute.xlu0 %5222
        %v5225 = vsel %vm3258, %v5221, 0
        %v5228 = vsel %vm3258, %v5223, 0
        %5230 = vmatpush.bf16.xpose.msra.mxu0 0
        %5231 = vmatpush.bf16.xpose.msra.mxu0 0
        %5232 = vmatpush.bf16.xpose.msra.mxu0 0
        %5233 = vmatpush.bf16.xpose.msra.mxu0 0
        %5234 = vmatpush.bf16.xpose.msra.mxu0 0
        %5235 = vmatpush.bf16.xpose.msra.mxu0 0
        %5236 = vmatpush.bf16.xpose.msra.mxu0 0
        %5237 = vmatpush.bf16.xpose.msra.mxu0 %v5228
        %5238 = vmatmul.bf16.gmra.mxu0 %v5225
        %v5239 = vpop.f32.mrf.mxu0
        %v5240 = vadd.f32 0.0, %v5239
        %v5241 = vpop.f32.mrf.mxu0
        %5242 = vdwg.mxu0
        %v5243 = vmul.f32 %v5240, 0.35355338
        %v5244 = vadd.f32 %v5243, %v4986
        %v5245 = vsel %vm5066, %v5244, -inf
        %5246 = vmax.xlane.f32.xlu0 %v5245
        %v5247 = vpop.xlane.xlu0 %5246
        %v5248 = vsub.f32 %v5244, %v5247
        %v5249 = vmul.f32 %v5248, 1.442695
        %v5250 = vpow.pop %v5249
        %v5251 = vsel %vm5066, %v5250, 0.0
        %5252 = vadd.xlane.f32.xlu0 %v5251
        %v5253 = vpop.xlane.xlu0 %5252
        %v5254 = vrcp.pop %v5253
        %v5255 = vmul.f32 %v5250, %v5254
        %v5256 = vpack.c.bf16 %v5255, %v5255
        %5257 = vrot.lane.b32.xlu0 %v5041, 40
        %v5258 = vpop.permute.xlu0 %5257
        %v5260 = vsel %vm5081, %v5256, 0
        %v5263 = vand.u32 %v5258, %v5087
        %5265 = vmatpush.bf16.msra.mxu0 0
        %5266 = vmatpush.bf16.msra.mxu0 0
        %5267 = vmatpush.bf16.msra.mxu0 0
        %5268 = vmatpush.bf16.msra.mxu0 0
        %5269 = vmatpush.bf16.msra.mxu0 0
        %5270 = vmatpush.bf16.msra.mxu0 0
        %5271 = vmatpush.bf16.msra.mxu0 0
        %5272 = vmatpush.bf16.msra.mxu0 %v5263
        %5273 = vmatmul.bf16.gmra.mxu0 %v5260
        %v5274 = vpop.f32.mrf.mxu0
        %v5275 = vadd.f32 0.0, %v5274
        %v5276 = vpop.f32.mrf.mxu0
        %5277 = vdwg.mxu0
        %5279 = vrot.lane.b32.xlu0 %v5159, 8
        %v5280 = vpop.permute.xlu0 %5279
        %5283 = vrot.lane.b32.xlu0 %v5217, 16
        %v5284 = vpop.permute.xlu0 %5283
        %5287 = vrot.lane.b32.xlu0 %v5275, 24
        %v5288 = vpop.permute.xlu0 %5287
        %v5290 = vsel %vm3258, %v5101, %v5280
        %v5291 = vsel %vm3930, %v5290, %v5284
        %v5292 = vsel %vm3490, %v5291, %v5288
        %v5293 = vpack.c.bf16 %v5292, %v5292
        %v5294 = vpack.c.bf16 %v3064, %v3063
        %v5295 = vpack.c.bf16 %v3066, %v3065
        %v5297 = vperm.slane %v3061, 0
        %v5300 = vsel %vm3329, %v5293, 0
        %5302 = vmatpush.bf16.msra.mxu0 0
        %5303 = vmatpush.bf16.msra.mxu0 0
        %5304 = vmatpush.bf16.msra.mxu0 0
        %5305 = vmatpush.bf16.msra.mxu0 0
        %5306 = vmatpush.bf16.msra.mxu0 0
        %5307 = vmatpush.bf16.msra.mxu0 0
        %5308 = vmatpush.bf16.msra.mxu0 %v5295
        %5309 = vmatpush.bf16.msra.mxu0 %v5294
        %5310 = vmatmul.bf16.gmra.mxu0 %v5300
        %v5311 = vpop.f32.mrf.mxu0
        %v5312 = vadd.f32 %v5297, %v5311
        %v5313 = vpop.f32.mrf.mxu0
        %5314 = vdwg.mxu0
        %v5315 = vadd.f32 %v4987, %v5312
        %v5316 = vsel %vm4988, %v5315, 0.0
        %5317 = vadd.xlane.f32.xlu0 %v5316
        %v5318 = vpop.xlane.xlu0 %5317
        %v5319 = vmul.f32 %v5318, %v3345
        %v5320 = vsub.f32 %v5315, %v5319
        %v5321 = vmul.f32 %v5320, %v5320
        %v5322 = vsel %vm4988, %v5321, 0.0
        %5323 = vadd.xlane.f32.xlu0 %v5322
        %v5324 = vpop.xlane.xlu0 %5323
        %v5325 = vmul.f32 %v5324, %v3345
        %v5326 = vadd.f32 %v5325, 1e-06
        %v5327 = vrsqrt.pop %v5326
        %v5328 = vmul.f32 %v5327, %v5326
        %v5329 = vmul.f32 %v5328, %v5327
        %v5330 = vmul.f32 0.5, %v5329
        %v5331 = vsub.f32 1.5, %v5330
        %v5332 = vmul.f32 %v5327, %v5331
        %vm5333 = vweird.f32 %v5326
        %vm5334 = vweird.f32 %v5327
        %vm5335 = vmor %vm5333, %vm5334
        %v5336 = vsel %vm5335, %v5327, %v5332
        %v5337 = vmul.f32 %v5320, %v5336
        %v5339 = vperm.slane %v3058, 0
        %v5341 = vmul.f32 %v5337, %v5339
        %v5343 = vperm.slane %v3057, 0
        %v5345 = vadd.f32 %v5341, %v5343
        %v5346 = vpack.c.bf16 %v5345, %v5345
        %v5347 = vpack.c.bf16 %v3038, %v3037
        %v5348 = vpack.c.bf16 %v3040, %v3039
        %v5350 = vperm.slane %v3028, 0
        %v5353 = vsel %vm3329, %v5346, 0
        %5355 = vmatpush.bf16.msra.mxu0 0
        %5356 = vmatpush.bf16.msra.mxu0 0
        %5357 = vmatpush.bf16.msra.mxu0 0
        %5358 = vmatpush.bf16.msra.mxu0 0
        %5359 = vmatpush.bf16.msra.mxu0 0
        %5360 = vmatpush.bf16.msra.mxu0 0
        %5361 = vmatpush.bf16.msra.mxu0 %v5348
        %5362 = vmatpush.bf16.msra.mxu0 %v5347
        %5363 = vmatmul.bf16.gmra.mxu0 %v5353
        %v5364 = vpop.f32.mrf.mxu0
        %v5365 = vadd.f32 %v5350, %v5364
        %v5366 = vpop.f32.mrf.mxu0
        %5367 = vdwg.mxu0
        %v5368 = vpack.c.bf16 %v4975, %v4974
        %v5369 = vpack.c.bf16 %v4976, %v4976
        %v5370 = vpack.c.bf16 %v3030, %v3029
        %v5371 = vpack.c.bf16 %v3032, %v3031
        %v5373 = vperm.slane %v3026, 0
        %v5376 = vsel %vm3329, %v5368, 0
        %v5379 = vsel %vm3329, %v5369, 0
        %5381 = vmatpush.bf16.msra.mxu0 0
        %5382 = vmatpush.bf16.msra.mxu0 0
        %5383 = vmatpush.bf16.msra.mxu0 0
        %5384 = vmatpush.bf16.msra.mxu0 0
        %5385 = vmatpush.bf16.msra.mxu0 0
        %5386 = vmatpush.bf16.msra.mxu0 0
        %5387 = vmatpush.bf16.msra.mxu0 %v5371
        %5388 = vmatpush.bf16.msra.mxu0 %v5370
        %5389 = vmatmul.bf16.gmra.mxu0 %v5376
        %v5390 = vpop.f32.mrf.mxu0
        %v5391 = vadd.f32 %v5373, %v5390
        %v5392 = vpop.f32.mrf.mxu0
        %v5393 = vadd.f32 %v5373, %v5392
        %5394 = vmatmul.bf16.gmra.mxu0 %v5379
        %v5395 = vpop.f32.mrf.mxu0
        %v5396 = vadd.f32 %v5373, %v5395
        %v5397 = vpop.f32.mrf.mxu0
        %5398 = vdwg.mxu0
        %v5399 = vpack.c.bf16 %v5365, %v5365
        %v5400 = vpack.c.bf16 %v5393, %v5391
        %v5401 = vpack.c.bf16 %v5396, %v5396
        %v5403 = vsel %vm3258, %v5399, 0
        %v5406 = vsel %vm3258, %v5400, 0
        %v5409 = vsel %vm3258, %v5401, 0
        %5411 = vmatpush.bf16.xpose.msra.mxu0 0
        %5412 = vmatpush.bf16.xpose.msra.mxu0 0
        %5413 = vmatpush.bf16.xpose.msra.mxu0 0
        %5414 = vmatpush.bf16.xpose.msra.mxu0 0
        %5415 = vmatpush.bf16.xpose.msra.mxu0 0
        %5416 = vmatpush.bf16.xpose.msra.mxu0 0
        %5417 = vmatpush.bf16.xpose.msra.mxu0 %v5409
        %5418 = vmatpush.bf16.xpose.msra.mxu0 %v5406
        %5419 = vmatmul.bf16.gmra.mxu0 %v5403
        %v5420 = vpop.f32.mrf.mxu0
        %v5421 = vadd.f32 0.0, %v5420
        %v5422 = vpop.f32.mrf.mxu0
        %5423 = vdwg.mxu0
        %v5424 = vmul.f32 %v5421, 0.35355338
        %v5425 = vadd.f32 %v5424, %v3328
        %vm5426 = vcmask 194560
        %v5427 = vsel %vm5426, %v5425, -inf
        %5428 = vmax.xlane.f32.xlu0 %v5427
        %v5429 = vpop.xlane.xlu0 %5428
        %v5430 = vsub.f32 %v5425, %v5429
        %v5431 = vmul.f32 %v5430, 1.442695
        %v5432 = vpow.pop %v5431
        %v5433 = vsel %vm5426, %v5432, 0.0
        %5434 = vadd.xlane.f32.xlu0 %v5433
        %v5435 = vpop.xlane.xlu0 %5434
        %v5436 = vrcp.pop %v5435
        %v5437 = vmul.f32 %v5432, %v5436
        %v5438 = vpack.c.bf16 %v5437, %v5437
        %5441 = vrot.lane.b32.xlu0 %v5400, 96
        %v5442 = vpop.permute.xlu0 %5441
        %5443 = vrot.lane.b32.xlu0 %v5401, 96
        %v5444 = vpop.permute.xlu0 %5443
        %v5447 = vsel %vm3490, %v5438, 0
        %v5450 = vsel %vm3262, %v5444, 0
        %5452 = vmatpush.bf16.msra.mxu0 0
        %5453 = vmatpush.bf16.msra.mxu0 0
        %5454 = vmatpush.bf16.msra.mxu0 0
        %5455 = vmatpush.bf16.msra.mxu0 0
        %5456 = vmatpush.bf16.msra.mxu0 0
        %5457 = vmatpush.bf16.msra.mxu0 0
        %5458 = vmatpush.bf16.msra.mxu0 %v5450
        %5459 = vmatpush.bf16.msra.mxu0 %v5442
        %5460 = vmatmul.bf16.gmra.mxu0 %v5447
        %v5461 = vpop.f32.mrf.mxu0
        %v5462 = vadd.f32 0.0, %v5461
        %v5463 = vpop.f32.mrf.mxu0
        %5464 = vdwg.mxu0
        %5466 = vrot.lane.b32.xlu0 %v5399, 120
        %v5467 = vpop.permute.xlu0 %5466
        %5468 = vrot.lane.b32.xlu0 %v5400, 120
        %v5469 = vpop.permute.xlu0 %5468
        %5470 = vrot.lane.b32.xlu0 %v5401, 120
        %v5471 = vpop.permute.xlu0 %5470
        %v5473 = vsel %vm3258, %v5467, 0
        %v5476 = vsel %vm3258, %v5469, 0
        %v5479 = vsel %vm3258, %v5471, 0
        %5481 = vmatpush.bf16.xpose.msra.mxu0 0
        %5482 = vmatpush.bf16.xpose.msra.mxu0 0
        %5483 = vmatpush.bf16.xpose.msra.mxu0 0
        %5484 = vmatpush.bf16.xpose.msra.mxu0 0
        %5485 = vmatpush.bf16.xpose.msra.mxu0 0
        %5486 = vmatpush.bf16.xpose.msra.mxu0 0
        %5487 = vmatpush.bf16.xpose.msra.mxu0 %v5479
        %5488 = vmatpush.bf16.xpose.msra.mxu0 %v5476
        %5489 = vmatmul.bf16.gmra.mxu0 %v5473
        %v5490 = vpop.f32.mrf.mxu0
        %v5491 = vadd.f32 0.0, %v5490
        %v5492 = vpop.f32.mrf.mxu0
        %5493 = vdwg.mxu0
        %v5494 = vmul.f32 %v5491, 0.35355338
        %v5495 = vadd.f32 %v5494, %v3328
        %v5496 = vsel %vm5426, %v5495, -inf
        %5497 = vmax.xlane.f32.xlu0 %v5496
        %v5498 = vpop.xlane.xlu0 %5497
        %v5499 = vsub.f32 %v5495, %v5498
        %v5500 = vmul.f32 %v5499, 1.442695
        %v5501 = vpow.pop %v5500
        %v5502 = vsel %vm5426, %v5501, 0.0
        %5503 = vadd.xlane.f32.xlu0 %v5502
        %v5504 = vpop.xlane.xlu0 %5503
        %v5505 = vrcp.pop %v5504
        %v5506 = vmul.f32 %v5501, %v5505
        %v5507 = vpack.c.bf16 %v5506, %v5506
        %5508 = vrot.lane.b32.xlu0 %v5400, 88
        %v5509 = vpop.permute.xlu0 %5508
        %5510 = vrot.lane.b32.xlu0 %v5401, 88
        %v5511 = vpop.permute.xlu0 %5510
        %v5514 = vsel %vm3490, %v5507, 0
        %v5517 = vsel %vm3262, %v5511, 0
        %5519 = vmatpush.bf16.msra.mxu0 0
        %5520 = vmatpush.bf16.msra.mxu0 0
        %5521 = vmatpush.bf16.msra.mxu0 0
        %5522 = vmatpush.bf16.msra.mxu0 0
        %5523 = vmatpush.bf16.msra.mxu0 0
        %5524 = vmatpush.bf16.msra.mxu0 0
        %5525 = vmatpush.bf16.msra.mxu0 %v5517
        %5526 = vmatpush.bf16.msra.mxu0 %v5509
        %5527 = vmatmul.bf16.gmra.mxu0 %v5514
        %v5528 = vpop.f32.mrf.mxu0
        %v5529 = vadd.f32 0.0, %v5528
        %v5530 = vpop.f32.mrf.mxu0
        %5531 = vdwg.mxu0
        %5532 = vrot.lane.b32.xlu0 %v5399, 112
        %v5533 = vpop.permute.xlu0 %5532
        %5534 = vrot.lane.b32.xlu0 %v5400, 112
        %v5535 = vpop.permute.xlu0 %5534
        %5536 = vrot.lane.b32.xlu0 %v5401, 112
        %v5537 = vpop.permute.xlu0 %5536
        %v5539 = vsel %vm3258, %v5533, 0
        %v5542 = vsel %vm3258, %v5535, 0
        %v5545 = vsel %vm3258, %v5537, 0
        %5547 = vmatpush.bf16.xpose.msra.mxu0 0
        %5548 = vmatpush.bf16.xpose.msra.mxu0 0
        %5549 = vmatpush.bf16.xpose.msra.mxu0 0
        %5550 = vmatpush.bf16.xpose.msra.mxu0 0
        %5551 = vmatpush.bf16.xpose.msra.mxu0 0
        %5552 = vmatpush.bf16.xpose.msra.mxu0 0
        %5553 = vmatpush.bf16.xpose.msra.mxu0 %v5545
        %5554 = vmatpush.bf16.xpose.msra.mxu0 %v5542
        %5555 = vmatmul.bf16.gmra.mxu0 %v5539
        %v5556 = vpop.f32.mrf.mxu0
        %v5557 = vadd.f32 0.0, %v5556
        %v5558 = vpop.f32.mrf.mxu0
        %5559 = vdwg.mxu0
        %v5560 = vmul.f32 %v5557, 0.35355338
        %v5561 = vadd.f32 %v5560, %v3328
        %v5562 = vsel %vm5426, %v5561, -inf
        %5563 = vmax.xlane.f32.xlu0 %v5562
        %v5564 = vpop.xlane.xlu0 %5563
        %v5565 = vsub.f32 %v5561, %v5564
        %v5566 = vmul.f32 %v5565, 1.442695
        %v5567 = vpow.pop %v5566
        %v5568 = vsel %vm5426, %v5567, 0.0
        %5569 = vadd.xlane.f32.xlu0 %v5568
        %v5570 = vpop.xlane.xlu0 %5569
        %v5571 = vrcp.pop %v5570
        %v5572 = vmul.f32 %v5567, %v5571
        %v5573 = vpack.c.bf16 %v5572, %v5572
        %5574 = vrot.lane.b32.xlu0 %v5400, 80
        %v5575 = vpop.permute.xlu0 %5574
        %5576 = vrot.lane.b32.xlu0 %v5401, 80
        %v5577 = vpop.permute.xlu0 %5576
        %v5580 = vsel %vm3490, %v5573, 0
        %v5583 = vsel %vm3262, %v5577, 0
        %5585 = vmatpush.bf16.msra.mxu0 0
        %5586 = vmatpush.bf16.msra.mxu0 0
        %5587 = vmatpush.bf16.msra.mxu0 0
        %5588 = vmatpush.bf16.msra.mxu0 0
        %5589 = vmatpush.bf16.msra.mxu0 0
        %5590 = vmatpush.bf16.msra.mxu0 0
        %5591 = vmatpush.bf16.msra.mxu0 %v5583
        %5592 = vmatpush.bf16.msra.mxu0 %v5575
        %5593 = vmatmul.bf16.gmra.mxu0 %v5580
        %v5594 = vpop.f32.mrf.mxu0
        %v5595 = vadd.f32 0.0, %v5594
        %v5596 = vpop.f32.mrf.mxu0
        %5597 = vdwg.mxu0
        %5598 = vrot.lane.b32.xlu0 %v5399, 104
        %v5599 = vpop.permute.xlu0 %5598
        %5600 = vrot.lane.b32.xlu0 %v5400, 104
        %v5601 = vpop.permute.xlu0 %5600
        %5602 = vrot.lane.b32.xlu0 %v5401, 104
        %v5603 = vpop.permute.xlu0 %5602
        %v5605 = vsel %vm3258, %v5599, 0
        %v5608 = vsel %vm3258, %v5601, 0
        %v5611 = vsel %vm3258, %v5603, 0
        %5613 = vmatpush.bf16.xpose.msra.mxu0 0
        %5614 = vmatpush.bf16.xpose.msra.mxu0 0
        %5615 = vmatpush.bf16.xpose.msra.mxu0 0
        %5616 = vmatpush.bf16.xpose.msra.mxu0 0
        %5617 = vmatpush.bf16.xpose.msra.mxu0 0
        %5618 = vmatpush.bf16.xpose.msra.mxu0 0
        %5619 = vmatpush.bf16.xpose.msra.mxu0 %v5611
        %5620 = vmatpush.bf16.xpose.msra.mxu0 %v5608
        %5621 = vmatmul.bf16.gmra.mxu0 %v5605
        %v5622 = vpop.f32.mrf.mxu0
        %v5623 = vadd.f32 0.0, %v5622
        %v5624 = vpop.f32.mrf.mxu0
        %5625 = vdwg.mxu0
        %v5626 = vmul.f32 %v5623, 0.35355338
        %v5627 = vadd.f32 %v5626, %v3328
        %v5628 = vsel %vm5426, %v5627, -inf
        %5629 = vmax.xlane.f32.xlu0 %v5628
        %v5630 = vpop.xlane.xlu0 %5629
        %v5631 = vsub.f32 %v5627, %v5630
        %v5632 = vmul.f32 %v5631, 1.442695
        %v5633 = vpow.pop %v5632
        %v5634 = vsel %vm5426, %v5633, 0.0
        %5635 = vadd.xlane.f32.xlu0 %v5634
        %v5636 = vpop.xlane.xlu0 %5635
        %v5637 = vrcp.pop %v5636
        %v5638 = vmul.f32 %v5633, %v5637
        %v5639 = vpack.c.bf16 %v5638, %v5638
        %5640 = vrot.lane.b32.xlu0 %v5400, 72
        %v5641 = vpop.permute.xlu0 %5640
        %5642 = vrot.lane.b32.xlu0 %v5401, 72
        %v5643 = vpop.permute.xlu0 %5642
        %v5646 = vsel %vm3490, %v5639, 0
        %v5649 = vsel %vm3262, %v5643, 0
        %5651 = vmatpush.bf16.msra.mxu0 0
        %5652 = vmatpush.bf16.msra.mxu0 0
        %5653 = vmatpush.bf16.msra.mxu0 0
        %5654 = vmatpush.bf16.msra.mxu0 0
        %5655 = vmatpush.bf16.msra.mxu0 0
        %5656 = vmatpush.bf16.msra.mxu0 0
        %5657 = vmatpush.bf16.msra.mxu0 %v5649
        %5658 = vmatpush.bf16.msra.mxu0 %v5641
        %5659 = vmatmul.bf16.gmra.mxu0 %v5646
        %v5660 = vpop.f32.mrf.mxu0
        %v5661 = vadd.f32 0.0, %v5660
        %v5662 = vpop.f32.mrf.mxu0
        %5663 = vdwg.mxu0
        %5665 = vrot.lane.b32.xlu0 %v5529, 8
        %v5666 = vpop.permute.xlu0 %5665
        %5669 = vrot.lane.b32.xlu0 %v5595, 16
        %v5670 = vpop.permute.xlu0 %5669
        %5673 = vrot.lane.b32.xlu0 %v5661, 24
        %v5674 = vpop.permute.xlu0 %5673
        %v5676 = vsel %vm3258, %v5462, %v5666
        %v5677 = vsel %vm3930, %v5676, %v5670
        %v5678 = vsel %vm3490, %v5677, %v5674
        %v5679 = vpack.c.bf16 %v5678, %v5678
        %v5680 = vpack.c.bf16 %v3034, %v3033
        %v5681 = vpack.c.bf16 %v3036, %v3035
        %v5683 = vperm.slane %v3027, 0
        %v5686 = vsel %vm3329, %v5679, 0
        %5688 = vmatpush.bf16.msra.mxu0 0
        %5689 = vmatpush.bf16.msra.mxu0 0
        %5690 = vmatpush.bf16.msra.mxu0 0
        %5691 = vmatpush.bf16.msra.mxu0 0
        %5692 = vmatpush.bf16.msra.mxu0 0
        %5693 = vmatpush.bf16.msra.mxu0 0
        %5694 = vmatpush.bf16.msra.mxu0 %v5681
        %5695 = vmatpush.bf16.msra.mxu0 %v5680
        %5696 = vmatmul.bf16.gmra.mxu0 %v5686
        %v5697 = vpop.f32.mrf.mxu0
        %v5698 = vadd.f32 %v5683, %v5697
        %v5699 = vpop.f32.mrf.mxu0
        %5700 = vdwg.mxu0
        %v5701 = vadd.f32 %v5315, %v5698
        %v5702 = vsel %vm4988, %v5701, 0.0
        %5703 = vadd.xlane.f32.xlu0 %v5702
        %v5704 = vpop.xlane.xlu0 %5703
        %v5705 = vmul.f32 %v5704, %v3345
        %v5706 = vsub.f32 %v5701, %v5705
        %v5707 = vmul.f32 %v5706, %v5706
        %v5708 = vsel %vm4988, %v5707, 0.0
        %5709 = vadd.xlane.f32.xlu0 %v5708
        %v5710 = vpop.xlane.xlu0 %5709
        %v5711 = vmul.f32 %v5710, %v3345
        %v5712 = vadd.f32 %v5711, 1e-06
        %v5713 = vrsqrt.pop %v5712
        %v5714 = vmul.f32 %v5713, %v5712
        %v5715 = vmul.f32 %v5714, %v5713
        %v5716 = vmul.f32 0.5, %v5715
        %v5717 = vsub.f32 1.5, %v5716
        %v5718 = vmul.f32 %v5713, %v5717
        %vm5719 = vweird.f32 %v5712
        %vm5720 = vweird.f32 %v5713
        %vm5721 = vmor %vm5719, %vm5720
        %v5722 = vsel %vm5721, %v5713, %v5718
        %v5723 = vmul.f32 %v5706, %v5722
        %v5725 = vperm.slane %v3060, 0
        %v5727 = vmul.f32 %v5723, %v5725
        %v5729 = vperm.slane %v3059, 0
        %v5731 = vadd.f32 %v5727, %v5729
        %v5732 = vpack.c.bf16 %v5731, %v5731
        %v5733 = vpack.c.bf16 %v3044, %v3043
        %v5734 = vpack.c.bf16 %v3046, %v3045
        %v5736 = vperm.slane %v3041, 0
        %v5739 = vsel %vm3329, %v5732, 0
        %5741 = vmatpush.bf16.msra.mxu0 0
        %5742 = vmatpush.bf16.msra.mxu0 0
        %5743 = vmatpush.bf16.msra.mxu0 0
        %5744 = vmatpush.bf16.msra.mxu0 0
        %5745 = vmatpush.bf16.msra.mxu0 0
        %5746 = vmatpush.bf16.msra.mxu0 0
        %5747 = vmatpush.bf16.msra.mxu0 %v5734
        %5748 = vmatpush.bf16.msra.mxu0 %v5733
        %5749 = vmatmul.bf16.gmra.mxu0 %v5739
        %v5750 = vpop.f32.mrf.mxu0
        %v5751 = vadd.f32 %v5736, %v5750
        %v5752 = vpop.f32.mrf.mxu0
        %5753 = vdwg.mxu0
        %v5754 = vmax.f32 %v5751, 0.0
        %v5755 = vpack.c.bf16 %v5754, %v5754
        %v5756 = vpack.c.bf16 %v3048, %v3047
        %v5757 = vpack.c.bf16 %v3050, %v3049
        %v5758 = vpack.c.bf16 %v3052, %v3051
        %v5759 = vpack.c.bf16 %v3054, %v3053
        %v5761 = vperm.slane %v3042, 0
        %v5764 = vsel %vm3217, %v5755, 0
        %5766 = vmatpush.bf16.msra.mxu0 0
        %5767 = vmatpush.bf16.msra.mxu0 0
        %5768 = vmatpush.bf16.msra.mxu0 0
        %5769 = vmatpush.bf16.msra.mxu0 0
        %5770 = vmatpush.bf16.msra.mxu0 %v5759
        %5771 = vmatpush.bf16.msra.mxu0 %v5758
        %5772 = vmatpush.bf16.msra.mxu0 %v5757
        %5773 = vmatpush.bf16.msra.mxu0 %v5756
        %5774 = vmatmul.bf16.gmra.mxu0 %v5764
        %v5775 = vpop.f32.mrf.mxu0
        %v5776 = vadd.f32 %v5761, %v5775
        %v5777 = vpop.f32.mrf.mxu0
        %5778 = vdwg.mxu0
        %v5779 = vadd.f32 %v5701, %v5776
        %v5780 = vsel %vm4988, %v5779, 0.0
        %5781 = vadd.xlane.f32.xlu0 %v5780
        %v5782 = vpop.xlane.xlu0 %5781
        %v5783 = vmul.f32 %v5782, %v3345
        %v5784 = vsub.f32 %v5779, %v5783
        %v5785 = vmul.f32 %v5784, %v5784
        %v5786 = vsel %vm4988, %v5785, 0.0
        %5787 = vadd.xlane.f32.xlu0 %v5786
        %v5788 = vpop.xlane.xlu0 %5787
        %v5789 = vmul.f32 %v5788, %v3345
        %v5790 = vadd.f32 %v5789, 1e-06
        %v5791 = vrsqrt.pop %v5790
        %v5792 = vmul.f32 %v5791, %v5790
        %v5793 = vmul.f32 %v5792, %v5791
        %v5794 = vmul.f32 0.5, %v5793
        %v5795 = vsub.f32 1.5, %v5794
        %v5796 = vmul.f32 %v5791, %v5795
        %vm5797 = vweird.f32 %v5790
        %vm5798 = vweird.f32 %v5791
        %vm5799 = vmor %vm5797, %vm5798
        %v5800 = vsel %vm5799, %v5791, %v5796
        %v5801 = vmul.f32 %v5784, %v5800
        %v5803 = vperm.slane %v3101, 0
        %v5805 = vmul.f32 %v5801, %v5803
        %v5807 = vperm.slane %v3100, 0
        %v5809 = vadd.f32 %v5805, %v5807
        %v5810 = vpack.c.bf16 %v5809, %v5809
        %v5811 = vpack.c.bf16 %v3113, %v3112
        %v5812 = vpack.c.bf16 %v3115, %v3114
        %v5814 = vperm.slane %v3107, 0
        %v5817 = vsel %vm3329, %v5810, 0
        %5819 = vmatpush.bf16.msra.mxu0 0
        %5820 = vmatpush.bf16.msra.mxu0 0
        %5821 = vmatpush.bf16.msra.mxu0 0
        %5822 = vmatpush.bf16.msra.mxu0 0
        %5823 = vmatpush.bf16.msra.mxu0 0
        %5824 = vmatpush.bf16.msra.mxu0 0
        %5825 = vmatpush.bf16.msra.mxu0 %v5812
        %5826 = vmatpush.bf16.msra.mxu0 %v5811
        %5827 = vmatmul.bf16.gmra.mxu0 %v5817
        %v5828 = vpop.f32.mrf.mxu0
        %v5829 = vadd.f32 %v5814, %v5828
        %v5830 = vpop.f32.mrf.mxu0
        %5831 = vdwg.mxu0
        %v5832 = vpack.c.bf16 %v5829, %v5829
        %5834 = vrot.lane.b32.xlu0 %v5832, 96
        %v5835 = vpop.permute.xlu0 %5834
        %v5837 = vsel %vm3258, %v5832, 0
        %v5840 = vsel %vm3258, %v5835, 0
        %5842 = vmatpush.bf16.xpose.msra.mxu0 0
        %5843 = vmatpush.bf16.xpose.msra.mxu0 0
        %5844 = vmatpush.bf16.xpose.msra.mxu0 0
        %5845 = vmatpush.bf16.xpose.msra.mxu0 0
        %5846 = vmatpush.bf16.xpose.msra.mxu0 0
        %5847 = vmatpush.bf16.xpose.msra.mxu0 0
        %5848 = vmatpush.bf16.xpose.msra.mxu0 0
        %5849 = vmatpush.bf16.xpose.msra.mxu0 %v5840
        %5850 = vmatmul.bf16.gmra.mxu0 %v5837
        %v5851 = vpop.f32.mrf.mxu0
        %v5852 = vadd.f32 0.0, %v5851
        %v5853 = vpop.f32.mrf.mxu0
        %5854 = vdwg.mxu0
        %v5855 = vmul.f32 %v5852, 0.35355338
        %v5856 = vadd.f32 %v5855, %v4986
        %v5857 = vsel %vm5066, %v5856, -inf
        %5858 = vmax.xlane.f32.xlu0 %v5857
        %v5859 = vpop.xlane.xlu0 %5858
        %v5860 = vsub.f32 %v5856, %v5859
        %v5861 = vmul.f32 %v5860, 1.442695
        %v5862 = vpow.pop %v5861
        %v5863 = vsel %vm5066, %v5862, 0.0
        %5864 = vadd.xlane.f32.xlu0 %v5863
        %v5865 = vpop.xlane.xlu0 %5864
        %v5866 = vrcp.pop %v5865
        %v5867 = vmul.f32 %v5862, %v5866
        %v5868 = vpack.c.bf16 %v5867, %v5867
        %5869 = vrot.lane.b32.xlu0 %v5832, 64
        %v5870 = vpop.permute.xlu0 %5869
        %v5872 = vsel %vm5081, %v5868, 0
        %v5875 = vand.u32 %v5870, %v5087
        %5877 = vmatpush.bf16.msra.mxu0 0
        %5878 = vmatpush.bf16.msra.mxu0 0
        %5879 = vmatpush.bf16.msra.mxu0 0
        %5880 = vmatpush.bf16.msra.mxu0 0
        %5881 = vmatpush.bf16.msra.mxu0 0
        %5882 = vmatpush.bf16.msra.mxu0 0
        %5883 = vmatpush.bf16.msra.mxu0 0
        %5884 = vmatpush.bf16.msra.mxu0 %v5875
        %5885 = vmatmul.bf16.gmra.mxu0 %v5872
        %v5886 = vpop.f32.mrf.mxu0
        %v5887 = vadd.f32 0.0, %v5886
        %v5888 = vpop.f32.mrf.mxu0
        %5889 = vdwg.mxu0
        %5890 = vrot.lane.b32.xlu0 %v5832, 120
        %v5891 = vpop.permute.xlu0 %5890
        %5892 = vrot.lane.b32.xlu0 %v5832, 88
        %v5893 = vpop.permute.xlu0 %5892
        %v5895 = vsel %vm3258, %v5891, 0
        %v5898 = vsel %vm3258, %v5893, 0
        %5900 = vmatpush.bf16.xpose.msra.mxu0 0
        %5901 = vmatpush.bf16.xpose.msra.mxu0 0
        %5902 = vmatpush.bf16.xpose.msra.mxu0 0
        %5903 = vmatpush.bf16.xpose.msra.mxu0 0
        %5904 = vmatpush.bf16.xpose.msra.mxu0 0
        %5905 = vmatpush.bf16.xpose.msra.mxu0 0
        %5906 = vmatpush.bf16.xpose.msra.mxu0 0
        %5907 = vmatpush.bf16.xpose.msra.mxu0 %v5898
        %5908 = vmatmul.bf16.gmra.mxu0 %v5895
        %v5909 = vpop.f32.mrf.mxu0
        %v5910 = vadd.f32 0.0, %v5909
        %v5911 = vpop.f32.mrf.mxu0
        %5912 = vdwg.mxu0
        %v5913 = vmul.f32 %v5910, 0.35355338
        %v5914 = vadd.f32 %v5913, %v4986
        %v5915 = vsel %vm5066, %v5914, -inf
        %5916 = vmax.xlane.f32.xlu0 %v5915
        %v5917 = vpop.xlane.xlu0 %5916
        %v5918 = vsub.f32 %v5914, %v5917
        %v5919 = vmul.f32 %v5918, 1.442695
        %v5920 = vpow.pop %v5919
        %v5921 = vsel %vm5066, %v5920, 0.0
        %5922 = vadd.xlane.f32.xlu0 %v5921
        %v5923 = vpop.xlane.xlu0 %5922
        %v5924 = vrcp.pop %v5923
        %v5925 = vmul.f32 %v5920, %v5924
        %v5926 = vpack.c.bf16 %v5925, %v5925
        %5927 = vrot.lane.b32.xlu0 %v5832, 56
        %v5928 = vpop.permute.xlu0 %5927
        %v5930 = vsel %vm5081, %v5926, 0
        %v5933 = vand.u32 %v5928, %v5087
        %5935 = vmatpush.bf16.msra.mxu0 0
        %5936 = vmatpush.bf16.msra.mxu0 0
        %5937 = vmatpush.bf16.msra.mxu0 0
        %5938 = vmatpush.bf16.msra.mxu0 0
        %5939 = vmatpush.bf16.msra.mxu0 0
        %5940 = vmatpush.bf16.msra.mxu0 0
        %5941 = vmatpush.bf16.msra.mxu0 0
        %5942 = vmatpush.bf16.msra.mxu0 %v5933
        %5943 = vmatmul.bf16.gmra.mxu0 %v5930
        %v5944 = vpop.f32.mrf.mxu0
        %v5945 = vadd.f32 0.0, %v5944
        %v5946 = vpop.f32.mrf.mxu0
        %5947 = vdwg.mxu0
        %5948 = vrot.lane.b32.xlu0 %v5832, 112
        %v5949 = vpop.permute.xlu0 %5948
        %5950 = vrot.lane.b32.xlu0 %v5832, 80
        %v5951 = vpop.permute.xlu0 %5950
        %v5953 = vsel %vm3258, %v5949, 0
        %v5956 = vsel %vm3258, %v5951, 0
        %5958 = vmatpush.bf16.xpose.msra.mxu0 0
        %5959 = vmatpush.bf16.xpose.msra.mxu0 0
        %5960 = vmatpush.bf16.xpose.msra.mxu0 0
        %5961 = vmatpush.bf16.xpose.msra.mxu0 0
        %5962 = vmatpush.bf16.xpose.msra.mxu0 0
        %5963 = vmatpush.bf16.xpose.msra.mxu0 0
        %5964 = vmatpush.bf16.xpose.msra.mxu0 0
        %5965 = vmatpush.bf16.xpose.msra.mxu0 %v5956
        %5966 = vmatmul.bf16.gmra.mxu0 %v5953
        %v5967 = vpop.f32.mrf.mxu0
        %v5968 = vadd.f32 0.0, %v5967
        %v5969 = vpop.f32.mrf.mxu0
        %5970 = vdwg.mxu0
        %v5971 = vmul.f32 %v5968, 0.35355338
        %v5972 = vadd.f32 %v5971, %v4986
        %v5973 = vsel %vm5066, %v5972, -inf
        %5974 = vmax.xlane.f32.xlu0 %v5973
        %v5975 = vpop.xlane.xlu0 %5974
        %v5976 = vsub.f32 %v5972, %v5975
        %v5977 = vmul.f32 %v5976, 1.442695
        %v5978 = vpow.pop %v5977
        %v5979 = vsel %vm5066, %v5978, 0.0
        %5980 = vadd.xlane.f32.xlu0 %v5979
        %v5981 = vpop.xlane.xlu0 %5980
        %v5982 = vrcp.pop %v5981
        %v5983 = vmul.f32 %v5978, %v5982
        %v5984 = vpack.c.bf16 %v5983, %v5983
        %5985 = vrot.lane.b32.xlu0 %v5832, 48
        %v5986 = vpop.permute.xlu0 %5985
        %v5988 = vsel %vm5081, %v5984, 0
        %v5991 = vand.u32 %v5986, %v5087
        %5993 = vmatpush.bf16.msra.mxu0 0
        %5994 = vmatpush.bf16.msra.mxu0 0
        %5995 = vmatpush.bf16.msra.mxu0 0
        %5996 = vmatpush.bf16.msra.mxu0 0
        %5997 = vmatpush.bf16.msra.mxu0 0
        %5998 = vmatpush.bf16.msra.mxu0 0
        %5999 = vmatpush.bf16.msra.mxu0 0
        %6000 = vmatpush.bf16.msra.mxu0 %v5991
        %6001 = vmatmul.bf16.gmra.mxu0 %v5988
        %v6002 = vpop.f32.mrf.mxu0
        %v6003 = vadd.f32 0.0, %v6002
        %v6004 = vpop.f32.mrf.mxu0
        %6005 = vdwg.mxu0
        %6006 = vrot.lane.b32.xlu0 %v5832, 104
        %v6007 = vpop.permute.xlu0 %6006
        %6008 = vrot.lane.b32.xlu0 %v5832, 72
        %v6009 = vpop.permute.xlu0 %6008
        %v6011 = vsel %vm3258, %v6007, 0
        %v6014 = vsel %vm3258, %v6009, 0
        %6016 = vmatpush.bf16.xpose.msra.mxu0 0
        %6017 = vmatpush.bf16.xpose.msra.mxu0 0
        %6018 = vmatpush.bf16.xpose.msra.mxu0 0
        %6019 = vmatpush.bf16.xpose.msra.mxu0 0
        %6020 = vmatpush.bf16.xpose.msra.mxu0 0
        %6021 = vmatpush.bf16.xpose.msra.mxu0 0
        %6022 = vmatpush.bf16.xpose.msra.mxu0 0
        %6023 = vmatpush.bf16.xpose.msra.mxu0 %v6014
        %6024 = vmatmul.bf16.gmra.mxu0 %v6011
        %v6025 = vpop.f32.mrf.mxu0
        %v6026 = vadd.f32 0.0, %v6025
        %v6027 = vpop.f32.mrf.mxu0
        %6028 = vdwg.mxu0
        %v6029 = vmul.f32 %v6026, 0.35355338
        %v6030 = vadd.f32 %v6029, %v4986
        %v6031 = vsel %vm5066, %v6030, -inf
        %6032 = vmax.xlane.f32.xlu0 %v6031
        %v6033 = vpop.xlane.xlu0 %6032
        %v6034 = vsub.f32 %v6030, %v6033
        %v6035 = vmul.f32 %v6034, 1.442695
        %v6036 = vpow.pop %v6035
        %v6037 = vsel %vm5066, %v6036, 0.0
        %6038 = vadd.xlane.f32.xlu0 %v6037
        %v6039 = vpop.xlane.xlu0 %6038
        %v6040 = vrcp.pop %v6039
        %v6041 = vmul.f32 %v6036, %v6040
        %v6042 = vpack.c.bf16 %v6041, %v6041
        %6043 = vrot.lane.b32.xlu0 %v5832, 40
        %v6044 = vpop.permute.xlu0 %6043
        %v6046 = vsel %vm5081, %v6042, 0
        %v6049 = vand.u32 %v6044, %v5087
        %6051 = vmatpush.bf16.msra.mxu0 0
        %6052 = vmatpush.bf16.msra.mxu0 0
        %6053 = vmatpush.bf16.msra.mxu0 0
        %6054 = vmatpush.bf16.msra.mxu0 0
        %6055 = vmatpush.bf16.msra.mxu0 0
        %6056 = vmatpush.bf16.msra.mxu0 0
        %6057 = vmatpush.bf16.msra.mxu0 0
        %6058 = vmatpush.bf16.msra.mxu0 %v6049
        %6059 = vmatmul.bf16.gmra.mxu0 %v6046
        %v6060 = vpop.f32.mrf.mxu0
        %v6061 = vadd.f32 0.0, %v6060
        %v6062 = vpop.f32.mrf.mxu0
        %6063 = vdwg.mxu0
        %6065 = vrot.lane.b32.xlu0 %v5945, 8
        %v6066 = vpop.permute.xlu0 %6065
        %6069 = vrot.lane.b32.xlu0 %v6003, 16
        %v6070 = vpop.permute.xlu0 %6069
        %6073 = vrot.lane.b32.xlu0 %v6061, 24
        %v6074 = vpop.permute.xlu0 %6073
        %v6076 = vsel %vm3258, %v5887, %v6066
        %v6077 = vsel %vm3930, %v6076, %v6070
        %v6078 = vsel %vm3490, %v6077, %v6074
        %v6079 = vpack.c.bf16 %v6078, %v6078
        %v6080 = vpack.c.bf16 %v3109, %v3108
        %v6081 = vpack.c.bf16 %v3111, %v3110
        %v6083 = vperm.slane %v3106, 0
        %v6086 = vsel %vm3329, %v6079, 0
        %6088 = vmatpush.bf16.msra.mxu0 0
        %6089 = vmatpush.bf16.msra.mxu0 0
        %6090 = vmatpush.bf16.msra.mxu0 0
        %6091 = vmatpush.bf16.msra.mxu0 0
        %6092 = vmatpush.bf16.msra.mxu0 0
        %6093 = vmatpush.bf16.msra.mxu0 0
        %6094 = vmatpush.bf16.msra.mxu0 %v6081
        %6095 = vmatpush.bf16.msra.mxu0 %v6080
        %6096 = vmatmul.bf16.gmra.mxu0 %v6086
        %v6097 = vpop.f32.mrf.mxu0
        %v6098 = vadd.f32 %v6083, %v6097
        %v6099 = vpop.f32.mrf.mxu0
        %6100 = vdwg.mxu0
        %v6101 = vadd.f32 %v5779, %v6098
        %v6102 = vsel %vm4988, %v6101, 0.0
        %6103 = vadd.xlane.f32.xlu0 %v6102
        %v6104 = vpop.xlane.xlu0 %6103
        %v6105 = vmul.f32 %v6104, %v3345
        %v6106 = vsub.f32 %v6101, %v6105
        %v6107 = vmul.f32 %v6106, %v6106
        %v6108 = vsel %vm4988, %v6107, 0.0
        %6109 = vadd.xlane.f32.xlu0 %v6108
        %v6110 = vpop.xlane.xlu0 %6109
        %v6111 = vmul.f32 %v6110, %v3345
        %v6112 = vadd.f32 %v6111, 1e-06
        %v6113 = vrsqrt.pop %v6112
        %v6114 = vmul.f32 %v6113, %v6112
        %v6115 = vmul.f32 %v6114, %v6113
        %v6116 = vmul.f32 0.5, %v6115
        %v6117 = vsub.f32 1.5, %v6116
        %v6118 = vmul.f32 %v6113, %v6117
        %vm6119 = vweird.f32 %v6112
        %vm6120 = vweird.f32 %v6113
        %vm6121 = vmor %vm6119, %vm6120
        %v6122 = vsel %vm6121, %v6113, %v6118
        %v6123 = vmul.f32 %v6106, %v6122
        %v6125 = vperm.slane %v3103, 0
        %v6127 = vmul.f32 %v6123, %v6125
        %v6129 = vperm.slane %v3102, 0
        %v6131 = vadd.f32 %v6127, %v6129
        %v6132 = vpack.c.bf16 %v6131, %v6131
        %v6133 = vpack.c.bf16 %v3083, %v3082
        %v6134 = vpack.c.bf16 %v3085, %v3084
        %v6136 = vperm.slane %v3073, 0
        %v6139 = vsel %vm3329, %v6132, 0
        %6141 = vmatpush.bf16.msra.mxu0 0
        %6142 = vmatpush.bf16.msra.mxu0 0
        %6143 = vmatpush.bf16.msra.mxu0 0
        %6144 = vmatpush.bf16.msra.mxu0 0
        %6145 = vmatpush.bf16.msra.mxu0 0
        %6146 = vmatpush.bf16.msra.mxu0 0
        %6147 = vmatpush.bf16.msra.mxu0 %v6134
        %6148 = vmatpush.bf16.msra.mxu0 %v6133
        %6149 = vmatmul.bf16.gmra.mxu0 %v6139
        %v6150 = vpop.f32.mrf.mxu0
        %v6151 = vadd.f32 %v6136, %v6150
        %v6152 = vpop.f32.mrf.mxu0
        %6153 = vdwg.mxu0
        %v6154 = vpack.c.bf16 %v3075, %v3074
        %v6155 = vpack.c.bf16 %v3077, %v3076
        %v6157 = vperm.slane %v3071, 0
        %6159 = vmatpush.bf16.msra.mxu0 0
        %6160 = vmatpush.bf16.msra.mxu0 0
        %6161 = vmatpush.bf16.msra.mxu0 0
        %6162 = vmatpush.bf16.msra.mxu0 0
        %6163 = vmatpush.bf16.msra.mxu0 0
        %6164 = vmatpush.bf16.msra.mxu0 0
        %6165 = vmatpush.bf16.msra.mxu0 %v6155
        %6166 = vmatpush.bf16.msra.mxu0 %v6154
        %6167 = vmatmul.bf16.gmra.mxu0 %v5376
        %v6168 = vpop.f32.mrf.mxu0
        %v6169 = vadd.f32 %v6157, %v6168
        %v6170 = vpop.f32.mrf.mxu0
        %v6171 = vadd.f32 %v6157, %v6170
        %6172 = vmatmul.bf16.gmra.mxu0 %v5379
        %v6173 = vpop.f32.mrf.mxu0
        %v6174 = vadd.f32 %v6157, %v6173
        %v6175 = vpop.f32.mrf.mxu0
        %6176 = vdwg.mxu0
        %v6177 = vpack.c.bf16 %v6151, %v6151
        %v6178 = vpack.c.bf16 %v6171, %v6169
        %v6179 = vpack.c.bf16 %v6174, %v6174
        %v6181 = vsel %vm3258, %v6177, 0
        %v6184 = vsel %vm3258, %v6178, 0
        %v6187 = vsel %vm3258, %v6179, 0
        %6189 = vmatpush.bf16.xpose.msra.mxu0 0
        %6190 = vmatpush.bf16.xpose.msra.mxu0 0
        %6191 = vmatpush.bf16.xpose.msra.mxu0 0
        %6192 = vmatpush.bf16.xpose.msra.mxu0 0
        %6193 = vmatpush.bf16.xpose.msra.mxu0 0
        %6194 = vmatpush.bf16.xpose.msra.mxu0 0
        %6195 = vmatpush.bf16.xpose.msra.mxu0 %v6187
        %6196 = vmatpush.bf16.xpose.msra.mxu0 %v6184
        %6197 = vmatmul.bf16.gmra.mxu0 %v6181
        %v6198 = vpop.f32.mrf.mxu0
        %v6199 = vadd.f32 0.0, %v6198
        %v6200 = vpop.f32.mrf.mxu0
        %6201 = vdwg.mxu0
        %v6202 = vmul.f32 %v6199, 0.35355338
        %v6203 = vadd.f32 %v6202, %v3328
        %v6204 = vsel %vm5426, %v6203, -inf
        %6205 = vmax.xlane.f32.xlu0 %v6204
        %v6206 = vpop.xlane.xlu0 %6205
        %v6207 = vsub.f32 %v6203, %v6206
        %v6208 = vmul.f32 %v6207, 1.442695
        %v6209 = vpow.pop %v6208
        %v6210 = vsel %vm5426, %v6209, 0.0
        %6211 = vadd.xlane.f32.xlu0 %v6210
        %v6212 = vpop.xlane.xlu0 %6211
        %v6213 = vrcp.pop %v6212
        %v6214 = vmul.f32 %v6209, %v6213
        %v6215 = vpack.c.bf16 %v6214, %v6214
        %6218 = vrot.lane.b32.xlu0 %v6178, 96
        %v6219 = vpop.permute.xlu0 %6218
        %6220 = vrot.lane.b32.xlu0 %v6179, 96
        %v6221 = vpop.permute.xlu0 %6220
        %v6224 = vsel %vm3490, %v6215, 0
        %v6227 = vsel %vm3262, %v6221, 0
        %6229 = vmatpush.bf16.msra.mxu0 0
        %6230 = vmatpush.bf16.msra.mxu0 0
        %6231 = vmatpush.bf16.msra.mxu0 0
        %6232 = vmatpush.bf16.msra.mxu0 0
        %6233 = vmatpush.bf16.msra.mxu0 0
        %6234 = vmatpush.bf16.msra.mxu0 0
        %6235 = vmatpush.bf16.msra.mxu0 %v6227
        %6236 = vmatpush.bf16.msra.mxu0 %v6219
        %6237 = vmatmul.bf16.gmra.mxu0 %v6224
        %v6238 = vpop.f32.mrf.mxu0
        %v6239 = vadd.f32 0.0, %v6238
        %v6240 = vpop.f32.mrf.mxu0
        %6241 = vdwg.mxu0
        %6243 = vrot.lane.b32.xlu0 %v6177, 120
        %v6244 = vpop.permute.xlu0 %6243
        %6245 = vrot.lane.b32.xlu0 %v6178, 120
        %v6246 = vpop.permute.xlu0 %6245
        %6247 = vrot.lane.b32.xlu0 %v6179, 120
        %v6248 = vpop.permute.xlu0 %6247
        %v6250 = vsel %vm3258, %v6244, 0
        %v6253 = vsel %vm3258, %v6246, 0
        %v6256 = vsel %vm3258, %v6248, 0
        %6258 = vmatpush.bf16.xpose.msra.mxu0 0
        %6259 = vmatpush.bf16.xpose.msra.mxu0 0
        %6260 = vmatpush.bf16.xpose.msra.mxu0 0
        %6261 = vmatpush.bf16.xpose.msra.mxu0 0
        %6262 = vmatpush.bf16.xpose.msra.mxu0 0
        %6263 = vmatpush.bf16.xpose.msra.mxu0 0
        %6264 = vmatpush.bf16.xpose.msra.mxu0 %v6256
        %6265 = vmatpush.bf16.xpose.msra.mxu0 %v6253
        %6266 = vmatmul.bf16.gmra.mxu0 %v6250
        %v6267 = vpop.f32.mrf.mxu0
        %v6268 = vadd.f32 0.0, %v6267
        %v6269 = vpop.f32.mrf.mxu0
        %6270 = vdwg.mxu0
        %v6271 = vmul.f32 %v6268, 0.35355338
        %v6272 = vadd.f32 %v6271, %v3328
        %v6273 = vsel %vm5426, %v6272, -inf
        %6274 = vmax.xlane.f32.xlu0 %v6273
        %v6275 = vpop.xlane.xlu0 %6274
        %v6276 = vsub.f32 %v6272, %v6275
        %v6277 = vmul.f32 %v6276, 1.442695
        %v6278 = vpow.pop %v6277
        %v6279 = vsel %vm5426, %v6278, 0.0
        %6280 = vadd.xlane.f32.xlu0 %v6279
        %v6281 = vpop.xlane.xlu0 %6280
        %v6282 = vrcp.pop %v6281
        %v6283 = vmul.f32 %v6278, %v6282
        %v6284 = vpack.c.bf16 %v6283, %v6283
        %6285 = vrot.lane.b32.xlu0 %v6178, 88
        %v6286 = vpop.permute.xlu0 %6285
        %6287 = vrot.lane.b32.xlu0 %v6179, 88
        %v6288 = vpop.permute.xlu0 %6287
        %v6291 = vsel %vm3490, %v6284, 0
        %v6294 = vsel %vm3262, %v6288, 0
        %6296 = vmatpush.bf16.msra.mxu0 0
        %6297 = vmatpush.bf16.msra.mxu0 0
        %6298 = vmatpush.bf16.msra.mxu0 0
        %6299 = vmatpush.bf16.msra.mxu0 0
        %6300 = vmatpush.bf16.msra.mxu0 0
        %6301 = vmatpush.bf16.msra.mxu0 0
        %6302 = vmatpush.bf16.msra.mxu0 %v6294
        %6303 = vmatpush.bf16.msra.mxu0 %v6286
        %6304 = vmatmul.bf16.gmra.mxu0 %v6291
        %v6305 = vpop.f32.mrf.mxu0
        %v6306 = vadd.f32 0.0, %v6305
        %v6307 = vpop.f32.mrf.mxu0
        %6308 = vdwg.mxu0
        %6309 = vrot.lane.b32.xlu0 %v6177, 112
        %v6310 = vpop.permute.xlu0 %6309
        %6311 = vrot.lane.b32.xlu0 %v6178, 112
        %v6312 = vpop.permute.xlu0 %6311
        %6313 = vrot.lane.b32.xlu0 %v6179, 112
        %v6314 = vpop.permute.xlu0 %6313
        %v6316 = vsel %vm3258, %v6310, 0
        %v6319 = vsel %vm3258, %v6312, 0
        %v6322 = vsel %vm3258, %v6314, 0
        %6324 = vmatpush.bf16.xpose.msra.mxu0 0
        %6325 = vmatpush.bf16.xpose.msra.mxu0 0
        %6326 = vmatpush.bf16.xpose.msra.mxu0 0
        %6327 = vmatpush.bf16.xpose.msra.mxu0 0
        %6328 = vmatpush.bf16.xpose.msra.mxu0 0
        %6329 = vmatpush.bf16.xpose.msra.mxu0 0
        %6330 = vmatpush.bf16.xpose.msra.mxu0 %v6322
        %6331 = vmatpush.bf16.xpose.msra.mxu0 %v6319
        %6332 = vmatmul.bf16.gmra.mxu0 %v6316
        %v6333 = vpop.f32.mrf.mxu0
        %v6334 = vadd.f32 0.0, %v6333
        %v6335 = vpop.f32.mrf.mxu0
        %6336 = vdwg.mxu0
        %v6337 = vmul.f32 %v6334, 0.35355338
        %v6338 = vadd.f32 %v6337, %v3328
        %v6339 = vsel %vm5426, %v6338, -inf
        %6340 = vmax.xlane.f32.xlu0 %v6339
        %v6341 = vpop.xlane.xlu0 %6340
        %v6342 = vsub.f32 %v6338, %v6341
        %v6343 = vmul.f32 %v6342, 1.442695
        %v6344 = vpow.pop %v6343
        %v6345 = vsel %vm5426, %v6344, 0.0
        %6346 = vadd.xlane.f32.xlu0 %v6345
        %v6347 = vpop.xlane.xlu0 %6346
        %v6348 = vrcp.pop %v6347
        %v6349 = vmul.f32 %v6344, %v6348
        %v6350 = vpack.c.bf16 %v6349, %v6349
        %6351 = vrot.lane.b32.xlu0 %v6178, 80
        %v6352 = vpop.permute.xlu0 %6351
        %6353 = vrot.lane.b32.xlu0 %v6179, 80
        %v6354 = vpop.permute.xlu0 %6353
        %v6357 = vsel %vm3490, %v6350, 0
        %v6360 = vsel %vm3262, %v6354, 0
        %6362 = vmatpush.bf16.msra.mxu0 0
        %6363 = vmatpush.bf16.msra.mxu0 0
        %6364 = vmatpush.bf16.msra.mxu0 0
        %6365 = vmatpush.bf16.msra.mxu0 0
        %6366 = vmatpush.bf16.msra.mxu0 0
        %6367 = vmatpush.bf16.msra.mxu0 0
        %6368 = vmatpush.bf16.msra.mxu0 %v6360
        %6369 = vmatpush.bf16.msra.mxu0 %v6352
        %6370 = vmatmul.bf16.gmra.mxu0 %v6357
        %v6371 = vpop.f32.mrf.mxu0
        %v6372 = vadd.f32 0.0, %v6371
        %v6373 = vpop.f32.mrf.mxu0
        %6374 = vdwg.mxu0
        %6375 = vrot.lane.b32.xlu0 %v6177, 104
        %v6376 = vpop.permute.xlu0 %6375
        %6377 = vrot.lane.b32.xlu0 %v6178, 104
        %v6378 = vpop.permute.xlu0 %6377
        %6379 = vrot.lane.b32.xlu0 %v6179, 104
        %v6380 = vpop.permute.xlu0 %6379
        %v6382 = vsel %vm3258, %v6376, 0
        %v6385 = vsel %vm3258, %v6378, 0
        %v6388 = vsel %vm3258, %v6380, 0
        %6390 = vmatpush.bf16.xpose.msra.mxu0 0
        %6391 = vmatpush.bf16.xpose.msra.mxu0 0
        %6392 = vmatpush.bf16.xpose.msra.mxu0 0
        %6393 = vmatpush.bf16.xpose.msra.mxu0 0
        %6394 = vmatpush.bf16.xpose.msra.mxu0 0
        %6395 = vmatpush.bf16.xpose.msra.mxu0 0
        %6396 = vmatpush.bf16.xpose.msra.mxu0 %v6388
        %6397 = vmatpush.bf16.xpose.msra.mxu0 %v6385
        %6398 = vmatmul.bf16.gmra.mxu0 %v6382
        %v6399 = vpop.f32.mrf.mxu0
        %v6400 = vadd.f32 0.0, %v6399
        %v6401 = vpop.f32.mrf.mxu0
        %6402 = vdwg.mxu0
        %v6403 = vmul.f32 %v6400, 0.35355338
        %v6404 = vadd.f32 %v6403, %v3328
        %v6405 = vsel %vm5426, %v6404, -inf
        %6406 = vmax.xlane.f32.xlu0 %v6405
        %v6407 = vpop.xlane.xlu0 %6406
        %v6408 = vsub.f32 %v6404, %v6407
        %v6409 = vmul.f32 %v6408, 1.442695
        %v6410 = vpow.pop %v6409
        %v6411 = vsel %vm5426, %v6410, 0.0
        %6412 = vadd.xlane.f32.xlu0 %v6411
        %v6413 = vpop.xlane.xlu0 %6412
        %v6414 = vrcp.pop %v6413
        %v6415 = vmul.f32 %v6410, %v6414
        %v6416 = vpack.c.bf16 %v6415, %v6415
        %6417 = vrot.lane.b32.xlu0 %v6178, 72
        %v6418 = vpop.permute.xlu0 %6417
        %6419 = vrot.lane.b32.xlu0 %v6179, 72
        %v6420 = vpop.permute.xlu0 %6419
        %v6423 = vsel %vm3490, %v6416, 0
        %v6426 = vsel %vm3262, %v6420, 0
        %6428 = vmatpush.bf16.msra.mxu0 0
        %6429 = vmatpush.bf16.msra.mxu0 0
        %6430 = vmatpush.bf16.msra.mxu0 0
        %6431 = vmatpush.bf16.msra.mxu0 0
        %6432 = vmatpush.bf16.msra.mxu0 0
        %6433 = vmatpush.bf16.msra.mxu0 0
        %6434 = vmatpush.bf16.msra.mxu0 %v6426
        %6435 = vmatpush.bf16.msra.mxu0 %v6418
        %6436 = vmatmul.bf16.gmra.mxu0 %v6423
        %v6437 = vpop.f32.mrf.mxu0
        %v6438 = vadd.f32 0.0, %v6437
        %v6439 = vpop.f32.mrf.mxu0
        %6440 = vdwg.mxu0
        %6442 = vrot.lane.b32.xlu0 %v6306, 8
        %v6443 = vpop.permute.xlu0 %6442
        %6446 = vrot.lane.b32.xlu0 %v6372, 16
        %v6447 = vpop.permute.xlu0 %6446
        %6450 = vrot.lane.b32.xlu0 %v6438, 24
        %v6451 = vpop.permute.xlu0 %6450
        %v6453 = vsel %vm3258, %v6239, %v6443
        %v6454 = vsel %vm3930, %v6453, %v6447
        %v6455 = vsel %vm3490, %v6454, %v6451
        %v6456 = vpack.c.bf16 %v6455, %v6455
        %v6457 = vpack.c.bf16 %v3079, %v3078
        %v6458 = vpack.c.bf16 %v3081, %v3080
        %v6460 = vperm.slane %v3072, 0
        %v6463 = vsel %vm3329, %v6456, 0
        %6465 = vmatpush.bf16.msra.mxu0 0
        %6466 = vmatpush.bf16.msra.mxu0 0
        %6467 = vmatpush.bf16.msra.mxu0 0
        %6468 = vmatpush.bf16.msra.mxu0 0
        %6469 = vmatpush.bf16.msra.mxu0 0
        %6470 = vmatpush.bf16.msra.mxu0 0
        %6471 = vmatpush.bf16.msra.mxu0 %v6458
        %6472 = vmatpush.bf16.msra.mxu0 %v6457
        %6473 = vmatmul.bf16.gmra.mxu0 %v6463
        %v6474 = vpop.f32.mrf.mxu0
        %v6475 = vadd.f32 %v6460, %v6474
        %v6476 = vpop.f32.mrf.mxu0
        %6477 = vdwg.mxu0
        %v6478 = vadd.f32 %v6101, %v6475
        %v6479 = vsel %vm4988, %v6478, 0.0
        %6480 = vadd.xlane.f32.xlu0 %v6479
        %v6481 = vpop.xlane.xlu0 %6480
        %v6482 = vmul.f32 %v6481, %v3345
        %v6483 = vsub.f32 %v6478, %v6482
        %v6484 = vmul.f32 %v6483, %v6483
        %v6485 = vsel %vm4988, %v6484, 0.0
        %6486 = vadd.xlane.f32.xlu0 %v6485
        %v6487 = vpop.xlane.xlu0 %6486
        %v6488 = vmul.f32 %v6487, %v3345
        %v6489 = vadd.f32 %v6488, 1e-06
        %v6490 = vrsqrt.pop %v6489
        %v6491 = vmul.f32 %v6490, %v6489
        %v6492 = vmul.f32 %v6491, %v6490
        %v6493 = vmul.f32 0.5, %v6492
        %v6494 = vsub.f32 1.5, %v6493
        %v6495 = vmul.f32 %v6490, %v6494
        %vm6496 = vweird.f32 %v6489
        %vm6497 = vweird.f32 %v6490
        %vm6498 = vmor %vm6496, %vm6497
        %v6499 = vsel %vm6498, %v6490, %v6495
        %v6500 = vmul.f32 %v6483, %v6499
        %v6502 = vperm.slane %v3105, 0
        %v6504 = vmul.f32 %v6500, %v6502
        %v6506 = vperm.slane %v3104, 0
        %v6508 = vadd.f32 %v6504, %v6506
        %v6509 = vpack.c.bf16 %v6508, %v6508
        %v6510 = vpack.c.bf16 %v3089, %v3088
        %v6511 = vpack.c.bf16 %v3091, %v3090
        %v6513 = vperm.slane %v3086, 0
        %v6516 = vsel %vm3329, %v6509, 0
        %6518 = vmatpush.bf16.msra.mxu0 0
        %6519 = vmatpush.bf16.msra.mxu0 0
        %6520 = vmatpush.bf16.msra.mxu0 0
        %6521 = vmatpush.bf16.msra.mxu0 0
        %6522 = vmatpush.bf16.msra.mxu0 0
        %6523 = vmatpush.bf16.msra.mxu0 0
        %6524 = vmatpush.bf16.msra.mxu0 %v6511
        %6525 = vmatpush.bf16.msra.mxu0 %v6510
        %6526 = vmatmul.bf16.gmra.mxu0 %v6516
        %v6527 = vpop.f32.mrf.mxu0
        %v6528 = vadd.f32 %v6513, %v6527
        %v6529 = vpop.f32.mrf.mxu0
        %6530 = vdwg.mxu0
        %v6531 = vmax.f32 %v6528, 0.0
        %v6532 = vpack.c.bf16 %v6531, %v6531
        %v6533 = vpack.c.bf16 %v3093, %v3092
        %v6534 = vpack.c.bf16 %v3095, %v3094
        %v6535 = vpack.c.bf16 %v3097, %v3096
        %v6536 = vpack.c.bf16 %v3099, %v3098
        %v6538 = vperm.slane %v3087, 0
        %v6541 = vsel %vm3217, %v6532, 0
        %6543 = vmatpush.bf16.msra.mxu0 0
        %6544 = vmatpush.bf16.msra.mxu0 0
        %6545 = vmatpush.bf16.msra.mxu0 0
        %6546 = vmatpush.bf16.msra.mxu0 0
        %6547 = vmatpush.bf16.msra.mxu0 %v6536
        %6548 = vmatpush.bf16.msra.mxu0 %v6535
        %6549 = vmatpush.bf16.msra.mxu0 %v6534
        %6550 = vmatpush.bf16.msra.mxu0 %v6533
        %6551 = vmatmul.bf16.gmra.mxu0 %v6541
        %v6552 = vpop.f32.mrf.mxu0
        %v6553 = vadd.f32 %v6538, %v6552
        %v6554 = vpop.f32.mrf.mxu0
        %6555 = vdwg.mxu0
        %v6556 = vadd.f32 %v6478, %v6553
        %v6557 = vsel %vm4988, %v6556, 0.0
        %6558 = vadd.xlane.f32.xlu0 %v6557
        %v6559 = vpop.xlane.xlu0 %6558
        %v6560 = vmul.f32 %v6559, %v3345
        %v6561 = vsub.f32 %v6556, %v6560
        %v6562 = vmul.f32 %v6561, %v6561
        %v6563 = vsel %vm4988, %v6562, 0.0
        %6564 = vadd.xlane.f32.xlu0 %v6563
        %v6565 = vpop.xlane.xlu0 %6564
        %v6566 = vmul.f32 %v6565, %v3345
        %v6567 = vadd.f32 %v6566, 1e-06
        %v6568 = vrsqrt.pop %v6567
        %v6569 = vmul.f32 %v6568, %v6567
        %v6570 = vmul.f32 %v6569, %v6568
        %v6571 = vmul.f32 0.5, %v6570
        %v6572 = vsub.f32 1.5, %v6571
        %v6573 = vmul.f32 %v6568, %v6572
        %vm6574 = vweird.f32 %v6567
        %vm6575 = vweird.f32 %v6568
        %vm6576 = vmor %vm6574, %vm6575
        %v6577 = vsel %vm6576, %v6568, %v6573
        %v6578 = vmul.f32 %v6561, %v6577
        %v6580 = vperm.slane %v3117, 0
        %v6582 = vmul.f32 %v6578, %v6580
        %v6584 = vperm.slane %v3116, 0
        %v6586 = vadd.f32 %v6582, %v6584
        %v6587 = vpack.c.bf16 %v6586, %v6586
        %v6588 = vpack.c.bf16 %v3178, %v3177
        %v6589 = vpack.c.bf16 %v3180, %v3179
        %v6591 = vperm.slane %v3176, 0
        %v6594 = vsel %vm3329, %v6587, 0
        %6596 = vmatpush.bf16.msra.mxu0 0
        %6597 = vmatpush.bf16.msra.mxu0 0
        %6598 = vmatpush.bf16.msra.mxu0 0
        %6599 = vmatpush.bf16.msra.mxu0 0
        %6600 = vmatpush.bf16.msra.mxu0 0
        %6601 = vmatpush.bf16.msra.mxu0 0
        %6602 = vmatpush.bf16.msra.mxu0 %v6589
        %6603 = vmatpush.bf16.msra.mxu0 %v6588
        %6604 = vmatmul.bf16.gmra.mxu0 %v6594
        %v6605 = vpop.f32.mrf.mxu0
        %v6606 = vadd.f32 %v6591, %v6605
        %v6607 = vpop.f32.mrf.mxu0
        %6608 = vdwg.mxu0
        %vm6609 = vcmask 243712
        %v6610 = vsel %vm6609, %v6606, -inf
        %6611 = vmax.xlane.f32.xlu0 %v6610
        %v6612 = vpop.xlane.xlu0 %6611
        %v6613 = vsub.f32 %v6606, %v6612
        %v6614 = vmul.f32 %v6613, 1.442695
        %v6615 = vpow.pop %v6614
        %v6616 = vsel %vm6609, %v6615, 0.0
        %6617 = vadd.xlane.f32.xlu0 %v6616
        %v6618 = vpop.xlane.xlu0 %6617
        %v6619 = vlog2.pop %v6618
        %v6620 = vmul.f32 %v6619, 0.6931472
        %v6621 = vsub.f32 %v6613, %v6620
        %6622 = vst.msk [vmem:[%s3006] sm:$0x7f] %vm6609, %v6621
        %vm6623 = vcmask 57344
        %6624 = vst.msk [vmem:[%s2990] sm:$0x1] %vm6623, %v3253
        %p6625 = scmp.lt.s32.totalorder %s201, 1
        %s6626 = scalar_select %p6625, %s201, 1
        %s6627 = smul.addr %s6626, 8
        %s6628 = scalar_lea.vmem %s163, %s6627
        %s6629 = sand.u32 %s1951, 1
        %s6630 = scalar_lea.sflag [#allocation5], %s6629
        %s6631 = sand.u32 %s1951, 1
        %s6632 = scalar_lea.vmem [#allocation65], %s6631
        // Predicated region
        $region505: #{lamrg_v7_forward.1} parent=343 // pred_check
          %p6633 = pneg %p1935
        $region506: #{lamrg_v7_forward.1} parent=343 // pred_check_branch
          %6635 = sbr.rel (%p6633) target = $region508
        $region507: #{lamrg_v7_forward.1} parent=343 // pred_region
          _
        $region508: #{lamrg_v7_forward.1} parent=343 // pred_fallthru
          _
        // Predicated region
        $region509: #{lamrg_v7_forward.1} parent=343 // pred_check
          %p6636 = pneg %p1961
        $region510: #{lamrg_v7_forward.1} parent=343 // pred_check_branch
          %6638 = sbr.rel (%p6636) target = $region512
        $region511: #{lamrg_v7_forward.1} parent=343 // pred_region
          %6640 = vsyncadd %s6630, 0
          %s6641 = scalar_lea.hbm %s165, %s201
          %s6643 = sshll.u32 %s6632, 4
          %s6644 = int_to_ptr.vmem [resolvable:$true] %s6643
          %s6645 = sshll.u32 %s6641, 4
          %s6646 = int_to_ptr.hbm [resolvable:$true] %s6645
          %6648 = dma.vmem_to_hbm [thread:$0]  %s6644, 16, %s6646, %s6630
        $region512: #{lamrg_v7_forward.1} parent=343 // pred_fallthru
          _
      $region344: #{lamrg_v7_forward.1} parent=5 // pred_fallthru
        _
      %p6649 = scmp.le.s32.totalorder 2, %s196
      // Predicated region
      $region513: #{lamrg_v7_forward.1} parent=5 // pred_check
        %p6650 = pneg %p6649
      $region514: #{lamrg_v7_forward.1} parent=5 // pred_check_branch
        %6652 = sbr.rel (%p6650) target = $region516
      $region515: #{lamrg_v7_forward.1} parent=5 // pred_region
        %s6653 = ssub.s32 %s196, 2
        // Predicated region
        $region517: #{lamrg_v7_forward.1} parent=515 // pred_check
          %p6654 = pneg %p1941
        $region518: #{lamrg_v7_forward.1} parent=515 // pred_check_branch
          %6656 = sbr.rel (%p6654) target = $region520
        $region519: #{lamrg_v7_forward.1} parent=515 // pred_region
          %p6657 = scmp.lt.s32.totalorder %s202, 1
          %s6658 = scalar_select %p6657, %s202, 1
          %s6659 = smul.addr %s6658, 8
          %s6660 = scalar_lea.vmem %s163, %s6659
        $region520: #{lamrg_v7_forward.1} parent=515 // pred_fallthru
          _
        // Predicated region
        $region521: #{lamrg_v7_forward.1} parent=515 // pred_check
          %p6661 = pneg %p1967
        $region522: #{lamrg_v7_forward.1} parent=515 // pred_check_branch
          %6663 = sbr.rel (%p6661) target = $region524
        $region523: #{lamrg_v7_forward.1} parent=515 // pred_region
          %s6664 = sand.u32 %s1952, 1
          %s6665 = scalar_lea.sflag [#allocation5], %s6664
          %s6666 = sand.u32 %s1952, 1
          %s6667 = scalar_lea.vmem [#allocation65], %s6666
          %6669 = dma.done %s6665, 16
        $region524: #{lamrg_v7_forward.1} parent=515 // pred_fallthru
          _
      $region516: #{lamrg_v7_forward.1} parent=5 // pred_fallthru
        _
    $region6: #{lamrg_v7_forward.1} parent=1 // loop_footer
      %s200 = sadd.s32 1, %s196
    $region7: #{lamrg_v7_forward.1} parent=1 // loop_footer_branch
      %195 = sbr.rel target = $region3
    $region8: #{lamrg_v7_forward.1} parent=1 // loop_exit
      _
    %6670 = vsyncpa [#allocation4], 1
    %s6671 = scalar_lea.sflag [#allocation4], 1
    %6672 = vsyncpa %s6671, 1
    %6673 = vsyncpa [#allocation7], 1
    %6674 = vsyncpa [#allocation10], 1
    %6675 = vsyncpa [#allocation13], 1
    %6676 = vsyncpa [#allocation16], 1
    %6677 = vsyncpa [#allocation19], 1
    %6678 = vsyncpa [#allocation22], 1
    %6679 = vsyncpa [#allocation25], 1
    %6680 = vsyncpa [#allocation28], 1
    %6681 = vsyncpa [#allocation31], 1
    %6682 = vsyncpa [#allocation34], 1
    %6683 = vsyncpa [#allocation37], 1
    %6684 = vsyncpa [#allocation40], 1
    %6685 = vsyncpa [#allocation43], 1
    %6686 = vsyncpa [#allocation46], 1
    %6687 = vsyncpa [#allocation49], 1
    %6688 = vsyncpa [#allocation52], 1
    %6689 = vsyncpa [#allocation55], 1
    %6690 = vsyncpa [#allocation58], 1
    %6691 = vsyncpa [#allocation61], 1
    %6692 = vsyncpa [#allocation64], 1
    %6693 = vsyncpa [#allocation5], 1
    %s6694 = scalar_lea.sflag [#allocation5], 1
    %6695 = vsyncpa %s6694, 1

</llo_original>
